<compile_context>
chip_gen: v7x
topology: tpu7x:2x2x1
jax: 0.10.0
libtpu: 0.0.40
codegen_flags: <defaults>
</compile_context>

<pallas_src>
import functools
import math

import jax
import jax.numpy as jnp
from jax.experimental import pallas as pl
from jax.experimental.pallas import tpu as pltpu


def _round_up(x, m):
    return (x + m - 1) // m * m


@functools.lru_cache(maxsize=None)
def _vmem_limit_bytes():
    """Per-generation VMEM budget: ~half of physical (32 MiB v7x, 64 MiB v5e/v6e)."""
    try:
        cap = int(pltpu.get_tpu_info().vmem_capacity_bytes)
    except Exception:
        cap = 64 * 1024 * 1024   # conservative fallback (v7x-sized)
    return min(cap // 2, 96 * 1024 * 1024)


# --------------------------------------------------------------------------
# Tiled matmul + bias (+ReLU): bf16 MXU inputs, f32 accumulation
# --------------------------------------------------------------------------

def _matmul_bias_single_k_kernel(x_ref, w_ref, b_ref, o_ref, *, activation):
    out = jnp.dot(x_ref[...], w_ref[...],
                  preferred_element_type=jnp.float32) + b_ref[...]
    if activation == "relu":
        out = jnp.maximum(out, 0.0)
    o_ref[...] = out.astype(o_ref.dtype)


def _matmul_bias_multi_k_kernel(x_ref, w_ref, b_ref, o_ref, acc_ref, *, activation):
    @pl.when(pl.program_id(2) == 0)
    def _():
        acc_ref[...] = jnp.zeros_like(acc_ref)

    acc_ref[...] += jnp.dot(x_ref[...], w_ref[...],
                            preferred_element_type=jnp.float32)

    @pl.when(pl.program_id(2) == pl.num_programs(2) - 1)
    def _():
        out = acc_ref[...] + b_ref[...]
        if activation == "relu":
            out = jnp.maximum(out, 0.0)
        o_ref[...] = out.astype(o_ref.dtype)


def pallas_linear(x, w, b, activation=None, out_dtype=jnp.bfloat16):
    """x: (M, K), w: (K, N) bf16 (pre-cast at init), b: (1, N) f32 -> (M, N).

    Grid over (M-tiles, N-tiles, K-tiles); K-tiling (with a VMEM f32 accumulator)
    only kicks in for K > 1024; small N/K use full-dim blocks so no padding or
    post-slice copies are needed.
    """
    M, K = x.shape
    Kw, N = w.shape
    assert K == Kw and b.shape == (1, N)

    if x.dtype != jnp.bfloat16:
        x = x.astype(jnp.bfloat16)

    tm = min(256, _round_up(M, 8))
    Mp = _round_up(M, tm)
    if Mp != M:
        x = jnp.pad(x, ((0, Mp - M), (0, 0)))

    if N <= 512:
        tn = N                                  # full-dim block, exact lanes
    else:
        tn = 512 if N % 512 == 0 else (256 if N % 256 == 0 else 128)
        assert N % tn == 0, "large N must be 128-aligned (pre-pad weight at init)"

    if K <= 1024:
        tk = K                                  # single K step, no accumulator
    else:
        tk = 512 if K % 512 == 0 else 256
        assert K % tk == 0, "large K must be 256-aligned (pre-pad weight at init)"

    gm, gn, gk = Mp // tm, N // tn, K // tk

    if gk == 1:
        kernel = functools.partial(_matmul_bias_single_k_kernel, activation=activation)
        scratch = []
    else:
        kernel = functools.partial(_matmul_bias_multi_k_kernel, activation=activation)
        scratch = [pltpu.VMEM((tm, tn), jnp.float32)]

    out = pl.pallas_call(
        kernel,
        out_shape=jax.ShapeDtypeStruct((Mp, N), out_dtype),
        grid=(gm, gn, gk),
        in_specs=[
            pl.BlockSpec((tm, tk), lambda i, j, k: (i, k)),
            pl.BlockSpec((tk, tn), lambda i, j, k: (k, j)),
            pl.BlockSpec((1, tn), lambda i, j, k: (0, j)),
        ],
        out_specs=pl.BlockSpec((tm, tn), lambda i, j, k: (i, j)),
        scratch_shapes=scratch,
        compiler_params=pltpu.CompilerParams(
            dimension_semantics=("parallel", "parallel", "arbitrary"),
            vmem_limit_bytes=_vmem_limit_bytes(),
        ),
    )(x, w, b)

    return out if Mp == M else out[:M]


# --------------------------------------------------------------------------
# Fused FFN kernel:  relu(x @ w1 + b1) @ w2 + b2  (hidden stays in VMEM)
# --------------------------------------------------------------------------

def _ffn_kernel(x_ref, w1_ref, b1_ref, w2_ref, b2_ref, o_ref):
    h = jnp.dot(x_ref[...], w1_ref[...],
                preferred_element_type=jnp.float32) + b1_ref[...]
    h = jnp.maximum(h, 0.0).astype(jnp.bfloat16)
    o = jnp.dot(h, w2_ref[...],
                preferred_element_type=jnp.float32) + b2_ref[...]
    o_ref[...] = o.astype(o_ref.dtype)


def pallas_ffn(x, w1, b1, w2, b2):
    """x: (M, E) bf16, w1: (E, F) bf16, w2: (F, E) bf16 -> (M, E) bf16."""
    M, E = x.shape
    F = w1.shape[1]
    if x.dtype != jnp.bfloat16:
        x = x.astype(jnp.bfloat16)
    tm = min(128, _round_up(M, 8))
    Mp = _round_up(M, tm)
    if Mp != M:
        x = jnp.pad(x, ((0, Mp - M), (0, 0)))
    out = pl.pallas_call(
        _ffn_kernel,
        out_shape=jax.ShapeDtypeStruct((Mp, E), jnp.bfloat16),
        grid=(Mp // tm,),
        in_specs=[
            pl.BlockSpec((tm, E), lambda i: (i, 0)),
            pl.BlockSpec((E, F), lambda i: (0, 0)),
            pl.BlockSpec((1, F), lambda i: (0, 0)),
            pl.BlockSpec((F, E), lambda i: (0, 0)),
            pl.BlockSpec((1, E), lambda i: (0, 0)),
        ],
        out_specs=pl.BlockSpec((tm, E), lambda i: (i, 0)),
        compiler_params=pltpu.CompilerParams(
            dimension_semantics=("parallel",),
            vmem_limit_bytes=_vmem_limit_bytes(),
        ),
    )(x, w1, b1, w2, b2)
    return out if Mp == M else out[:M]


# --------------------------------------------------------------------------
# Attention kernels: packed QKV / KV refs, per-head slice stores, bf16 MXU
# --------------------------------------------------------------------------

def _self_attn_kernel(qkv_ref, o_ref, *, nhead, scale):
    L, E = o_ref.shape[1], o_ref.shape[2]
    Dh = E // nhead
    rows = jax.lax.broadcasted_iota(jnp.int32, (L, L), 0)
    cols = jax.lax.broadcasted_iota(jnp.int32, (L, L), 1)
    mask = jnp.where(cols <= rows, jnp.float32(0.0), jnp.float32(-1e9))
    for h in range(nhead):                                   # static, small
        qh = qkv_ref[0, :, h * Dh:(h + 1) * Dh]              # (L, Dh) bf16
        kh = qkv_ref[0, :, E + h * Dh:E + (h + 1) * Dh]
        vh = qkv_ref[0, :, 2 * E + h * Dh:2 * E + (h + 1) * Dh]
        s = jax.lax.dot_general(qh, kh, (((1,), (1,)), ((), ())),
                                preferred_element_type=jnp.float32)
        s = s * scale + mask
        m = jnp.max(s, axis=-1, keepdims=True)
        p = jnp.exp(s - m)
        p = p * pl.reciprocal(jnp.sum(p, axis=-1, keepdims=True), approx=True)
        oh = jnp.dot(p.astype(jnp.bfloat16), vh,
                     preferred_element_type=jnp.float32)
        o_ref[0, :, h * Dh:(h + 1) * Dh] = oh.astype(o_ref.dtype)


def _cross_attn_kernel(q_ref, kv_ref, o_ref, *, nhead, scale):
    E = o_ref.shape[2]
    Dh = E // nhead
    for h in range(nhead):
        qh = q_ref[0, :, h * Dh:(h + 1) * Dh]                # (L, Dh) bf16
        kh = kv_ref[0, :, h * Dh:(h + 1) * Dh]               # (S, Dh) bf16
        vh = kv_ref[0, :, E + h * Dh:E + (h + 1) * Dh]
        s = jax.lax.dot_general(qh, kh, (((1,), (1,)), ((), ())),
                                preferred_element_type=jnp.float32) * scale
        m = jnp.max(s, axis=-1, keepdims=True)
        p = jnp.exp(s - m)
        p = p * pl.reciprocal(jnp.sum(p, axis=-1, keepdims=True), approx=True)
        oh = jnp.dot(p.astype(jnp.bfloat16), vh,
                     preferred_element_type=jnp.float32)
        o_ref[0, :, h * Dh:(h + 1) * Dh] = oh.astype(o_ref.dtype)


def pallas_self_attention(qkv, nhead):
    """qkv: (B, L, 3E) bf16 packed Q|K|V -> (B, L, E) bf16, causal mask in-kernel."""
    B, L, E3 = qkv.shape
    E = E3 // 3
    scale = 1.0 / math.sqrt(E // nhead)
    return pl.pallas_call(
        functools.partial(_self_attn_kernel, nhead=nhead, scale=scale),
        out_shape=jax.ShapeDtypeStruct((B, L, E), jnp.bfloat16),
        grid=(B,),
        in_specs=[pl.BlockSpec((1, L, E3), lambda b: (b, 0, 0))],
        out_specs=pl.BlockSpec((1, L, E), lambda b: (b, 0, 0)),
        compiler_params=pltpu.CompilerParams(
            dimension_semantics=("parallel",),
            vmem_limit_bytes=_vmem_limit_bytes(),
        ),
    )(qkv)


def pallas_cross_attention(q, kv, nhead):
    """q: (B, L, E) bf16, kv: (B, S, 2E) bf16 packed K|V -> (B, L, E) bf16 (no mask)."""
    B, L, E = q.shape
    S = kv.shape[1]
    scale = 1.0 / math.sqrt(E // nhead)
    return pl.pallas_call(
        functools.partial(_cross_attn_kernel, nhead=nhead, scale=scale),
        out_shape=jax.ShapeDtypeStruct((B, L, E), jnp.bfloat16),
        grid=(B,),
        in_specs=[pl.BlockSpec((1, L, E), lambda b: (b, 0, 0)),
                  pl.BlockSpec((1, S, 2 * E), lambda b: (b, 0, 0))],
        out_specs=pl.BlockSpec((1, L, E), lambda b: (b, 0, 0)),
        compiler_params=pltpu.CompilerParams(
            dimension_semantics=("parallel",),
            vmem_limit_bytes=_vmem_limit_bytes(),
        ),
    )(q, kv)


# --------------------------------------------------------------------------
# Fused residual-add + LayerNorm kernel (f32 math, bf16 in/out)
# --------------------------------------------------------------------------

def _add_layernorm_kernel(x_ref, y_ref, g_ref, b_ref, o_ref, *, eps):
    x = x_ref[...].astype(jnp.float32) + y_ref[...].astype(jnp.float32)
    mu = jnp.mean(x, axis=-1, keepdims=True)
    var = jnp.mean(jnp.square(x - mu), axis=-1, keepdims=True)
    y = (x - mu) * jax.lax.rsqrt(var + eps)
    o_ref[...] = (y * g_ref[...] + b_ref[...]).astype(o_ref.dtype)


def pallas_add_layernorm(x, y, gamma, beta, eps=1e-5):
    """LayerNorm(x + y); x, y: (M, D) bf16, gamma/beta: (1, D) f32 -> (M, D) bf16."""
    M, D = x.shape
    tm = min(256, _round_up(M, 8))
    Mp = _round_up(M, tm)
    if Mp != M:
        x = jnp.pad(x, ((0, Mp - M), (0, 0)))
        y = jnp.pad(y, ((0, Mp - M), (0, 0)))
    out = pl.pallas_call(
        functools.partial(_add_layernorm_kernel, eps=eps),
        out_shape=jax.ShapeDtypeStruct((Mp, D), jnp.bfloat16),
        grid=(Mp // tm,),
        in_specs=[
            pl.BlockSpec((tm, D), lambda i: (i, 0)),
            pl.BlockSpec((tm, D), lambda i: (i, 0)),
            pl.BlockSpec((1, D), lambda i: (0, 0)),
            pl.BlockSpec((1, D), lambda i: (0, 0)),
        ],
        out_specs=pl.BlockSpec((tm, D), lambda i: (i, 0)),
        compiler_params=pltpu.CompilerParams(
            dimension_semantics=("parallel",),
            vmem_limit_bytes=_vmem_limit_bytes(),
        ),
    )(x, y, gamma, beta)
    return out if Mp == M else out[:M]


# --------------------------------------------------------------------------
# Encoder (VGG-style), NHWC: patch build fused into the conv kernel
# --------------------------------------------------------------------------

def _conv3x3_relu_kernel(x_ref, w_ref, b_ref, o_ref):
    """x_ref: (1, H+2, W+2, C) padded image; w_ref: (9C, Cout) bf16; b: (1, Cout) f32;
    o_ref: (1, H*W, Cout).  Patches are built from 9 static ref slices in VMEM."""
    _, Hp, Wp, C = x_ref.shape
    H, W = Hp - 2, Wp - 2
    taps = []
    for ky in range(3):
        for kx in range(3):
            taps.append(x_ref[0, ky:ky + H, kx:kx + W, :])    # (H, W, C)
    patches = jnp.concatenate(taps, axis=-1)                  # (H, W, 9C)
    patches = patches.reshape(H * W, 9 * C).astype(jnp.bfloat16)
    out = jnp.dot(patches, w_ref[...],
                  preferred_element_type=jnp.float32) + b_ref[...]
    o_ref[0] = jnp.maximum(out, 0.0).astype(o_ref.dtype)


def _conv3x3_relu(x_nhwc, w, b):
    """3x3 conv, stride 1, pad 1, ReLU; w: (9*C_in, C_out) bf16, b: (1, C_out) f32."""
    B, H, W, C = x_nhwc.shape
    assert H % 8 == 0 and W % 8 == 0, "conv kernel expects H, W multiples of 8"
    xp = jnp.pad(x_nhwc, ((0, 0), (1, 1), (1, 1), (0, 0)))
    Cout = w.shape[1]
    out = pl.pallas_call(
        _conv3x3_relu_kernel,
        out_shape=jax.ShapeDtypeStruct((B, H * W, Cout), jnp.bfloat16),
        grid=(B,),
        in_specs=[
            pl.BlockSpec((1, H + 2, W + 2, C), lambda bb: (bb, 0, 0, 0)),
            pl.BlockSpec((9 * C, Cout), lambda bb: (0, 0)),
            pl.BlockSpec((1, Cout), lambda bb: (0, 0)),
        ],
        out_specs=pl.BlockSpec((1, H * W, Cout), lambda bb: (bb, 0, 0)),
        compiler_params=pltpu.CompilerParams(
            dimension_semantics=("parallel",),
            vmem_limit_bytes=_vmem_limit_bytes(),
        ),
    )(xp, w, b)
    return out.reshape(B, H, W, Cout)


def _maxpool2_nhwc(x):
    B, H, W, C = x.shape
    assert H % 2 == 0 and W % 2 == 0
    return x.reshape(B, H // 2, 2, W // 2, 2, C).max(axis=(2, 4))


def encoder_vgg16(p, images_nchw):
    x = jnp.transpose(images_nchw, (0, 2, 3, 1))    # single NCHW -> NHWC conversion
    x = _conv3x3_relu(x, p["conv1_w"], p["conv1_b"])
    x = _maxpool2_nhwc(x)
    x = _conv3x3_relu(x, p["conv2_w"], p["conv2_b"])
    x = _maxpool2_nhwc(x)
    B, Hf, Wf, Df = x.shape
    return x.reshape(B, Hf * Wf, Df)                # (B, S_img, D_img) bf16 regions


# --------------------------------------------------------------------------
# Transformer decoder
# --------------------------------------------------------------------------

def _decoder_layer(x, mem, p, nhead):
    B, L, E = x.shape
    S = mem.shape[1]

    # --- causal self-attention (fused QKV, packed into the attention kernel) ---
    qkv = pallas_linear(x.reshape(B * L, E),
                        p["self"]["w_qkv"], p["self"]["b_qkv"]).reshape(B, L, 3 * E)
    sa = pallas_self_attention(qkv, nhead)
    sa = pallas_linear(sa.reshape(B * L, E),
                       p["self"]["wo"], p["self"]["bo"])
    x = pallas_add_layernorm(x.reshape(B * L, E), sa,
                             p["ln1_g"], p["ln1_b"]).reshape(B, L, E)

    # --- cross-attention over image memory (pre-split q / kv weights) ---
    q = pallas_linear(x.reshape(B * L, E),
                      p["cross"]["w_q"], p["cross"]["b_q"]).reshape(B, L, E)
    kv = pallas_linear(mem.reshape(B * S, E),
                       p["cross"]["w_kv"], p["cross"]["b_kv"]).reshape(B, S, 2 * E)
    ca = pallas_cross_attention(q, kv, nhead)
    ca = pallas_linear(ca.reshape(B * L, E),
                       p["cross"]["wo"], p["cross"]["bo"])
    x = pallas_add_layernorm(x.reshape(B * L, E), ca,
                             p["ln2_g"], p["ln2_b"]).reshape(B, L, E)

    # --- fused FFN ---
    h = pallas_ffn(x.reshape(B * L, E),
                   p["ffn_w1"], p["ffn_b1"], p["ffn_w2"], p["ffn_b2"])
    x = pallas_add_layernorm(x.reshape(B * L, E), h,
                             p["ln3_g"], p["ln3_b"]).reshape(B, L, E)
    return x


def transformer_decoder(p, memory_bsd, captions, nhead):
    """memory_bsd: (B, S, D_img) image regions; captions: (B, L) int32
    -> logits (B, L, vocab_size) f32."""
    B, S, Dimg = memory_bsd.shape
    E = p["embedding"].shape[1]
    L = captions.shape[1]

    mem = pallas_linear(memory_bsd.reshape(B * S, Dimg),
                        p["mem_proj_w"], p["mem_proj_b"]).reshape(B, S, E)

    # token embedding (gather — plain JAX glue) + positional encoding, then bf16
    x = jnp.take(p["embedding"], captions, axis=0) * math.sqrt(E)
    x = (x + p["pos_enc"][None, :L, :]).astype(jnp.bfloat16)

    for layer in p["layers"]:
        x = _decoder_layer(x, mem, layer, nhead)

    V = p["fc_w"].shape[1]
    logits = pallas_linear(x.reshape(B * L, E), p["fc_w"], p["fc_b"],
                           out_dtype=jnp.float32).reshape(B, L, V)
    return logits


# --------------------------------------------------------------------------
# Full model forward (mirrors ImageCaptioningModel.forward)
# --------------------------------------------------------------------------

def image_captioning_forward(params, images, captions, nhead=4):
    feat = encoder_vgg16(params["enc"], images)    # (B, S, D_img)
    # PyTorch does features.permute(1, 0, 2) (seq-first) and the decoder converts
    # back to batch-first; the two transposes cancel, so we pass (B, S, D) directly.
    return transformer_decoder(params["dec"], feat, captions, nhead)


# --------------------------------------------------------------------------
# Deterministic parameter init (matmul weights pre-cast to bf16 once)
# --------------------------------------------------------------------------

def _sinusoidal_pos_enc(max_len, d):
    pos = jnp.arange(max_len, dtype=jnp.float32)[:, None]
    div = jnp.exp(jnp.arange(0, d, 2, dtype=jnp.float32) * (-math.log(10000.0) / d))
    pe = jnp.zeros((max_len, d), jnp.float32)
    pe = pe.at[:, 0::2].set(jnp.sin(pos * div))
    pe = pe.at[:, 1::2].set(jnp.cos(pos * div))
    return pe


def init_params(key, *, in_channels, image_features_dim, embed_size, vocab_size,
                num_layers, ffn_dim, max_len):
    counter = [0]

    def nk():
        counter[0] += 1
        return jax.random.fold_in(key, counter[0])

    def glorot(shape, dtype=jnp.bfloat16):
        lim = math.sqrt(6.0 / (shape[0] + shape[-1]))
        return jax.random.uniform(nk(), shape, jnp.float32, -lim, lim).astype(dtype)

    def zeros(shape):
        return jnp.zeros(shape, jnp.float32)

    def ones(shape):
        return jnp.ones(shape, jnp.float32)

    def self_attn():
        return {
            "w_qkv": glorot((embed_size, 3 * embed_size)),
            "b_qkv": zeros((1, 3 * embed_size)),
            "wo": glorot((embed_size, embed_size)), "bo": zeros((1, embed_size)),
        }

    def cross_attn():
        return {
            "w_q": glorot((embed_size, embed_size)), "b_q": zeros((1, embed_size)),
            "w_kv": glorot((embed_size, 2 * embed_size)),
            "b_kv": zeros((1, 2 * embed_size)),
            "wo": glorot((embed_size, embed_size)), "bo": zeros((1, embed_size)),
        }

    enc = {
        "conv1_w": glorot((in_channels * 9, 8)), "conv1_b": zeros((1, 8)),
        "conv2_w": glorot((8 * 9, image_features_dim)),
        "conv2_b": zeros((1, image_features_dim)),
    }

    layers = []
    for _ in range(num_layers):
        layers.append({
            "self": self_attn(), "cross": cross_attn(),
            "ln1_g": ones((1, embed_size)), "ln1_b": zeros((1, embed_size)),
            "ln2_g": ones((1, embed_size)), "ln2_b": zeros((1, embed_size)),
            "ln3_g": ones((1, embed_size)), "ln3_b": zeros((1, embed_size)),
            "ffn_w1": glorot((embed_size, ffn_dim)), "ffn_b1": zeros((1, ffn_dim)),
            "ffn_w2": glorot((ffn_dim, embed_size)), "ffn_b2": zeros((1, embed_size)),
        })

    dec = {
        "mem_proj_w": glorot((image_features_dim, embed_size)),
        "mem_proj_b": zeros((1, embed_size)),
        "embedding": glorot((vocab_size, embed_size), dtype=jnp.float32),
        "pos_enc": _sinusoidal_pos_enc(max_len, embed_size),
        "layers": layers,
        "fc_w": glorot((embed_size, vocab_size)), "fc_b": zeros((1, vocab_size)),
    }
    return {"enc": enc, "dec": dec}


# --------------------------------------------------------------------------
# Demo
# --------------------------------------------------------------------------

if __name__ == "__main__":
    B, C, H, W = 2, 3, 16, 16          # images: (batch, channels, W, H) — NCHW
    L = 8                               # caption length
    vocab_size = 30
    embed_size = 32
    image_features_dim = 16
    num_layers = 2                      # small stand-in for decoder_num_layers=8
    nhead = 4
    caption_max_length = 16

    key = jax.random.PRNGKey(0)
    k_img, k_cap, k_par = jax.random.split(key, 3)
    images = jax.random.normal(k_img, (B, C, H, W), jnp.float32)
    captions = jax.random.randint(k_cap, (B, L), 0, vocab_size, dtype=jnp.int32)

    params = init_params(
        k_par,
        in_channels=C,
        image_features_dim=image_features_dim,
        embed_size=embed_size,
        vocab_size=vocab_size,
        num_layers=num_layers,
        ffn_dim=4 * embed_size,
        max_len=caption_max_length,
    )

    fwd = jax.jit(functools.partial(image_captioning_forward, nhead=nhead))
    preds = fwd(params, images, captions)
    preds = jax.block_until_ready(preds)

    assert preds.shape == (B, L, vocab_size), preds.shape
    assert bool(jnp.all(jnp.isfinite(preds)))
    print("KERNEL_OK")
</pallas_src>

<mosaic_0001>
module attributes {stable_mosaic.version = 11 : i64} {
  func.func @_matmul_bias_single_k_kernel(%arg0: i32, %arg1: i32, %arg2: i32, %arg3: memref<16x32xbf16, #tpu.memory_space<vmem>>, %arg4: memref<32x96xbf16, #tpu.memory_space<vmem>>, %arg5: memref<1x96xf32, #tpu.memory_space<vmem>>, %arg6: memref<16x96xbf16, #tpu.memory_space<vmem>>) attributes {dimension_semantics = [#tpu.dimension_semantics<parallel>, #tpu.dimension_semantics<parallel>, #tpu.dimension_semantics<arbitrary>], iteration_bounds = array<i64: 1, 1, 1>, scalar_prefetch = 0 : i64, scratch_operands = 0 : i64, tpu.core_type = #tpu.core_type<tc>, window_params = [{transform_indices = @transform_0, window_bounds = array<i64: 16, 32>}, {transform_indices = @transform_1, window_bounds = array<i64: 32, 96>}, {transform_indices = @transform_2, window_bounds = array<i64: 1, 96>}, {transform_indices = @transform_3, window_bounds = array<i64: 16, 96>}]} {
    %c0 = arith.constant 0 : index
    %c0_0 = arith.constant 0 : index
    %0 = vector.load %arg3[%c0, %c0_0] : memref<16x32xbf16, #tpu.memory_space<vmem>>, vector<16x32xbf16>
    %c0_1 = arith.constant 0 : index
    %c0_2 = arith.constant 0 : index
    %1 = vector.load %arg4[%c0_1, %c0_2] : memref<32x96xbf16, #tpu.memory_space<vmem>>, vector<32x96xbf16>
    %cst = arith.constant dense<0.000000e+00> : vector<16x96xf32>
    %2 = tpu.matmul %0, %1, %cst {dimension_numbers = #tpu.dot_dimension_numbers<[1], [0], [0], [1], [0, 0, 1, 1], [], []>} : vector<16x32xbf16>, vector<32x96xbf16>, vector<16x96xf32> -> vector<16x96xf32>
    %c0_3 = arith.constant 0 : index
    %c0_4 = arith.constant 0 : index
    %3 = vector.load %arg5[%c0_3, %c0_4] : memref<1x96xf32, #tpu.memory_space<vmem>>, vector<1x96xf32>
    %4 = vector.broadcast %3 : vector<1x96xf32> to vector<16x96xf32>
    %5 = arith.addf %2, %4 : vector<16x96xf32>
    %6 = arith.truncf %5 : vector<16x96xf32> to vector<16x96xbf16>
    %c0_5 = arith.constant 0 : index
    %c0_6 = arith.constant 0 : index
    %7 = vector.load %arg6[%c0_5, %c0_6] : memref<16x96xbf16, #tpu.memory_space<vmem>>, vector<16x96xbf16>
    tpu.vector_store %arg6[%c0_5, %c0_6], %6 {strides = array<i32>} : memref<16x96xbf16, #tpu.memory_space<vmem>>, vector<16x96xbf16>,
    return
  }
  func.func @transform_0(%arg0: i32, %arg1: i32, %arg2: i32) -> (i32, i32) {
    %c0_i32 = arith.constant 0 : i32
    return %arg0, %arg2 : i32, i32
  }
  func.func @transform_1(%arg0: i32, %arg1: i32, %arg2: i32) -> (i32, i32) {
    %c0_i32 = arith.constant 0 : i32
    return %arg2, %arg1 : i32, i32
  }
  func.func @transform_2(%arg0: i32, %arg1: i32, %arg2: i32) -> (i32, i32) {
    %c0_i32 = arith.constant 0 : i32
    %c0_i32_0 = arith.constant 0 : i32
    return %c0_i32, %arg1 : i32, i32
  }
  func.func @transform_3(%arg0: i32, %arg1: i32, %arg2: i32) -> (i32, i32) {
    %c0_i32 = arith.constant 0 : i32
    return %arg0, %arg1 : i32, i32
  }
}

module attributes {stable_mosaic.version = 11 : i64} {
  func.func @_add_layernorm_kernel(%arg0: i32, %arg1: memref<16x32xbf16, #tpu.memory_space<vmem>>, %arg2: memref<16x32xbf16, #tpu.memory_space<vmem>>, %arg3: memref<1x32xf32, #tpu.memory_space<vmem>>, %arg4: memref<1x32xf32, #tpu.memory_space<vmem>>, %arg5: memref<16x32xbf16, #tpu.memory_space<vmem>>) attributes {dimension_semantics = [#tpu.dimension_semantics<parallel>], iteration_bounds = array<i64: 1>, scalar_prefetch = 0 : i64, scratch_operands = 0 : i64, tpu.core_type = #tpu.core_type<tc>, window_params = [{transform_indices = @transform_0, window_bounds = array<i64: 16, 32>}, {transform_indices = @transform_1, window_bounds = array<i64: 16, 32>}, {pipeline_mode = #tpu.pipeline_mode<synchronous>, transform_indices = @transform_2, window_bounds = array<i64: 1, 32>}, {pipeline_mode = #tpu.pipeline_mode<synchronous>, transform_indices = @transform_3, window_bounds = array<i64: 1, 32>}, {transform_indices = @transform_4, window_bounds = array<i64: 16, 32>}]} {
    %c0 = arith.constant 0 : index
    %c0_0 = arith.constant 0 : index
    %0 = vector.load %arg1[%c0, %c0_0] : memref<16x32xbf16, #tpu.memory_space<vmem>>, vector<16x32xbf16>
    %1 = arith.extf %0 : vector<16x32xbf16> to vector<16x32xf32>
    %c0_1 = arith.constant 0 : index
    %c0_2 = arith.constant 0 : index
    %2 = vector.load %arg2[%c0_1, %c0_2] : memref<16x32xbf16, #tpu.memory_space<vmem>>, vector<16x32xbf16>
    %3 = arith.extf %2 : vector<16x32xbf16> to vector<16x32xf32>
    %4 = arith.addf %1, %3 : vector<16x32xf32>
    %cst = arith.constant dense<0.000000e+00> : vector<16xf32>
    %5 = vector.multi_reduction <add>, %4, %cst [1] : vector<16x32xf32> to vector<16xf32>
    %6 = vector.shape_cast %5 : vector<16xf32> to vector<16x1xf32>
    %cst_3 = arith.constant 3.200000e+01 : f32
    %7 = vector.broadcast %cst_3 : f32 to vector<16x1xf32>
    %8 = arith.divf %6, %7 : vector<16x1xf32>
    %9 = vector.broadcast %8 : vector<16x1xf32> to vector<16x32xf32>
    %10 = arith.subf %4, %9 : vector<16x32xf32>
    %11 = arith.mulf %10, %10 : vector<16x32xf32>
    %cst_4 = arith.constant dense<0.000000e+00> : vector<16xf32>
    %12 = vector.multi_reduction <add>, %11, %cst_4 [1] : vector<16x32xf32> to vector<16xf32>
    %13 = vector.shape_cast %12 : vector<16xf32> to vector<16x1xf32>
    %cst_5 = arith.constant 3.200000e+01 : f32
    %14 = vector.broadcast %cst_5 : f32 to vector<16x1xf32>
    %15 = arith.divf %13, %14 : vector<16x1xf32>
    %16 = vector.broadcast %8 : vector<16x1xf32> to vector<16x32xf32>
    %17 = arith.subf %4, %16 : vector<16x32xf32>
    %cst_6 = arith.constant 9.99999974E-6 : f32
    %18 = vector.broadcast %cst_6 : f32 to vector<16x1xf32>
    %19 = arith.addf %15, %18 : vector<16x1xf32>
    %20 = math.rsqrt %19 : vector<16x1xf32>
    %21 = vector.broadcast %20 : vector<16x1xf32> to vector<16x32xf32>
    %22 = arith.mulf %17, %21 : vector<16x32xf32>
    %c0_7 = arith.constant 0 : index
    %c0_8 = arith.constant 0 : index
    %23 = vector.load %arg3[%c0_7, %c0_8] : memref<1x32xf32, #tpu.memory_space<vmem>>, vector<1x32xf32>
    %24 = vector.broadcast %23 : vector<1x32xf32> to vector<16x32xf32>
    %25 = arith.mulf %22, %24 : vector<16x32xf32>
    %c0_9 = arith.constant 0 : index
    %c0_10 = arith.constant 0 : index
    %26 = vector.load %arg4[%c0_9, %c0_10] : memref<1x32xf32, #tpu.memory_space<vmem>>, vector<1x32xf32>
    %27 = vector.broadcast %26 : vector<1x32xf32> to vector<16x32xf32>
    %28 = arith.addf %25, %27 : vector<16x32xf32>
    %29 = arith.truncf %28 : vector<16x32xf32> to vector<16x32xbf16>
    %c0_11 = arith.constant 0 : index
    %c0_12 = arith.constant 0 : index
    %30 = vector.load %arg5[%c0_11, %c0_12] : memref<16x32xbf16, #tpu.memory_space<vmem>>, vector<16x32xbf16>
    tpu.vector_store %arg5[%c0_11, %c0_12], %29 {strides = array<i32>} : memref<16x32xbf16, #tpu.memory_space<vmem>>, vector<16x32xbf16>,
    return
  }
  func.func @transform_0(%arg0: i32) -> (i32, i32) {
    %c0_i32 = arith.constant 0 : i32
    %c0_i32_0 = arith.constant 0 : i32
    return %arg0, %c0_i32 : i32, i32
  }
  func.func @transform_1(%arg0: i32) -> (i32, i32) {
    %c0_i32 = arith.constant 0 : i32
    %c0_i32_0 = arith.constant 0 : i32
    return %arg0, %c0_i32 : i32, i32
  }
  func.func @transform_2(%arg0: i32) -> (i32, i32) {
    %c0_i32 = arith.constant 0 : i32
    %c0_i32_0 = arith.constant 0 : i32
    %c0_i32_1 = arith.constant 0 : i32
    return %c0_i32, %c0_i32_0 : i32, i32
  }
  func.func @transform_3(%arg0: i32) -> (i32, i32) {
    %c0_i32 = arith.constant 0 : i32
    %c0_i32_0 = arith.constant 0 : i32
    %c0_i32_1 = arith.constant 0 : i32
    return %c0_i32, %c0_i32_0 : i32, i32
  }
  func.func @transform_4(%arg0: i32) -> (i32, i32) {
    %c0_i32 = arith.constant 0 : i32
    %c0_i32_0 = arith.constant 0 : i32
    return %arg0, %c0_i32 : i32, i32
  }
}

module attributes {stable_mosaic.version = 11 : i64} {
  func.func @_matmul_bias_single_k_kernel(%arg0: i32, %arg1: i32, %arg2: i32, %arg3: memref<16x32xbf16, #tpu.memory_space<vmem>>, %arg4: memref<32x32xbf16, #tpu.memory_space<vmem>>, %arg5: memref<1x32xf32, #tpu.memory_space<vmem>>, %arg6: memref<16x32xbf16, #tpu.memory_space<vmem>>) attributes {dimension_semantics = [#tpu.dimension_semantics<parallel>, #tpu.dimension_semantics<parallel>, #tpu.dimension_semantics<arbitrary>], iteration_bounds = array<i64: 1, 1, 1>, scalar_prefetch = 0 : i64, scratch_operands = 0 : i64, tpu.core_type = #tpu.core_type<tc>, window_params = [{transform_indices = @transform_0, window_bounds = array<i64: 16, 32>}, {transform_indices = @transform_1, window_bounds = array<i64: 32, 32>}, {transform_indices = @transform_2, window_bounds = array<i64: 1, 32>}, {transform_indices = @transform_3, window_bounds = array<i64: 16, 32>}]} {
    %c0 = arith.constant 0 : index
    %c0_0 = arith.constant 0 : index
    %0 = vector.load %arg3[%c0, %c0_0] : memref<16x32xbf16, #tpu.memory_space<vmem>>, vector<16x32xbf16>
    %c0_1 = arith.constant 0 : index
    %c0_2 = arith.constant 0 : index
    %1 = vector.load %arg4[%c0_1, %c0_2] : memref<32x32xbf16, #tpu.memory_space<vmem>>, vector<32x32xbf16>
    %cst = arith.constant dense<0.000000e+00> : vector<16x32xf32>
    %2 = tpu.matmul %0, %1, %cst {dimension_numbers = #tpu.dot_dimension_numbers<[1], [0], [0], [1], [0, 0, 1, 1], [], []>} : vector<16x32xbf16>, vector<32x32xbf16>, vector<16x32xf32> -> vector<16x32xf32>
    %c0_3 = arith.constant 0 : index
    %c0_4 = arith.constant 0 : index
    %3 = vector.load %arg5[%c0_3, %c0_4] : memref<1x32xf32, #tpu.memory_space<vmem>>, vector<1x32xf32>
    %4 = vector.broadcast %3 : vector<1x32xf32> to vector<16x32xf32>
    %5 = arith.addf %2, %4 : vector<16x32xf32>
    %6 = arith.truncf %5 : vector<16x32xf32> to vector<16x32xbf16>
    %c0_5 = arith.constant 0 : index
    %c0_6 = arith.constant 0 : index
    %7 = vector.load %arg6[%c0_5, %c0_6] : memref<16x32xbf16, #tpu.memory_space<vmem>>, vector<16x32xbf16>
    tpu.vector_store %arg6[%c0_5, %c0_6], %6 {strides = array<i32>} : memref<16x32xbf16, #tpu.memory_space<vmem>>, vector<16x32xbf16>,
    return
  }
  func.func @transform_0(%arg0: i32, %arg1: i32, %arg2: i32) -> (i32, i32) {
    %c0_i32 = arith.constant 0 : i32
    return %arg0, %arg2 : i32, i32
  }
  func.func @transform_1(%arg0: i32, %arg1: i32, %arg2: i32) -> (i32, i32) {
    %c0_i32 = arith.constant 0 : i32
    return %arg2, %arg1 : i32, i32
  }
  func.func @transform_2(%arg0: i32, %arg1: i32, %arg2: i32) -> (i32, i32) {
    %c0_i32 = arith.constant 0 : i32
    %c0_i32_0 = arith.constant 0 : i32
    return %c0_i32, %arg1 : i32, i32
  }
  func.func @transform_3(%arg0: i32, %arg1: i32, %arg2: i32) -> (i32, i32) {
    %c0_i32 = arith.constant 0 : i32
    return %arg0, %arg1 : i32, i32
  }
}

module attributes {stable_mosaic.version = 11 : i64} {
  func.func @_self_attn_kernel(%arg0: i32, %arg1: memref<1x8x96xbf16, #tpu.memory_space<vmem>>, %arg2: memref<1x8x32xbf16, #tpu.memory_space<vmem>>) attributes {dimension_semantics = [#tpu.dimension_semantics<parallel>], iteration_bounds = array<i64: 2>, scalar_prefetch = 0 : i64, scratch_operands = 0 : i64, tpu.core_type = #tpu.core_type<tc>, window_params = [{transform_indices = @transform_0, window_bounds = array<i64: 1, 8, 96>}, {transform_indices = @transform_1, window_bounds = array<i64: 1, 8, 32>}]} {
    %0 = tpu.iota {dimensions = array<i32: 0>} : vector<8x8xi32>
    %1 = tpu.iota {dimensions = array<i32: 1>} : vector<8x8xi32>
    %2 = arith.cmpi sle, %1, %0 : vector<8x8xi32>
    %cst = arith.constant 0.000000e+00 : f32
    %cst_0 = arith.constant -1.000000e+09 : f32
    %3 = vector.broadcast %cst : f32 to vector<8x8xf32>
    %4 = vector.broadcast %cst_0 : f32 to vector<8x8xf32>
    %5 = arith.select %2, %3, %4 : vector<8x8xi1>, vector<8x8xf32>
    %c0 = arith.constant 0 : index
    %c0_1 = arith.constant 0 : index
    %c0_2 = arith.constant 0 : index
    %6 = vector.load %arg1[%c0, %c0_1, %c0_2] : memref<1x8x96xbf16, #tpu.memory_space<vmem>>, vector<1x8x8xbf16>
    %7 = vector.shape_cast %6 : vector<1x8x8xbf16> to vector<8x8xbf16>
    %c0_3 = arith.constant 0 : index
    %c0_4 = arith.constant 0 : index
    %c32 = arith.constant 32 : index
    %8 = vector.load %arg1[%c0_3, %c0_4, %c32] : memref<1x8x96xbf16, #tpu.memory_space<vmem>>, vector<1x8x8xbf16>
    %9 = vector.shape_cast %8 : vector<1x8x8xbf16> to vector<8x8xbf16>
    %c0_5 = arith.constant 0 : index
    %c0_6 = arith.constant 0 : index
    %c64 = arith.constant 64 : index
    %10 = vector.load %arg1[%c0_5, %c0_6, %c64] : memref<1x8x96xbf16, #tpu.memory_space<vmem>>, vector<1x8x8xbf16>
    %11 = vector.shape_cast %10 : vector<1x8x8xbf16> to vector<8x8xbf16>
    %cst_7 = arith.constant dense<0.000000e+00> : vector<8x8xf32>
    %12 = tpu.matmul %7, %9, %cst_7 {dimension_numbers = #tpu.dot_dimension_numbers<[1], [1], [0], [0], [0, 0, 1, 0], [], []>} : vector<8x8xbf16>, vector<8x8xbf16>, vector<8x8xf32> -> vector<8x8xf32>
    %cst_8 = arith.constant 0.353553385 : f32
    %13 = vector.broadcast %cst_8 : f32 to vector<8x8xf32>
    %14 = arith.mulf %12, %13 : vector<8x8xf32>
    %15 = arith.addf %14, %5 : vector<8x8xf32>
    %cst_9 = arith.constant dense<0xFF800000> : vector<8xf32>
    %16 = vector.multi_reduction <maximumf>, %15, %cst_9 [1] : vector<8x8xf32> to vector<8xf32>
    %17 = vector.shape_cast %16 : vector<8xf32> to vector<8x1xf32>
    %18 = vector.broadcast %17 : vector<8x1xf32> to vector<8x8xf32>
    %19 = arith.subf %15, %18 : vector<8x8xf32>
    %20 = math.exp %19 : vector<8x8xf32>
    %cst_10 = arith.constant dense<0.000000e+00> : vector<8xf32>
    %21 = vector.multi_reduction <add>, %20, %cst_10 [1] : vector<8x8xf32> to vector<8xf32>
    %22 = vector.shape_cast %21 : vector<8xf32> to vector<8x1xf32>
    %23 = tpu.reciprocal %22 {approx = true} : vector<8x1xf32> -> vector<8x1xf32>
    %24 = vector.broadcast %23 : vector<8x1xf32> to vector<8x8xf32>
    %25 = arith.mulf %20, %24 : vector<8x8xf32>
    %26 = arith.truncf %25 : vector<8x8xf32> to vector<8x8xbf16>
    %cst_11 = arith.constant dense<0.000000e+00> : vector<8x8xf32>
    %27 = tpu.matmul %26, %11, %cst_11 {dimension_numbers = #tpu.dot_dimension_numbers<[1], [0], [0], [1], [0, 0, 1, 1], [], []>} : vector<8x8xbf16>, vector<8x8xbf16>, vector<8x8xf32> -> vector<8x8xf32>
    %28 = arith.truncf %27 : vector<8x8xf32> to vector<8x8xbf16>
    %c0_12 = arith.constant 0 : index
    %c0_13 = arith.constant 0 : index
    %c0_14 = arith.constant 0 : index
    %29 = vector.load %arg2[%c0_12, %c0_13, %c0_14] : memref<1x8x32xbf16, #tpu.memory_space<vmem>>, vector<1x8x8xbf16>
    %30 = vector.shape_cast %29 : vector<1x8x8xbf16> to vector<8x8xbf16>
    %31 = vector.shape_cast %28 : vector<8x8xbf16> to vector<1x8x8xbf16>
    tpu.vector_store %arg2[%c0_12, %c0_13, %c0_14], %31 {strides = array<i32>} : memref<1x8x32xbf16, #tpu.memory_space<vmem>>, vector<1x8x8xbf16>,
    %c0_15 = arith.constant 0 : index
    %c0_16 = arith.constant 0 : index
    %c8 = arith.constant 8 : index
    %32 = vector.load %arg1[%c0_15, %c0_16, %c8] : memref<1x8x96xbf16, #tpu.memory_space<vmem>>, vector<1x8x8xbf16>
    %33 = vector.shape_cast %32 : vector<1x8x8xbf16> to vector<8x8xbf16>
    %c0_17 = arith.constant 0 : index
    %c0_18 = arith.constant 0 : index
    %c40 = arith.constant 40 : index
    %34 = vector.load %arg1[%c0_17, %c0_18, %c40] : memref<1x8x96xbf16, #tpu.memory_space<vmem>>, vector<1x8x8xbf16>
    %35 = vector.shape_cast %34 : vector<1x8x8xbf16> to vector<8x8xbf16>
    %c0_19 = arith.constant 0 : index
    %c0_20 = arith.constant 0 : index
    %c72 = arith.constant 72 : index
    %36 = vector.load %arg1[%c0_19, %c0_20, %c72] : memref<1x8x96xbf16, #tpu.memory_space<vmem>>, vector<1x8x8xbf16>
    %37 = vector.shape_cast %36 : vector<1x8x8xbf16> to vector<8x8xbf16>
    %cst_21 = arith.constant dense<0.000000e+00> : vector<8x8xf32>
    %38 = tpu.matmul %33, %35, %cst_21 {dimension_numbers = #tpu.dot_dimension_numbers<[1], [1], [0], [0], [0, 0, 1, 0], [], []>} : vector<8x8xbf16>, vector<8x8xbf16>, vector<8x8xf32> -> vector<8x8xf32>
    %cst_22 = arith.constant 0.353553385 : f32
    %39 = vector.broadcast %cst_22 : f32 to vector<8x8xf32>
    %40 = arith.mulf %38, %39 : vector<8x8xf32>
    %41 = arith.addf %40, %5 : vector<8x8xf32>
    %cst_23 = arith.constant dense<0xFF800000> : vector<8xf32>
    %42 = vector.multi_reduction <maximumf>, %41, %cst_23 [1] : vector<8x8xf32> to vector<8xf32>
    %43 = vector.shape_cast %42 : vector<8xf32> to vector<8x1xf32>
    %44 = vector.broadcast %43 : vector<8x1xf32> to vector<8x8xf32>
    %45 = arith.subf %41, %44 : vector<8x8xf32>
    %46 = math.exp %45 : vector<8x8xf32>
    %cst_24 = arith.constant dense<0.000000e+00> : vector<8xf32>
    %47 = vector.multi_reduction <add>, %46, %cst_24 [1] : vector<8x8xf32> to vector<8xf32>
    %48 = vector.shape_cast %47 : vector<8xf32> to vector<8x1xf32>
    %49 = tpu.reciprocal %48 {approx = true} : vector<8x1xf32> -> vector<8x1xf32>
    %50 = vector.broadcast %49 : vector<8x1xf32> to vector<8x8xf32>
    %51 = arith.mulf %46, %50 : vector<8x8xf32>
    %52 = arith.truncf %51 : vector<8x8xf32> to vector<8x8xbf16>
    %cst_25 = arith.constant dense<0.000000e+00> : vector<8x8xf32>
    %53 = tpu.matmul %52, %37, %cst_25 {dimension_numbers = #tpu.dot_dimension_numbers<[1], [0], [0], [1], [0, 0, 1, 1], [], []>} : vector<8x8xbf16>, vector<8x8xbf16>, vector<8x8xf32> -> vector<8x8xf32>
    %54 = arith.truncf %53 : vector<8x8xf32> to vector<8x8xbf16>
    %c0_26 = arith.constant 0 : index
    %c0_27 = arith.constant 0 : index
    %c8_28 = arith.constant 8 : index
    %55 = vector.load %arg2[%c0_26, %c0_27, %c8_28] : memref<1x8x32xbf16, #tpu.memory_space<vmem>>, vector<1x8x8xbf16>
    %56 = vector.shape_cast %55 : vector<1x8x8xbf16> to vector<8x8xbf16>
    %57 = vector.shape_cast %54 : vector<8x8xbf16> to vector<1x8x8xbf16>
    tpu.vector_store %arg2[%c0_26, %c0_27, %c8_28], %57 {strides = array<i32>} : memref<1x8x32xbf16, #tpu.memory_space<vmem>>, vector<1x8x8xbf16>,
    %c0_29 = arith.constant 0 : index
    %c0_30 = arith.constant 0 : index
    %c16 = arith.constant 16 : index
    %58 = vector.load %arg1[%c0_29, %c0_30, %c16] : memref<1x8x96xbf16, #tpu.memory_space<vmem>>, vector<1x8x8xbf16>
    %59 = vector.shape_cast %58 : vector<1x8x8xbf16> to vector<8x8xbf16>
    %c0_31 = arith.constant 0 : index
    %c0_32 = arith.constant 0 : index
    %c48 = arith.constant 48 : index
    %60 = vector.load %arg1[%c0_31, %c0_32, %c48] : memref<1x8x96xbf16, #tpu.memory_space<vmem>>, vector<1x8x8xbf16>
    %61 = vector.shape_cast %60 : vector<1x8x8xbf16> to vector<8x8xbf16>
    %c0_33 = arith.constant 0 : index
    %c0_34 = arith.constant 0 : index
    %c80 = arith.constant 80 : index
    %62 = vector.load %arg1[%c0_33, %c0_34, %c80] : memref<1x8x96xbf16, #tpu.memory_space<vmem>>, vector<1x8x8xbf16>
    %63 = vector.shape_cast %62 : vector<1x8x8xbf16> to vector<8x8xbf16>
    %cst_35 = arith.constant dense<0.000000e+00> : vector<8x8xf32>
    %64 = tpu.matmul %59, %61, %cst_35 {dimension_numbers = #tpu.dot_dimension_numbers<[1], [1], [0], [0], [0, 0, 1, 0], [], []>} : vector<8x8xbf16>, vector<8x8xbf16>, vector<8x8xf32> -> vector<8x8xf32>
    %cst_36 = arith.constant 0.353553385 : f32
    %65 = vector.broadcast %cst_36 : f32 to vector<8x8xf32>
    %66 = arith.mulf %64, %65 : vector<8x8xf32>
    %67 = arith.addf %66, %5 : vector<8x8xf32>
    %cst_37 = arith.constant dense<0xFF800000> : vector<8xf32>
    %68 = vector.multi_reduction <maximumf>, %67, %cst_37 [1] : vector<8x8xf32> to vector<8xf32>
    %69 = vector.shape_cast %68 : vector<8xf32> to vector<8x1xf32>
    %70 = vector.broadcast %69 : vector<8x1xf32> to vector<8x8xf32>
    %71 = arith.subf %67, %70 : vector<8x8xf32>
    %72 = math.exp %71 : vector<8x8xf32>
    %cst_38 = arith.constant dense<0.000000e+00> : vector<8xf32>
    %73 = vector.multi_reduction <add>, %72, %cst_38 [1] : vector<8x8xf32> to vector<8xf32>
    %74 = vector.shape_cast %73 : vector<8xf32> to vector<8x1xf32>
    %75 = tpu.reciprocal %74 {approx = true} : vector<8x1xf32> -> vector<8x1xf32>
    %76 = vector.broadcast %75 : vector<8x1xf32> to vector<8x8xf32>
    %77 = arith.mulf %72, %76 : vector<8x8xf32>
    %78 = arith.truncf %77 : vector<8x8xf32> to vector<8x8xbf16>
    %cst_39 = arith.constant dense<0.000000e+00> : vector<8x8xf32>
    %79 = tpu.matmul %78, %63, %cst_39 {dimension_numbers = #tpu.dot_dimension_numbers<[1], [0], [0], [1], [0, 0, 1, 1], [], []>} : vector<8x8xbf16>, vector<8x8xbf16>, vector<8x8xf32> -> vector<8x8xf32>
    %80 = arith.truncf %79 : vector<8x8xf32> to vector<8x8xbf16>
    %c0_40 = arith.constant 0 : index
    %c0_41 = arith.constant 0 : index
    %c16_42 = arith.constant 16 : index
    %81 = vector.load %arg2[%c0_40, %c0_41, %c16_42] : memref<1x8x32xbf16, #tpu.memory_space<vmem>>, vector<1x8x8xbf16>
    %82 = vector.shape_cast %81 : vector<1x8x8xbf16> to vector<8x8xbf16>
    %83 = vector.shape_cast %80 : vector<8x8xbf16> to vector<1x8x8xbf16>
    tpu.vector_store %arg2[%c0_40, %c0_41, %c16_42], %83 {strides = array<i32>} : memref<1x8x32xbf16, #tpu.memory_space<vmem>>, vector<1x8x8xbf16>,
    %c0_43 = arith.constant 0 : index
    %c0_44 = arith.constant 0 : index
    %c24 = arith.constant 24 : index
    %84 = vector.load %arg1[%c0_43, %c0_44, %c24] : memref<1x8x96xbf16, #tpu.memory_space<vmem>>, vector<1x8x8xbf16>
    %85 = vector.shape_cast %84 : vector<1x8x8xbf16> to vector<8x8xbf16>
    %c0_45 = arith.constant 0 : index
    %c0_46 = arith.constant 0 : index
    %c56 = arith.constant 56 : index
    %86 = vector.load %arg1[%c0_45, %c0_46, %c56] : memref<1x8x96xbf16, #tpu.memory_space<vmem>>, vector<1x8x8xbf16>
    %87 = vector.shape_cast %86 : vector<1x8x8xbf16> to vector<8x8xbf16>
    %c0_47 = arith.constant 0 : index
    %c0_48 = arith.constant 0 : index
    %c88 = arith.constant 88 : index
    %88 = vector.load %arg1[%c0_47, %c0_48, %c88] : memref<1x8x96xbf16, #tpu.memory_space<vmem>>, vector<1x8x8xbf16>
    %89 = vector.shape_cast %88 : vector<1x8x8xbf16> to vector<8x8xbf16>
    %cst_49 = arith.constant dense<0.000000e+00> : vector<8x8xf32>
    %90 = tpu.matmul %85, %87, %cst_49 {dimension_numbers = #tpu.dot_dimension_numbers<[1], [1], [0], [0], [0, 0, 1, 0], [], []>} : vector<8x8xbf16>, vector<8x8xbf16>, vector<8x8xf32> -> vector<8x8xf32>
    %cst_50 = arith.constant 0.353553385 : f32
    %91 = vector.broadcast %cst_50 : f32 to vector<8x8xf32>
    %92 = arith.mulf %90, %91 : vector<8x8xf32>
    %93 = arith.addf %92, %5 : vector<8x8xf32>
    %cst_51 = arith.constant dense<0xFF800000> : vector<8xf32>
    %94 = vector.multi_reduction <maximumf>, %93, %cst_51 [1] : vector<8x8xf32> to vector<8xf32>
    %95 = vector.shape_cast %94 : vector<8xf32> to vector<8x1xf32>
    %96 = vector.broadcast %95 : vector<8x1xf32> to vector<8x8xf32>
    %97 = arith.subf %93, %96 : vector<8x8xf32>
    %98 = math.exp %97 : vector<8x8xf32>
    %cst_52 = arith.constant dense<0.000000e+00> : vector<8xf32>
    %99 = vector.multi_reduction <add>, %98, %cst_52 [1] : vector<8x8xf32> to vector<8xf32>
    %100 = vector.shape_cast %99 : vector<8xf32> to vector<8x1xf32>
    %101 = tpu.reciprocal %100 {approx = true} : vector<8x1xf32> -> vector<8x1xf32>
    %102 = vector.broadcast %101 : vector<8x1xf32> to vector<8x8xf32>
    %103 = arith.mulf %98, %102 : vector<8x8xf32>
    %104 = arith.truncf %103 : vector<8x8xf32> to vector<8x8xbf16>
    %cst_53 = arith.constant dense<0.000000e+00> : vector<8x8xf32>
    %105 = tpu.matmul %104, %89, %cst_53 {dimension_numbers = #tpu.dot_dimension_numbers<[1], [0], [0], [1], [0, 0, 1, 1], [], []>} : vector<8x8xbf16>, vector<8x8xbf16>, vector<8x8xf32> -> vector<8x8xf32>
    %106 = arith.truncf %105 : vector<8x8xf32> to vector<8x8xbf16>
    %c0_54 = arith.constant 0 : index
    %c0_55 = arith.constant 0 : index
    %c24_56 = arith.constant 24 : index
    %107 = vector.load %arg2[%c0_54, %c0_55, %c24_56] : memref<1x8x32xbf16, #tpu.memory_space<vmem>>, vector<1x8x8xbf16>
    %108 = vector.shape_cast %107 : vector<1x8x8xbf16> to vector<8x8xbf16>
    %109 = vector.shape_cast %106 : vector<8x8xbf16> to vector<1x8x8xbf16>
    tpu.vector_store %arg2[%c0_54, %c0_55, %c24_56], %109 {strides = array<i32>} : memref<1x8x32xbf16, #tpu.memory_space<vmem>>, vector<1x8x8xbf16>,
    return
  }
  func.func @transform_0(%arg0: i32) -> (i32, i32, i32) {
    %c0_i32 = arith.constant 0 : i32
    %c0_i32_0 = arith.constant 0 : i32
    %c0_i32_1 = arith.constant 0 : i32
    return %arg0, %c0_i32, %c0_i32_0 : i32, i32, i32
  }
  func.func @transform_1(%arg0: i32) -> (i32, i32, i32) {
    %c0_i32 = arith.constant 0 : i32
    %c0_i32_0 = arith.constant 0 : i32
    %c0_i32_1 = arith.constant 0 : i32
    return %arg0, %c0_i32, %c0_i32_0 : i32, i32, i32
  }
}

module attributes {stable_mosaic.version = 11 : i64} {
  func.func @_conv3x3_relu_kernel(%arg0: i32, %arg1: memref<1x18x18x3xf32, #tpu.memory_space<vmem>>, %arg2: memref<27x8xbf16, #tpu.memory_space<vmem>>, %arg3: memref<1x8xf32, #tpu.memory_space<vmem>>, %arg4: memref<1x256x8xbf16, #tpu.memory_space<vmem>>) attributes {dimension_semantics = [#tpu.dimension_semantics<parallel>], iteration_bounds = array<i64: 2>, scalar_prefetch = 0 : i64, scratch_operands = 0 : i64, tpu.core_type = #tpu.core_type<tc>, window_params = [{transform_indices = @transform_0, window_bounds = array<i64: 1, 18, 18, 3>}, {pipeline_mode = #tpu.pipeline_mode<synchronous>, transform_indices = @transform_1, window_bounds = array<i64: 27, 8>}, {pipeline_mode = #tpu.pipeline_mode<synchronous>, transform_indices = @transform_2, window_bounds = array<i64: 1, 8>}, {transform_indices = @transform_3, window_bounds = array<i64: 1, 256, 8>}]} {
    %c0 = arith.constant 0 : index
    %c0_0 = arith.constant 0 : index
    %c0_1 = arith.constant 0 : index
    %c0_2 = arith.constant 0 : index
    %0 = vector.load %arg1[%c0, %c0_0, %c0_1, %c0_2] : memref<1x18x18x3xf32, #tpu.memory_space<vmem>>, vector<1x16x16x3xf32>
    %1 = vector.shape_cast %0 : vector<1x16x16x3xf32> to vector<16x16x3xf32>
    %c0_3 = arith.constant 0 : index
    %c0_4 = arith.constant 0 : index
    %c1 = arith.constant 1 : index
    %c0_5 = arith.constant 0 : index
    %2 = vector.load %arg1[%c0_3, %c0_4, %c1, %c0_5] : memref<1x18x18x3xf32, #tpu.memory_space<vmem>>, vector<1x16x16x3xf32>
    %3 = vector.shape_cast %2 : vector<1x16x16x3xf32> to vector<16x16x3xf32>
    %c0_6 = arith.constant 0 : index
    %c0_7 = arith.constant 0 : index
    %c2 = arith.constant 2 : index
    %c0_8 = arith.constant 0 : index
    %4 = vector.load %arg1[%c0_6, %c0_7, %c2, %c0_8] : memref<1x18x18x3xf32, #tpu.memory_space<vmem>>, vector<1x16x16x3xf32>
    %5 = vector.shape_cast %4 : vector<1x16x16x3xf32> to vector<16x16x3xf32>
    %c0_9 = arith.constant 0 : index
    %c1_10 = arith.constant 1 : index
    %c0_11 = arith.constant 0 : index
    %c0_12 = arith.constant 0 : index
    %6 = vector.load %arg1[%c0_9, %c1_10, %c0_11, %c0_12] : memref<1x18x18x3xf32, #tpu.memory_space<vmem>>, vector<1x16x16x3xf32>
    %7 = vector.shape_cast %6 : vector<1x16x16x3xf32> to vector<16x16x3xf32>
    %c0_13 = arith.constant 0 : index
    %c1_14 = arith.constant 1 : index
    %c1_15 = arith.constant 1 : index
    %c0_16 = arith.constant 0 : index
    %8 = vector.load %arg1[%c0_13, %c1_14, %c1_15, %c0_16] : memref<1x18x18x3xf32, #tpu.memory_space<vmem>>, vector<1x16x16x3xf32>
    %9 = vector.shape_cast %8 : vector<1x16x16x3xf32> to vector<16x16x3xf32>
    %c0_17 = arith.constant 0 : index
    %c1_18 = arith.constant 1 : index
    %c2_19 = arith.constant 2 : index
    %c0_20 = arith.constant 0 : index
    %10 = vector.load %arg1[%c0_17, %c1_18, %c2_19, %c0_20] : memref<1x18x18x3xf32, #tpu.memory_space<vmem>>, vector<1x16x16x3xf32>
    %11 = vector.shape_cast %10 : vector<1x16x16x3xf32> to vector<16x16x3xf32>
    %c0_21 = arith.constant 0 : index
    %c2_22 = arith.constant 2 : index
    %c0_23 = arith.constant 0 : index
    %c0_24 = arith.constant 0 : index
    %12 = vector.load %arg1[%c0_21, %c2_22, %c0_23, %c0_24] : memref<1x18x18x3xf32, #tpu.memory_space<vmem>>, vector<1x16x16x3xf32>
    %13 = vector.shape_cast %12 : vector<1x16x16x3xf32> to vector<16x16x3xf32>
    %c0_25 = arith.constant 0 : index
    %c2_26 = arith.constant 2 : index
    %c1_27 = arith.constant 1 : index
    %c0_28 = arith.constant 0 : index
    %14 = vector.load %arg1[%c0_25, %c2_26, %c1_27, %c0_28] : memref<1x18x18x3xf32, #tpu.memory_space<vmem>>, vector<1x16x16x3xf32>
    %15 = vector.shape_cast %14 : vector<1x16x16x3xf32> to vector<16x16x3xf32>
    %c0_29 = arith.constant 0 : index
    %c2_30 = arith.constant 2 : index
    %c2_31 = arith.constant 2 : index
    %c0_32 = arith.constant 0 : index
    %16 = vector.load %arg1[%c0_29, %c2_30, %c2_31, %c0_32] : memref<1x18x18x3xf32, #tpu.memory_space<vmem>>, vector<1x16x16x3xf32>
    %17 = vector.shape_cast %16 : vector<1x16x16x3xf32> to vector<16x16x3xf32>
    %18 = tpu.concatenate %1, %3, %5, %7, %9, %11, %13, %15, %17 in 2 : vector<16x16x3xf32>, vector<16x16x3xf32>, vector<16x16x3xf32>, vector<16x16x3xf32>, vector<16x16x3xf32>, vector<16x16x3xf32>, vector<16x16x3xf32>, vector<16x16x3xf32>, vector<16x16x3xf32> -> vector<16x16x27xf32>
    %19 = vector.shape_cast %18 : vector<16x16x27xf32> to vector<256x27xf32>
    %20 = arith.truncf %19 : vector<256x27xf32> to vector<256x27xbf16>
    %c0_33 = arith.constant 0 : index
    %c0_34 = arith.constant 0 : index
    %21 = vector.load %arg2[%c0_33, %c0_34] : memref<27x8xbf16, #tpu.memory_space<vmem>>, vector<27x8xbf16>
    %cst = arith.constant dense<0.000000e+00> : vector<256x8xf32>
    %22 = tpu.matmul %20, %21, %cst {dimension_numbers = #tpu.dot_dimension_numbers<[1], [0], [0], [1], [0, 0, 1, 1], [], []>} : vector<256x27xbf16>, vector<27x8xbf16>, vector<256x8xf32> -> vector<256x8xf32>
    %c0_35 = arith.constant 0 : index
    %c0_36 = arith.constant 0 : index
    %23 = vector.load %arg3[%c0_35, %c0_36] : memref<1x8xf32, #tpu.memory_space<vmem>>, vector<1x8xf32>
    %24 = vector.broadcast %23 : vector<1x8xf32> to vector<256x8xf32>
    %25 = arith.addf %22, %24 : vector<256x8xf32>
    %cst_37 = arith.constant 0.000000e+00 : f32
    %26 = vector.broadcast %cst_37 : f32 to vector<256x8xf32>
    %27 = arith.maximumf %25, %26 : vector<256x8xf32>
    %28 = arith.truncf %27 : vector<256x8xf32> to vector<256x8xbf16>
    %c0_38 = arith.constant 0 : index
    %c0_39 = arith.constant 0 : index
    %c0_40 = arith.constant 0 : index
    %29 = vector.load %arg4[%c0_38, %c0_39, %c0_40] : memref<1x256x8xbf16, #tpu.memory_space<vmem>>, vector<1x256x8xbf16>
    %30 = vector.shape_cast %29 : vector<1x256x8xbf16> to vector<256x8xbf16>
    %31 = vector.shape_cast %28 : vector<256x8xbf16> to vector<1x256x8xbf16>
    tpu.vector_store %arg4[%c0_38, %c0_39, %c0_40], %31 {strides = array<i32>} : memref<1x256x8xbf16, #tpu.memory_space<vmem>>, vector<1x256x8xbf16>,
    return
  }
  func.func @transform_0(%arg0: i32) -> (i32, i32, i32, i32) {
    %c0_i32 = arith.constant 0 : i32
    %c0_i32_0 = arith.constant 0 : i32
    %c0_i32_1 = arith.constant 0 : i32
    %c0_i32_2 = arith.constant 0 : i32
    return %arg0, %c0_i32, %c0_i32_0, %c0_i32_1 : i32, i32, i32, i32
  }
  func.func @transform_1(%arg0: i32) -> (i32, i32) {
    %c0_i32 = arith.constant 0 : i32
    %c0_i32_0 = arith.constant 0 : i32
    %c0_i32_1 = arith.constant 0 : i32
    return %c0_i32, %c0_i32_0 : i32, i32
  }
  func.func @transform_2(%arg0: i32) -> (i32, i32) {
    %c0_i32 = arith.constant 0 : i32
    %c0_i32_0 = arith.constant 0 : i32
    %c0_i32_1 = arith.constant 0 : i32
    return %c0_i32, %c0_i32_0 : i32, i32
  }
  func.func @transform_3(%arg0: i32) -> (i32, i32, i32) {
    %c0_i32 = arith.constant 0 : i32
    %c0_i32_0 = arith.constant 0 : i32
    %c0_i32_1 = arith.constant 0 : i32
    return %arg0, %c0_i32, %c0_i32_0 : i32, i32, i32
  }
}

module attributes {stable_mosaic.version = 11 : i64} {
  func.func @_matmul_bias_single_k_kernel(%arg0: i32, %arg1: i32, %arg2: i32, %arg3: memref<32x16xbf16, #tpu.memory_space<vmem>>, %arg4: memref<16x32xbf16, #tpu.memory_space<vmem>>, %arg5: memref<1x32xf32, #tpu.memory_space<vmem>>, %arg6: memref<32x32xbf16, #tpu.memory_space<vmem>>) attributes {dimension_semantics = [#tpu.dimension_semantics<parallel>, #tpu.dimension_semantics<parallel>, #tpu.dimension_semantics<arbitrary>], iteration_bounds = array<i64: 1, 1, 1>, scalar_prefetch = 0 : i64, scratch_operands = 0 : i64, tpu.core_type = #tpu.core_type<tc>, window_params = [{transform_indices = @transform_0, window_bounds = array<i64: 32, 16>}, {transform_indices = @transform_1, window_bounds = array<i64: 16, 32>}, {transform_indices = @transform_2, window_bounds = array<i64: 1, 32>}, {transform_indices = @transform_3, window_bounds = array<i64: 32, 32>}]} {
    %c0 = arith.constant 0 : index
    %c0_0 = arith.constant 0 : index
    %0 = vector.load %arg3[%c0, %c0_0] : memref<32x16xbf16, #tpu.memory_space<vmem>>, vector<32x16xbf16>
    %c0_1 = arith.constant 0 : index
    %c0_2 = arith.constant 0 : index
    %1 = vector.load %arg4[%c0_1, %c0_2] : memref<16x32xbf16, #tpu.memory_space<vmem>>, vector<16x32xbf16>
    %cst = arith.constant dense<0.000000e+00> : vector<32x32xf32>
    %2 = tpu.matmul %0, %1, %cst {dimension_numbers = #tpu.dot_dimension_numbers<[1], [0], [0], [1], [0, 0, 1, 1], [], []>} : vector<32x16xbf16>, vector<16x32xbf16>, vector<32x32xf32> -> vector<32x32xf32>
    %c0_3 = arith.constant 0 : index
    %c0_4 = arith.constant 0 : index
    %3 = vector.load %arg5[%c0_3, %c0_4] : memref<1x32xf32, #tpu.memory_space<vmem>>, vector<1x32xf32>
    %4 = vector.broadcast %3 : vector<1x32xf32> to vector<32x32xf32>
    %5 = arith.addf %2, %4 : vector<32x32xf32>
    %6 = arith.truncf %5 : vector<32x32xf32> to vector<32x32xbf16>
    %c0_5 = arith.constant 0 : index
    %c0_6 = arith.constant 0 : index
    %7 = vector.load %arg6[%c0_5, %c0_6] : memref<32x32xbf16, #tpu.memory_space<vmem>>, vector<32x32xbf16>
    tpu.vector_store %arg6[%c0_5, %c0_6], %6 {strides = array<i32>} : memref<32x32xbf16, #tpu.memory_space<vmem>>, vector<32x32xbf16>,
    return
  }
  func.func @transform_0(%arg0: i32, %arg1: i32, %arg2: i32) -> (i32, i32) {
    %c0_i32 = arith.constant 0 : i32
    return %arg0, %arg2 : i32, i32
  }
  func.func @transform_1(%arg0: i32, %arg1: i32, %arg2: i32) -> (i32, i32) {
    %c0_i32 = arith.constant 0 : i32
    return %arg2, %arg1 : i32, i32
  }
  func.func @transform_2(%arg0: i32, %arg1: i32, %arg2: i32) -> (i32, i32) {
    %c0_i32 = arith.constant 0 : i32
    %c0_i32_0 = arith.constant 0 : i32
    return %c0_i32, %arg1 : i32, i32
  }
  func.func @transform_3(%arg0: i32, %arg1: i32, %arg2: i32) -> (i32, i32) {
    %c0_i32 = arith.constant 0 : i32
    return %arg0, %arg1 : i32, i32
  }
}

module attributes {stable_mosaic.version = 11 : i64} {
  func.func @_conv3x3_relu_kernel(%arg0: i32, %arg1: memref<1x10x10x8xbf16, #tpu.memory_space<vmem>>, %arg2: memref<72x16xbf16, #tpu.memory_space<vmem>>, %arg3: memref<1x16xf32, #tpu.memory_space<vmem>>, %arg4: memref<1x64x16xbf16, #tpu.memory_space<vmem>>) attributes {dimension_semantics = [#tpu.dimension_semantics<parallel>], iteration_bounds = array<i64: 2>, scalar_prefetch = 0 : i64, scratch_operands = 0 : i64, tpu.core_type = #tpu.core_type<tc>, window_params = [{transform_indices = @transform_0, window_bounds = array<i64: 1, 10, 10, 8>}, {pipeline_mode = #tpu.pipeline_mode<synchronous>, transform_indices = @transform_1, window_bounds = array<i64: 72, 16>}, {pipeline_mode = #tpu.pipeline_mode<synchronous>, transform_indices = @transform_2, window_bounds = array<i64: 1, 16>}, {transform_indices = @transform_3, window_bounds = array<i64: 1, 64, 16>}]} {
    %c0 = arith.constant 0 : index
    %c0_0 = arith.constant 0 : index
    %c0_1 = arith.constant 0 : index
    %c0_2 = arith.constant 0 : index
    %0 = vector.load %arg1[%c0, %c0_0, %c0_1, %c0_2] : memref<1x10x10x8xbf16, #tpu.memory_space<vmem>>, vector<1x8x8x8xbf16>
    %1 = vector.shape_cast %0 : vector<1x8x8x8xbf16> to vector<8x8x8xbf16>
    %c0_3 = arith.constant 0 : index
    %c0_4 = arith.constant 0 : index
    %c1 = arith.constant 1 : index
    %c0_5 = arith.constant 0 : index
    %2 = vector.load %arg1[%c0_3, %c0_4, %c1, %c0_5] : memref<1x10x10x8xbf16, #tpu.memory_space<vmem>>, vector<1x8x8x8xbf16>
    %3 = vector.shape_cast %2 : vector<1x8x8x8xbf16> to vector<8x8x8xbf16>
    %c0_6 = arith.constant 0 : index
    %c0_7 = arith.constant 0 : index
    %c2 = arith.constant 2 : index
    %c0_8 = arith.constant 0 : index
    %4 = vector.load %arg1[%c0_6, %c0_7, %c2, %c0_8] : memref<1x10x10x8xbf16, #tpu.memory_space<vmem>>, vector<1x8x8x8xbf16>
    %5 = vector.shape_cast %4 : vector<1x8x8x8xbf16> to vector<8x8x8xbf16>
    %c0_9 = arith.constant 0 : index
    %c1_10 = arith.constant 1 : index
    %c0_11 = arith.constant 0 : index
    %c0_12 = arith.constant 0 : index
    %6 = vector.load %arg1[%c0_9, %c1_10, %c0_11, %c0_12] : memref<1x10x10x8xbf16, #tpu.memory_space<vmem>>, vector<1x8x8x8xbf16>
    %7 = vector.shape_cast %6 : vector<1x8x8x8xbf16> to vector<8x8x8xbf16>
    %c0_13 = arith.constant 0 : index
    %c1_14 = arith.constant 1 : index
    %c1_15 = arith.constant 1 : index
    %c0_16 = arith.constant 0 : index
    %8 = vector.load %arg1[%c0_13, %c1_14, %c1_15, %c0_16] : memref<1x10x10x8xbf16, #tpu.memory_space<vmem>>, vector<1x8x8x8xbf16>
    %9 = vector.shape_cast %8 : vector<1x8x8x8xbf16> to vector<8x8x8xbf16>
    %c0_17 = arith.constant 0 : index
    %c1_18 = arith.constant 1 : index
    %c2_19 = arith.constant 2 : index
    %c0_20 = arith.constant 0 : index
    %10 = vector.load %arg1[%c0_17, %c1_18, %c2_19, %c0_20] : memref<1x10x10x8xbf16, #tpu.memory_space<vmem>>, vector<1x8x8x8xbf16>
    %11 = vector.shape_cast %10 : vector<1x8x8x8xbf16> to vector<8x8x8xbf16>
    %c0_21 = arith.constant 0 : index
    %c2_22 = arith.constant 2 : index
    %c0_23 = arith.constant 0 : index
    %c0_24 = arith.constant 0 : index
    %12 = vector.load %arg1[%c0_21, %c2_22, %c0_23, %c0_24] : memref<1x10x10x8xbf16, #tpu.memory_space<vmem>>, vector<1x8x8x8xbf16>
    %13 = vector.shape_cast %12 : vector<1x8x8x8xbf16> to vector<8x8x8xbf16>
    %c0_25 = arith.constant 0 : index
    %c2_26 = arith.constant 2 : index
    %c1_27 = arith.constant 1 : index
    %c0_28 = arith.constant 0 : index
    %14 = vector.load %arg1[%c0_25, %c2_26, %c1_27, %c0_28] : memref<1x10x10x8xbf16, #tpu.memory_space<vmem>>, vector<1x8x8x8xbf16>
    %15 = vector.shape_cast %14 : vector<1x8x8x8xbf16> to vector<8x8x8xbf16>
    %c0_29 = arith.constant 0 : index
    %c2_30 = arith.constant 2 : index
    %c2_31 = arith.constant 2 : index
    %c0_32 = arith.constant 0 : index
    %16 = vector.load %arg1[%c0_29, %c2_30, %c2_31, %c0_32] : memref<1x10x10x8xbf16, #tpu.memory_space<vmem>>, vector<1x8x8x8xbf16>
    %17 = vector.shape_cast %16 : vector<1x8x8x8xbf16> to vector<8x8x8xbf16>
    %18 = tpu.concatenate %1, %3, %5, %7, %9, %11, %13, %15, %17 in 2 : vector<8x8x8xbf16>, vector<8x8x8xbf16>, vector<8x8x8xbf16>, vector<8x8x8xbf16>, vector<8x8x8xbf16>, vector<8x8x8xbf16>, vector<8x8x8xbf16>, vector<8x8x8xbf16>, vector<8x8x8xbf16> -> vector<8x8x72xbf16>
    %19 = vector.shape_cast %18 : vector<8x8x72xbf16> to vector<64x72xbf16>
    %c0_33 = arith.constant 0 : index
    %c0_34 = arith.constant 0 : index
    %20 = vector.load %arg2[%c0_33, %c0_34] : memref<72x16xbf16, #tpu.memory_space<vmem>>, vector<72x16xbf16>
    %cst = arith.constant dense<0.000000e+00> : vector<64x16xf32>
    %21 = tpu.matmul %19, %20, %cst {dimension_numbers = #tpu.dot_dimension_numbers<[1], [0], [0], [1], [0, 0, 1, 1], [], []>} : vector<64x72xbf16>, vector<72x16xbf16>, vector<64x16xf32> -> vector<64x16xf32>
    %c0_35 = arith.constant 0 : index
    %c0_36 = arith.constant 0 : index
    %22 = vector.load %arg3[%c0_35, %c0_36] : memref<1x16xf32, #tpu.memory_space<vmem>>, vector<1x16xf32>
    %23 = vector.broadcast %22 : vector<1x16xf32> to vector<64x16xf32>
    %24 = arith.addf %21, %23 : vector<64x16xf32>
    %cst_37 = arith.constant 0.000000e+00 : f32
    %25 = vector.broadcast %cst_37 : f32 to vector<64x16xf32>
    %26 = arith.maximumf %24, %25 : vector<64x16xf32>
    %27 = arith.truncf %26 : vector<64x16xf32> to vector<64x16xbf16>
    %c0_38 = arith.constant 0 : index
    %c0_39 = arith.constant 0 : index
    %c0_40 = arith.constant 0 : index
    %28 = vector.load %arg4[%c0_38, %c0_39, %c0_40] : memref<1x64x16xbf16, #tpu.memory_space<vmem>>, vector<1x64x16xbf16>
    %29 = vector.shape_cast %28 : vector<1x64x16xbf16> to vector<64x16xbf16>
    %30 = vector.shape_cast %27 : vector<64x16xbf16> to vector<1x64x16xbf16>
    tpu.vector_store %arg4[%c0_38, %c0_39, %c0_40], %30 {strides = array<i32>} : memref<1x64x16xbf16, #tpu.memory_space<vmem>>, vector<1x64x16xbf16>,
    return
  }
  func.func @transform_0(%arg0: i32) -> (i32, i32, i32, i32) {
    %c0_i32 = arith.constant 0 : i32
    %c0_i32_0 = arith.constant 0 : i32
    %c0_i32_1 = arith.constant 0 : i32
    %c0_i32_2 = arith.constant 0 : i32
    return %arg0, %c0_i32, %c0_i32_0, %c0_i32_1 : i32, i32, i32, i32
  }
  func.func @transform_1(%arg0: i32) -> (i32, i32) {
    %c0_i32 = arith.constant 0 : i32
    %c0_i32_0 = arith.constant 0 : i32
    %c0_i32_1 = arith.constant 0 : i32
    return %c0_i32, %c0_i32_0 : i32, i32
  }
  func.func @transform_2(%arg0: i32) -> (i32, i32) {
    %c0_i32 = arith.constant 0 : i32
    %c0_i32_0 = arith.constant 0 : i32
    %c0_i32_1 = arith.constant 0 : i32
    return %c0_i32, %c0_i32_0 : i32, i32
  }
  func.func @transform_3(%arg0: i32) -> (i32, i32, i32) {
    %c0_i32 = arith.constant 0 : i32
    %c0_i32_0 = arith.constant 0 : i32
    %c0_i32_1 = arith.constant 0 : i32
    return %arg0, %c0_i32, %c0_i32_0 : i32, i32, i32
  }
}

module attributes {stable_mosaic.version = 11 : i64} {
  func.func @_matmul_bias_single_k_kernel(%arg0: i32, %arg1: i32, %arg2: i32, %arg3: memref<32x32xbf16, #tpu.memory_space<vmem>>, %arg4: memref<32x64xbf16, #tpu.memory_space<vmem>>, %arg5: memref<1x64xf32, #tpu.memory_space<vmem>>, %arg6: memref<32x64xbf16, #tpu.memory_space<vmem>>) attributes {dimension_semantics = [#tpu.dimension_semantics<parallel>, #tpu.dimension_semantics<parallel>, #tpu.dimension_semantics<arbitrary>], iteration_bounds = array<i64: 1, 1, 1>, scalar_prefetch = 0 : i64, scratch_operands = 0 : i64, tpu.core_type = #tpu.core_type<tc>, window_params = [{transform_indices = @transform_0, window_bounds = array<i64: 32, 32>}, {transform_indices = @transform_1, window_bounds = array<i64: 32, 64>}, {transform_indices = @transform_2, window_bounds = array<i64: 1, 64>}, {transform_indices = @transform_3, window_bounds = array<i64: 32, 64>}]} {
    %c0 = arith.constant 0 : index
    %c0_0 = arith.constant 0 : index
    %0 = vector.load %arg3[%c0, %c0_0] : memref<32x32xbf16, #tpu.memory_space<vmem>>, vector<32x32xbf16>
    %c0_1 = arith.constant 0 : index
    %c0_2 = arith.constant 0 : index
    %1 = vector.load %arg4[%c0_1, %c0_2] : memref<32x64xbf16, #tpu.memory_space<vmem>>, vector<32x64xbf16>
    %cst = arith.constant dense<0.000000e+00> : vector<32x64xf32>
    %2 = tpu.matmul %0, %1, %cst {dimension_numbers = #tpu.dot_dimension_numbers<[1], [0], [0], [1], [0, 0, 1, 1], [], []>} : vector<32x32xbf16>, vector<32x64xbf16>, vector<32x64xf32> -> vector<32x64xf32>
    %c0_3 = arith.constant 0 : index
    %c0_4 = arith.constant 0 : index
    %3 = vector.load %arg5[%c0_3, %c0_4] : memref<1x64xf32, #tpu.memory_space<vmem>>, vector<1x64xf32>
    %4 = vector.broadcast %3 : vector<1x64xf32> to vector<32x64xf32>
    %5 = arith.addf %2, %4 : vector<32x64xf32>
    %6 = arith.truncf %5 : vector<32x64xf32> to vector<32x64xbf16>
    %c0_5 = arith.constant 0 : index
    %c0_6 = arith.constant 0 : index
    %7 = vector.load %arg6[%c0_5, %c0_6] : memref<32x64xbf16, #tpu.memory_space<vmem>>, vector<32x64xbf16>
    tpu.vector_store %arg6[%c0_5, %c0_6], %6 {strides = array<i32>} : memref<32x64xbf16, #tpu.memory_space<vmem>>, vector<32x64xbf16>,
    return
  }
  func.func @transform_0(%arg0: i32, %arg1: i32, %arg2: i32) -> (i32, i32) {
    %c0_i32 = arith.constant 0 : i32
    return %arg0, %arg2 : i32, i32
  }
  func.func @transform_1(%arg0: i32, %arg1: i32, %arg2: i32) -> (i32, i32) {
    %c0_i32 = arith.constant 0 : i32
    return %arg2, %arg1 : i32, i32
  }
  func.func @transform_2(%arg0: i32, %arg1: i32, %arg2: i32) -> (i32, i32) {
    %c0_i32 = arith.constant 0 : i32
    %c0_i32_0 = arith.constant 0 : i32
    return %c0_i32, %arg1 : i32, i32
  }
  func.func @transform_3(%arg0: i32, %arg1: i32, %arg2: i32) -> (i32, i32) {
    %c0_i32 = arith.constant 0 : i32
    return %arg0, %arg1 : i32, i32
  }
}

module attributes {stable_mosaic.version = 11 : i64} {
  func.func @_cross_attn_kernel(%arg0: i32, %arg1: memref<1x8x32xbf16, #tpu.memory_space<vmem>>, %arg2: memref<1x16x64xbf16, #tpu.memory_space<vmem>>, %arg3: memref<1x8x32xbf16, #tpu.memory_space<vmem>>) attributes {dimension_semantics = [#tpu.dimension_semantics<parallel>], iteration_bounds = array<i64: 2>, scalar_prefetch = 0 : i64, scratch_operands = 0 : i64, tpu.core_type = #tpu.core_type<tc>, window_params = [{transform_indices = @transform_0, window_bounds = array<i64: 1, 8, 32>}, {transform_indices = @transform_1, window_bounds = array<i64: 1, 16, 64>}, {transform_indices = @transform_2, window_bounds = array<i64: 1, 8, 32>}]} {
    %c0 = arith.constant 0 : index
    %c0_0 = arith.constant 0 : index
    %c0_1 = arith.constant 0 : index
    %0 = vector.load %arg1[%c0, %c0_0, %c0_1] : memref<1x8x32xbf16, #tpu.memory_space<vmem>>, vector<1x8x8xbf16>
    %1 = vector.shape_cast %0 : vector<1x8x8xbf16> to vector<8x8xbf16>
    %c0_2 = arith.constant 0 : index
    %c0_3 = arith.constant 0 : index
    %c0_4 = arith.constant 0 : index
    %2 = vector.load %arg2[%c0_2, %c0_3, %c0_4] : memref<1x16x64xbf16, #tpu.memory_space<vmem>>, vector<1x16x8xbf16>
    %3 = vector.shape_cast %2 : vector<1x16x8xbf16> to vector<16x8xbf16>
    %c0_5 = arith.constant 0 : index
    %c0_6 = arith.constant 0 : index
    %c32 = arith.constant 32 : index
    %4 = vector.load %arg2[%c0_5, %c0_6, %c32] : memref<1x16x64xbf16, #tpu.memory_space<vmem>>, vector<1x16x8xbf16>
    %5 = vector.shape_cast %4 : vector<1x16x8xbf16> to vector<16x8xbf16>
    %cst = arith.constant dense<0.000000e+00> : vector<8x16xf32>
    %6 = tpu.matmul %1, %3, %cst {dimension_numbers = #tpu.dot_dimension_numbers<[1], [1], [0], [0], [0, 0, 1, 0], [], []>} : vector<8x8xbf16>, vector<16x8xbf16>, vector<8x16xf32> -> vector<8x16xf32>
    %cst_7 = arith.constant 0.353553385 : f32
    %7 = vector.broadcast %cst_7 : f32 to vector<8x16xf32>
    %8 = arith.mulf %6, %7 : vector<8x16xf32>
    %cst_8 = arith.constant dense<0xFF800000> : vector<8xf32>
    %9 = vector.multi_reduction <maximumf>, %8, %cst_8 [1] : vector<8x16xf32> to vector<8xf32>
    %10 = vector.shape_cast %9 : vector<8xf32> to vector<8x1xf32>
    %11 = vector.broadcast %10 : vector<8x1xf32> to vector<8x16xf32>
    %12 = arith.subf %8, %11 : vector<8x16xf32>
    %13 = math.exp %12 : vector<8x16xf32>
    %cst_9 = arith.constant dense<0.000000e+00> : vector<8xf32>
    %14 = vector.multi_reduction <add>, %13, %cst_9 [1] : vector<8x16xf32> to vector<8xf32>
    %15 = vector.shape_cast %14 : vector<8xf32> to vector<8x1xf32>
    %16 = tpu.reciprocal %15 {approx = true} : vector<8x1xf32> -> vector<8x1xf32>
    %17 = vector.broadcast %16 : vector<8x1xf32> to vector<8x16xf32>
    %18 = arith.mulf %13, %17 : vector<8x16xf32>
    %19 = arith.truncf %18 : vector<8x16xf32> to vector<8x16xbf16>
    %cst_10 = arith.constant dense<0.000000e+00> : vector<8x8xf32>
    %20 = tpu.matmul %19, %5, %cst_10 {dimension_numbers = #tpu.dot_dimension_numbers<[1], [0], [0], [1], [0, 0, 1, 1], [], []>} : vector<8x16xbf16>, vector<16x8xbf16>, vector<8x8xf32> -> vector<8x8xf32>
    %21 = arith.truncf %20 : vector<8x8xf32> to vector<8x8xbf16>
    %c0_11 = arith.constant 0 : index
    %c0_12 = arith.constant 0 : index
    %c0_13 = arith.constant 0 : index
    %22 = vector.load %arg3[%c0_11, %c0_12, %c0_13] : memref<1x8x32xbf16, #tpu.memory_space<vmem>>, vector<1x8x8xbf16>
    %23 = vector.shape_cast %22 : vector<1x8x8xbf16> to vector<8x8xbf16>
    %24 = vector.shape_cast %21 : vector<8x8xbf16> to vector<1x8x8xbf16>
    tpu.vector_store %arg3[%c0_11, %c0_12, %c0_13], %24 {strides = array<i32>} : memref<1x8x32xbf16, #tpu.memory_space<vmem>>, vector<1x8x8xbf16>,
    %c0_14 = arith.constant 0 : index
    %c0_15 = arith.constant 0 : index
    %c8 = arith.constant 8 : index
    %25 = vector.load %arg1[%c0_14, %c0_15, %c8] : memref<1x8x32xbf16, #tpu.memory_space<vmem>>, vector<1x8x8xbf16>
    %26 = vector.shape_cast %25 : vector<1x8x8xbf16> to vector<8x8xbf16>
    %c0_16 = arith.constant 0 : index
    %c0_17 = arith.constant 0 : index
    %c8_18 = arith.constant 8 : index
    %27 = vector.load %arg2[%c0_16, %c0_17, %c8_18] : memref<1x16x64xbf16, #tpu.memory_space<vmem>>, vector<1x16x8xbf16>
    %28 = vector.shape_cast %27 : vector<1x16x8xbf16> to vector<16x8xbf16>
    %c0_19 = arith.constant 0 : index
    %c0_20 = arith.constant 0 : index
    %c40 = arith.constant 40 : index
    %29 = vector.load %arg2[%c0_19, %c0_20, %c40] : memref<1x16x64xbf16, #tpu.memory_space<vmem>>, vector<1x16x8xbf16>
    %30 = vector.shape_cast %29 : vector<1x16x8xbf16> to vector<16x8xbf16>
    %cst_21 = arith.constant dense<0.000000e+00> : vector<8x16xf32>
    %31 = tpu.matmul %26, %28, %cst_21 {dimension_numbers = #tpu.dot_dimension_numbers<[1], [1], [0], [0], [0, 0, 1, 0], [], []>} : vector<8x8xbf16>, vector<16x8xbf16>, vector<8x16xf32> -> vector<8x16xf32>
    %cst_22 = arith.constant 0.353553385 : f32
    %32 = vector.broadcast %cst_22 : f32 to vector<8x16xf32>
    %33 = arith.mulf %31, %32 : vector<8x16xf32>
    %cst_23 = arith.constant dense<0xFF800000> : vector<8xf32>
    %34 = vector.multi_reduction <maximumf>, %33, %cst_23 [1] : vector<8x16xf32> to vector<8xf32>
    %35 = vector.shape_cast %34 : vector<8xf32> to vector<8x1xf32>
    %36 = vector.broadcast %35 : vector<8x1xf32> to vector<8x16xf32>
    %37 = arith.subf %33, %36 : vector<8x16xf32>
    %38 = math.exp %37 : vector<8x16xf32>
    %cst_24 = arith.constant dense<0.000000e+00> : vector<8xf32>
    %39 = vector.multi_reduction <add>, %38, %cst_24 [1] : vector<8x16xf32> to vector<8xf32>
    %40 = vector.shape_cast %39 : vector<8xf32> to vector<8x1xf32>
    %41 = tpu.reciprocal %40 {approx = true} : vector<8x1xf32> -> vector<8x1xf32>
    %42 = vector.broadcast %41 : vector<8x1xf32> to vector<8x16xf32>
    %43 = arith.mulf %38, %42 : vector<8x16xf32>
    %44 = arith.truncf %43 : vector<8x16xf32> to vector<8x16xbf16>
    %cst_25 = arith.constant dense<0.000000e+00> : vector<8x8xf32>
    %45 = tpu.matmul %44, %30, %cst_25 {dimension_numbers = #tpu.dot_dimension_numbers<[1], [0], [0], [1], [0, 0, 1, 1], [], []>} : vector<8x16xbf16>, vector<16x8xbf16>, vector<8x8xf32> -> vector<8x8xf32>
    %46 = arith.truncf %45 : vector<8x8xf32> to vector<8x8xbf16>
    %c0_26 = arith.constant 0 : index
    %c0_27 = arith.constant 0 : index
    %c8_28 = arith.constant 8 : index
    %47 = vector.load %arg3[%c0_26, %c0_27, %c8_28] : memref<1x8x32xbf16, #tpu.memory_space<vmem>>, vector<1x8x8xbf16>
    %48 = vector.shape_cast %47 : vector<1x8x8xbf16> to vector<8x8xbf16>
    %49 = vector.shape_cast %46 : vector<8x8xbf16> to vector<1x8x8xbf16>
    tpu.vector_store %arg3[%c0_26, %c0_27, %c8_28], %49 {strides = array<i32>} : memref<1x8x32xbf16, #tpu.memory_space<vmem>>, vector<1x8x8xbf16>,
    %c0_29 = arith.constant 0 : index
    %c0_30 = arith.constant 0 : index
    %c16 = arith.constant 16 : index
    %50 = vector.load %arg1[%c0_29, %c0_30, %c16] : memref<1x8x32xbf16, #tpu.memory_space<vmem>>, vector<1x8x8xbf16>
    %51 = vector.shape_cast %50 : vector<1x8x8xbf16> to vector<8x8xbf16>
    %c0_31 = arith.constant 0 : index
    %c0_32 = arith.constant 0 : index
    %c16_33 = arith.constant 16 : index
    %52 = vector.load %arg2[%c0_31, %c0_32, %c16_33] : memref<1x16x64xbf16, #tpu.memory_space<vmem>>, vector<1x16x8xbf16>
    %53 = vector.shape_cast %52 : vector<1x16x8xbf16> to vector<16x8xbf16>
    %c0_34 = arith.constant 0 : index
    %c0_35 = arith.constant 0 : index
    %c48 = arith.constant 48 : index
    %54 = vector.load %arg2[%c0_34, %c0_35, %c48] : memref<1x16x64xbf16, #tpu.memory_space<vmem>>, vector<1x16x8xbf16>
    %55 = vector.shape_cast %54 : vector<1x16x8xbf16> to vector<16x8xbf16>
    %cst_36 = arith.constant dense<0.000000e+00> : vector<8x16xf32>
    %56 = tpu.matmul %51, %53, %cst_36 {dimension_numbers = #tpu.dot_dimension_numbers<[1], [1], [0], [0], [0, 0, 1, 0], [], []>} : vector<8x8xbf16>, vector<16x8xbf16>, vector<8x16xf32> -> vector<8x16xf32>
    %cst_37 = arith.constant 0.353553385 : f32
    %57 = vector.broadcast %cst_37 : f32 to vector<8x16xf32>
    %58 = arith.mulf %56, %57 : vector<8x16xf32>
    %cst_38 = arith.constant dense<0xFF800000> : vector<8xf32>
    %59 = vector.multi_reduction <maximumf>, %58, %cst_38 [1] : vector<8x16xf32> to vector<8xf32>
    %60 = vector.shape_cast %59 : vector<8xf32> to vector<8x1xf32>
    %61 = vector.broadcast %60 : vector<8x1xf32> to vector<8x16xf32>
    %62 = arith.subf %58, %61 : vector<8x16xf32>
    %63 = math.exp %62 : vector<8x16xf32>
    %cst_39 = arith.constant dense<0.000000e+00> : vector<8xf32>
    %64 = vector.multi_reduction <add>, %63, %cst_39 [1] : vector<8x16xf32> to vector<8xf32>
    %65 = vector.shape_cast %64 : vector<8xf32> to vector<8x1xf32>
    %66 = tpu.reciprocal %65 {approx = true} : vector<8x1xf32> -> vector<8x1xf32>
    %67 = vector.broadcast %66 : vector<8x1xf32> to vector<8x16xf32>
    %68 = arith.mulf %63, %67 : vector<8x16xf32>
    %69 = arith.truncf %68 : vector<8x16xf32> to vector<8x16xbf16>
    %cst_40 = arith.constant dense<0.000000e+00> : vector<8x8xf32>
    %70 = tpu.matmul %69, %55, %cst_40 {dimension_numbers = #tpu.dot_dimension_numbers<[1], [0], [0], [1], [0, 0, 1, 1], [], []>} : vector<8x16xbf16>, vector<16x8xbf16>, vector<8x8xf32> -> vector<8x8xf32>
    %71 = arith.truncf %70 : vector<8x8xf32> to vector<8x8xbf16>
    %c0_41 = arith.constant 0 : index
    %c0_42 = arith.constant 0 : index
    %c16_43 = arith.constant 16 : index
    %72 = vector.load %arg3[%c0_41, %c0_42, %c16_43] : memref<1x8x32xbf16, #tpu.memory_space<vmem>>, vector<1x8x8xbf16>
    %73 = vector.shape_cast %72 : vector<1x8x8xbf16> to vector<8x8xbf16>
    %74 = vector.shape_cast %71 : vector<8x8xbf16> to vector<1x8x8xbf16>
    tpu.vector_store %arg3[%c0_41, %c0_42, %c16_43], %74 {strides = array<i32>} : memref<1x8x32xbf16, #tpu.memory_space<vmem>>, vector<1x8x8xbf16>,
    %c0_44 = arith.constant 0 : index
    %c0_45 = arith.constant 0 : index
    %c24 = arith.constant 24 : index
    %75 = vector.load %arg1[%c0_44, %c0_45, %c24] : memref<1x8x32xbf16, #tpu.memory_space<vmem>>, vector<1x8x8xbf16>
    %76 = vector.shape_cast %75 : vector<1x8x8xbf16> to vector<8x8xbf16>
    %c0_46 = arith.constant 0 : index
    %c0_47 = arith.constant 0 : index
    %c24_48 = arith.constant 24 : index
    %77 = vector.load %arg2[%c0_46, %c0_47, %c24_48] : memref<1x16x64xbf16, #tpu.memory_space<vmem>>, vector<1x16x8xbf16>
    %78 = vector.shape_cast %77 : vector<1x16x8xbf16> to vector<16x8xbf16>
    %c0_49 = arith.constant 0 : index
    %c0_50 = arith.constant 0 : index
    %c56 = arith.constant 56 : index
    %79 = vector.load %arg2[%c0_49, %c0_50, %c56] : memref<1x16x64xbf16, #tpu.memory_space<vmem>>, vector<1x16x8xbf16>
    %80 = vector.shape_cast %79 : vector<1x16x8xbf16> to vector<16x8xbf16>
    %cst_51 = arith.constant dense<0.000000e+00> : vector<8x16xf32>
    %81 = tpu.matmul %76, %78, %cst_51 {dimension_numbers = #tpu.dot_dimension_numbers<[1], [1], [0], [0], [0, 0, 1, 0], [], []>} : vector<8x8xbf16>, vector<16x8xbf16>, vector<8x16xf32> -> vector<8x16xf32>
    %cst_52 = arith.constant 0.353553385 : f32
    %82 = vector.broadcast %cst_52 : f32 to vector<8x16xf32>
    %83 = arith.mulf %81, %82 : vector<8x16xf32>
    %cst_53 = arith.constant dense<0xFF800000> : vector<8xf32>
    %84 = vector.multi_reduction <maximumf>, %83, %cst_53 [1] : vector<8x16xf32> to vector<8xf32>
    %85 = vector.shape_cast %84 : vector<8xf32> to vector<8x1xf32>
    %86 = vector.broadcast %85 : vector<8x1xf32> to vector<8x16xf32>
    %87 = arith.subf %83, %86 : vector<8x16xf32>
    %88 = math.exp %87 : vector<8x16xf32>
    %cst_54 = arith.constant dense<0.000000e+00> : vector<8xf32>
    %89 = vector.multi_reduction <add>, %88, %cst_54 [1] : vector<8x16xf32> to vector<8xf32>
    %90 = vector.shape_cast %89 : vector<8xf32> to vector<8x1xf32>
    %91 = tpu.reciprocal %90 {approx = true} : vector<8x1xf32> -> vector<8x1xf32>
    %92 = vector.broadcast %91 : vector<8x1xf32> to vector<8x16xf32>
    %93 = arith.mulf %88, %92 : vector<8x16xf32>
    %94 = arith.truncf %93 : vector<8x16xf32> to vector<8x16xbf16>
    %cst_55 = arith.constant dense<0.000000e+00> : vector<8x8xf32>
    %95 = tpu.matmul %94, %80, %cst_55 {dimension_numbers = #tpu.dot_dimension_numbers<[1], [0], [0], [1], [0, 0, 1, 1], [], []>} : vector<8x16xbf16>, vector<16x8xbf16>, vector<8x8xf32> -> vector<8x8xf32>
    %96 = arith.truncf %95 : vector<8x8xf32> to vector<8x8xbf16>
    %c0_56 = arith.constant 0 : index
    %c0_57 = arith.constant 0 : index
    %c24_58 = arith.constant 24 : index
    %97 = vector.load %arg3[%c0_56, %c0_57, %c24_58] : memref<1x8x32xbf16, #tpu.memory_space<vmem>>, vector<1x8x8xbf16>
    %98 = vector.shape_cast %97 : vector<1x8x8xbf16> to vector<8x8xbf16>
    %99 = vector.shape_cast %96 : vector<8x8xbf16> to vector<1x8x8xbf16>
    tpu.vector_store %arg3[%c0_56, %c0_57, %c24_58], %99 {strides = array<i32>} : memref<1x8x32xbf16, #tpu.memory_space<vmem>>, vector<1x8x8xbf16>,
    return
  }
  func.func @transform_0(%arg0: i32) -> (i32, i32, i32) {
    %c0_i32 = arith.constant 0 : i32
    %c0_i32_0 = arith.constant 0 : i32
    %c0_i32_1 = arith.constant 0 : i32
    return %arg0, %c0_i32, %c0_i32_0 : i32, i32, i32
  }
  func.func @transform_1(%arg0: i32) -> (i32, i32, i32) {
    %c0_i32 = arith.constant 0 : i32
    %c0_i32_0 = arith.constant 0 : i32
    %c0_i32_1 = arith.constant 0 : i32
    return %arg0, %c0_i32, %c0_i32_0 : i32, i32, i32
  }
  func.func @transform_2(%arg0: i32) -> (i32, i32, i32) {
    %c0_i32 = arith.constant 0 : i32
    %c0_i32_0 = arith.constant 0 : i32
    %c0_i32_1 = arith.constant 0 : i32
    return %arg0, %c0_i32, %c0_i32_0 : i32, i32, i32
  }
}

module attributes {stable_mosaic.version = 11 : i64} {
  func.func @_matmul_bias_single_k_kernel(%arg0: i32, %arg1: i32, %arg2: i32, %arg3: memref<16x32xbf16, #tpu.memory_space<vmem>>, %arg4: memref<32x30xbf16, #tpu.memory_space<vmem>>, %arg5: memref<1x30xf32, #tpu.memory_space<vmem>>, %arg6: memref<16x30xf32, #tpu.memory_space<vmem>>) attributes {dimension_semantics = [#tpu.dimension_semantics<parallel>, #tpu.dimension_semantics<parallel>, #tpu.dimension_semantics<arbitrary>], iteration_bounds = array<i64: 1, 1, 1>, scalar_prefetch = 0 : i64, scratch_operands = 0 : i64, tpu.core_type = #tpu.core_type<tc>, window_params = [{transform_indices = @transform_0, window_bounds = array<i64: 16, 32>}, {transform_indices = @transform_1, window_bounds = array<i64: 32, 30>}, {transform_indices = @transform_2, window_bounds = array<i64: 1, 30>}, {transform_indices = @transform_3, window_bounds = array<i64: 16, 30>}]} {
    %c0 = arith.constant 0 : index
    %c0_0 = arith.constant 0 : index
    %0 = vector.load %arg3[%c0, %c0_0] : memref<16x32xbf16, #tpu.memory_space<vmem>>, vector<16x32xbf16>
    %c0_1 = arith.constant 0 : index
    %c0_2 = arith.constant 0 : index
    %1 = vector.load %arg4[%c0_1, %c0_2] : memref<32x30xbf16, #tpu.memory_space<vmem>>, vector<32x30xbf16>
    %cst = arith.constant dense<0.000000e+00> : vector<16x30xf32>
    %2 = tpu.matmul %0, %1, %cst {dimension_numbers = #tpu.dot_dimension_numbers<[1], [0], [0], [1], [0, 0, 1, 1], [], []>} : vector<16x32xbf16>, vector<32x30xbf16>, vector<16x30xf32> -> vector<16x30xf32>
    %c0_3 = arith.constant 0 : index
    %c0_4 = arith.constant 0 : index
    %3 = vector.load %arg5[%c0_3, %c0_4] : memref<1x30xf32, #tpu.memory_space<vmem>>, vector<1x30xf32>
    %4 = vector.broadcast %3 : vector<1x30xf32> to vector<16x30xf32>
    %5 = arith.addf %2, %4 : vector<16x30xf32>
    %c0_5 = arith.constant 0 : index
    %c0_6 = arith.constant 0 : index
    %6 = vector.load %arg6[%c0_5, %c0_6] : memref<16x30xf32, #tpu.memory_space<vmem>>, vector<16x30xf32>
    tpu.vector_store %arg6[%c0_5, %c0_6], %5 {strides = array<i32>} : memref<16x30xf32, #tpu.memory_space<vmem>>, vector<16x30xf32>,
    return
  }
  func.func @transform_0(%arg0: i32, %arg1: i32, %arg2: i32) -> (i32, i32) {
    %c0_i32 = arith.constant 0 : i32
    return %arg0, %arg2 : i32, i32
  }
  func.func @transform_1(%arg0: i32, %arg1: i32, %arg2: i32) -> (i32, i32) {
    %c0_i32 = arith.constant 0 : i32
    return %arg2, %arg1 : i32, i32
  }
  func.func @transform_2(%arg0: i32, %arg1: i32, %arg2: i32) -> (i32, i32) {
    %c0_i32 = arith.constant 0 : i32
    %c0_i32_0 = arith.constant 0 : i32
    return %c0_i32, %arg1 : i32, i32
  }
  func.func @transform_3(%arg0: i32, %arg1: i32, %arg2: i32) -> (i32, i32) {
    %c0_i32 = arith.constant 0 : i32
    return %arg0, %arg1 : i32, i32
  }
}

module attributes {stable_mosaic.version = 11 : i64} {
  func.func @_ffn_kernel(%arg0: i32, %arg1: memref<16x32xbf16, #tpu.memory_space<vmem>>, %arg2: memref<32x128xbf16, #tpu.memory_space<vmem>>, %arg3: memref<1x128xf32, #tpu.memory_space<vmem>>, %arg4: memref<128x32xbf16, #tpu.memory_space<vmem>>, %arg5: memref<1x32xf32, #tpu.memory_space<vmem>>, %arg6: memref<16x32xbf16, #tpu.memory_space<vmem>>) attributes {dimension_semantics = [#tpu.dimension_semantics<parallel>], iteration_bounds = array<i64: 1>, scalar_prefetch = 0 : i64, scratch_operands = 0 : i64, tpu.core_type = #tpu.core_type<tc>, window_params = [{transform_indices = @transform_0, window_bounds = array<i64: 16, 32>}, {pipeline_mode = #tpu.pipeline_mode<synchronous>, transform_indices = @transform_1, window_bounds = array<i64: 32, 128>}, {pipeline_mode = #tpu.pipeline_mode<synchronous>, transform_indices = @transform_2, window_bounds = array<i64: 1, 128>}, {pipeline_mode = #tpu.pipeline_mode<synchronous>, transform_indices = @transform_3, window_bounds = array<i64: 128, 32>}, {pipeline_mode = #tpu.pipeline_mode<synchronous>, transform_indices = @transform_4, window_bounds = array<i64: 1, 32>}, {transform_indices = @transform_5, window_bounds = array<i64: 16, 32>}]} {
    %c0 = arith.constant 0 : index
    %c0_0 = arith.constant 0 : index
    %0 = vector.load %arg1[%c0, %c0_0] : memref<16x32xbf16, #tpu.memory_space<vmem>>, vector<16x32xbf16>
    %c0_1 = arith.constant 0 : index
    %c0_2 = arith.constant 0 : index
    %1 = vector.load %arg2[%c0_1, %c0_2] : memref<32x128xbf16, #tpu.memory_space<vmem>>, vector<32x128xbf16>
    %cst = arith.constant dense<0.000000e+00> : vector<16x128xf32>
    %2 = tpu.matmul %0, %1, %cst {dimension_numbers = #tpu.dot_dimension_numbers<[1], [0], [0], [1], [0, 0, 1, 1], [], []>} : vector<16x32xbf16>, vector<32x128xbf16>, vector<16x128xf32> -> vector<16x128xf32>
    %c0_3 = arith.constant 0 : index
    %c0_4 = arith.constant 0 : index
    %3 = vector.load %arg3[%c0_3, %c0_4] : memref<1x128xf32, #tpu.memory_space<vmem>>, vector<1x128xf32>
    %4 = vector.broadcast %3 : vector<1x128xf32> to vector<16x128xf32>
    %5 = arith.addf %2, %4 : vector<16x128xf32>
    %cst_5 = arith.constant 0.000000e+00 : f32
    %6 = vector.broadcast %cst_5 : f32 to vector<16x128xf32>
    %7 = arith.maximumf %5, %6 : vector<16x128xf32>
    %8 = arith.truncf %7 : vector<16x128xf32> to vector<16x128xbf16>
    %c0_6 = arith.constant 0 : index
    %c0_7 = arith.constant 0 : index
    %9 = vector.load %arg4[%c0_6, %c0_7] : memref<128x32xbf16, #tpu.memory_space<vmem>>, vector<128x32xbf16>
    %cst_8 = arith.constant dense<0.000000e+00> : vector<16x32xf32>
    %10 = tpu.matmul %8, %9, %cst_8 {dimension_numbers = #tpu.dot_dimension_numbers<[1], [0], [0], [1], [0, 0, 1, 1], [], []>} : vector<16x128xbf16>, vector<128x32xbf16>, vector<16x32xf32> -> vector<16x32xf32>
    %c0_9 = arith.constant 0 : index
    %c0_10 = arith.constant 0 : index
    %11 = vector.load %arg5[%c0_9, %c0_10] : memref<1x32xf32, #tpu.memory_space<vmem>>, vector<1x32xf32>
    %12 = vector.broadcast %11 : vector<1x32xf32> to vector<16x32xf32>
    %13 = arith.addf %10, %12 : vector<16x32xf32>
    %14 = arith.truncf %13 : vector<16x32xf32> to vector<16x32xbf16>
    %c0_11 = arith.constant 0 : index
    %c0_12 = arith.constant 0 : index
    %15 = vector.load %arg6[%c0_11, %c0_12] : memref<16x32xbf16, #tpu.memory_space<vmem>>, vector<16x32xbf16>
    tpu.vector_store %arg6[%c0_11, %c0_12], %14 {strides = array<i32>} : memref<16x32xbf16, #tpu.memory_space<vmem>>, vector<16x32xbf16>,
    return
  }
  func.func @transform_0(%arg0: i32) -> (i32, i32) {
    %c0_i32 = arith.constant 0 : i32
    %c0_i32_0 = arith.constant 0 : i32
    return %arg0, %c0_i32 : i32, i32
  }
  func.func @transform_1(%arg0: i32) -> (i32, i32) {
    %c0_i32 = arith.constant 0 : i32
    %c0_i32_0 = arith.constant 0 : i32
    %c0_i32_1 = arith.constant 0 : i32
    return %c0_i32, %c0_i32_0 : i32, i32
  }
  func.func @transform_2(%arg0: i32) -> (i32, i32) {
    %c0_i32 = arith.constant 0 : i32
    %c0_i32_0 = arith.constant 0 : i32
    %c0_i32_1 = arith.constant 0 : i32
    return %c0_i32, %c0_i32_0 : i32, i32
  }
  func.func @transform_3(%arg0: i32) -> (i32, i32) {
    %c0_i32 = arith.constant 0 : i32
    %c0_i32_0 = arith.constant 0 : i32
    %c0_i32_1 = arith.constant 0 : i32
    return %c0_i32, %c0_i32_0 : i32, i32
  }
  func.func @transform_4(%arg0: i32) -> (i32, i32) {
    %c0_i32 = arith.constant 0 : i32
    %c0_i32_0 = arith.constant 0 : i32
    %c0_i32_1 = arith.constant 0 : i32
    return %c0_i32, %c0_i32_0 : i32, i32
  }
  func.func @transform_5(%arg0: i32) -> (i32, i32) {
    %c0_i32 = arith.constant 0 : i32
    %c0_i32_0 = arith.constant 0 : i32
    return %arg0, %c0_i32 : i32, i32
  }
}

</mosaic_0001>

<llo_original>
// kernel: image_captioning_forward.29
$region0: #{image_captioning_forward.29}
  #allocation0 [shape = 'u32[]', space=smem, size = 0x4, offset = 0x4, fixed_abs, tag = 'smem constant byte address 0x4 - core index']
  #allocation1 [shape = 'u32[144,128]{1,0:T(1,128)}', space=vmem, size = 0x12000, scoped, tag = 'internal scratch']
  %s0 = inlined_call_operand.vmem [shape: bf16[16,32], index: 0, kind: input, shape index: {}]
  %s1 = inlined_call_operand.vmem [shape: bf16[32,96], index: 1, kind: input, shape index: {}]
  %s2 = inlined_call_operand.vmem [shape: f32[1,96], index: 2, kind: input, shape index: {}]
  %s3 = inlined_call_operand.vmem [shape: bf16[16,96], index: 3, kind: output, shape index: {}]
  %s4 = sld [smem:[#allocation0]]
  $region22: #{image_captioning_forward.29} parent=0
    _
  %s6 = ssub.s32 1, %s4
  %s7 = scalar_select 0, %s6, %s4
  // Predicated region
  $region2: #{image_captioning_forward.29} parent=0 // pred_check
    _
  $region3: #{image_captioning_forward.29} parent=0 // pred_check_branch
    %9 = sbr.rel (0) target = $region5
  $region4: #{image_captioning_forward.29} parent=0 // pred_region
    _
  $region5: #{image_captioning_forward.29} parent=0 // pred_fallthru
    _
  // Predicated region
  $region6: #{image_captioning_forward.29} parent=0 // pred_check
    _
  $region7: #{image_captioning_forward.29} parent=0 // pred_check_branch
    %11 = sbr.rel (0) target = $region9
  $region8: #{image_captioning_forward.29} parent=0 // pred_region
    _
  $region9: #{image_captioning_forward.29} parent=0 // pred_fallthru
    _
  // Predicated region
  $region10: #{image_captioning_forward.29} parent=0 // pred_check
    _
  $region11: #{image_captioning_forward.29} parent=0 // pred_check_branch
    %13 = sbr.rel (0) target = $region13
  $region12: #{image_captioning_forward.29} parent=0 // pred_region
    _
  $region13: #{image_captioning_forward.29} parent=0 // pred_fallthru
    _
  %v15 = vld [vmem:[%s0] sm:$0xf]
  %v16 = vld [vmem:[%s0 + $0x4] sm:$0xf]
  %v17 = vld [vmem:[%s1] sm:$0xf]
  %v18 = vld [vmem:[%s1 + $0x4] sm:$0xf]
  %v19 = vld [vmem:[%s1 + $0x8] sm:$0xf]
  %v20 = vld [vmem:[%s1 + $0xc] sm:$0xf]
  %v21 = vld [vmem:[%s2] sm:$0x1]
  %v23 = vlaneseq
  %v24 = vshrl.u32 %v23, 7
  %v25 = vsub.s32 0, %v24
  %v26 = vrot.slane %v21, %v25
  %v30 = vunpack.c.l.b16 %v15
  %v31 = vunpack.c.l.b16 %v16
  %v32 = vpack.c.b16 %v31, %v30
  %v37 = vunpack.c.l.b16 %v17
  %v38 = vunpack.c.l.b16 %v18
  %v39 = vunpack.c.l.b16 %v19
  %v40 = vunpack.c.l.b16 %v20
  %v41 = vpack.c.b16 %v38, %v37
  %v42 = vpack.c.b16 %v40, %v39
  %vm45 = vcmask 261120
  %v47 = vsel %vm45, %v32, 0
  %49 = vmatprep.subr.bf16.mxu0 0
  %50 = vmatpush1.bf16.msra.mxu0 %v41
  %51 = vmatprep.subr.bf16.mxu0 0
  %52 = vmatpush1.bf16.msra.mxu0 %v42
  %53 = vmatprep.subr.bf16.mxu0 0
  %54 = vmatpush1.bf16.msra.mxu0 0
  %55 = vmatprep.subr.bf16.mxu0 0
  %56 = vmatpush1.bf16.msra.mxu0 0
  %57 = vmatprep.subr.bf16.mxu0 0
  %58 = vmatpush1.bf16.msra.mxu0 0
  %59 = vmatprep.subr.bf16.mxu0 0
  %60 = vmatpush1.bf16.msra.mxu0 0
  %61 = vmatprep.subr.bf16.mxu0 0
  %62 = vmatpush1.bf16.msra.mxu0 0
  %63 = vmatprep.subr.bf16.mxu0 0
  %64 = vmatpush1.bf16.msra.mxu0 0
  %65 = vmatprep.subr.bf16.mxu0 0
  %66 = vmatpush1.bf16.msra.mxu0 0
  %67 = vmatprep.subr.bf16.mxu0 0
  %68 = vmatpush1.bf16.msra.mxu0 0
  %69 = vmatprep.subr.bf16.mxu0 0
  %70 = vmatpush1.bf16.msra.mxu0 0
  %71 = vmatprep.subr.bf16.mxu0 0
  %72 = vmatpush1.bf16.msra.mxu0 0
  %73 = vmatprep.subr.bf16.mxu0 0
  %74 = vmatpush1.bf16.msra.mxu0 0
  %75 = vmatprep.subr.bf16.mxu0 0
  %76 = vmatpush1.bf16.msra.mxu0 0
  %77 = vmatprep.subr.bf16.mxu0 0
  %78 = vmatpush1.bf16.msra.mxu0 0
  %79 = vmatprep.subr.bf16.mxu0 0
  %80 = vmatpush1.bf16.msra.mxu0 0
  %81 = vmatprep.mubr.bf16.mxu0 0
  %82 = vmatmul.mubr.bf16.gmra.mrb[0].mxu0 %v47
  %v83 = vpop.f32.mrb[0].mxu0
  %v84 = vadd.f32 %v26, %v83
  %v85 = vpop.f32.mrb[0].mxu0
  %v86 = vpop.f32.mrb[0].mxu0
  %v87 = vadd.f32 %v26, %v86
  %v88 = vpop.f32.mrb[0].mxu0
  %89 = vdwg.mxu0
  %v90 = vpack.c.bf16 %v87, %v84
  %v92 = vunpack.c.l.b16 %v90
  %v93 = vunpack.c.h.b16 %v90
  %v94 = vpack.c.b16 %v92, %v92
  %v95 = vpack.c.b16 %v93, %v93
  %vm98 = vcmask 781312
  %99 = vst.msk [vmem:[%s3] sm:$0xf] %vm98, %v94
  %100 = vst.msk [vmem:[%s3 + $0x4] sm:$0xf] %vm98, %v95
  // Predicated region
  $region14: #{image_captioning_forward.29} parent=0 // pred_check
    _
  $region15: #{image_captioning_forward.29} parent=0 // pred_check_branch
    %102 = sbr.rel (0) target = $region17
  $region16: #{image_captioning_forward.29} parent=0 // pred_region
    _
  $region17: #{image_captioning_forward.29} parent=0 // pred_fallthru
    _
  // Predicated region
  $region18: #{image_captioning_forward.29} parent=0 // pred_check
    _
  $region19: #{image_captioning_forward.29} parent=0 // pred_check_branch
    %104 = sbr.rel (0) target = $region21
  $region20: #{image_captioning_forward.29} parent=0 // pred_region
    _
  $region21: #{image_captioning_forward.29} parent=0 // pred_fallthru
    _

// kernel: image_captioning_forward.31
$region0: #{image_captioning_forward.31}
  #allocation0 [shape = 'u32[]', space=smem, size = 0x4, offset = 0x4, fixed_abs, tag = 'smem constant byte address 0x4 - core index']
  #allocation1 [shape = 'u32[144,128]{1,0:T(1,128)}', space=vmem, size = 0x12000, scoped, tag = 'internal scratch']
  %s0 = inlined_call_operand.vmem [shape: bf16[16,32], index: 0, kind: input, shape index: {}]
  %s1 = inlined_call_operand.vmem [shape: bf16[32,32], index: 1, kind: input, shape index: {}]
  %s2 = inlined_call_operand.vmem [shape: f32[1,32], index: 2, kind: input, shape index: {}]
  %s3 = inlined_call_operand.vmem [shape: bf16[16,32], index: 3, kind: output, shape index: {}]
  %s4 = sld [smem:[#allocation0]]
  $region22: #{image_captioning_forward.31} parent=0
    _
  %s6 = ssub.s32 1, %s4
  %s7 = scalar_select 0, %s6, %s4
  // Predicated region
  $region2: #{image_captioning_forward.31} parent=0 // pred_check
    _
  $region3: #{image_captioning_forward.31} parent=0 // pred_check_branch
    %9 = sbr.rel (0) target = $region5
  $region4: #{image_captioning_forward.31} parent=0 // pred_region
    _
  $region5: #{image_captioning_forward.31} parent=0 // pred_fallthru
    _
  // Predicated region
  $region6: #{image_captioning_forward.31} parent=0 // pred_check
    _
  $region7: #{image_captioning_forward.31} parent=0 // pred_check_branch
    %11 = sbr.rel (0) target = $region9
  $region8: #{image_captioning_forward.31} parent=0 // pred_region
    _
  $region9: #{image_captioning_forward.31} parent=0 // pred_fallthru
    _
  // Predicated region
  $region10: #{image_captioning_forward.31} parent=0 // pred_check
    _
  $region11: #{image_captioning_forward.31} parent=0 // pred_check_branch
    %13 = sbr.rel (0) target = $region13
  $region12: #{image_captioning_forward.31} parent=0 // pred_region
    _
  $region13: #{image_captioning_forward.31} parent=0 // pred_fallthru
    _
  %v15 = vld [vmem:[%s0] sm:$0xf]
  %v16 = vld [vmem:[%s0 + $0x4] sm:$0xf]
  %v17 = vld [vmem:[%s1] sm:$0xf]
  %v18 = vld [vmem:[%s1 + $0x4] sm:$0xf]
  %v19 = vld [vmem:[%s1 + $0x8] sm:$0xf]
  %v20 = vld [vmem:[%s1 + $0xc] sm:$0xf]
  %v21 = vld [vmem:[%s2] sm:$0x1]
  %v23 = vlaneseq
  %v24 = vshrl.u32 %v23, 7
  %v25 = vsub.s32 0, %v24
  %v26 = vrot.slane %v21, %v25
  %v30 = vunpack.c.l.b16 %v15
  %v31 = vunpack.c.l.b16 %v16
  %v32 = vpack.c.b16 %v31, %v30
  %v37 = vunpack.c.l.b16 %v17
  %v38 = vunpack.c.l.b16 %v18
  %v39 = vunpack.c.l.b16 %v19
  %v40 = vunpack.c.l.b16 %v20
  %v41 = vpack.c.b16 %v38, %v37
  %v42 = vpack.c.b16 %v40, %v39
  %vm45 = vcmask 261120
  %v47 = vsel %vm45, %v32, 0
  %49 = vmatprep.subr.bf16.mxu0 0
  %50 = vmatpush1.bf16.msra.mxu0 %v41
  %51 = vmatprep.subr.bf16.mxu0 0
  %52 = vmatpush1.bf16.msra.mxu0 %v42
  %53 = vmatprep.subr.bf16.mxu0 0
  %54 = vmatpush1.bf16.msra.mxu0 0
  %55 = vmatprep.subr.bf16.mxu0 0
  %56 = vmatpush1.bf16.msra.mxu0 0
  %57 = vmatprep.subr.bf16.mxu0 0
  %58 = vmatpush1.bf16.msra.mxu0 0
  %59 = vmatprep.subr.bf16.mxu0 0
  %60 = vmatpush1.bf16.msra.mxu0 0
  %61 = vmatprep.subr.bf16.mxu0 0
  %62 = vmatpush1.bf16.msra.mxu0 0
  %63 = vmatprep.subr.bf16.mxu0 0
  %64 = vmatpush1.bf16.msra.mxu0 0
  %65 = vmatprep.subr.bf16.mxu0 0
  %66 = vmatpush1.bf16.msra.mxu0 0
  %67 = vmatprep.subr.bf16.mxu0 0
  %68 = vmatpush1.bf16.msra.mxu0 0
  %69 = vmatprep.subr.bf16.mxu0 0
  %70 = vmatpush1.bf16.msra.mxu0 0
  %71 = vmatprep.subr.bf16.mxu0 0
  %72 = vmatpush1.bf16.msra.mxu0 0
  %73 = vmatprep.subr.bf16.mxu0 0
  %74 = vmatpush1.bf16.msra.mxu0 0
  %75 = vmatprep.subr.bf16.mxu0 0
  %76 = vmatpush1.bf16.msra.mxu0 0
  %77 = vmatprep.subr.bf16.mxu0 0
  %78 = vmatpush1.bf16.msra.mxu0 0
  %79 = vmatprep.subr.bf16.mxu0 0
  %80 = vmatpush1.bf16.msra.mxu0 0
  %81 = vmatprep.mubr.bf16.mxu0 0
  %82 = vmatmul.mubr.bf16.gmra.mrb[0].mxu0 %v47
  %v83 = vpop.f32.mrb[0].mxu0
  %v84 = vadd.f32 %v26, %v83
  %v85 = vpop.f32.mrb[0].mxu0
  %v86 = vpop.f32.mrb[0].mxu0
  %v87 = vadd.f32 %v26, %v86
  %v88 = vpop.f32.mrb[0].mxu0
  %89 = vdwg.mxu0
  %v90 = vpack.c.bf16 %v87, %v84
  %v92 = vunpack.c.l.b16 %v90
  %v93 = vunpack.c.h.b16 %v90
  %v94 = vpack.c.b16 %v92, %v92
  %v95 = vpack.c.b16 %v93, %v93
  %vm98 = vcmask 257024
  %99 = vst.msk [vmem:[%s3] sm:$0xf] %vm98, %v94
  %100 = vst.msk [vmem:[%s3 + $0x4] sm:$0xf] %vm98, %v95
  // Predicated region
  $region14: #{image_captioning_forward.31} parent=0 // pred_check
    _
  $region15: #{image_captioning_forward.31} parent=0 // pred_check_branch
    %102 = sbr.rel (0) target = $region17
  $region16: #{image_captioning_forward.31} parent=0 // pred_region
    _
  $region17: #{image_captioning_forward.31} parent=0 // pred_fallthru
    _
  // Predicated region
  $region18: #{image_captioning_forward.31} parent=0 // pred_check
    _
  $region19: #{image_captioning_forward.31} parent=0 // pred_check_branch
    %104 = sbr.rel (0) target = $region21
  $region20: #{image_captioning_forward.31} parent=0 // pred_region
    _
  $region21: #{image_captioning_forward.31} parent=0 // pred_fallthru
    _

// kernel: image_captioning_forward.32
$region0: #{image_captioning_forward.32}
  #allocation0 [shape = 'u32[]', space=smem, size = 0x4, offset = 0x4, fixed_abs, tag = 'smem constant byte address 0x4 - core index']
  #allocation1 [shape = 'u32[144,128]{1,0:T(1,128)}', space=vmem, size = 0x12000, scoped, tag = 'internal scratch']
  %s0 = inlined_call_operand.vmem [shape: bf16[16,32], index: 0, kind: input, shape index: {}]
  %s1 = inlined_call_operand.vmem [shape: bf16[16,32], index: 1, kind: input, shape index: {}]
  %s2 = inlined_call_operand.vmem [shape: f32[1,32], index: 2, kind: input, shape index: {}]
  %s3 = inlined_call_operand.vmem [shape: f32[1,32], index: 3, kind: input, shape index: {}]
  %s4 = inlined_call_operand.vmem [shape: bf16[16,32], index: 4, kind: output, shape index: {}]
  %s5 = sld [smem:[#allocation0]]
  $region26: #{image_captioning_forward.32} parent=0
    _
  %s7 = ssub.s32 1, %s5
  %s8 = scalar_select 0, %s7, %s5
  // Predicated region
  $region2: #{image_captioning_forward.32} parent=0 // pred_check
    _
  $region3: #{image_captioning_forward.32} parent=0 // pred_check_branch
    %10 = sbr.rel (0) target = $region5
  $region4: #{image_captioning_forward.32} parent=0 // pred_region
    _
  $region5: #{image_captioning_forward.32} parent=0 // pred_fallthru
    _
  // Predicated region
  $region6: #{image_captioning_forward.32} parent=0 // pred_check
    _
  $region7: #{image_captioning_forward.32} parent=0 // pred_check_branch
    %12 = sbr.rel (0) target = $region9
  $region8: #{image_captioning_forward.32} parent=0 // pred_region
    _
  $region9: #{image_captioning_forward.32} parent=0 // pred_fallthru
    _
  // Predicated region
  $region10: #{image_captioning_forward.32} parent=0 // pred_check
    _
  $region11: #{image_captioning_forward.32} parent=0 // pred_check_branch
    %14 = sbr.rel (0) target = $region13
  $region12: #{image_captioning_forward.32} parent=0 // pred_region
    _
  $region13: #{image_captioning_forward.32} parent=0 // pred_fallthru
    _
  // Predicated region
  $region14: #{image_captioning_forward.32} parent=0 // pred_check
    _
  $region15: #{image_captioning_forward.32} parent=0 // pred_check_branch
    %16 = sbr.rel (0) target = $region17
  $region16: #{image_captioning_forward.32} parent=0 // pred_region
    _
  $region17: #{image_captioning_forward.32} parent=0 // pred_fallthru
    _
  %v17 = vld [vmem:[%s0] sm:$0xf]
  %v18 = vld [vmem:[%s0 + $0x4] sm:$0xf]
  %v19 = vunpack.c.l.bf16 %v17
  %v20 = vunpack.c.l.bf16 %v18
  %v21 = vld [vmem:[%s1] sm:$0xf]
  %v22 = vld [vmem:[%s1 + $0x4] sm:$0xf]
  %v23 = vunpack.c.l.bf16 %v21
  %v24 = vunpack.c.l.bf16 %v22
  %v25 = vadd.f32 %v19, %v23
  %v26 = vadd.f32 %v20, %v24
  %vm27 = vcmask 261120
  %v28 = vsel %vm27, %v25, 0.0
  %29 = vadd.xlane.f32.xlu0 %v28
  %v30 = vpop.xlane.xlu0 %29
  %v31 = vsel %vm27, %v26, 0.0
  %32 = vadd.xlane.f32.xlu0 %v31
  %v33 = vpop.xlane.xlu0 %32
  %v34 = vrcp.pop 32.0
  %v35 = vmul.f32 %v30, %v34
  %v36 = vmul.f32 %v33, %v34
  %v37 = vsub.f32 %v25, %v35
  %v38 = vsub.f32 %v26, %v36
  %v39 = vmul.f32 %v37, %v37
  %v40 = vmul.f32 %v38, %v38
  %v41 = vsel %vm27, %v39, 0.0
  %42 = vadd.xlane.f32.xlu0 %v41
  %v43 = vpop.xlane.xlu0 %42
  %v44 = vsel %vm27, %v40, 0.0
  %45 = vadd.xlane.f32.xlu0 %v44
  %v46 = vpop.xlane.xlu0 %45
  %v47 = vmul.f32 %v43, %v34
  %v48 = vmul.f32 %v46, %v34
  %v49 = vadd.f32 %v47, 1e-05
  %v50 = vadd.f32 %v48, 1e-05
  %v51 = vrsqrt.pop %v49
  %v52 = vrsqrt.pop %v50
  %v53 = vmul.f32 %v37, %v51
  %v54 = vmul.f32 %v38, %v52
  %v55 = vld [vmem:[%s2] sm:$0x1]
  %v57 = vlaneseq
  %v58 = vshrl.u32 %v57, 7
  %v59 = vsub.s32 0, %v58
  %v60 = vrot.slane %v55, %v59
  %v62 = vmul.f32 %v53, %v60
  %v63 = vmul.f32 %v54, %v60
  %v64 = vld [vmem:[%s3] sm:$0x1]
  %v66 = vlaneseq
  %v67 = vshrl.u32 %v66, 7
  %v68 = vsub.s32 0, %v67
  %v69 = vrot.slane %v64, %v68
  %v71 = vadd.f32 %v62, %v69
  %v72 = vadd.f32 %v63, %v69
  %v73 = vpack.c.bf16 %v72, %v71
  %v75 = vunpack.c.l.b16 %v73
  %v76 = vunpack.c.h.b16 %v73
  %v77 = vpack.c.b16 %v75, %v75
  %v78 = vpack.c.b16 %v76, %v76
  %vm81 = vcmask 257024
  %82 = vst.msk [vmem:[%s4] sm:$0xf] %vm81, %v77
  %83 = vst.msk [vmem:[%s4 + $0x4] sm:$0xf] %vm81, %v78
  // Predicated region
  $region18: #{image_captioning_forward.32} parent=0 // pred_check
    _
  $region19: #{image_captioning_forward.32} parent=0 // pred_check_branch
    %85 = sbr.rel (0) target = $region21
  $region20: #{image_captioning_forward.32} parent=0 // pred_region
    _
  $region21: #{image_captioning_forward.32} parent=0 // pred_fallthru
    _
  // Predicated region
  $region22: #{image_captioning_forward.32} parent=0 // pred_check
    _
  $region23: #{image_captioning_forward.32} parent=0 // pred_check_branch
    %87 = sbr.rel (0) target = $region25
  $region24: #{image_captioning_forward.32} parent=0 // pred_region
    _
  $region25: #{image_captioning_forward.32} parent=0 // pred_fallthru
    _

// kernel: image_captioning_forward.30
$region0: #{image_captioning_forward.30}
  #allocation0 [shape = 'u32[]', space=smem, size = 0x4, offset = 0x4, fixed_abs, tag = 'smem constant byte address 0x4 - core index']
  #allocation1 [shape = 'u32[144,128]{1,0:T(1,128)}', space=vmem, size = 0x12000, scoped, tag = 'internal scratch']
  %s0 = inlined_call_operand.vmem [shape: bf16[2,8,96], index: 0, kind: input, shape index: {}]
  %s1 = inlined_call_operand.vmem [shape: bf16[2,8,32], index: 1, kind: output, shape index: {}]
  %s2 = sld [smem:[#allocation0]]
  $region37: #{image_captioning_forward.30} parent=0
    _
  %s4 = ssub.s32 1, %s2
  %s5 = scalar_select 0, %s4, %s2
  loop: start=0, step=1, limit=4
  $region2: #{image_captioning_forward.30} parent=0 // loop_pre_header
    _
  $region3: #{image_captioning_forward.30} parent=0 // loop_header
    %s7 = sphi 0, %s11
    %p8 = scmp.ge.s32.totalorder %s7, 4
    %s17 = sphi 0, %s19
    %s20 = sphi 0, %s17
    %s21 = sphi 0, %s20
    %s37 = sphi 0, %s21
    %s43 = sphi 0, %s45
    %s46 = sphi 0, %s43
    %s47 = sphi 0, %s46
    %s63 = sphi 0, %s47
  $region4: #{image_captioning_forward.30} parent=0 // loop_header_branch
    %10 = sbr.rel (%p8) target = $region8
  $region5: #{image_captioning_forward.30} parent=0 // loop_body
    %s12 = ssub.s32 %s7, 1
    %s13 = ssub.s32 %s7, 2
    %s14 = sadd.s32 %s7, 1
    %s15 = ssub.s32 %s7, %s14
    %p16 = scmp.eq.s32.totalorder %s15, 0
    %s18 = sadd.s32 %s17, 1
    %s19 = scalar_select %p16, %s17, %s18
    %p22 = pneg %p16
    %p23 = scmp.eq.s32.totalorder %s7, 1
    %p24 = por %p22, %p23
    %p25 = scmp.ne.s32.totalorder %s17, %s20
    %p26 = scmp.eq.s32.totalorder %s7, 0
    %p27 = por %p25, %p26
    %p28 = scmp.ne.s32.totalorder %s17, %s20
    %p29 = scmp.eq.s32.totalorder %s12, 1
    %p30 = por %p28, %p29
    %p31 = scmp.ne.s32.totalorder %s20, %s21
    %p32 = scmp.eq.s32.totalorder %s12, 0
    %p33 = por %p31, %p32
    %p34 = scmp.ne.s32.totalorder %s20, %s21
    %p35 = scmp.eq.s32.totalorder %s13, 1
    %p36 = por %p34, %p35
    %p38 = scmp.ne.s32.totalorder %s21, %s37
    %p39 = scmp.eq.s32.totalorder %s13, 0
    %p40 = por %p38, %p39
    %s41 = ssub.s32 %s7, %s14
    %p42 = scmp.eq.s32.totalorder %s41, 0
    %s44 = sadd.s32 %s43, 1
    %s45 = scalar_select %p42, %s43, %s44
    %p48 = pneg %p42
    %p49 = scmp.eq.s32.totalorder %s7, 1
    %p50 = por %p48, %p49
    %p51 = scmp.ne.s32.totalorder %s43, %s46
    %p52 = scmp.eq.s32.totalorder %s7, 0
    %p53 = por %p51, %p52
    %p54 = scmp.ne.s32.totalorder %s43, %s46
    %p55 = scmp.eq.s32.totalorder %s12, 1
    %p56 = por %p54, %p55
    %p57 = scmp.ne.s32.totalorder %s46, %s47
    %p58 = scmp.eq.s32.totalorder %s12, 0
    %p59 = por %p57, %p58
    %p60 = scmp.ne.s32.totalorder %s46, %s47
    %p61 = scmp.eq.s32.totalorder %s13, 1
    %p62 = por %p60, %p61
    %p64 = scmp.ne.s32.totalorder %s47, %s63
    %p65 = scmp.eq.s32.totalorder %s13, 0
    %p66 = por %p64, %p65
    %p67 = scmp.le.s32.totalorder 1, %s7
    %p68 = scmp.lt.s32.totalorder %s7, 3
    %p69 = pnand %p67, %p68
    %p70 = pneg %p69
    // Predicated region
    $region9: #{image_captioning_forward.30} parent=5 // pred_check
      _
    $region10: #{image_captioning_forward.30} parent=5 // pred_check_branch
      %72 = sbr.rel (%p69) target = $region12
    $region11: #{image_captioning_forward.30} parent=5 // pred_region
      %s73 = ssub.s32 %s7, 1
    $region12: #{image_captioning_forward.30} parent=5 // pred_fallthru
      _
    %p74 = scmp.lt.s32.totalorder %s7, 2
    // Predicated region
    $region13: #{image_captioning_forward.30} parent=5 // pred_check
      %p75 = pneg %p74
    $region14: #{image_captioning_forward.30} parent=5 // pred_check_branch
      %77 = sbr.rel (%p75) target = $region16
    $region15: #{image_captioning_forward.30} parent=5 // pred_region
      // Predicated region
      $region17: #{image_captioning_forward.30} parent=15 // pred_check
        %p78 = pneg %p27
      $region18: #{image_captioning_forward.30} parent=15 // pred_check_branch
        %80 = sbr.rel (%p78) target = $region20
      $region19: #{image_captioning_forward.30} parent=15 // pred_region
        %p81 = scmp.lt.s32.totalorder %s7, 1
        %s82 = scalar_select %p81, %s7, 1
        %s83 = smul.addr %s82, 4
        %s84 = scalar_lea.vmem %s0, %s83
      $region20: #{image_captioning_forward.30} parent=15 // pred_fallthru
        _
    $region16: #{image_captioning_forward.30} parent=5 // pred_fallthru
      _
    %p85 = scmp.le.s32.totalorder 1, %s7
    %p86 = scmp.lt.s32.totalorder %s7, 3
    %p87 = pnand %p85, %p86
    %p88 = pneg %p87
    // Predicated region
    $region21: #{image_captioning_forward.30} parent=5 // pred_check
      _
    $region22: #{image_captioning_forward.30} parent=5 // pred_check_branch
      %90 = sbr.rel (%p87) target = $region24
    $region23: #{image_captioning_forward.30} parent=5 // pred_region
      %s91 = ssub.s32 %s7, 1
      %p92 = scmp.lt.s32.totalorder %s12, 1
      %s93 = scalar_select %p92, %s12, 1
      %s94 = smul.addr %s93, 4
      %s95 = scalar_lea.vmem %s0, %s94
      %p96 = pneg %p33
      %p97 = pneg %p30
      %p98 = pneg %p59
      %p99 = pneg %p56
      %p100 = scmp.lt.s32.totalorder %s12, 1
      %s101 = scalar_select %p100, %s12, 1
      %s102 = smul.addr %s101, 4
      %s103 = scalar_lea.vmem %s1, %s102
      %p104 = scmp.lt.s32.totalorder %s12, 1
      %s105 = scalar_select %p104, %s12, 1
      %s106 = smul.addr %s105, 4
      %s107 = scalar_lea.vmem %s0, %s106
      %p108 = scmp.lt.s32.totalorder %s12, 1
      %s109 = scalar_select %p108, %s12, 1
      %s110 = smul.addr %s109, 4
      %s111 = scalar_lea.vmem %s1, %s110
      %v113 = vlaneseq
      %v114 = vshrl.u32 %v113, 7
      %v115 = vlaneseq
      %v116 = vand.u32 %v115, 127
      %vm117 = vcmp.le.s32.totalorder %v116, %v114
      %v118 = vsel %vm117, 0.0, -1e+09
      %v119 = vld [vmem:[%s107] sm:$0xf]
      %v121 = vunpack.c.l.b16 %v119
      %v122 = vpack.c.b16 %v121, %v121
      %123 = vrot.lane.b32.xlu0 %v122, 96
      %v124 = vpop.permute.xlu0 %123
      %vm125 = vcmask 64512
      %v127 = vsel %vm125, %v119, 0
      %v130 = vsel %vm125, %v124, 0
      %132 = vmatprep.subr.bf16.mxu0 0
      %133 = vmatpush1.bf16.xpose.msra.mxu0 %v130
      %134 = vmatprep.subr.bf16.mxu0 0
      %135 = vmatpush1.bf16.xpose.msra.mxu0 0
      %136 = vmatprep.subr.bf16.mxu0 0
      %137 = vmatpush1.bf16.xpose.msra.mxu0 0
      %138 = vmatprep.subr.bf16.mxu0 0
      %139 = vmatpush1.bf16.xpose.msra.mxu0 0
      %140 = vmatprep.subr.bf16.mxu0 0
      %141 = vmatpush1.bf16.xpose.msra.mxu0 0
      %142 = vmatprep.subr.bf16.mxu0 0
      %143 = vmatpush1.bf16.xpose.msra.mxu0 0
      %144 = vmatprep.subr.bf16.mxu0 0
      %145 = vmatpush1.bf16.xpose.msra.mxu0 0
      %146 = vmatprep.subr.bf16.mxu0 0
      %147 = vmatpush1.bf16.xpose.msra.mxu0 0
      %148 = vmatprep.subr.bf16.mxu0 0
      %149 = vmatpush1.bf16.xpose.msra.mxu0 0
      %150 = vmatprep.subr.bf16.mxu0 0
      %151 = vmatpush1.bf16.xpose.msra.mxu0 0
      %152 = vmatprep.subr.bf16.mxu0 0
      %153 = vmatpush1.bf16.xpose.msra.mxu0 0
      %154 = vmatprep.subr.bf16.mxu0 0
      %155 = vmatpush1.bf16.xpose.msra.mxu0 0
      %156 = vmatprep.subr.bf16.mxu0 0
      %157 = vmatpush1.bf16.xpose.msra.mxu0 0
      %158 = vmatprep.subr.bf16.mxu0 0
      %159 = vmatpush1.bf16.xpose.msra.mxu0 0
      %160 = vmatprep.subr.bf16.mxu0 0
      %161 = vmatpush1.bf16.xpose.msra.mxu0 0
      %162 = vmatprep.subr.bf16.mxu0 0
      %163 = vmatpush1.bf16.xpose.msra.mxu0 0
      %164 = vmatprep.mubr.bf16.mxu0 0
      %165 = vmatmul.mubr.bf16.gmra.mrb[0].mxu0 %v127
      %v166 = vpop.f32.mrb[0].mxu0
      %v167 = vadd.f32 0.0, %v166
      %v168 = vpop.f32.mrb[0].mxu0
      %v169 = vpop.f32.mrb[0].mxu0
      %v170 = vpop.f32.mrb[0].mxu0
      %171 = vdwg.mxu0
      %v172 = vmul.f32 %v167, 0.35355338
      %v173 = vadd.f32 %v172, %v118
      %v174 = vsel %vm125, %v173, -inf
      %175 = vmax.xlane.f32.xlu0 %v174
      %v176 = vpop.xlane.xlu0 %175
      %v177 = vsub.f32 %v173, %v176
      %v178 = vmul.f32 %v177, 1.442695
      %v179 = vpow.pop %v178
      %v180 = vsel %vm125, %v179, 0.0
      %181 = vadd.xlane.f32.xlu0 %v180
      %v182 = vpop.xlane.xlu0 %181
      %v183 = vrcp.pop %v182
      %v184 = vmul.f32 %v179, %v183
      %v185 = vpack.c.bf16 %v184, %v184
      %186 = vrot.lane.b32.xlu0 %v122, 64
      %v187 = vpop.permute.xlu0 %186
      %v189 = vsel %vm125, %v185, 0
      %vm191 = vcmask 1043456
      %v193 = vsel %vm191, %v187, 0
      %195 = vmatprep.subr.bf16.mxu0 0
      %196 = vmatpush1.bf16.msra.mxu0 %v193
      %197 = vmatprep.subr.bf16.mxu0 0
      %198 = vmatpush1.bf16.msra.mxu0 0
      %199 = vmatprep.subr.bf16.mxu0 0
      %200 = vmatpush1.bf16.msra.mxu0 0
      %201 = vmatprep.subr.bf16.mxu0 0
      %202 = vmatpush1.bf16.msra.mxu0 0
      %203 = vmatprep.subr.bf16.mxu0 0
      %204 = vmatpush1.bf16.msra.mxu0 0
      %205 = vmatprep.subr.bf16.mxu0 0
      %206 = vmatpush1.bf16.msra.mxu0 0
      %207 = vmatprep.subr.bf16.mxu0 0
      %208 = vmatpush1.bf16.msra.mxu0 0
      %209 = vmatprep.subr.bf16.mxu0 0
      %210 = vmatpush1.bf16.msra.mxu0 0
      %211 = vmatprep.subr.bf16.mxu0 0
      %212 = vmatpush1.bf16.msra.mxu0 0
      %213 = vmatprep.subr.bf16.mxu0 0
      %214 = vmatpush1.bf16.msra.mxu0 0
      %215 = vmatprep.subr.bf16.mxu0 0
      %216 = vmatpush1.bf16.msra.mxu0 0
      %217 = vmatprep.subr.bf16.mxu0 0
      %218 = vmatpush1.bf16.msra.mxu0 0
      %219 = vmatprep.subr.bf16.mxu0 0
      %220 = vmatpush1.bf16.msra.mxu0 0
      %221 = vmatprep.subr.bf16.mxu0 0
      %222 = vmatpush1.bf16.msra.mxu0 0
      %223 = vmatprep.subr.bf16.mxu0 0
      %224 = vmatpush1.bf16.msra.mxu0 0
      %225 = vmatprep.subr.bf16.mxu0 0
      %226 = vmatpush1.bf16.msra.mxu0 0
      %227 = vmatprep.mubr.bf16.mxu0 0
      %228 = vmatmul.mubr.bf16.gmra.mrb[0].mxu0 %v189
      %v229 = vpop.f32.mrb[0].mxu0
      %v230 = vadd.f32 0.0, %v229
      %v231 = vpop.f32.mrb[0].mxu0
      %v232 = vpop.f32.mrb[0].mxu0
      %v233 = vpop.f32.mrb[0].mxu0
      %234 = vdwg.mxu0
      %v235 = vpack.c.bf16 %v230, %v230
      %vm236 = vcmask 60416
      %237 = vst.msk [vmem:[%s111] sm:$0xf] %vm236, %v235
      %v238 = vld [vmem:[%s107] sm:$0xf]
      %v240 = vunpack.c.l.b16 %v238
      %v241 = vpack.c.b16 %v240, %v240
      %242 = vrot.lane.b32.xlu0 %v241, 120
      %v243 = vpop.permute.xlu0 %242
      %244 = vrot.lane.b32.xlu0 %v241, 88
      %v245 = vpop.permute.xlu0 %244
      %v247 = vsel %vm125, %v243, 0
      %v250 = vsel %vm125, %v245, 0
      %252 = vmatprep.subr.bf16.mxu0 0
      %253 = vmatpush1.bf16.xpose.msra.mxu0 %v250
      %254 = vmatprep.subr.bf16.mxu0 0
      %255 = vmatpush1.bf16.xpose.msra.mxu0 0
      %256 = vmatprep.subr.bf16.mxu0 0
      %257 = vmatpush1.bf16.xpose.msra.mxu0 0
      %258 = vmatprep.subr.bf16.mxu0 0
      %259 = vmatpush1.bf16.xpose.msra.mxu0 0
      %260 = vmatprep.subr.bf16.mxu0 0
      %261 = vmatpush1.bf16.xpose.msra.mxu0 0
      %262 = vmatprep.subr.bf16.mxu0 0
      %263 = vmatpush1.bf16.xpose.msra.mxu0 0
      %264 = vmatprep.subr.bf16.mxu0 0
      %265 = vmatpush1.bf16.xpose.msra.mxu0 0
      %266 = vmatprep.subr.bf16.mxu0 0
      %267 = vmatpush1.bf16.xpose.msra.mxu0 0
      %268 = vmatprep.subr.bf16.mxu0 0
      %269 = vmatpush1.bf16.xpose.msra.mxu0 0
      %270 = vmatprep.subr.bf16.mxu0 0
      %271 = vmatpush1.bf16.xpose.msra.mxu0 0
      %272 = vmatprep.subr.bf16.mxu0 0
      %273 = vmatpush1.bf16.xpose.msra.mxu0 0
      %274 = vmatprep.subr.bf16.mxu0 0
      %275 = vmatpush1.bf16.xpose.msra.mxu0 0
      %276 = vmatprep.subr.bf16.mxu0 0
      %277 = vmatpush1.bf16.xpose.msra.mxu0 0
      %278 = vmatprep.subr.bf16.mxu0 0
      %279 = vmatpush1.bf16.xpose.msra.mxu0 0
      %280 = vmatprep.subr.bf16.mxu0 0
      %281 = vmatpush1.bf16.xpose.msra.mxu0 0
      %282 = vmatprep.subr.bf16.mxu0 0
      %283 = vmatpush1.bf16.xpose.msra.mxu0 0
      %284 = vmatprep.mubr.bf16.mxu0 0
      %285 = vmatmul.mubr.bf16.gmra.mrb[0].mxu0 %v247
      %v286 = vpop.f32.mrb[0].mxu0
      %v287 = vadd.f32 0.0, %v286
      %v288 = vpop.f32.mrb[0].mxu0
      %v289 = vpop.f32.mrb[0].mxu0
      %v290 = vpop.f32.mrb[0].mxu0
      %291 = vdwg.mxu0
      %v292 = vmul.f32 %v287, 0.35355338
      %v293 = vadd.f32 %v292, %v118
      %v294 = vsel %vm125, %v293, -inf
      %295 = vmax.xlane.f32.xlu0 %v294
      %v296 = vpop.xlane.xlu0 %295
      %v297 = vsub.f32 %v293, %v296
      %v298 = vmul.f32 %v297, 1.442695
      %v299 = vpow.pop %v298
      %v300 = vsel %vm125, %v299, 0.0
      %301 = vadd.xlane.f32.xlu0 %v300
      %v302 = vpop.xlane.xlu0 %301
      %v303 = vrcp.pop %v302
      %v304 = vmul.f32 %v299, %v303
      %v305 = vpack.c.bf16 %v304, %v304
      %306 = vrot.lane.b32.xlu0 %v241, 56
      %v307 = vpop.permute.xlu0 %306
      %v309 = vsel %vm125, %v305, 0
      %v312 = vsel %vm191, %v307, 0
      %314 = vmatprep.subr.bf16.mxu0 0
      %315 = vmatpush1.bf16.msra.mxu0 %v312
      %316 = vmatprep.subr.bf16.mxu0 0
      %317 = vmatpush1.bf16.msra.mxu0 0
      %318 = vmatprep.subr.bf16.mxu0 0
      %319 = vmatpush1.bf16.msra.mxu0 0
      %320 = vmatprep.subr.bf16.mxu0 0
      %321 = vmatpush1.bf16.msra.mxu0 0
      %322 = vmatprep.subr.bf16.mxu0 0
      %323 = vmatpush1.bf16.msra.mxu0 0
      %324 = vmatprep.subr.bf16.mxu0 0
      %325 = vmatpush1.bf16.msra.mxu0 0
      %326 = vmatprep.subr.bf16.mxu0 0
      %327 = vmatpush1.bf16.msra.mxu0 0
      %328 = vmatprep.subr.bf16.mxu0 0
      %329 = vmatpush1.bf16.msra.mxu0 0
      %330 = vmatprep.subr.bf16.mxu0 0
      %331 = vmatpush1.bf16.msra.mxu0 0
      %332 = vmatprep.subr.bf16.mxu0 0
      %333 = vmatpush1.bf16.msra.mxu0 0
      %334 = vmatprep.subr.bf16.mxu0 0
      %335 = vmatpush1.bf16.msra.mxu0 0
      %336 = vmatprep.subr.bf16.mxu0 0
      %337 = vmatpush1.bf16.msra.mxu0 0
      %338 = vmatprep.subr.bf16.mxu0 0
      %339 = vmatpush1.bf16.msra.mxu0 0
      %340 = vmatprep.subr.bf16.mxu0 0
      %341 = vmatpush1.bf16.msra.mxu0 0
      %342 = vmatprep.subr.bf16.mxu0 0
      %343 = vmatpush1.bf16.msra.mxu0 0
      %344 = vmatprep.subr.bf16.mxu0 0
      %345 = vmatpush1.bf16.msra.mxu0 0
      %346 = vmatprep.mubr.bf16.mxu0 0
      %347 = vmatmul.mubr.bf16.gmra.mrb[0].mxu0 %v309
      %v348 = vpop.f32.mrb[0].mxu0
      %v349 = vadd.f32 0.0, %v348
      %v350 = vpop.f32.mrb[0].mxu0
      %v351 = vpop.f32.mrb[0].mxu0
      %v352 = vpop.f32.mrb[0].mxu0
      %353 = vdwg.mxu0
      %v354 = vpack.c.bf16 %v349, %v349
      %v356 = vunpack.c.l.b16 %v354
      %v357 = vpack.c.b16 %v356, %v356
      %358 = vrot.lane.b32.xlu0 %v357, 8
      %v359 = vpop.permute.xlu0 %358
      %vm361 = vcmask 126016
      %362 = vst.msk [vmem:[%s111] sm:$0xf] %vm361, %v359
      %v363 = vld [vmem:[%s107] sm:$0xf]
      %v365 = vunpack.c.l.b16 %v363
      %v366 = vpack.c.b16 %v365, %v365
      %367 = vrot.lane.b32.xlu0 %v366, 112
      %v368 = vpop.permute.xlu0 %367
      %369 = vrot.lane.b32.xlu0 %v366, 80
      %v370 = vpop.permute.xlu0 %369
      %v372 = vsel %vm125, %v368, 0
      %v375 = vsel %vm125, %v370, 0
      %377 = vmatprep.subr.bf16.mxu0 0
      %378 = vmatpush1.bf16.xpose.msra.mxu0 %v375
      %379 = vmatprep.subr.bf16.mxu0 0
      %380 = vmatpush1.bf16.xpose.msra.mxu0 0
      %381 = vmatprep.subr.bf16.mxu0 0
      %382 = vmatpush1.bf16.xpose.msra.mxu0 0
      %383 = vmatprep.subr.bf16.mxu0 0
      %384 = vmatpush1.bf16.xpose.msra.mxu0 0
      %385 = vmatprep.subr.bf16.mxu0 0
      %386 = vmatpush1.bf16.xpose.msra.mxu0 0
      %387 = vmatprep.subr.bf16.mxu0 0
      %388 = vmatpush1.bf16.xpose.msra.mxu0 0
      %389 = vmatprep.subr.bf16.mxu0 0
      %390 = vmatpush1.bf16.xpose.msra.mxu0 0
      %391 = vmatprep.subr.bf16.mxu0 0
      %392 = vmatpush1.bf16.xpose.msra.mxu0 0
      %393 = vmatprep.subr.bf16.mxu0 0
      %394 = vmatpush1.bf16.xpose.msra.mxu0 0
      %395 = vmatprep.subr.bf16.mxu0 0
      %396 = vmatpush1.bf16.xpose.msra.mxu0 0
      %397 = vmatprep.subr.bf16.mxu0 0
      %398 = vmatpush1.bf16.xpose.msra.mxu0 0
      %399 = vmatprep.subr.bf16.mxu0 0
      %400 = vmatpush1.bf16.xpose.msra.mxu0 0
      %401 = vmatprep.subr.bf16.mxu0 0
      %402 = vmatpush1.bf16.xpose.msra.mxu0 0
      %403 = vmatprep.subr.bf16.mxu0 0
      %404 = vmatpush1.bf16.xpose.msra.mxu0 0
      %405 = vmatprep.subr.bf16.mxu0 0
      %406 = vmatpush1.bf16.xpose.msra.mxu0 0
      %407 = vmatprep.subr.bf16.mxu0 0
      %408 = vmatpush1.bf16.xpose.msra.mxu0 0
      %409 = vmatprep.mubr.bf16.mxu0 0
      %410 = vmatmul.mubr.bf16.gmra.mrb[0].mxu0 %v372
      %v411 = vpop.f32.mrb[0].mxu0
      %v412 = vadd.f32 0.0, %v411
      %v413 = vpop.f32.mrb[0].mxu0
      %v414 = vpop.f32.mrb[0].mxu0
      %v415 = vpop.f32.mrb[0].mxu0
      %416 = vdwg.mxu0
      %v417 = vmul.f32 %v412, 0.35355338
      %v418 = vadd.f32 %v417, %v118
      %v419 = vsel %vm125, %v418, -inf
      %420 = vmax.xlane.f32.xlu0 %v419
      %v421 = vpop.xlane.xlu0 %420
      %v422 = vsub.f32 %v418, %v421
      %v423 = vmul.f32 %v422, 1.442695
      %v424 = vpow.pop %v423
      %v425 = vsel %vm125, %v424, 0.0
      %426 = vadd.xlane.f32.xlu0 %v425
      %v427 = vpop.xlane.xlu0 %426
      %v428 = vrcp.pop %v427
      %v429 = vmul.f32 %v424, %v428
      %v430 = vpack.c.bf16 %v429, %v429
      %431 = vrot.lane.b32.xlu0 %v366, 48
      %v432 = vpop.permute.xlu0 %431
      %v434 = vsel %vm125, %v430, 0
      %v437 = vsel %vm191, %v432, 0
      %439 = vmatprep.subr.bf16.mxu0 0
      %440 = vmatpush1.bf16.msra.mxu0 %v437
      %441 = vmatprep.subr.bf16.mxu0 0
      %442 = vmatpush1.bf16.msra.mxu0 0
      %443 = vmatprep.subr.bf16.mxu0 0
      %444 = vmatpush1.bf16.msra.mxu0 0
      %445 = vmatprep.subr.bf16.mxu0 0
      %446 = vmatpush1.bf16.msra.mxu0 0
      %447 = vmatprep.subr.bf16.mxu0 0
      %448 = vmatpush1.bf16.msra.mxu0 0
      %449 = vmatprep.subr.bf16.mxu0 0
      %450 = vmatpush1.bf16.msra.mxu0 0
      %451 = vmatprep.subr.bf16.mxu0 0
      %452 = vmatpush1.bf16.msra.mxu0 0
      %453 = vmatprep.subr.bf16.mxu0 0
      %454 = vmatpush1.bf16.msra.mxu0 0
      %455 = vmatprep.subr.bf16.mxu0 0
      %456 = vmatpush1.bf16.msra.mxu0 0
      %457 = vmatprep.subr.bf16.mxu0 0
      %458 = vmatpush1.bf16.msra.mxu0 0
      %459 = vmatprep.subr.bf16.mxu0 0
      %460 = vmatpush1.bf16.msra.mxu0 0
      %461 = vmatprep.subr.bf16.mxu0 0
      %462 = vmatpush1.bf16.msra.mxu0 0
      %463 = vmatprep.subr.bf16.mxu0 0
      %464 = vmatpush1.bf16.msra.mxu0 0
      %465 = vmatprep.subr.bf16.mxu0 0
      %466 = vmatpush1.bf16.msra.mxu0 0
      %467 = vmatprep.subr.bf16.mxu0 0
      %468 = vmatpush1.bf16.msra.mxu0 0
      %469 = vmatprep.subr.bf16.mxu0 0
      %470 = vmatpush1.bf16.msra.mxu0 0
      %471 = vmatprep.mubr.bf16.mxu0 0
      %472 = vmatmul.mubr.bf16.gmra.mrb[0].mxu0 %v434
      %v473 = vpop.f32.mrb[0].mxu0
      %v474 = vadd.f32 0.0, %v473
      %v475 = vpop.f32.mrb[0].mxu0
      %v476 = vpop.f32.mrb[0].mxu0
      %v477 = vpop.f32.mrb[0].mxu0
      %478 = vdwg.mxu0
      %v479 = vpack.c.bf16 %v474, %v474
      %v481 = vunpack.c.l.b16 %v479
      %v482 = vpack.c.b16 %v481, %v481
      %483 = vrot.lane.b32.xlu0 %v482, 16
      %v484 = vpop.permute.xlu0 %483
      %vm486 = vcmask 191616
      %487 = vst.msk [vmem:[%s111] sm:$0xf] %vm486, %v484
      %v488 = vld [vmem:[%s107] sm:$0xf]
      %v490 = vunpack.c.l.b16 %v488
      %v491 = vpack.c.b16 %v490, %v490
      %492 = vrot.lane.b32.xlu0 %v491, 104
      %v493 = vpop.permute.xlu0 %492
      %494 = vrot.lane.b32.xlu0 %v491, 72
      %v495 = vpop.permute.xlu0 %494
      %v497 = vsel %vm125, %v493, 0
      %v500 = vsel %vm125, %v495, 0
      %502 = vmatprep.subr.bf16.mxu0 0
      %503 = vmatpush1.bf16.xpose.msra.mxu0 %v500
      %504 = vmatprep.subr.bf16.mxu0 0
      %505 = vmatpush1.bf16.xpose.msra.mxu0 0
      %506 = vmatprep.subr.bf16.mxu0 0
      %507 = vmatpush1.bf16.xpose.msra.mxu0 0
      %508 = vmatprep.subr.bf16.mxu0 0
      %509 = vmatpush1.bf16.xpose.msra.mxu0 0
      %510 = vmatprep.subr.bf16.mxu0 0
      %511 = vmatpush1.bf16.xpose.msra.mxu0 0
      %512 = vmatprep.subr.bf16.mxu0 0
      %513 = vmatpush1.bf16.xpose.msra.mxu0 0
      %514 = vmatprep.subr.bf16.mxu0 0
      %515 = vmatpush1.bf16.xpose.msra.mxu0 0
      %516 = vmatprep.subr.bf16.mxu0 0
      %517 = vmatpush1.bf16.xpose.msra.mxu0 0
      %518 = vmatprep.subr.bf16.mxu0 0
      %519 = vmatpush1.bf16.xpose.msra.mxu0 0
      %520 = vmatprep.subr.bf16.mxu0 0
      %521 = vmatpush1.bf16.xpose.msra.mxu0 0
      %522 = vmatprep.subr.bf16.mxu0 0
      %523 = vmatpush1.bf16.xpose.msra.mxu0 0
      %524 = vmatprep.subr.bf16.mxu0 0
      %525 = vmatpush1.bf16.xpose.msra.mxu0 0
      %526 = vmatprep.subr.bf16.mxu0 0
      %527 = vmatpush1.bf16.xpose.msra.mxu0 0
      %528 = vmatprep.subr.bf16.mxu0 0
      %529 = vmatpush1.bf16.xpose.msra.mxu0 0
      %530 = vmatprep.subr.bf16.mxu0 0
      %531 = vmatpush1.bf16.xpose.msra.mxu0 0
      %532 = vmatprep.subr.bf16.mxu0 0
      %533 = vmatpush1.bf16.xpose.msra.mxu0 0
      %534 = vmatprep.mubr.bf16.mxu0 0
      %535 = vmatmul.mubr.bf16.gmra.mrb[0].mxu0 %v497
      %v536 = vpop.f32.mrb[0].mxu0
      %v537 = vadd.f32 0.0, %v536
      %v538 = vpop.f32.mrb[0].mxu0
      %v539 = vpop.f32.mrb[0].mxu0
      %v540 = vpop.f32.mrb[0].mxu0
      %541 = vdwg.mxu0
      %v542 = vmul.f32 %v537, 0.35355338
      %v543 = vadd.f32 %v542, %v118
      %v544 = vsel %vm125, %v543, -inf
      %545 = vmax.xlane.f32.xlu0 %v544
      %v546 = vpop.xlane.xlu0 %545
      %v547 = vsub.f32 %v543, %v546
      %v548 = vmul.f32 %v547, 1.442695
      %v549 = vpow.pop %v548
      %v550 = vsel %vm125, %v549, 0.0
      %551 = vadd.xlane.f32.xlu0 %v550
      %v552 = vpop.xlane.xlu0 %551
      %v553 = vrcp.pop %v552
      %v554 = vmul.f32 %v549, %v553
      %v555 = vpack.c.bf16 %v554, %v554
      %556 = vrot.lane.b32.xlu0 %v491, 40
      %v557 = vpop.permute.xlu0 %556
      %v559 = vsel %vm125, %v555, 0
      %v562 = vsel %vm191, %v557, 0
      %564 = vmatprep.subr.bf16.mxu0 0
      %565 = vmatpush1.bf16.msra.mxu0 %v562
      %566 = vmatprep.subr.bf16.mxu0 0
      %567 = vmatpush1.bf16.msra.mxu0 0
      %568 = vmatprep.subr.bf16.mxu0 0
      %569 = vmatpush1.bf16.msra.mxu0 0
      %570 = vmatprep.subr.bf16.mxu0 0
      %571 = vmatpush1.bf16.msra.mxu0 0
      %572 = vmatprep.subr.bf16.mxu0 0
      %573 = vmatpush1.bf16.msra.mxu0 0
      %574 = vmatprep.subr.bf16.mxu0 0
      %575 = vmatpush1.bf16.msra.mxu0 0
      %576 = vmatprep.subr.bf16.mxu0 0
      %577 = vmatpush1.bf16.msra.mxu0 0
      %578 = vmatprep.subr.bf16.mxu0 0
      %579 = vmatpush1.bf16.msra.mxu0 0
      %580 = vmatprep.subr.bf16.mxu0 0
      %581 = vmatpush1.bf16.msra.mxu0 0
      %582 = vmatprep.subr.bf16.mxu0 0
      %583 = vmatpush1.bf16.msra.mxu0 0
      %584 = vmatprep.subr.bf16.mxu0 0
      %585 = vmatpush1.bf16.msra.mxu0 0
      %586 = vmatprep.subr.bf16.mxu0 0
      %587 = vmatpush1.bf16.msra.mxu0 0
      %588 = vmatprep.subr.bf16.mxu0 0
      %589 = vmatpush1.bf16.msra.mxu0 0
      %590 = vmatprep.subr.bf16.mxu0 0
      %591 = vmatpush1.bf16.msra.mxu0 0
      %592 = vmatprep.subr.bf16.mxu0 0
      %593 = vmatpush1.bf16.msra.mxu0 0
      %594 = vmatprep.subr.bf16.mxu0 0
      %595 = vmatpush1.bf16.msra.mxu0 0
      %596 = vmatprep.mubr.bf16.mxu0 0
      %597 = vmatmul.mubr.bf16.gmra.mrb[0].mxu0 %v559
      %v598 = vpop.f32.mrb[0].mxu0
      %v599 = vadd.f32 0.0, %v598
      %v600 = vpop.f32.mrb[0].mxu0
      %v601 = vpop.f32.mrb[0].mxu0
      %v602 = vpop.f32.mrb[0].mxu0
      %603 = vdwg.mxu0
      %v604 = vpack.c.bf16 %v599, %v599
      %v606 = vunpack.c.l.b16 %v604
      %v607 = vpack.c.b16 %v606, %v606
      %608 = vrot.lane.b32.xlu0 %v607, 24
      %v609 = vpop.permute.xlu0 %608
      %vm611 = vcmask 257216
      %612 = vst.msk [vmem:[%s111] sm:$0xf] %vm611, %v609
      %p613 = scmp.lt.s32.totalorder %s12, 1
      %s614 = scalar_select %p613, %s12, 1
      %s615 = smul.addr %s614, 4
      %s616 = scalar_lea.vmem %s1, %s615
      // Predicated region
      $region25: #{image_captioning_forward.30} parent=23 // pred_check
        %p617 = pneg %p56
      $region26: #{image_captioning_forward.30} parent=23 // pred_check_branch
        %619 = sbr.rel (%p617) target = $region28
      $region27: #{image_captioning_forward.30} parent=23 // pred_region
        _
      $region28: #{image_captioning_forward.30} parent=23 // pred_fallthru
        _
    $region24: #{image_captioning_forward.30} parent=5 // pred_fallthru
      _
    %p620 = scmp.le.s32.totalorder 2, %s7
    // Predicated region
    $region29: #{image_captioning_forward.30} parent=5 // pred_check
      %p621 = pneg %p620
    $region30: #{image_captioning_forward.30} parent=5 // pred_check_branch
      %623 = sbr.rel (%p621) target = $region32
    $region31: #{image_captioning_forward.30} parent=5 // pred_region
      %s624 = ssub.s32 %s7, 2
      // Predicated region
      $region33: #{image_captioning_forward.30} parent=31 // pred_check
        %p625 = pneg %p62
      $region34: #{image_captioning_forward.30} parent=31 // pred_check_branch
        %627 = sbr.rel (%p625) target = $region36
      $region35: #{image_captioning_forward.30} parent=31 // pred_region
        %p628 = scmp.lt.s32.totalorder %s13, 1
        %s629 = scalar_select %p628, %s13, 1
        %s630 = smul.addr %s629, 4
        %s631 = scalar_lea.vmem %s1, %s630
      $region36: #{image_captioning_forward.30} parent=31 // pred_fallthru
        _
    $region32: #{image_captioning_forward.30} parent=5 // pred_fallthru
      _
  $region6: #{image_captioning_forward.30} parent=0 // loop_footer
    %s11 = sadd.s32 1, %s7
  $region7: #{image_captioning_forward.30} parent=0 // loop_footer_branch
    %6 = sbr.rel target = $region3
  $region8: #{image_captioning_forward.30} parent=0 // loop_exit
    _

// kernel: image_captioning_forward.28
$region0: #{image_captioning_forward.28}
  #allocation0 [shape = 'u32[]', space=smem, size = 0x4, offset = 0x4, fixed_abs, tag = 'smem constant byte address 0x4 - core index']
  #allocation1 [shape = 'u32[144,128]{1,0:T(1,128)}', space=vmem, size = 0x12000, scoped, tag = 'internal scratch']
  %s0 = inlined_call_operand.vmem [shape: bf16[32,16], index: 0, kind: input, shape index: {}]
  %s1 = inlined_call_operand.vmem [shape: bf16[16,32], index: 1, kind: input, shape index: {}]
  %s2 = inlined_call_operand.vmem [shape: f32[1,32], index: 2, kind: input, shape index: {}]
  %s3 = inlined_call_operand.vmem [shape: bf16[32,32], index: 3, kind: output, shape index: {}]
  %s4 = sld [smem:[#allocation0]]
  $region22: #{image_captioning_forward.28} parent=0
    _
  %s6 = ssub.s32 1, %s4
  %s7 = scalar_select 0, %s6, %s4
  // Predicated region
  $region2: #{image_captioning_forward.28} parent=0 // pred_check
    _
  $region3: #{image_captioning_forward.28} parent=0 // pred_check_branch
    %9 = sbr.rel (0) target = $region5
  $region4: #{image_captioning_forward.28} parent=0 // pred_region
    _
  $region5: #{image_captioning_forward.28} parent=0 // pred_fallthru
    _
  // Predicated region
  $region6: #{image_captioning_forward.28} parent=0 // pred_check
    _
  $region7: #{image_captioning_forward.28} parent=0 // pred_check_branch
    %11 = sbr.rel (0) target = $region9
  $region8: #{image_captioning_forward.28} parent=0 // pred_region
    _
  $region9: #{image_captioning_forward.28} parent=0 // pred_fallthru
    _
  // Predicated region
  $region10: #{image_captioning_forward.28} parent=0 // pred_check
    _
  $region11: #{image_captioning_forward.28} parent=0 // pred_check_branch
    %13 = sbr.rel (0) target = $region13
  $region12: #{image_captioning_forward.28} parent=0 // pred_region
    _
  $region13: #{image_captioning_forward.28} parent=0 // pred_fallthru
    _
  %v15 = vld [vmem:[%s0] sm:$0xf]
  %v16 = vld [vmem:[%s0 + $0x4] sm:$0xf]
  %v17 = vld [vmem:[%s0 + $0x8] sm:$0xf]
  %v18 = vld [vmem:[%s0 + $0xc] sm:$0xf]
  %v19 = vld [vmem:[%s1] sm:$0xf]
  %v20 = vld [vmem:[%s1 + $0x4] sm:$0xf]
  %v21 = vld [vmem:[%s2] sm:$0x1]
  %v23 = vlaneseq
  %v24 = vshrl.u32 %v23, 7
  %v25 = vsub.s32 0, %v24
  %v26 = vrot.slane %v21, %v25
  %v32 = vunpack.c.l.b16 %v15
  %v33 = vunpack.c.l.b16 %v16
  %v34 = vunpack.c.l.b16 %v17
  %v35 = vunpack.c.l.b16 %v18
  %v36 = vpack.c.b16 %v33, %v32
  %v37 = vpack.c.b16 %v35, %v34
  %v40 = vunpack.c.l.b16 %v19
  %v41 = vunpack.c.l.b16 %v20
  %v42 = vpack.c.b16 %v41, %v40
  %vm44 = vcmask 130048
  %v46 = vsel %vm44, %v36, 0
  %v49 = vsel %vm44, %v37, 0
  %51 = vmatprep.subr.bf16.mxu0 0
  %52 = vmatpush1.bf16.msra.mxu0 %v42
  %53 = vmatprep.subr.bf16.mxu0 0
  %54 = vmatpush1.bf16.msra.mxu0 0
  %55 = vmatprep.subr.bf16.mxu0 0
  %56 = vmatpush1.bf16.msra.mxu0 0
  %57 = vmatprep.subr.bf16.mxu0 0
  %58 = vmatpush1.bf16.msra.mxu0 0
  %59 = vmatprep.subr.bf16.mxu0 0
  %60 = vmatpush1.bf16.msra.mxu0 0
  %61 = vmatprep.subr.bf16.mxu0 0
  %62 = vmatpush1.bf16.msra.mxu0 0
  %63 = vmatprep.subr.bf16.mxu0 0
  %64 = vmatpush1.bf16.msra.mxu0 0
  %65 = vmatprep.subr.bf16.mxu0 0
  %66 = vmatpush1.bf16.msra.mxu0 0
  %67 = vmatprep.subr.bf16.mxu0 0
  %68 = vmatpush1.bf16.msra.mxu0 0
  %69 = vmatprep.subr.bf16.mxu0 0
  %70 = vmatpush1.bf16.msra.mxu0 0
  %71 = vmatprep.subr.bf16.mxu0 0
  %72 = vmatpush1.bf16.msra.mxu0 0
  %73 = vmatprep.subr.bf16.mxu0 0
  %74 = vmatpush1.bf16.msra.mxu0 0
  %75 = vmatprep.subr.bf16.mxu0 0
  %76 = vmatpush1.bf16.msra.mxu0 0
  %77 = vmatprep.subr.bf16.mxu0 0
  %78 = vmatpush1.bf16.msra.mxu0 0
  %79 = vmatprep.subr.bf16.mxu0 0
  %80 = vmatpush1.bf16.msra.mxu0 0
  %81 = vmatprep.subr.bf16.mxu0 0
  %82 = vmatpush1.bf16.msra.mxu0 0
  %83 = vmatprep.mubr.bf16.mxu0 0
  %84 = vmatmul.mubr.bf16.gmra.mrb[0].mxu0 %v46
  %v85 = vpop.f32.mrb[0].mxu0
  %v86 = vadd.f32 %v26, %v85
  %v87 = vpop.f32.mrb[0].mxu0
  %v88 = vpop.f32.mrb[0].mxu0
  %v89 = vadd.f32 %v26, %v88
  %v90 = vpop.f32.mrb[0].mxu0
  %91 = vmatprep.mubr.bf16.mxu0 0
  %92 = vmatmul.mubr.bf16.gmra.mrb[0].mxu0 %v49
  %v93 = vpop.f32.mrb[0].mxu0
  %v94 = vadd.f32 %v26, %v93
  %v95 = vpop.f32.mrb[0].mxu0
  %v96 = vpop.f32.mrb[0].mxu0
  %v97 = vadd.f32 %v26, %v96
  %v98 = vpop.f32.mrb[0].mxu0
  %99 = vdwg.mxu0
  %v100 = vpack.c.bf16 %v89, %v86
  %v101 = vpack.c.bf16 %v97, %v94
  %v104 = vunpack.c.l.b16 %v100
  %v105 = vunpack.c.h.b16 %v100
  %v106 = vunpack.c.l.b16 %v101
  %v107 = vunpack.c.h.b16 %v101
  %v108 = vpack.c.b16 %v104, %v104
  %v109 = vpack.c.b16 %v105, %v105
  %v110 = vpack.c.b16 %v106, %v106
  %v111 = vpack.c.b16 %v107, %v107
  %vm116 = vcmask 257024
  %117 = vst.msk [vmem:[%s3] sm:$0xf] %vm116, %v108
  %118 = vst.msk [vmem:[%s3 + $0x4] sm:$0xf] %vm116, %v109
  %119 = vst.msk [vmem:[%s3 + $0x8] sm:$0xf] %vm116, %v110
  %120 = vst.msk [vmem:[%s3 + $0xc] sm:$0xf] %vm116, %v111
  // Predicated region
  $region14: #{image_captioning_forward.28} parent=0 // pred_check
    _
  $region15: #{image_captioning_forward.28} parent=0 // pred_check_branch
    %122 = sbr.rel (0) target = $region17
  $region16: #{image_captioning_forward.28} parent=0 // pred_region
    _
  $region17: #{image_captioning_forward.28} parent=0 // pred_fallthru
    _
  // Predicated region
  $region18: #{image_captioning_forward.28} parent=0 // pred_check
    _
  $region19: #{image_captioning_forward.28} parent=0 // pred_check_branch
    %124 = sbr.rel (0) target = $region21
  $region20: #{image_captioning_forward.28} parent=0 // pred_region
    _
  $region21: #{image_captioning_forward.28} parent=0 // pred_fallthru
    _

// kernel: image_captioning_forward.26
$region0: #{image_captioning_forward.26}
  #allocation0 [shape = 'u32[]', space=smem, size = 0x4, offset = 0x4, fixed_abs, tag = 'smem constant byte address 0x4 - core index']
  #allocation1 [shape = 'u32[144,128]{1,0:T(1,128)}', space=vmem, size = 0x12000, scoped, tag = 'internal scratch']
  %s0 = inlined_call_operand.vmem [shape: f32[2,18,18,3], index: 0, kind: input, shape index: {}]
  %s1 = inlined_call_operand.vmem [shape: bf16[27,8], index: 1, kind: input, shape index: {}]
  %s2 = inlined_call_operand.vmem [shape: f32[1,8], index: 2, kind: input, shape index: {}]
  %s3 = inlined_call_operand.vmem [shape: bf16[2,256,8], index: 3, kind: output, shape index: {}]
  %s4 = sld [smem:[#allocation0]]
  $region45: #{image_captioning_forward.26} parent=0
    _
  %s6 = ssub.s32 1, %s4
  %s7 = scalar_select 0, %s6, %s4
  loop: start=0, step=1, limit=4
  $region2: #{image_captioning_forward.26} parent=0 // loop_pre_header
    _
  $region3: #{image_captioning_forward.26} parent=0 // loop_header
    %s9 = sphi 0, %s13
    %p10 = scmp.ge.s32.totalorder %s9, 4
    %s19 = sphi 0, %s21
    %s22 = sphi 0, %s19
    %s23 = sphi 0, %s22
    %s39 = sphi 0, %s23
    %s43 = sphi 0, %s43
    %s45 = sphi 0, %s43
    %s46 = sphi 0, %s45
    %s60 = sphi 0, %s46
    %s64 = sphi 0, %s64
    %s66 = sphi 0, %s64
    %s67 = sphi 0, %s66
    %s81 = sphi 0, %s67
    %s87 = sphi 0, %s89
    %s90 = sphi 0, %s87
    %s91 = sphi 0, %s90
    %s107 = sphi 0, %s91
  $region4: #{image_captioning_forward.26} parent=0 // loop_header_branch
    %12 = sbr.rel (%p10) target = $region8
  $region5: #{image_captioning_forward.26} parent=0 // loop_body
    %s14 = ssub.s32 %s9, 1
    %s15 = ssub.s32 %s9, 2
    %s16 = sadd.s32 %s9, 1
    %s17 = ssub.s32 %s9, %s16
    %p18 = scmp.eq.s32.totalorder %s17, 0
    %s20 = sadd.s32 %s19, 1
    %s21 = scalar_select %p18, %s19, %s20
    %p24 = pneg %p18
    %p25 = scmp.eq.s32.totalorder %s9, 1
    %p26 = por %p24, %p25
    %p27 = scmp.ne.s32.totalorder %s19, %s22
    %p28 = scmp.eq.s32.totalorder %s9, 0
    %p29 = por %p27, %p28
    %p30 = scmp.ne.s32.totalorder %s19, %s22
    %p31 = scmp.eq.s32.totalorder %s14, 1
    %p32 = por %p30, %p31
    %p33 = scmp.ne.s32.totalorder %s22, %s23
    %p34 = scmp.eq.s32.totalorder %s14, 0
    %p35 = por %p33, %p34
    %p36 = scmp.ne.s32.totalorder %s22, %s23
    %p37 = scmp.eq.s32.totalorder %s15, 1
    %p38 = por %p36, %p37
    %p40 = scmp.ne.s32.totalorder %s23, %s39
    %p41 = scmp.eq.s32.totalorder %s15, 0
    %p42 = por %p40, %p41
    %s44 = sadd.s32 %s43, 1
    %p47 = scmp.eq.s32.totalorder %s9, 1
    %p48 = scmp.ne.s32.totalorder %s43, %s45
    %p49 = scmp.eq.s32.totalorder %s9, 0
    %p50 = por %p48, %p49
    %p51 = scmp.ne.s32.totalorder %s43, %s45
    %p52 = scmp.eq.s32.totalorder %s14, 1
    %p53 = por %p51, %p52
    %p54 = scmp.ne.s32.totalorder %s45, %s46
    %p55 = scmp.eq.s32.totalorder %s14, 0
    %p56 = por %p54, %p55
    %p57 = scmp.ne.s32.totalorder %s45, %s46
    %p58 = scmp.eq.s32.totalorder %s15, 1
    %p59 = por %p57, %p58
    %p61 = scmp.ne.s32.totalorder %s46, %s60
    %p62 = scmp.eq.s32.totalorder %s15, 0
    %p63 = por %p61, %p62
    %s65 = sadd.s32 %s64, 1
    %p68 = scmp.eq.s32.totalorder %s9, 1
    %p69 = scmp.ne.s32.totalorder %s64, %s66
    %p70 = scmp.eq.s32.totalorder %s9, 0
    %p71 = por %p69, %p70
    %p72 = scmp.ne.s32.totalorder %s64, %s66
    %p73 = scmp.eq.s32.totalorder %s14, 1
    %p74 = por %p72, %p73
    %p75 = scmp.ne.s32.totalorder %s66, %s67
    %p76 = scmp.eq.s32.totalorder %s14, 0
    %p77 = por %p75, %p76
    %p78 = scmp.ne.s32.totalorder %s66, %s67
    %p79 = scmp.eq.s32.totalorder %s15, 1
    %p80 = por %p78, %p79
    %p82 = scmp.ne.s32.totalorder %s67, %s81
    %p83 = scmp.eq.s32.totalorder %s15, 0
    %p84 = por %p82, %p83
    %s85 = ssub.s32 %s9, %s16
    %p86 = scmp.eq.s32.totalorder %s85, 0
    %s88 = sadd.s32 %s87, 1
    %s89 = scalar_select %p86, %s87, %s88
    %p92 = pneg %p86
    %p93 = scmp.eq.s32.totalorder %s9, 1
    %p94 = por %p92, %p93
    %p95 = scmp.ne.s32.totalorder %s87, %s90
    %p96 = scmp.eq.s32.totalorder %s9, 0
    %p97 = por %p95, %p96
    %p98 = scmp.ne.s32.totalorder %s87, %s90
    %p99 = scmp.eq.s32.totalorder %s14, 1
    %p100 = por %p98, %p99
    %p101 = scmp.ne.s32.totalorder %s90, %s91
    %p102 = scmp.eq.s32.totalorder %s14, 0
    %p103 = por %p101, %p102
    %p104 = scmp.ne.s32.totalorder %s90, %s91
    %p105 = scmp.eq.s32.totalorder %s15, 1
    %p106 = por %p104, %p105
    %p108 = scmp.ne.s32.totalorder %s91, %s107
    %p109 = scmp.eq.s32.totalorder %s15, 0
    %p110 = por %p108, %p109
    %p111 = scmp.le.s32.totalorder 1, %s9
    %p112 = scmp.lt.s32.totalorder %s9, 3
    %p113 = pnand %p111, %p112
    %p114 = pneg %p113
    // Predicated region
    $region9: #{image_captioning_forward.26} parent=5 // pred_check
      _
    $region10: #{image_captioning_forward.26} parent=5 // pred_check_branch
      %116 = sbr.rel (%p113) target = $region12
    $region11: #{image_captioning_forward.26} parent=5 // pred_region
      %s117 = ssub.s32 %s9, 1
      // Predicated region
      $region13: #{image_captioning_forward.26} parent=11 // pred_check
        %p118 = pneg %p56
      $region14: #{image_captioning_forward.26} parent=11 // pred_check_branch
        %120 = sbr.rel (%p118) target = $region16
      $region15: #{image_captioning_forward.26} parent=11 // pred_region
        _
      $region16: #{image_captioning_forward.26} parent=11 // pred_fallthru
        _
      // Predicated region
      $region17: #{image_captioning_forward.26} parent=11 // pred_check
        %p121 = pneg %p77
      $region18: #{image_captioning_forward.26} parent=11 // pred_check_branch
        %123 = sbr.rel (%p121) target = $region20
      $region19: #{image_captioning_forward.26} parent=11 // pred_region
        _
      $region20: #{image_captioning_forward.26} parent=11 // pred_fallthru
        _
    $region12: #{image_captioning_forward.26} parent=5 // pred_fallthru
      _
    %p124 = scmp.lt.s32.totalorder %s9, 2
    // Predicated region
    $region21: #{image_captioning_forward.26} parent=5 // pred_check
      %p125 = pneg %p124
    $region22: #{image_captioning_forward.26} parent=5 // pred_check_branch
      %127 = sbr.rel (%p125) target = $region24
    $region23: #{image_captioning_forward.26} parent=5 // pred_region
      // Predicated region
      $region25: #{image_captioning_forward.26} parent=23 // pred_check
        %p128 = pneg %p29
      $region26: #{image_captioning_forward.26} parent=23 // pred_check_branch
        %130 = sbr.rel (%p128) target = $region28
      $region27: #{image_captioning_forward.26} parent=23 // pred_region
        %p131 = scmp.lt.s32.totalorder %s9, 1
        %s132 = scalar_select %p131, %s9, 1
        %s133 = smul.addr %s132, 54
        %s134 = smul.addr %s133, 8
        %s135 = scalar_lea.vmem %s0, %s134
      $region28: #{image_captioning_forward.26} parent=23 // pred_fallthru
        _
    $region24: #{image_captioning_forward.26} parent=5 // pred_fallthru
      _
    %p136 = scmp.le.s32.totalorder 1, %s9
    %p137 = scmp.lt.s32.totalorder %s9, 3
    %p138 = pnand %p136, %p137
    %p139 = pneg %p138
    // Predicated region
    $region29: #{image_captioning_forward.26} parent=5 // pred_check
      _
    $region30: #{image_captioning_forward.26} parent=5 // pred_check_branch
      %141 = sbr.rel (%p138) target = $region32
    $region31: #{image_captioning_forward.26} parent=5 // pred_region
      %s142 = ssub.s32 %s9, 1
      %p143 = scmp.lt.s32.totalorder %s14, 1
      %s144 = scalar_select %p143, %s14, 1
      %s145 = smul.addr %s144, 54
      %s146 = smul.addr %s145, 8
      %s147 = scalar_lea.vmem %s0, %s146
      %p148 = pneg %p35
      %p149 = pneg %p32
      %p150 = pneg %p56
      %p151 = pneg %p53
      %p152 = pneg %p77
      %p153 = pneg %p74
      %p154 = pneg %p103
      %p155 = pneg %p100
      %p156 = scmp.lt.s32.totalorder %s14, 1
      %s157 = scalar_select %p156, %s14, 1
      %s158 = smul.addr %s157, 32
      %s159 = smul.addr %s158, 4
      %s160 = scalar_lea.vmem %s3, %s159
      %p161 = scmp.lt.s32.totalorder %s14, 1
      %s162 = scalar_select %p161, %s14, 1
      %s163 = smul.addr %s162, 54
      %s164 = smul.addr %s163, 8
      %s165 = scalar_lea.vmem %s0, %s164
      %p166 = scmp.lt.s32.totalorder %s14, 1
      %s167 = scalar_select %p166, %s14, 1
      %s168 = smul.addr %s167, 32
      %s169 = smul.addr %s168, 4
      %s170 = scalar_lea.vmem %s3, %s169
      %v172 = vld [vmem:[%s165] sm:$0xff]
      %v173 = vld [vmem:[%s165 + $0x8] sm:$0xff]
      %v174 = vld [vmem:[%s165 + $0x18] sm:$0xff]
      %v175 = vld [vmem:[%s165 + $0x20] sm:$0xff]
      %v176 = vld [vmem:[%s165 + $0x30] sm:$0xff]
      %v177 = vld [vmem:[%s165 + $0x38] sm:$0xff]
      %v178 = vld [vmem:[%s165 + $0x48] sm:$0xff]
      %v179 = vld [vmem:[%s165 + $0x50] sm:$0xff]
      %v180 = vld [vmem:[%s165 + $0x60] sm:$0xff]
      %v181 = vld [vmem:[%s165 + $0x68] sm:$0xff]
      %v182 = vld [vmem:[%s165 + $0x78] sm:$0xff]
      %v183 = vld [vmem:[%s165 + $0x80] sm:$0xff]
      %v184 = vld [vmem:[%s165 + $0x90] sm:$0xff]
      %v185 = vld [vmem:[%s165 + $0x98] sm:$0xff]
      %v186 = vld [vmem:[%s165 + $0xa8] sm:$0xff]
      %v187 = vld [vmem:[%s165 + $0xb0] sm:$0xff]
      %v188 = vld [vmem:[%s165 + $0xc0] sm:$0xff]
      %v189 = vld [vmem:[%s165 + $0xc8] sm:$0xff]
      %v190 = vld [vmem:[%s165 + $0xd8] sm:$0xff]
      %v191 = vld [vmem:[%s165 + $0xe0] sm:$0xff]
      %v192 = vld [vmem:[%s165 + $0xf0] sm:$0xff]
      %v193 = vld [vmem:[%s165 + $0xf8] sm:$0xff]
      %v194 = vld [vmem:[%s165 + $0x108] sm:$0xff]
      %v195 = vld [vmem:[%s165 + $0x110] sm:$0xff]
      %v196 = vld [vmem:[%s165 + $0x120] sm:$0xff]
      %v197 = vld [vmem:[%s165 + $0x128] sm:$0xff]
      %v198 = vld [vmem:[%s165 + $0x138] sm:$0xff]
      %v199 = vld [vmem:[%s165 + $0x140] sm:$0xff]
      %v200 = vld [vmem:[%s165 + $0x150] sm:$0xff]
      %v201 = vld [vmem:[%s165 + $0x158] sm:$0xff]
      %v202 = vld [vmem:[%s165 + $0x168] sm:$0xff]
      %v203 = vld [vmem:[%s165 + $0x170] sm:$0xff]
      %v204 = vld [vmem:[%s165 + $0x1] sm:$0xff]
      %v205 = vld [vmem:[%s165 + $0x9] sm:$0xff]
      %v206 = vld [vmem:[%s165 + $0x19] sm:$0xff]
      %v207 = vld [vmem:[%s165 + $0x21] sm:$0xff]
      %v208 = vld [vmem:[%s165 + $0x31] sm:$0xff]
      %v209 = vld [vmem:[%s165 + $0x39] sm:$0xff]
      %v210 = vld [vmem:[%s165 + $0x49] sm:$0xff]
      %v211 = vld [vmem:[%s165 + $0x51] sm:$0xff]
      %v212 = vld [vmem:[%s165 + $0x61] sm:$0xff]
      %v213 = vld [vmem:[%s165 + $0x69] sm:$0xff]
      %v214 = vld [vmem:[%s165 + $0x79] sm:$0xff]
      %v215 = vld [vmem:[%s165 + $0x81] sm:$0xff]
      %v216 = vld [vmem:[%s165 + $0x91] sm:$0xff]
      %v217 = vld [vmem:[%s165 + $0x99] sm:$0xff]
      %v218 = vld [vmem:[%s165 + $0xa9] sm:$0xff]
      %v219 = vld [vmem:[%s165 + $0xb1] sm:$0xff]
      %v220 = vld [vmem:[%s165 + $0xc1] sm:$0xff]
      %v221 = vld [vmem:[%s165 + $0xc9] sm:$0xff]
      %v222 = vld [vmem:[%s165 + $0xd9] sm:$0xff]
      %v223 = vld [vmem:[%s165 + $0xe1] sm:$0xff]
      %v224 = vld [vmem:[%s165 + $0xf1] sm:$0xff]
      %v225 = vld [vmem:[%s165 + $0xf9] sm:$0xff]
      %v226 = vld [vmem:[%s165 + $0x109] sm:$0xff]
      %v227 = vld [vmem:[%s165 + $0x111] sm:$0xff]
      %v228 = vld [vmem:[%s165 + $0x121] sm:$0xff]
      %v229 = vld [vmem:[%s165 + $0x129] sm:$0xff]
      %v230 = vld [vmem:[%s165 + $0x139] sm:$0xff]
      %v231 = vld [vmem:[%s165 + $0x141] sm:$0xff]
      %v232 = vld [vmem:[%s165 + $0x151] sm:$0xff]
      %v233 = vld [vmem:[%s165 + $0x159] sm:$0xff]
      %v234 = vld [vmem:[%s165 + $0x169] sm:$0xff]
      %v235 = vld [vmem:[%s165 + $0x171] sm:$0xff]
      %v236 = vld [vmem:[%s165 + $0x2] sm:$0xff]
      %v237 = vld [vmem:[%s165 + $0xa] sm:$0xff]
      %v238 = vld [vmem:[%s165 + $0x1a] sm:$0xff]
      %v239 = vld [vmem:[%s165 + $0x22] sm:$0xff]
      %v240 = vld [vmem:[%s165 + $0x32] sm:$0xff]
      %v241 = vld [vmem:[%s165 + $0x3a] sm:$0xff]
      %v242 = vld [vmem:[%s165 + $0x4a] sm:$0xff]
      %v243 = vld [vmem:[%s165 + $0x52] sm:$0xff]
      %v244 = vld [vmem:[%s165 + $0x62] sm:$0xff]
      %v245 = vld [vmem:[%s165 + $0x6a] sm:$0xff]
      %v246 = vld [vmem:[%s165 + $0x7a] sm:$0xff]
      %v247 = vld [vmem:[%s165 + $0x82] sm:$0xff]
      %v248 = vld [vmem:[%s165 + $0x92] sm:$0xff]
      %v249 = vld [vmem:[%s165 + $0x9a] sm:$0xff]
      %v250 = vld [vmem:[%s165 + $0xaa] sm:$0xff]
      %v251 = vld [vmem:[%s165 + $0xb2] sm:$0xff]
      %v252 = vld [vmem:[%s165 + $0xc2] sm:$0xff]
      %v253 = vld [vmem:[%s165 + $0xca] sm:$0xff]
      %v254 = vld [vmem:[%s165 + $0xda] sm:$0xff]
      %v255 = vld [vmem:[%s165 + $0xe2] sm:$0xff]
      %v256 = vld [vmem:[%s165 + $0xf2] sm:$0xff]
      %v257 = vld [vmem:[%s165 + $0xfa] sm:$0xff]
      %v258 = vld [vmem:[%s165 + $0x10a] sm:$0xff]
      %v259 = vld [vmem:[%s165 + $0x112] sm:$0xff]
      %v260 = vld [vmem:[%s165 + $0x122] sm:$0xff]
      %v261 = vld [vmem:[%s165 + $0x12a] sm:$0xff]
      %v262 = vld [vmem:[%s165 + $0x13a] sm:$0xff]
      %v263 = vld [vmem:[%s165 + $0x142] sm:$0xff]
      %v264 = vld [vmem:[%s165 + $0x152] sm:$0xff]
      %v265 = vld [vmem:[%s165 + $0x15a] sm:$0xff]
      %v266 = vld [vmem:[%s165 + $0x16a] sm:$0xff]
      %v267 = vld [vmem:[%s165 + $0x172] sm:$0xff]
      %s268 = scalar_lea.vmem %s165, 24
      %v269 = vld [vmem:[%s268] sm:$0xff]
      %v270 = vld [vmem:[%s268 + $0x8] sm:$0xff]
      %v271 = vld [vmem:[%s268 + $0x18] sm:$0xff]
      %v272 = vld [vmem:[%s268 + $0x20] sm:$0xff]
      %v273 = vld [vmem:[%s268 + $0x30] sm:$0xff]
      %v274 = vld [vmem:[%s268 + $0x38] sm:$0xff]
      %v275 = vld [vmem:[%s268 + $0x48] sm:$0xff]
      %v276 = vld [vmem:[%s268 + $0x50] sm:$0xff]
      %v277 = vld [vmem:[%s268 + $0x60] sm:$0xff]
      %v278 = vld [vmem:[%s268 + $0x68] sm:$0xff]
      %v279 = vld [vmem:[%s268 + $0x78] sm:$0xff]
      %v280 = vld [vmem:[%s268 + $0x80] sm:$0xff]
      %v281 = vld [vmem:[%s268 + $0x90] sm:$0xff]
      %v282 = vld [vmem:[%s268 + $0x98] sm:$0xff]
      %v283 = vld [vmem:[%s268 + $0xa8] sm:$0xff]
      %v284 = vld [vmem:[%s268 + $0xb0] sm:$0xff]
      %v285 = vld [vmem:[%s268 + $0xc0] sm:$0xff]
      %v286 = vld [vmem:[%s268 + $0xc8] sm:$0xff]
      %v287 = vld [vmem:[%s268 + $0xd8] sm:$0xff]
      %v288 = vld [vmem:[%s268 + $0xe0] sm:$0xff]
      %v289 = vld [vmem:[%s268 + $0xf0] sm:$0xff]
      %v290 = vld [vmem:[%s268 + $0xf8] sm:$0xff]
      %v291 = vld [vmem:[%s268 + $0x108] sm:$0xff]
      %v292 = vld [vmem:[%s268 + $0x110] sm:$0xff]
      %v293 = vld [vmem:[%s268 + $0x120] sm:$0xff]
      %v294 = vld [vmem:[%s268 + $0x128] sm:$0xff]
      %v295 = vld [vmem:[%s268 + $0x138] sm:$0xff]
      %v296 = vld [vmem:[%s268 + $0x140] sm:$0xff]
      %v297 = vld [vmem:[%s268 + $0x150] sm:$0xff]
      %v298 = vld [vmem:[%s268 + $0x158] sm:$0xff]
      %v299 = vld [vmem:[%s268 + $0x168] sm:$0xff]
      %v300 = vld [vmem:[%s268 + $0x170] sm:$0xff]
      %v301 = vld [vmem:[%s268 + $0x1] sm:$0xff]
      %v302 = vld [vmem:[%s268 + $0x9] sm:$0xff]
      %v303 = vld [vmem:[%s268 + $0x19] sm:$0xff]
      %v304 = vld [vmem:[%s268 + $0x21] sm:$0xff]
      %v305 = vld [vmem:[%s268 + $0x31] sm:$0xff]
      %v306 = vld [vmem:[%s268 + $0x39] sm:$0xff]
      %v307 = vld [vmem:[%s268 + $0x49] sm:$0xff]
      %v308 = vld [vmem:[%s268 + $0x51] sm:$0xff]
      %v309 = vld [vmem:[%s268 + $0x61] sm:$0xff]
      %v310 = vld [vmem:[%s268 + $0x69] sm:$0xff]
      %v311 = vld [vmem:[%s268 + $0x79] sm:$0xff]
      %v312 = vld [vmem:[%s268 + $0x81] sm:$0xff]
      %v313 = vld [vmem:[%s268 + $0x91] sm:$0xff]
      %v314 = vld [vmem:[%s268 + $0x99] sm:$0xff]
      %v315 = vld [vmem:[%s268 + $0xa9] sm:$0xff]
      %v316 = vld [vmem:[%s268 + $0xb1] sm:$0xff]
      %v317 = vld [vmem:[%s268 + $0xc1] sm:$0xff]
      %v318 = vld [vmem:[%s268 + $0xc9] sm:$0xff]
      %v319 = vld [vmem:[%s268 + $0xd9] sm:$0xff]
      %v320 = vld [vmem:[%s268 + $0xe1] sm:$0xff]
      %v321 = vld [vmem:[%s268 + $0xf1] sm:$0xff]
      %v322 = vld [vmem:[%s268 + $0xf9] sm:$0xff]
      %v323 = vld [vmem:[%s268 + $0x109] sm:$0xff]
      %v324 = vld [vmem:[%s268 + $0x111] sm:$0xff]
      %v325 = vld [vmem:[%s268 + $0x121] sm:$0xff]
      %v326 = vld [vmem:[%s268 + $0x129] sm:$0xff]
      %v327 = vld [vmem:[%s268 + $0x139] sm:$0xff]
      %v328 = vld [vmem:[%s268 + $0x141] sm:$0xff]
      %v329 = vld [vmem:[%s268 + $0x151] sm:$0xff]
      %v330 = vld [vmem:[%s268 + $0x159] sm:$0xff]
      %v331 = vld [vmem:[%s268 + $0x169] sm:$0xff]
      %v332 = vld [vmem:[%s268 + $0x171] sm:$0xff]
      %v333 = vld [vmem:[%s268 + $0x2] sm:$0xff]
      %v334 = vld [vmem:[%s268 + $0xa] sm:$0xff]
      %v335 = vld [vmem:[%s268 + $0x1a] sm:$0xff]
      %v336 = vld [vmem:[%s268 + $0x22] sm:$0xff]
      %v337 = vld [vmem:[%s268 + $0x32] sm:$0xff]
      %v338 = vld [vmem:[%s268 + $0x3a] sm:$0xff]
      %v339 = vld [vmem:[%s268 + $0x4a] sm:$0xff]
      %v340 = vld [vmem:[%s268 + $0x52] sm:$0xff]
      %v341 = vld [vmem:[%s268 + $0x62] sm:$0xff]
      %v342 = vld [vmem:[%s268 + $0x6a] sm:$0xff]
      %v343 = vld [vmem:[%s268 + $0x7a] sm:$0xff]
      %v344 = vld [vmem:[%s268 + $0x82] sm:$0xff]
      %v345 = vld [vmem:[%s268 + $0x92] sm:$0xff]
      %v346 = vld [vmem:[%s268 + $0x9a] sm:$0xff]
      %v347 = vld [vmem:[%s268 + $0xaa] sm:$0xff]
      %v348 = vld [vmem:[%s268 + $0xb2] sm:$0xff]
      %v349 = vld [vmem:[%s268 + $0xc2] sm:$0xff]
      %v350 = vld [vmem:[%s268 + $0xca] sm:$0xff]
      %v351 = vld [vmem:[%s268 + $0xda] sm:$0xff]
      %v352 = vld [vmem:[%s268 + $0xe2] sm:$0xff]
      %v353 = vld [vmem:[%s268 + $0xf2] sm:$0xff]
      %v354 = vld [vmem:[%s268 + $0xfa] sm:$0xff]
      %v355 = vld [vmem:[%s268 + $0x10a] sm:$0xff]
      %v356 = vld [vmem:[%s268 + $0x112] sm:$0xff]
      %v357 = vld [vmem:[%s268 + $0x122] sm:$0xff]
      %v358 = vld [vmem:[%s268 + $0x12a] sm:$0xff]
      %v359 = vld [vmem:[%s268 + $0x13a] sm:$0xff]
      %v360 = vld [vmem:[%s268 + $0x142] sm:$0xff]
      %v361 = vld [vmem:[%s268 + $0x152] sm:$0xff]
      %v362 = vld [vmem:[%s268 + $0x15a] sm:$0xff]
      %v363 = vld [vmem:[%s268 + $0x16a] sm:$0xff]
      %v364 = vld [vmem:[%s268 + $0x172] sm:$0xff]
      %s365 = scalar_lea.vmem %s165, 48
      %v366 = vld [vmem:[%s365] sm:$0xff]
      %v367 = vld [vmem:[%s365 + $0x8] sm:$0xff]
      %v368 = vld [vmem:[%s365 + $0x18] sm:$0xff]
      %v369 = vld [vmem:[%s365 + $0x20] sm:$0xff]
      %v370 = vld [vmem:[%s365 + $0x30] sm:$0xff]
      %v371 = vld [vmem:[%s365 + $0x38] sm:$0xff]
      %v372 = vld [vmem:[%s365 + $0x48] sm:$0xff]
      %v373 = vld [vmem:[%s365 + $0x50] sm:$0xff]
      %v374 = vld [vmem:[%s365 + $0x60] sm:$0xff]
      %v375 = vld [vmem:[%s365 + $0x68] sm:$0xff]
      %v376 = vld [vmem:[%s365 + $0x78] sm:$0xff]
      %v377 = vld [vmem:[%s365 + $0x80] sm:$0xff]
      %v378 = vld [vmem:[%s365 + $0x90] sm:$0xff]
      %v379 = vld [vmem:[%s365 + $0x98] sm:$0xff]
      %v380 = vld [vmem:[%s365 + $0xa8] sm:$0xff]
      %v381 = vld [vmem:[%s365 + $0xb0] sm:$0xff]
      %v382 = vld [vmem:[%s365 + $0xc0] sm:$0xff]
      %v383 = vld [vmem:[%s365 + $0xc8] sm:$0xff]
      %v384 = vld [vmem:[%s365 + $0xd8] sm:$0xff]
      %v385 = vld [vmem:[%s365 + $0xe0] sm:$0xff]
      %v386 = vld [vmem:[%s365 + $0xf0] sm:$0xff]
      %v387 = vld [vmem:[%s365 + $0xf8] sm:$0xff]
      %v388 = vld [vmem:[%s365 + $0x108] sm:$0xff]
      %v389 = vld [vmem:[%s365 + $0x110] sm:$0xff]
      %v390 = vld [vmem:[%s365 + $0x120] sm:$0xff]
      %v391 = vld [vmem:[%s365 + $0x128] sm:$0xff]
      %v392 = vld [vmem:[%s365 + $0x138] sm:$0xff]
      %v393 = vld [vmem:[%s365 + $0x140] sm:$0xff]
      %v394 = vld [vmem:[%s365 + $0x150] sm:$0xff]
      %v395 = vld [vmem:[%s365 + $0x158] sm:$0xff]
      %v396 = vld [vmem:[%s365 + $0x168] sm:$0xff]
      %v397 = vld [vmem:[%s365 + $0x170] sm:$0xff]
      %v398 = vld [vmem:[%s365 + $0x1] sm:$0xff]
      %v399 = vld [vmem:[%s365 + $0x9] sm:$0xff]
      %v400 = vld [vmem:[%s365 + $0x19] sm:$0xff]
      %v401 = vld [vmem:[%s365 + $0x21] sm:$0xff]
      %v402 = vld [vmem:[%s365 + $0x31] sm:$0xff]
      %v403 = vld [vmem:[%s365 + $0x39] sm:$0xff]
      %v404 = vld [vmem:[%s365 + $0x49] sm:$0xff]
      %v405 = vld [vmem:[%s365 + $0x51] sm:$0xff]
      %v406 = vld [vmem:[%s365 + $0x61] sm:$0xff]
      %v407 = vld [vmem:[%s365 + $0x69] sm:$0xff]
      %v408 = vld [vmem:[%s365 + $0x79] sm:$0xff]
      %v409 = vld [vmem:[%s365 + $0x81] sm:$0xff]
      %v410 = vld [vmem:[%s365 + $0x91] sm:$0xff]
      %v411 = vld [vmem:[%s365 + $0x99] sm:$0xff]
      %v412 = vld [vmem:[%s365 + $0xa9] sm:$0xff]
      %v413 = vld [vmem:[%s365 + $0xb1] sm:$0xff]
      %v414 = vld [vmem:[%s365 + $0xc1] sm:$0xff]
      %v415 = vld [vmem:[%s365 + $0xc9] sm:$0xff]
      %v416 = vld [vmem:[%s365 + $0xd9] sm:$0xff]
      %v417 = vld [vmem:[%s365 + $0xe1] sm:$0xff]
      %v418 = vld [vmem:[%s365 + $0xf1] sm:$0xff]
      %v419 = vld [vmem:[%s365 + $0xf9] sm:$0xff]
      %v420 = vld [vmem:[%s365 + $0x109] sm:$0xff]
      %v421 = vld [vmem:[%s365 + $0x111] sm:$0xff]
      %v422 = vld [vmem:[%s365 + $0x121] sm:$0xff]
      %v423 = vld [vmem:[%s365 + $0x129] sm:$0xff]
      %v424 = vld [vmem:[%s365 + $0x139] sm:$0xff]
      %v425 = vld [vmem:[%s365 + $0x141] sm:$0xff]
      %v426 = vld [vmem:[%s365 + $0x151] sm:$0xff]
      %v427 = vld [vmem:[%s365 + $0x159] sm:$0xff]
      %v428 = vld [vmem:[%s365 + $0x169] sm:$0xff]
      %v429 = vld [vmem:[%s365 + $0x171] sm:$0xff]
      %v430 = vld [vmem:[%s365 + $0x2] sm:$0xff]
      %v431 = vld [vmem:[%s365 + $0xa] sm:$0xff]
      %v432 = vld [vmem:[%s365 + $0x1a] sm:$0xff]
      %v433 = vld [vmem:[%s365 + $0x22] sm:$0xff]
      %v434 = vld [vmem:[%s365 + $0x32] sm:$0xff]
      %v435 = vld [vmem:[%s365 + $0x3a] sm:$0xff]
      %v436 = vld [vmem:[%s365 + $0x4a] sm:$0xff]
      %v437 = vld [vmem:[%s365 + $0x52] sm:$0xff]
      %v438 = vld [vmem:[%s365 + $0x62] sm:$0xff]
      %v439 = vld [vmem:[%s365 + $0x6a] sm:$0xff]
      %v440 = vld [vmem:[%s365 + $0x7a] sm:$0xff]
      %v441 = vld [vmem:[%s365 + $0x82] sm:$0xff]
      %v442 = vld [vmem:[%s365 + $0x92] sm:$0xff]
      %v443 = vld [vmem:[%s365 + $0x9a] sm:$0xff]
      %v444 = vld [vmem:[%s365 + $0xaa] sm:$0xff]
      %v445 = vld [vmem:[%s365 + $0xb2] sm:$0xff]
      %v446 = vld [vmem:[%s365 + $0xc2] sm:$0xff]
      %v447 = vld [vmem:[%s365 + $0xca] sm:$0xff]
      %v448 = vld [vmem:[%s365 + $0xda] sm:$0xff]
      %v449 = vld [vmem:[%s365 + $0xe2] sm:$0xff]
      %v450 = vld [vmem:[%s365 + $0xf2] sm:$0xff]
      %v451 = vld [vmem:[%s365 + $0xfa] sm:$0xff]
      %v452 = vld [vmem:[%s365 + $0x10a] sm:$0xff]
      %v453 = vld [vmem:[%s365 + $0x112] sm:$0xff]
      %v454 = vld [vmem:[%s365 + $0x122] sm:$0xff]
      %v455 = vld [vmem:[%s365 + $0x12a] sm:$0xff]
      %v456 = vld [vmem:[%s365 + $0x13a] sm:$0xff]
      %v457 = vld [vmem:[%s365 + $0x142] sm:$0xff]
      %v458 = vld [vmem:[%s365 + $0x152] sm:$0xff]
      %v459 = vld [vmem:[%s365 + $0x15a] sm:$0xff]
      %v460 = vld [vmem:[%s365 + $0x16a] sm:$0xff]
      %v461 = vld [vmem:[%s365 + $0x172] sm:$0xff]
      %494 = vrot.lane.b32.xlu0 %v204, 3
      %v495 = vpop.permute.xlu0 %494
      %496 = vrot.lane.b32.xlu0 %v205, 3
      %v497 = vpop.permute.xlu0 %496
      %498 = vrot.lane.b32.xlu0 %v206, 3
      %v499 = vpop.permute.xlu0 %498
      %500 = vrot.lane.b32.xlu0 %v207, 3
      %v501 = vpop.permute.xlu0 %500
      %502 = vrot.lane.b32.xlu0 %v208, 3
      %v503 = vpop.permute.xlu0 %502
      %504 = vrot.lane.b32.xlu0 %v209, 3
      %v505 = vpop.permute.xlu0 %504
      %506 = vrot.lane.b32.xlu0 %v210, 3
      %v507 = vpop.permute.xlu0 %506
      %508 = vrot.lane.b32.xlu0 %v211, 3
      %v509 = vpop.permute.xlu0 %508
      %510 = vrot.lane.b32.xlu0 %v212, 3
      %v511 = vpop.permute.xlu0 %510
      %512 = vrot.lane.b32.xlu0 %v213, 3
      %v513 = vpop.permute.xlu0 %512
      %514 = vrot.lane.b32.xlu0 %v214, 3
      %v515 = vpop.permute.xlu0 %514
      %516 = vrot.lane.b32.xlu0 %v215, 3
      %v517 = vpop.permute.xlu0 %516
      %518 = vrot.lane.b32.xlu0 %v216, 3
      %v519 = vpop.permute.xlu0 %518
      %520 = vrot.lane.b32.xlu0 %v217, 3
      %v521 = vpop.permute.xlu0 %520
      %522 = vrot.lane.b32.xlu0 %v218, 3
      %v523 = vpop.permute.xlu0 %522
      %524 = vrot.lane.b32.xlu0 %v219, 3
      %v525 = vpop.permute.xlu0 %524
      %526 = vrot.lane.b32.xlu0 %v220, 3
      %v527 = vpop.permute.xlu0 %526
      %528 = vrot.lane.b32.xlu0 %v221, 3
      %v529 = vpop.permute.xlu0 %528
      %530 = vrot.lane.b32.xlu0 %v222, 3
      %v531 = vpop.permute.xlu0 %530
      %532 = vrot.lane.b32.xlu0 %v223, 3
      %v533 = vpop.permute.xlu0 %532
      %534 = vrot.lane.b32.xlu0 %v224, 3
      %v535 = vpop.permute.xlu0 %534
      %536 = vrot.lane.b32.xlu0 %v225, 3
      %v537 = vpop.permute.xlu0 %536
      %538 = vrot.lane.b32.xlu0 %v226, 3
      %v539 = vpop.permute.xlu0 %538
      %540 = vrot.lane.b32.xlu0 %v227, 3
      %v541 = vpop.permute.xlu0 %540
      %542 = vrot.lane.b32.xlu0 %v228, 3
      %v543 = vpop.permute.xlu0 %542
      %544 = vrot.lane.b32.xlu0 %v229, 3
      %v545 = vpop.permute.xlu0 %544
      %546 = vrot.lane.b32.xlu0 %v230, 3
      %v547 = vpop.permute.xlu0 %546
      %548 = vrot.lane.b32.xlu0 %v231, 3
      %v549 = vpop.permute.xlu0 %548
      %550 = vrot.lane.b32.xlu0 %v232, 3
      %v551 = vpop.permute.xlu0 %550
      %552 = vrot.lane.b32.xlu0 %v233, 3
      %v553 = vpop.permute.xlu0 %552
      %554 = vrot.lane.b32.xlu0 %v234, 3
      %v555 = vpop.permute.xlu0 %554
      %556 = vrot.lane.b32.xlu0 %v235, 3
      %v557 = vpop.permute.xlu0 %556
      %622 = vrot.lane.b32.xlu0 %v236, 6
      %v623 = vpop.permute.xlu0 %622
      %624 = vrot.lane.b32.xlu0 %v237, 6
      %v625 = vpop.permute.xlu0 %624
      %626 = vrot.lane.b32.xlu0 %v238, 6
      %v627 = vpop.permute.xlu0 %626
      %628 = vrot.lane.b32.xlu0 %v239, 6
      %v629 = vpop.permute.xlu0 %628
      %630 = vrot.lane.b32.xlu0 %v240, 6
      %v631 = vpop.permute.xlu0 %630
      %632 = vrot.lane.b32.xlu0 %v241, 6
      %v633 = vpop.permute.xlu0 %632
      %634 = vrot.lane.b32.xlu0 %v242, 6
      %v635 = vpop.permute.xlu0 %634
      %636 = vrot.lane.b32.xlu0 %v243, 6
      %v637 = vpop.permute.xlu0 %636
      %638 = vrot.lane.b32.xlu0 %v244, 6
      %v639 = vpop.permute.xlu0 %638
      %640 = vrot.lane.b32.xlu0 %v245, 6
      %v641 = vpop.permute.xlu0 %640
      %642 = vrot.lane.b32.xlu0 %v246, 6
      %v643 = vpop.permute.xlu0 %642
      %644 = vrot.lane.b32.xlu0 %v247, 6
      %v645 = vpop.permute.xlu0 %644
      %646 = vrot.lane.b32.xlu0 %v248, 6
      %v647 = vpop.permute.xlu0 %646
      %648 = vrot.lane.b32.xlu0 %v249, 6
      %v649 = vpop.permute.xlu0 %648
      %650 = vrot.lane.b32.xlu0 %v250, 6
      %v651 = vpop.permute.xlu0 %650
      %652 = vrot.lane.b32.xlu0 %v251, 6
      %v653 = vpop.permute.xlu0 %652
      %654 = vrot.lane.b32.xlu0 %v252, 6
      %v655 = vpop.permute.xlu0 %654
      %656 = vrot.lane.b32.xlu0 %v253, 6
      %v657 = vpop.permute.xlu0 %656
      %658 = vrot.lane.b32.xlu0 %v254, 6
      %v659 = vpop.permute.xlu0 %658
      %660 = vrot.lane.b32.xlu0 %v255, 6
      %v661 = vpop.permute.xlu0 %660
      %662 = vrot.lane.b32.xlu0 %v256, 6
      %v663 = vpop.permute.xlu0 %662
      %664 = vrot.lane.b32.xlu0 %v257, 6
      %v665 = vpop.permute.xlu0 %664
      %666 = vrot.lane.b32.xlu0 %v258, 6
      %v667 = vpop.permute.xlu0 %666
      %668 = vrot.lane.b32.xlu0 %v259, 6
      %v669 = vpop.permute.xlu0 %668
      %670 = vrot.lane.b32.xlu0 %v260, 6
      %v671 = vpop.permute.xlu0 %670
      %672 = vrot.lane.b32.xlu0 %v261, 6
      %v673 = vpop.permute.xlu0 %672
      %674 = vrot.lane.b32.xlu0 %v262, 6
      %v675 = vpop.permute.xlu0 %674
      %676 = vrot.lane.b32.xlu0 %v263, 6
      %v677 = vpop.permute.xlu0 %676
      %678 = vrot.lane.b32.xlu0 %v264, 6
      %v679 = vpop.permute.xlu0 %678
      %680 = vrot.lane.b32.xlu0 %v265, 6
      %v681 = vpop.permute.xlu0 %680
      %682 = vrot.lane.b32.xlu0 %v266, 6
      %v683 = vpop.permute.xlu0 %682
      %684 = vrot.lane.b32.xlu0 %v267, 6
      %v685 = vpop.permute.xlu0 %684
      %750 = vrot.lane.b32.xlu0 %v269, 9
      %v751 = vpop.permute.xlu0 %750
      %752 = vrot.lane.b32.xlu0 %v270, 9
      %v753 = vpop.permute.xlu0 %752
      %754 = vrot.lane.b32.xlu0 %v271, 9
      %v755 = vpop.permute.xlu0 %754
      %756 = vrot.lane.b32.xlu0 %v272, 9
      %v757 = vpop.permute.xlu0 %756
      %758 = vrot.lane.b32.xlu0 %v273, 9
      %v759 = vpop.permute.xlu0 %758
      %760 = vrot.lane.b32.xlu0 %v274, 9
      %v761 = vpop.permute.xlu0 %760
      %762 = vrot.lane.b32.xlu0 %v275, 9
      %v763 = vpop.permute.xlu0 %762
      %764 = vrot.lane.b32.xlu0 %v276, 9
      %v765 = vpop.permute.xlu0 %764
      %766 = vrot.lane.b32.xlu0 %v277, 9
      %v767 = vpop.permute.xlu0 %766
      %768 = vrot.lane.b32.xlu0 %v278, 9
      %v769 = vpop.permute.xlu0 %768
      %770 = vrot.lane.b32.xlu0 %v279, 9
      %v771 = vpop.permute.xlu0 %770
      %772 = vrot.lane.b32.xlu0 %v280, 9
      %v773 = vpop.permute.xlu0 %772
      %774 = vrot.lane.b32.xlu0 %v281, 9
      %v775 = vpop.permute.xlu0 %774
      %776 = vrot.lane.b32.xlu0 %v282, 9
      %v777 = vpop.permute.xlu0 %776
      %778 = vrot.lane.b32.xlu0 %v283, 9
      %v779 = vpop.permute.xlu0 %778
      %780 = vrot.lane.b32.xlu0 %v284, 9
      %v781 = vpop.permute.xlu0 %780
      %782 = vrot.lane.b32.xlu0 %v285, 9
      %v783 = vpop.permute.xlu0 %782
      %784 = vrot.lane.b32.xlu0 %v286, 9
      %v785 = vpop.permute.xlu0 %784
      %786 = vrot.lane.b32.xlu0 %v287, 9
      %v787 = vpop.permute.xlu0 %786
      %788 = vrot.lane.b32.xlu0 %v288, 9
      %v789 = vpop.permute.xlu0 %788
      %790 = vrot.lane.b32.xlu0 %v289, 9
      %v791 = vpop.permute.xlu0 %790
      %792 = vrot.lane.b32.xlu0 %v290, 9
      %v793 = vpop.permute.xlu0 %792
      %794 = vrot.lane.b32.xlu0 %v291, 9
      %v795 = vpop.permute.xlu0 %794
      %796 = vrot.lane.b32.xlu0 %v292, 9
      %v797 = vpop.permute.xlu0 %796
      %798 = vrot.lane.b32.xlu0 %v293, 9
      %v799 = vpop.permute.xlu0 %798
      %800 = vrot.lane.b32.xlu0 %v294, 9
      %v801 = vpop.permute.xlu0 %800
      %802 = vrot.lane.b32.xlu0 %v295, 9
      %v803 = vpop.permute.xlu0 %802
      %804 = vrot.lane.b32.xlu0 %v296, 9
      %v805 = vpop.permute.xlu0 %804
      %806 = vrot.lane.b32.xlu0 %v297, 9
      %v807 = vpop.permute.xlu0 %806
      %808 = vrot.lane.b32.xlu0 %v298, 9
      %v809 = vpop.permute.xlu0 %808
      %810 = vrot.lane.b32.xlu0 %v299, 9
      %v811 = vpop.permute.xlu0 %810
      %812 = vrot.lane.b32.xlu0 %v300, 9
      %v813 = vpop.permute.xlu0 %812
      %878 = vrot.lane.b32.xlu0 %v301, 12
      %v879 = vpop.permute.xlu0 %878
      %880 = vrot.lane.b32.xlu0 %v302, 12
      %v881 = vpop.permute.xlu0 %880
      %882 = vrot.lane.b32.xlu0 %v303, 12
      %v883 = vpop.permute.xlu0 %882
      %884 = vrot.lane.b32.xlu0 %v304, 12
      %v885 = vpop.permute.xlu0 %884
      %886 = vrot.lane.b32.xlu0 %v305, 12
      %v887 = vpop.permute.xlu0 %886
      %888 = vrot.lane.b32.xlu0 %v306, 12
      %v889 = vpop.permute.xlu0 %888
      %890 = vrot.lane.b32.xlu0 %v307, 12
      %v891 = vpop.permute.xlu0 %890
      %892 = vrot.lane.b32.xlu0 %v308, 12
      %v893 = vpop.permute.xlu0 %892
      %894 = vrot.lane.b32.xlu0 %v309, 12
      %v895 = vpop.permute.xlu0 %894
      %896 = vrot.lane.b32.xlu0 %v310, 12
      %v897 = vpop.permute.xlu0 %896
      %898 = vrot.lane.b32.xlu0 %v311, 12
      %v899 = vpop.permute.xlu0 %898
      %900 = vrot.lane.b32.xlu0 %v312, 12
      %v901 = vpop.permute.xlu0 %900
      %902 = vrot.lane.b32.xlu0 %v313, 12
      %v903 = vpop.permute.xlu0 %902
      %904 = vrot.lane.b32.xlu0 %v314, 12
      %v905 = vpop.permute.xlu0 %904
      %906 = vrot.lane.b32.xlu0 %v315, 12
      %v907 = vpop.permute.xlu0 %906
      %908 = vrot.lane.b32.xlu0 %v316, 12
      %v909 = vpop.permute.xlu0 %908
      %910 = vrot.lane.b32.xlu0 %v317, 12
      %v911 = vpop.permute.xlu0 %910
      %912 = vrot.lane.b32.xlu0 %v318, 12
      %v913 = vpop.permute.xlu0 %912
      %914 = vrot.lane.b32.xlu0 %v319, 12
      %v915 = vpop.permute.xlu0 %914
      %916 = vrot.lane.b32.xlu0 %v320, 12
      %v917 = vpop.permute.xlu0 %916
      %918 = vrot.lane.b32.xlu0 %v321, 12
      %v919 = vpop.permute.xlu0 %918
      %920 = vrot.lane.b32.xlu0 %v322, 12
      %v921 = vpop.permute.xlu0 %920
      %922 = vrot.lane.b32.xlu0 %v323, 12
      %v923 = vpop.permute.xlu0 %922
      %924 = vrot.lane.b32.xlu0 %v324, 12
      %v925 = vpop.permute.xlu0 %924
      %926 = vrot.lane.b32.xlu0 %v325, 12
      %v927 = vpop.permute.xlu0 %926
      %928 = vrot.lane.b32.xlu0 %v326, 12
      %v929 = vpop.permute.xlu0 %928
      %930 = vrot.lane.b32.xlu0 %v327, 12
      %v931 = vpop.permute.xlu0 %930
      %932 = vrot.lane.b32.xlu0 %v328, 12
      %v933 = vpop.permute.xlu0 %932
      %934 = vrot.lane.b32.xlu0 %v329, 12
      %v935 = vpop.permute.xlu0 %934
      %936 = vrot.lane.b32.xlu0 %v330, 12
      %v937 = vpop.permute.xlu0 %936
      %938 = vrot.lane.b32.xlu0 %v331, 12
      %v939 = vpop.permute.xlu0 %938
      %940 = vrot.lane.b32.xlu0 %v332, 12
      %v941 = vpop.permute.xlu0 %940
      %1006 = vrot.lane.b32.xlu0 %v333, 15
      %v1007 = vpop.permute.xlu0 %1006
      %1008 = vrot.lane.b32.xlu0 %v334, 15
      %v1009 = vpop.permute.xlu0 %1008
      %1010 = vrot.lane.b32.xlu0 %v335, 15
      %v1011 = vpop.permute.xlu0 %1010
      %1012 = vrot.lane.b32.xlu0 %v336, 15
      %v1013 = vpop.permute.xlu0 %1012
      %1014 = vrot.lane.b32.xlu0 %v337, 15
      %v1015 = vpop.permute.xlu0 %1014
      %1016 = vrot.lane.b32.xlu0 %v338, 15
      %v1017 = vpop.permute.xlu0 %1016
      %1018 = vrot.lane.b32.xlu0 %v339, 15
      %v1019 = vpop.permute.xlu0 %1018
      %1020 = vrot.lane.b32.xlu0 %v340, 15
      %v1021 = vpop.permute.xlu0 %1020
      %1022 = vrot.lane.b32.xlu0 %v341, 15
      %v1023 = vpop.permute.xlu0 %1022
      %1024 = vrot.lane.b32.xlu0 %v342, 15
      %v1025 = vpop.permute.xlu0 %1024
      %1026 = vrot.lane.b32.xlu0 %v343, 15
      %v1027 = vpop.permute.xlu0 %1026
      %1028 = vrot.lane.b32.xlu0 %v344, 15
      %v1029 = vpop.permute.xlu0 %1028
      %1030 = vrot.lane.b32.xlu0 %v345, 15
      %v1031 = vpop.permute.xlu0 %1030
      %1032 = vrot.lane.b32.xlu0 %v346, 15
      %v1033 = vpop.permute.xlu0 %1032
      %1034 = vrot.lane.b32.xlu0 %v347, 15
      %v1035 = vpop.permute.xlu0 %1034
      %1036 = vrot.lane.b32.xlu0 %v348, 15
      %v1037 = vpop.permute.xlu0 %1036
      %1038 = vrot.lane.b32.xlu0 %v349, 15
      %v1039 = vpop.permute.xlu0 %1038
      %1040 = vrot.lane.b32.xlu0 %v350, 15
      %v1041 = vpop.permute.xlu0 %1040
      %1042 = vrot.lane.b32.xlu0 %v351, 15
      %v1043 = vpop.permute.xlu0 %1042
      %1044 = vrot.lane.b32.xlu0 %v352, 15
      %v1045 = vpop.permute.xlu0 %1044
      %1046 = vrot.lane.b32.xlu0 %v353, 15
      %v1047 = vpop.permute.xlu0 %1046
      %1048 = vrot.lane.b32.xlu0 %v354, 15
      %v1049 = vpop.permute.xlu0 %1048
      %1050 = vrot.lane.b32.xlu0 %v355, 15
      %v1051 = vpop.permute.xlu0 %1050
      %1052 = vrot.lane.b32.xlu0 %v356, 15
      %v1053 = vpop.permute.xlu0 %1052
      %1054 = vrot.lane.b32.xlu0 %v357, 15
      %v1055 = vpop.permute.xlu0 %1054
      %1056 = vrot.lane.b32.xlu0 %v358, 15
      %v1057 = vpop.permute.xlu0 %1056
      %1058 = vrot.lane.b32.xlu0 %v359, 15
      %v1059 = vpop.permute.xlu0 %1058
      %1060 = vrot.lane.b32.xlu0 %v360, 15
      %v1061 = vpop.permute.xlu0 %1060
      %1062 = vrot.lane.b32.xlu0 %v361, 15
      %v1063 = vpop.permute.xlu0 %1062
      %1064 = vrot.lane.b32.xlu0 %v362, 15
      %v1065 = vpop.permute.xlu0 %1064
      %1066 = vrot.lane.b32.xlu0 %v363, 15
      %v1067 = vpop.permute.xlu0 %1066
      %1068 = vrot.lane.b32.xlu0 %v364, 15
      %v1069 = vpop.permute.xlu0 %1068
      %1134 = vrot.lane.b32.xlu0 %v366, 18
      %v1135 = vpop.permute.xlu0 %1134
      %1136 = vrot.lane.b32.xlu0 %v367, 18
      %v1137 = vpop.permute.xlu0 %1136
      %1138 = vrot.lane.b32.xlu0 %v368, 18
      %v1139 = vpop.permute.xlu0 %1138
      %1140 = vrot.lane.b32.xlu0 %v369, 18
      %v1141 = vpop.permute.xlu0 %1140
      %1142 = vrot.lane.b32.xlu0 %v370, 18
      %v1143 = vpop.permute.xlu0 %1142
      %1144 = vrot.lane.b32.xlu0 %v371, 18
      %v1145 = vpop.permute.xlu0 %1144
      %1146 = vrot.lane.b32.xlu0 %v372, 18
      %v1147 = vpop.permute.xlu0 %1146
      %1148 = vrot.lane.b32.xlu0 %v373, 18
      %v1149 = vpop.permute.xlu0 %1148
      %1150 = vrot.lane.b32.xlu0 %v374, 18
      %v1151 = vpop.permute.xlu0 %1150
      %1152 = vrot.lane.b32.xlu0 %v375, 18
      %v1153 = vpop.permute.xlu0 %1152
      %1154 = vrot.lane.b32.xlu0 %v376, 18
      %v1155 = vpop.permute.xlu0 %1154
      %1156 = vrot.lane.b32.xlu0 %v377, 18
      %v1157 = vpop.permute.xlu0 %1156
      %1158 = vrot.lane.b32.xlu0 %v378, 18
      %v1159 = vpop.permute.xlu0 %1158
      %1160 = vrot.lane.b32.xlu0 %v379, 18
      %v1161 = vpop.permute.xlu0 %1160
      %1162 = vrot.lane.b32.xlu0 %v380, 18
      %v1163 = vpop.permute.xlu0 %1162
      %1164 = vrot.lane.b32.xlu0 %v381, 18
      %v1165 = vpop.permute.xlu0 %1164
      %1166 = vrot.lane.b32.xlu0 %v382, 18
      %v1167 = vpop.permute.xlu0 %1166
      %1168 = vrot.lane.b32.xlu0 %v383, 18
      %v1169 = vpop.permute.xlu0 %1168
      %1170 = vrot.lane.b32.xlu0 %v384, 18
      %v1171 = vpop.permute.xlu0 %1170
      %1172 = vrot.lane.b32.xlu0 %v385, 18
      %v1173 = vpop.permute.xlu0 %1172
      %1174 = vrot.lane.b32.xlu0 %v386, 18
      %v1175 = vpop.permute.xlu0 %1174
      %1176 = vrot.lane.b32.xlu0 %v387, 18
      %v1177 = vpop.permute.xlu0 %1176
      %1178 = vrot.lane.b32.xlu0 %v388, 18
      %v1179 = vpop.permute.xlu0 %1178
      %1180 = vrot.lane.b32.xlu0 %v389, 18
      %v1181 = vpop.permute.xlu0 %1180
      %1182 = vrot.lane.b32.xlu0 %v390, 18
      %v1183 = vpop.permute.xlu0 %1182
      %1184 = vrot.lane.b32.xlu0 %v391, 18
      %v1185 = vpop.permute.xlu0 %1184
      %1186 = vrot.lane.b32.xlu0 %v392, 18
      %v1187 = vpop.permute.xlu0 %1186
      %1188 = vrot.lane.b32.xlu0 %v393, 18
      %v1189 = vpop.permute.xlu0 %1188
      %1190 = vrot.lane.b32.xlu0 %v394, 18
      %v1191 = vpop.permute.xlu0 %1190
      %1192 = vrot.lane.b32.xlu0 %v395, 18
      %v1193 = vpop.permute.xlu0 %1192
      %1194 = vrot.lane.b32.xlu0 %v396, 18
      %v1195 = vpop.permute.xlu0 %1194
      %1196 = vrot.lane.b32.xlu0 %v397, 18
      %v1197 = vpop.permute.xlu0 %1196
      %1262 = vrot.lane.b32.xlu0 %v398, 21
      %v1263 = vpop.permute.xlu0 %1262
      %1264 = vrot.lane.b32.xlu0 %v399, 21
      %v1265 = vpop.permute.xlu0 %1264
      %1266 = vrot.lane.b32.xlu0 %v400, 21
      %v1267 = vpop.permute.xlu0 %1266
      %1268 = vrot.lane.b32.xlu0 %v401, 21
      %v1269 = vpop.permute.xlu0 %1268
      %1270 = vrot.lane.b32.xlu0 %v402, 21
      %v1271 = vpop.permute.xlu0 %1270
      %1272 = vrot.lane.b32.xlu0 %v403, 21
      %v1273 = vpop.permute.xlu0 %1272
      %1274 = vrot.lane.b32.xlu0 %v404, 21
      %v1275 = vpop.permute.xlu0 %1274
      %1276 = vrot.lane.b32.xlu0 %v405, 21
      %v1277 = vpop.permute.xlu0 %1276
      %1278 = vrot.lane.b32.xlu0 %v406, 21
      %v1279 = vpop.permute.xlu0 %1278
      %1280 = vrot.lane.b32.xlu0 %v407, 21
      %v1281 = vpop.permute.xlu0 %1280
      %1282 = vrot.lane.b32.xlu0 %v408, 21
      %v1283 = vpop.permute.xlu0 %1282
      %1284 = vrot.lane.b32.xlu0 %v409, 21
      %v1285 = vpop.permute.xlu0 %1284
      %1286 = vrot.lane.b32.xlu0 %v410, 21
      %v1287 = vpop.permute.xlu0 %1286
      %1288 = vrot.lane.b32.xlu0 %v411, 21
      %v1289 = vpop.permute.xlu0 %1288
      %1290 = vrot.lane.b32.xlu0 %v412, 21
      %v1291 = vpop.permute.xlu0 %1290
      %1292 = vrot.lane.b32.xlu0 %v413, 21
      %v1293 = vpop.permute.xlu0 %1292
      %1294 = vrot.lane.b32.xlu0 %v414, 21
      %v1295 = vpop.permute.xlu0 %1294
      %1296 = vrot.lane.b32.xlu0 %v415, 21
      %v1297 = vpop.permute.xlu0 %1296
      %1298 = vrot.lane.b32.xlu0 %v416, 21
      %v1299 = vpop.permute.xlu0 %1298
      %1300 = vrot.lane.b32.xlu0 %v417, 21
      %v1301 = vpop.permute.xlu0 %1300
      %1302 = vrot.lane.b32.xlu0 %v418, 21
      %v1303 = vpop.permute.xlu0 %1302
      %1304 = vrot.lane.b32.xlu0 %v419, 21
      %v1305 = vpop.permute.xlu0 %1304
      %1306 = vrot.lane.b32.xlu0 %v420, 21
      %v1307 = vpop.permute.xlu0 %1306
      %1308 = vrot.lane.b32.xlu0 %v421, 21
      %v1309 = vpop.permute.xlu0 %1308
      %1310 = vrot.lane.b32.xlu0 %v422, 21
      %v1311 = vpop.permute.xlu0 %1310
      %1312 = vrot.lane.b32.xlu0 %v423, 21
      %v1313 = vpop.permute.xlu0 %1312
      %1314 = vrot.lane.b32.xlu0 %v424, 21
      %v1315 = vpop.permute.xlu0 %1314
      %1316 = vrot.lane.b32.xlu0 %v425, 21
      %v1317 = vpop.permute.xlu0 %1316
      %1318 = vrot.lane.b32.xlu0 %v426, 21
      %v1319 = vpop.permute.xlu0 %1318
      %1320 = vrot.lane.b32.xlu0 %v427, 21
      %v1321 = vpop.permute.xlu0 %1320
      %1322 = vrot.lane.b32.xlu0 %v428, 21
      %v1323 = vpop.permute.xlu0 %1322
      %1324 = vrot.lane.b32.xlu0 %v429, 21
      %v1325 = vpop.permute.xlu0 %1324
      %1390 = vrot.lane.b32.xlu0 %v430, 24
      %v1391 = vpop.permute.xlu0 %1390
      %1392 = vrot.lane.b32.xlu0 %v431, 24
      %v1393 = vpop.permute.xlu0 %1392
      %1394 = vrot.lane.b32.xlu0 %v432, 24
      %v1395 = vpop.permute.xlu0 %1394
      %1396 = vrot.lane.b32.xlu0 %v433, 24
      %v1397 = vpop.permute.xlu0 %1396
      %1398 = vrot.lane.b32.xlu0 %v434, 24
      %v1399 = vpop.permute.xlu0 %1398
      %1400 = vrot.lane.b32.xlu0 %v435, 24
      %v1401 = vpop.permute.xlu0 %1400
      %1402 = vrot.lane.b32.xlu0 %v436, 24
      %v1403 = vpop.permute.xlu0 %1402
      %1404 = vrot.lane.b32.xlu0 %v437, 24
      %v1405 = vpop.permute.xlu0 %1404
      %1406 = vrot.lane.b32.xlu0 %v438, 24
      %v1407 = vpop.permute.xlu0 %1406
      %1408 = vrot.lane.b32.xlu0 %v439, 24
      %v1409 = vpop.permute.xlu0 %1408
      %1410 = vrot.lane.b32.xlu0 %v440, 24
      %v1411 = vpop.permute.xlu0 %1410
      %1412 = vrot.lane.b32.xlu0 %v441, 24
      %v1413 = vpop.permute.xlu0 %1412
      %1414 = vrot.lane.b32.xlu0 %v442, 24
      %v1415 = vpop.permute.xlu0 %1414
      %1416 = vrot.lane.b32.xlu0 %v443, 24
      %v1417 = vpop.permute.xlu0 %1416
      %1418 = vrot.lane.b32.xlu0 %v444, 24
      %v1419 = vpop.permute.xlu0 %1418
      %1420 = vrot.lane.b32.xlu0 %v445, 24
      %v1421 = vpop.permute.xlu0 %1420
      %1422 = vrot.lane.b32.xlu0 %v446, 24
      %v1423 = vpop.permute.xlu0 %1422
      %1424 = vrot.lane.b32.xlu0 %v447, 24
      %v1425 = vpop.permute.xlu0 %1424
      %1426 = vrot.lane.b32.xlu0 %v448, 24
      %v1427 = vpop.permute.xlu0 %1426
      %1428 = vrot.lane.b32.xlu0 %v449, 24
      %v1429 = vpop.permute.xlu0 %1428
      %1430 = vrot.lane.b32.xlu0 %v450, 24
      %v1431 = vpop.permute.xlu0 %1430
      %1432 = vrot.lane.b32.xlu0 %v451, 24
      %v1433 = vpop.permute.xlu0 %1432
      %1434 = vrot.lane.b32.xlu0 %v452, 24
      %v1435 = vpop.permute.xlu0 %1434
      %1436 = vrot.lane.b32.xlu0 %v453, 24
      %v1437 = vpop.permute.xlu0 %1436
      %1438 = vrot.lane.b32.xlu0 %v454, 24
      %v1439 = vpop.permute.xlu0 %1438
      %1440 = vrot.lane.b32.xlu0 %v455, 24
      %v1441 = vpop.permute.xlu0 %1440
      %1442 = vrot.lane.b32.xlu0 %v456, 24
      %v1443 = vpop.permute.xlu0 %1442
      %1444 = vrot.lane.b32.xlu0 %v457, 24
      %v1445 = vpop.permute.xlu0 %1444
      %1446 = vrot.lane.b32.xlu0 %v458, 24
      %v1447 = vpop.permute.xlu0 %1446
      %1448 = vrot.lane.b32.xlu0 %v459, 24
      %v1449 = vpop.permute.xlu0 %1448
      %1450 = vrot.lane.b32.xlu0 %v460, 24
      %v1451 = vpop.permute.xlu0 %1450
      %1452 = vrot.lane.b32.xlu0 %v461, 24
      %v1453 = vpop.permute.xlu0 %1452
      %vm1486 = vcmask 23552
      %v1487 = vsel %vm1486, %v172, %v495
      %v1488 = vsel %vm1486, %v173, %v497
      %v1489 = vsel %vm1486, %v174, %v499
      %v1490 = vsel %vm1486, %v175, %v501
      %v1491 = vsel %vm1486, %v176, %v503
      %v1492 = vsel %vm1486, %v177, %v505
      %v1493 = vsel %vm1486, %v178, %v507
      %v1494 = vsel %vm1486, %v179, %v509
      %v1495 = vsel %vm1486, %v180, %v511
      %v1496 = vsel %vm1486, %v181, %v513
      %v1497 = vsel %vm1486, %v182, %v515
      %v1498 = vsel %vm1486, %v183, %v517
      %v1499 = vsel %vm1486, %v184, %v519
      %v1500 = vsel %vm1486, %v185, %v521
      %v1501 = vsel %vm1486, %v186, %v523
      %v1502 = vsel %vm1486, %v187, %v525
      %v1503 = vsel %vm1486, %v188, %v527
      %v1504 = vsel %vm1486, %v189, %v529
      %v1505 = vsel %vm1486, %v190, %v531
      %v1506 = vsel %vm1486, %v191, %v533
      %v1507 = vsel %vm1486, %v192, %v535
      %v1508 = vsel %vm1486, %v193, %v537
      %v1509 = vsel %vm1486, %v194, %v539
      %v1510 = vsel %vm1486, %v195, %v541
      %v1511 = vsel %vm1486, %v196, %v543
      %v1512 = vsel %vm1486, %v197, %v545
      %v1513 = vsel %vm1486, %v198, %v547
      %v1514 = vsel %vm1486, %v199, %v549
      %v1515 = vsel %vm1486, %v200, %v551
      %v1516 = vsel %vm1486, %v201, %v553
      %v1517 = vsel %vm1486, %v202, %v555
      %v1518 = vsel %vm1486, %v203, %v557
      %vm1519 = vcmask 48128
      %v1520 = vsel %vm1519, %v1487, %v623
      %v1521 = vsel %vm1519, %v1488, %v625
      %v1522 = vsel %vm1519, %v1489, %v627
      %v1523 = vsel %vm1519, %v1490, %v629
      %v1524 = vsel %vm1519, %v1491, %v631
      %v1525 = vsel %vm1519, %v1492, %v633
      %v1526 = vsel %vm1519, %v1493, %v635
      %v1527 = vsel %vm1519, %v1494, %v637
      %v1528 = vsel %vm1519, %v1495, %v639
      %v1529 = vsel %vm1519, %v1496, %v641
      %v1530 = vsel %vm1519, %v1497, %v643
      %v1531 = vsel %vm1519, %v1498, %v645
      %v1532 = vsel %vm1519, %v1499, %v647
      %v1533 = vsel %vm1519, %v1500, %v649
      %v1534 = vsel %vm1519, %v1501, %v651
      %v1535 = vsel %vm1519, %v1502, %v653
      %v1536 = vsel %vm1519, %v1503, %v655
      %v1537 = vsel %vm1519, %v1504, %v657
      %v1538 = vsel %vm1519, %v1505, %v659
      %v1539 = vsel %vm1519, %v1506, %v661
      %v1540 = vsel %vm1519, %v1507, %v663
      %v1541 = vsel %vm1519, %v1508, %v665
      %v1542 = vsel %vm1519, %v1509, %v667
      %v1543 = vsel %vm1519, %v1510, %v669
      %v1544 = vsel %vm1519, %v1511, %v671
      %v1545 = vsel %vm1519, %v1512, %v673
      %v1546 = vsel %vm1519, %v1513, %v675
      %v1547 = vsel %vm1519, %v1514, %v677
      %v1548 = vsel %vm1519, %v1515, %v679
      %v1549 = vsel %vm1519, %v1516, %v681
      %v1550 = vsel %vm1519, %v1517, %v683
      %v1551 = vsel %vm1519, %v1518, %v685
      %vm1552 = vcmask 72704
      %v1553 = vsel %vm1552, %v1520, %v751
      %v1554 = vsel %vm1552, %v1521, %v753
      %v1555 = vsel %vm1552, %v1522, %v755
      %v1556 = vsel %vm1552, %v1523, %v757
      %v1557 = vsel %vm1552, %v1524, %v759
      %v1558 = vsel %vm1552, %v1525, %v761
      %v1559 = vsel %vm1552, %v1526, %v763
      %v1560 = vsel %vm1552, %v1527, %v765
      %v1561 = vsel %vm1552, %v1528, %v767
      %v1562 = vsel %vm1552, %v1529, %v769
      %v1563 = vsel %vm1552, %v1530, %v771
      %v1564 = vsel %vm1552, %v1531, %v773
      %v1565 = vsel %vm1552, %v1532, %v775
      %v1566 = vsel %vm1552, %v1533, %v777
      %v1567 = vsel %vm1552, %v1534, %v779
      %v1568 = vsel %vm1552, %v1535, %v781
      %v1569 = vsel %vm1552, %v1536, %v783
      %v1570 = vsel %vm1552, %v1537, %v785
      %v1571 = vsel %vm1552, %v1538, %v787
      %v1572 = vsel %vm1552, %v1539, %v789
      %v1573 = vsel %vm1552, %v1540, %v791
      %v1574 = vsel %vm1552, %v1541, %v793
      %v1575 = vsel %vm1552, %v1542, %v795
      %v1576 = vsel %vm1552, %v1543, %v797
      %v1577 = vsel %vm1552, %v1544, %v799
      %v1578 = vsel %vm1552, %v1545, %v801
      %v1579 = vsel %vm1552, %v1546, %v803
      %v1580 = vsel %vm1552, %v1547, %v805
      %v1581 = vsel %vm1552, %v1548, %v807
      %v1582 = vsel %vm1552, %v1549, %v809
      %v1583 = vsel %vm1552, %v1550, %v811
      %v1584 = vsel %vm1552, %v1551, %v813
      %vm1585 = vcmask 97280
      %v1586 = vsel %vm1585, %v1553, %v879
      %v1587 = vsel %vm1585, %v1554, %v881
      %v1588 = vsel %vm1585, %v1555, %v883
      %v1589 = vsel %vm1585, %v1556, %v885
      %v1590 = vsel %vm1585, %v1557, %v887
      %v1591 = vsel %vm1585, %v1558, %v889
      %v1592 = vsel %vm1585, %v1559, %v891
      %v1593 = vsel %vm1585, %v1560, %v893
      %v1594 = vsel %vm1585, %v1561, %v895
      %v1595 = vsel %vm1585, %v1562, %v897
      %v1596 = vsel %vm1585, %v1563, %v899
      %v1597 = vsel %vm1585, %v1564, %v901
      %v1598 = vsel %vm1585, %v1565, %v903
      %v1599 = vsel %vm1585, %v1566, %v905
      %v1600 = vsel %vm1585, %v1567, %v907
      %v1601 = vsel %vm1585, %v1568, %v909
      %v1602 = vsel %vm1585, %v1569, %v911
      %v1603 = vsel %vm1585, %v1570, %v913
      %v1604 = vsel %vm1585, %v1571, %v915
      %v1605 = vsel %vm1585, %v1572, %v917
      %v1606 = vsel %vm1585, %v1573, %v919
      %v1607 = vsel %vm1585, %v1574, %v921
      %v1608 = vsel %vm1585, %v1575, %v923
      %v1609 = vsel %vm1585, %v1576, %v925
      %v1610 = vsel %vm1585, %v1577, %v927
      %v1611 = vsel %vm1585, %v1578, %v929
      %v1612 = vsel %vm1585, %v1579, %v931
      %v1613 = vsel %vm1585, %v1580, %v933
      %v1614 = vsel %vm1585, %v1581, %v935
      %v1615 = vsel %vm1585, %v1582, %v937
      %v1616 = vsel %vm1585, %v1583, %v939
      %v1617 = vsel %vm1585, %v1584, %v941
      %vm1618 = vcmask 121856
      %v1619 = vsel %vm1618, %v1586, %v1007
      %v1620 = vsel %vm1618, %v1587, %v1009
      %v1621 = vsel %vm1618, %v1588, %v1011
      %v1622 = vsel %vm1618, %v1589, %v1013
      %v1623 = vsel %vm1618, %v1590, %v1015
      %v1624 = vsel %vm1618, %v1591, %v1017
      %v1625 = vsel %vm1618, %v1592, %v1019
      %v1626 = vsel %vm1618, %v1593, %v1021
      %v1627 = vsel %vm1618, %v1594, %v1023
      %v1628 = vsel %vm1618, %v1595, %v1025
      %v1629 = vsel %vm1618, %v1596, %v1027
      %v1630 = vsel %vm1618, %v1597, %v1029
      %v1631 = vsel %vm1618, %v1598, %v1031
      %v1632 = vsel %vm1618, %v1599, %v1033
      %v1633 = vsel %vm1618, %v1600, %v1035
      %v1634 = vsel %vm1618, %v1601, %v1037
      %v1635 = vsel %vm1618, %v1602, %v1039
      %v1636 = vsel %vm1618, %v1603, %v1041
      %v1637 = vsel %vm1618, %v1604, %v1043
      %v1638 = vsel %vm1618, %v1605, %v1045
      %v1639 = vsel %vm1618, %v1606, %v1047
      %v1640 = vsel %vm1618, %v1607, %v1049
      %v1641 = vsel %vm1618, %v1608, %v1051
      %v1642 = vsel %vm1618, %v1609, %v1053
      %v1643 = vsel %vm1618, %v1610, %v1055
      %v1644 = vsel %vm1618, %v1611, %v1057
      %v1645 = vsel %vm1618, %v1612, %v1059
      %v1646 = vsel %vm1618, %v1613, %v1061
      %v1647 = vsel %vm1618, %v1614, %v1063
      %v1648 = vsel %vm1618, %v1615, %v1065
      %v1649 = vsel %vm1618, %v1616, %v1067
      %v1650 = vsel %vm1618, %v1617, %v1069
      %vm1651 = vcmask 146432
      %v1652 = vsel %vm1651, %v1619, %v1135
      %v1653 = vsel %vm1651, %v1620, %v1137
      %v1654 = vsel %vm1651, %v1621, %v1139
      %v1655 = vsel %vm1651, %v1622, %v1141
      %v1656 = vsel %vm1651, %v1623, %v1143
      %v1657 = vsel %vm1651, %v1624, %v1145
      %v1658 = vsel %vm1651, %v1625, %v1147
      %v1659 = vsel %vm1651, %v1626, %v1149
      %v1660 = vsel %vm1651, %v1627, %v1151
      %v1661 = vsel %vm1651, %v1628, %v1153
      %v1662 = vsel %vm1651, %v1629, %v1155
      %v1663 = vsel %vm1651, %v1630, %v1157
      %v1664 = vsel %vm1651, %v1631, %v1159
      %v1665 = vsel %vm1651, %v1632, %v1161
      %v1666 = vsel %vm1651, %v1633, %v1163
      %v1667 = vsel %vm1651, %v1634, %v1165
      %v1668 = vsel %vm1651, %v1635, %v1167
      %v1669 = vsel %vm1651, %v1636, %v1169
      %v1670 = vsel %vm1651, %v1637, %v1171
      %v1671 = vsel %vm1651, %v1638, %v1173
      %v1672 = vsel %vm1651, %v1639, %v1175
      %v1673 = vsel %vm1651, %v1640, %v1177
      %v1674 = vsel %vm1651, %v1641, %v1179
      %v1675 = vsel %vm1651, %v1642, %v1181
      %v1676 = vsel %vm1651, %v1643, %v1183
      %v1677 = vsel %vm1651, %v1644, %v1185
      %v1678 = vsel %vm1651, %v1645, %v1187
      %v1679 = vsel %vm1651, %v1646, %v1189
      %v1680 = vsel %vm1651, %v1647, %v1191
      %v1681 = vsel %vm1651, %v1648, %v1193
      %v1682 = vsel %vm1651, %v1649, %v1195
      %v1683 = vsel %vm1651, %v1650, %v1197
      %vm1684 = vcmask 171008
      %v1685 = vsel %vm1684, %v1652, %v1263
      %v1686 = vsel %vm1684, %v1653, %v1265
      %v1687 = vsel %vm1684, %v1654, %v1267
      %v1688 = vsel %vm1684, %v1655, %v1269
      %v1689 = vsel %vm1684, %v1656, %v1271
      %v1690 = vsel %vm1684, %v1657, %v1273
      %v1691 = vsel %vm1684, %v1658, %v1275
      %v1692 = vsel %vm1684, %v1659, %v1277
      %v1693 = vsel %vm1684, %v1660, %v1279
      %v1694 = vsel %vm1684, %v1661, %v1281
      %v1695 = vsel %vm1684, %v1662, %v1283
      %v1696 = vsel %vm1684, %v1663, %v1285
      %v1697 = vsel %vm1684, %v1664, %v1287
      %v1698 = vsel %vm1684, %v1665, %v1289
      %v1699 = vsel %vm1684, %v1666, %v1291
      %v1700 = vsel %vm1684, %v1667, %v1293
      %v1701 = vsel %vm1684, %v1668, %v1295
      %v1702 = vsel %vm1684, %v1669, %v1297
      %v1703 = vsel %vm1684, %v1670, %v1299
      %v1704 = vsel %vm1684, %v1671, %v1301
      %v1705 = vsel %vm1684, %v1672, %v1303
      %v1706 = vsel %vm1684, %v1673, %v1305
      %v1707 = vsel %vm1684, %v1674, %v1307
      %v1708 = vsel %vm1684, %v1675, %v1309
      %v1709 = vsel %vm1684, %v1676, %v1311
      %v1710 = vsel %vm1684, %v1677, %v1313
      %v1711 = vsel %vm1684, %v1678, %v1315
      %v1712 = vsel %vm1684, %v1679, %v1317
      %v1713 = vsel %vm1684, %v1680, %v1319
      %v1714 = vsel %vm1684, %v1681, %v1321
      %v1715 = vsel %vm1684, %v1682, %v1323
      %v1716 = vsel %vm1684, %v1683, %v1325
      %vm1717 = vcmask 195584
      %v1718 = vsel %vm1717, %v1685, %v1391
      %v1719 = vsel %vm1717, %v1686, %v1393
      %v1720 = vsel %vm1717, %v1687, %v1395
      %v1721 = vsel %vm1717, %v1688, %v1397
      %v1722 = vsel %vm1717, %v1689, %v1399
      %v1723 = vsel %vm1717, %v1690, %v1401
      %v1724 = vsel %vm1717, %v1691, %v1403
      %v1725 = vsel %vm1717, %v1692, %v1405
      %v1726 = vsel %vm1717, %v1693, %v1407
      %v1727 = vsel %vm1717, %v1694, %v1409
      %v1728 = vsel %vm1717, %v1695, %v1411
      %v1729 = vsel %vm1717, %v1696, %v1413
      %v1730 = vsel %vm1717, %v1697, %v1415
      %v1731 = vsel %vm1717, %v1698, %v1417
      %v1732 = vsel %vm1717, %v1699, %v1419
      %v1733 = vsel %vm1717, %v1700, %v1421
      %v1734 = vsel %vm1717, %v1701, %v1423
      %v1735 = vsel %vm1717, %v1702, %v1425
      %v1736 = vsel %vm1717, %v1703, %v1427
      %v1737 = vsel %vm1717, %v1704, %v1429
      %v1738 = vsel %vm1717, %v1705, %v1431
      %v1739 = vsel %vm1717, %v1706, %v1433
      %v1740 = vsel %vm1717, %v1707, %v1435
      %v1741 = vsel %vm1717, %v1708, %v1437
      %v1742 = vsel %vm1717, %v1709, %v1439
      %v1743 = vsel %vm1717, %v1710, %v1441
      %v1744 = vsel %vm1717, %v1711, %v1443
      %v1745 = vsel %vm1717, %v1712, %v1445
      %v1746 = vsel %vm1717, %v1713, %v1447
      %v1747 = vsel %vm1717, %v1714, %v1449
      %v1748 = vsel %vm1717, %v1715, %v1451
      %v1749 = vsel %vm1717, %v1716, %v1453
      %v1750 = vpack.c.bf16 %v1719, %v1718
      %v1751 = vpack.c.bf16 %v1721, %v1720
      %v1752 = vpack.c.bf16 %v1723, %v1722
      %v1753 = vpack.c.bf16 %v1725, %v1724
      %v1754 = vpack.c.bf16 %v1727, %v1726
      %v1755 = vpack.c.bf16 %v1729, %v1728
      %v1756 = vpack.c.bf16 %v1731, %v1730
      %v1757 = vpack.c.bf16 %v1733, %v1732
      %v1758 = vpack.c.bf16 %v1735, %v1734
      %v1759 = vpack.c.bf16 %v1737, %v1736
      %v1760 = vpack.c.bf16 %v1739, %v1738
      %v1761 = vpack.c.bf16 %v1741, %v1740
      %v1762 = vpack.c.bf16 %v1743, %v1742
      %v1763 = vpack.c.bf16 %v1745, %v1744
      %v1764 = vpack.c.bf16 %v1747, %v1746
      %v1765 = vpack.c.bf16 %v1749, %v1748
      %v1766 = vld [vmem:[%s1] sm:$0xf]
      %v1767 = vld [vmem:[%s1 + $0x4] sm:$0xf]
      %v1768 = vld [vmem:[%s1 + $0x8] sm:$0xf]
      %v1769 = vld [vmem:[%s1 + $0xc] sm:$0x3]
      %v1770 = vld [vmem:[%s2] sm:$0x1]
      %v1772 = vlaneseq
      %v1773 = vshrl.u32 %v1772, 7
      %v1774 = vsub.s32 0, %v1773
      %v1775 = vrot.slane %v1770, %v1774
      %v1781 = vunpack.c.l.b16 %v1766
      %v1782 = vunpack.c.l.b16 %v1767
      %v1783 = vunpack.c.l.b16 %v1768
      %v1784 = vunpack.c.l.b16 %v1769
      %v1785 = vpack.c.b16 %v1782, %v1781
      %v1786 = vpack.c.b16 %v1784, %v1783
      %vm1788 = vcmask 220160
      %v1790 = vsel %vm1788, %v1750, 0
      %v1793 = vsel %vm1788, %v1751, 0
      %v1796 = vsel %vm1788, %v1752, 0
      %v1799 = vsel %vm1788, %v1753, 0
      %v1802 = vsel %vm1788, %v1754, 0
      %v1805 = vsel %vm1788, %v1755, 0
      %v1808 = vsel %vm1788, %v1756, 0
      %v1811 = vsel %vm1788, %v1757, 0
      %v1814 = vsel %vm1788, %v1758, 0
      %v1817 = vsel %vm1788, %v1759, 0
      %v1820 = vsel %vm1788, %v1760, 0
      %v1823 = vsel %vm1788, %v1761, 0
      %v1826 = vsel %vm1788, %v1762, 0
      %v1829 = vsel %vm1788, %v1763, 0
      %v1832 = vsel %vm1788, %v1764, 0
      %v1835 = vsel %vm1788, %v1765, 0
      %vm1837 = vcmask 1044480
      %vm1838 = vcmask 1045504
      %v1839 = vsel %vm1837, 4294967295, 65535
      %v1840 = vsel %vm1838, %v1839, 0
      %v1842 = vand.u32 %v1786, %v1840
      %1844 = vmatprep.subr.bf16.mxu0 0
      %1845 = vmatpush1.bf16.msra.mxu0 %v1785
      %1846 = vmatprep.subr.bf16.mxu0 0
      %1847 = vmatpush1.bf16.msra.mxu0 %v1842
      %1848 = vmatprep.subr.bf16.mxu0 0
      %1849 = vmatpush1.bf16.msra.mxu0 0
      %1850 = vmatprep.subr.bf16.mxu0 0
      %1851 = vmatpush1.bf16.msra.mxu0 0
      %1852 = vmatprep.subr.bf16.mxu0 0
      %1853 = vmatpush1.bf16.msra.mxu0 0
      %1854 = vmatprep.subr.bf16.mxu0 0
      %1855 = vmatpush1.bf16.msra.mxu0 0
      %1856 = vmatprep.subr.bf16.mxu0 0
      %1857 = vmatpush1.bf16.msra.mxu0 0
      %1858 = vmatprep.subr.bf16.mxu0 0
      %1859 = vmatpush1.bf16.msra.mxu0 0
      %1860 = vmatprep.subr.bf16.mxu0 0
      %1861 = vmatpush1.bf16.msra.mxu0 0
      %1862 = vmatprep.subr.bf16.mxu0 0
      %1863 = vmatpush1.bf16.msra.mxu0 0
      %1864 = vmatprep.subr.bf16.mxu0 0
      %1865 = vmatpush1.bf16.msra.mxu0 0
      %1866 = vmatprep.subr.bf16.mxu0 0
      %1867 = vmatpush1.bf16.msra.mxu0 0
      %1868 = vmatprep.subr.bf16.mxu0 0
      %1869 = vmatpush1.bf16.msra.mxu0 0
      %1870 = vmatprep.subr.bf16.mxu0 0
      %1871 = vmatpush1.bf16.msra.mxu0 0
      %1872 = vmatprep.subr.bf16.mxu0 0
      %1873 = vmatpush1.bf16.msra.mxu0 0
      %1874 = vmatprep.subr.bf16.mxu0 0
      %1875 = vmatpush1.bf16.msra.mxu0 0
      %1876 = vmatprep.mubr.bf16.mxu0 0
      %1877 = vmatmul.mubr.bf16.gmra.mrb[0].mxu0 %v1790
      %v1878 = vpop.f32.mrb[0].mxu0
      %v1879 = vadd.f32 %v1775, %v1878
      %v1880 = vpop.f32.mrb[0].mxu0
      %v1881 = vpop.f32.mrb[0].mxu0
      %v1882 = vadd.f32 %v1775, %v1881
      %v1883 = vpop.f32.mrb[0].mxu0
      %1884 = vmatprep.mubr.bf16.mxu0 0
      %1885 = vmatmul.mubr.bf16.gmra.mrb[0].mxu0 %v1793
      %v1886 = vpop.f32.mrb[0].mxu0
      %v1887 = vadd.f32 %v1775, %v1886
      %v1888 = vpop.f32.mrb[0].mxu0
      %v1889 = vpop.f32.mrb[0].mxu0
      %v1890 = vadd.f32 %v1775, %v1889
      %v1891 = vpop.f32.mrb[0].mxu0
      %1892 = vmatprep.mubr.bf16.mxu0 0
      %1893 = vmatmul.mubr.bf16.gmra.mrb[0].mxu0 %v1796
      %v1894 = vpop.f32.mrb[0].mxu0
      %v1895 = vadd.f32 %v1775, %v1894
      %v1896 = vpop.f32.mrb[0].mxu0
      %v1897 = vpop.f32.mrb[0].mxu0
      %v1898 = vadd.f32 %v1775, %v1897
      %v1899 = vpop.f32.mrb[0].mxu0
      %1900 = vmatprep.mubr.bf16.mxu0 0
      %1901 = vmatmul.mubr.bf16.gmra.mrb[0].mxu0 %v1799
      %v1902 = vpop.f32.mrb[0].mxu0
      %v1903 = vadd.f32 %v1775, %v1902
      %v1904 = vpop.f32.mrb[0].mxu0
      %v1905 = vpop.f32.mrb[0].mxu0
      %v1906 = vadd.f32 %v1775, %v1905
      %v1907 = vpop.f32.mrb[0].mxu0
      %1908 = vmatprep.mubr.bf16.mxu0 0
      %1909 = vmatmul.mubr.bf16.gmra.mrb[0].mxu0 %v1802
      %v1910 = vpop.f32.mrb[0].mxu0
      %v1911 = vadd.f32 %v1775, %v1910
      %v1912 = vpop.f32.mrb[0].mxu0
      %v1913 = vpop.f32.mrb[0].mxu0
      %v1914 = vadd.f32 %v1775, %v1913
      %v1915 = vpop.f32.mrb[0].mxu0
      %1916 = vmatprep.mubr.bf16.mxu0 0
      %1917 = vmatmul.mubr.bf16.gmra.mrb[0].mxu0 %v1805
      %v1918 = vpop.f32.mrb[0].mxu0
      %v1919 = vadd.f32 %v1775, %v1918
      %v1920 = vpop.f32.mrb[0].mxu0
      %v1921 = vpop.f32.mrb[0].mxu0
      %v1922 = vadd.f32 %v1775, %v1921
      %v1923 = vpop.f32.mrb[0].mxu0
      %1924 = vmatprep.mubr.bf16.mxu0 0
      %1925 = vmatmul.mubr.bf16.gmra.mrb[0].mxu0 %v1808
      %v1926 = vpop.f32.mrb[0].mxu0
      %v1927 = vadd.f32 %v1775, %v1926
      %v1928 = vpop.f32.mrb[0].mxu0
      %v1929 = vpop.f32.mrb[0].mxu0
      %v1930 = vadd.f32 %v1775, %v1929
      %v1931 = vpop.f32.mrb[0].mxu0
      %1932 = vmatprep.mubr.bf16.mxu0 0
      %1933 = vmatmul.mubr.bf16.gmra.mrb[0].mxu0 %v1811
      %v1934 = vpop.f32.mrb[0].mxu0
      %v1935 = vadd.f32 %v1775, %v1934
      %v1936 = vpop.f32.mrb[0].mxu0
      %v1937 = vpop.f32.mrb[0].mxu0
      %v1938 = vadd.f32 %v1775, %v1937
      %v1939 = vpop.f32.mrb[0].mxu0
      %1940 = vmatprep.mubr.bf16.mxu0 0
      %1941 = vmatmul.mubr.bf16.gmra.mrb[0].mxu0 %v1814
      %v1942 = vpop.f32.mrb[0].mxu0
      %v1943 = vadd.f32 %v1775, %v1942
      %v1944 = vpop.f32.mrb[0].mxu0
      %v1945 = vpop.f32.mrb[0].mxu0
      %v1946 = vadd.f32 %v1775, %v1945
      %v1947 = vpop.f32.mrb[0].mxu0
      %1948 = vmatprep.mubr.bf16.mxu0 0
      %1949 = vmatmul.mubr.bf16.gmra.mrb[0].mxu0 %v1817
      %v1950 = vpop.f32.mrb[0].mxu0
      %v1951 = vadd.f32 %v1775, %v1950
      %v1952 = vpop.f32.mrb[0].mxu0
      %v1953 = vpop.f32.mrb[0].mxu0
      %v1954 = vadd.f32 %v1775, %v1953
      %v1955 = vpop.f32.mrb[0].mxu0
      %1956 = vmatprep.mubr.bf16.mxu0 0
      %1957 = vmatmul.mubr.bf16.gmra.mrb[0].mxu0 %v1820
      %v1958 = vpop.f32.mrb[0].mxu0
      %v1959 = vadd.f32 %v1775, %v1958
      %v1960 = vpop.f32.mrb[0].mxu0
      %v1961 = vpop.f32.mrb[0].mxu0
      %v1962 = vadd.f32 %v1775, %v1961
      %v1963 = vpop.f32.mrb[0].mxu0
      %1964 = vmatprep.mubr.bf16.mxu0 0
      %1965 = vmatmul.mubr.bf16.gmra.mrb[0].mxu0 %v1823
      %v1966 = vpop.f32.mrb[0].mxu0
      %v1967 = vadd.f32 %v1775, %v1966
      %v1968 = vpop.f32.mrb[0].mxu0
      %v1969 = vpop.f32.mrb[0].mxu0
      %v1970 = vadd.f32 %v1775, %v1969
      %v1971 = vpop.f32.mrb[0].mxu0
      %1972 = vmatprep.mubr.bf16.mxu0 0
      %1973 = vmatmul.mubr.bf16.gmra.mrb[0].mxu0 %v1826
      %v1974 = vpop.f32.mrb[0].mxu0
      %v1975 = vadd.f32 %v1775, %v1974
      %v1976 = vpop.f32.mrb[0].mxu0
      %v1977 = vpop.f32.mrb[0].mxu0
      %v1978 = vadd.f32 %v1775, %v1977
      %v1979 = vpop.f32.mrb[0].mxu0
      %1980 = vmatprep.mubr.bf16.mxu0 0
      %1981 = vmatmul.mubr.bf16.gmra.mrb[0].mxu0 %v1829
      %v1982 = vpop.f32.mrb[0].mxu0
      %v1983 = vadd.f32 %v1775, %v1982
      %v1984 = vpop.f32.mrb[0].mxu0
      %v1985 = vpop.f32.mrb[0].mxu0
      %v1986 = vadd.f32 %v1775, %v1985
      %v1987 = vpop.f32.mrb[0].mxu0
      %1988 = vmatprep.mubr.bf16.mxu0 0
      %1989 = vmatmul.mubr.bf16.gmra.mrb[0].mxu0 %v1832
      %v1990 = vpop.f32.mrb[0].mxu0
      %v1991 = vadd.f32 %v1775, %v1990
      %v1992 = vpop.f32.mrb[0].mxu0
      %v1993 = vpop.f32.mrb[0].mxu0
      %v1994 = vadd.f32 %v1775, %v1993
      %v1995 = vpop.f32.mrb[0].mxu0
      %1996 = vmatprep.mubr.bf16.mxu0 0
      %1997 = vmatmul.mubr.bf16.gmra.mrb[0].mxu0 %v1835
      %v1998 = vpop.f32.mrb[0].mxu0
      %v1999 = vadd.f32 %v1775, %v1998
      %v2000 = vpop.f32.mrb[0].mxu0
      %v2001 = vpop.f32.mrb[0].mxu0
      %v2002 = vadd.f32 %v1775, %v2001
      %v2003 = vpop.f32.mrb[0].mxu0
      %2004 = vdwg.mxu0
      %v2005 = vmax.f32 %v1879, 0.0
      %v2006 = vmax.f32 %v1882, 0.0
      %v2007 = vmax.f32 %v1887, 0.0
      %v2008 = vmax.f32 %v1890, 0.0
      %v2009 = vmax.f32 %v1895, 0.0
      %v2010 = vmax.f32 %v1898, 0.0
      %v2011 = vmax.f32 %v1903, 0.0
      %v2012 = vmax.f32 %v1906, 0.0
      %v2013 = vmax.f32 %v1911, 0.0
      %v2014 = vmax.f32 %v1914, 0.0
      %v2015 = vmax.f32 %v1919, 0.0
      %v2016 = vmax.f32 %v1922, 0.0
      %v2017 = vmax.f32 %v1927, 0.0
      %v2018 = vmax.f32 %v1930, 0.0
      %v2019 = vmax.f32 %v1935, 0.0
      %v2020 = vmax.f32 %v1938, 0.0
      %v2021 = vmax.f32 %v1943, 0.0
      %v2022 = vmax.f32 %v1946, 0.0
      %v2023 = vmax.f32 %v1951, 0.0
      %v2024 = vmax.f32 %v1954, 0.0
      %v2025 = vmax.f32 %v1959, 0.0
      %v2026 = vmax.f32 %v1962, 0.0
      %v2027 = vmax.f32 %v1967, 0.0
      %v2028 = vmax.f32 %v1970, 0.0
      %v2029 = vmax.f32 %v1975, 0.0
      %v2030 = vmax.f32 %v1978, 0.0
      %v2031 = vmax.f32 %v1983, 0.0
      %v2032 = vmax.f32 %v1986, 0.0
      %v2033 = vmax.f32 %v1991, 0.0
      %v2034 = vmax.f32 %v1994, 0.0
      %v2035 = vmax.f32 %v1999, 0.0
      %v2036 = vmax.f32 %v2002, 0.0
      %v2037 = vpack.c.bf16 %v2006, %v2005
      %v2038 = vpack.c.bf16 %v2008, %v2007
      %v2039 = vpack.c.bf16 %v2010, %v2009
      %v2040 = vpack.c.bf16 %v2012, %v2011
      %v2041 = vpack.c.bf16 %v2014, %v2013
      %v2042 = vpack.c.bf16 %v2016, %v2015
      %v2043 = vpack.c.bf16 %v2018, %v2017
      %v2044 = vpack.c.bf16 %v2020, %v2019
      %v2045 = vpack.c.bf16 %v2022, %v2021
      %v2046 = vpack.c.bf16 %v2024, %v2023
      %v2047 = vpack.c.bf16 %v2026, %v2025
      %v2048 = vpack.c.bf16 %v2028, %v2027
      %v2049 = vpack.c.bf16 %v2030, %v2029
      %v2050 = vpack.c.bf16 %v2032, %v2031
      %v2051 = vpack.c.bf16 %v2034, %v2033
      %v2052 = vpack.c.bf16 %v2036, %v2035
      %v2069 = vunpack.c.l.b16 %v2037
      %v2070 = vunpack.c.h.b16 %v2037
      %v2071 = vunpack.c.l.b16 %v2038
      %v2072 = vunpack.c.h.b16 %v2038
      %v2073 = vunpack.c.l.b16 %v2039
      %v2074 = vunpack.c.h.b16 %v2039
      %v2075 = vunpack.c.l.b16 %v2040
      %v2076 = vunpack.c.h.b16 %v2040
      %v2077 = vunpack.c.l.b16 %v2041
      %v2078 = vunpack.c.h.b16 %v2041
      %v2079 = vunpack.c.l.b16 %v2042
      %v2080 = vunpack.c.h.b16 %v2042
      %v2081 = vunpack.c.l.b16 %v2043
      %v2082 = vunpack.c.h.b16 %v2043
      %v2083 = vunpack.c.l.b16 %v2044
      %v2084 = vunpack.c.h.b16 %v2044
      %v2085 = vunpack.c.l.b16 %v2045
      %v2086 = vunpack.c.h.b16 %v2045
      %v2087 = vunpack.c.l.b16 %v2046
      %v2088 = vunpack.c.h.b16 %v2046
      %v2089 = vunpack.c.l.b16 %v2047
      %v2090 = vunpack.c.h.b16 %v2047
      %v2091 = vunpack.c.l.b16 %v2048
      %v2092 = vunpack.c.h.b16 %v2048
      %v2093 = vunpack.c.l.b16 %v2049
      %v2094 = vunpack.c.h.b16 %v2049
      %v2095 = vunpack.c.l.b16 %v2050
      %v2096 = vunpack.c.h.b16 %v2050
      %v2097 = vunpack.c.l.b16 %v2051
      %v2098 = vunpack.c.h.b16 %v2051
      %v2099 = vunpack.c.l.b16 %v2052
      %v2100 = vunpack.c.h.b16 %v2052
      %v2101 = vpack.c.b16 %v2069, %v2069
      %v2102 = vpack.c.b16 %v2070, %v2070
      %v2103 = vpack.c.b16 %v2071, %v2071
      %v2104 = vpack.c.b16 %v2072, %v2072
      %v2105 = vpack.c.b16 %v2073, %v2073
      %v2106 = vpack.c.b16 %v2074, %v2074
      %v2107 = vpack.c.b16 %v2075, %v2075
      %v2108 = vpack.c.b16 %v2076, %v2076
      %v2109 = vpack.c.b16 %v2077, %v2077
      %v2110 = vpack.c.b16 %v2078, %v2078
      %v2111 = vpack.c.b16 %v2079, %v2079
      %v2112 = vpack.c.b16 %v2080, %v2080
      %v2113 = vpack.c.b16 %v2081, %v2081
      %v2114 = vpack.c.b16 %v2082, %v2082
      %v2115 = vpack.c.b16 %v2083, %v2083
      %v2116 = vpack.c.b16 %v2084, %v2084
      %v2117 = vpack.c.b16 %v2085, %v2085
      %v2118 = vpack.c.b16 %v2086, %v2086
      %v2119 = vpack.c.b16 %v2087, %v2087
      %v2120 = vpack.c.b16 %v2088, %v2088
      %v2121 = vpack.c.b16 %v2089, %v2089
      %v2122 = vpack.c.b16 %v2090, %v2090
      %v2123 = vpack.c.b16 %v2091, %v2091
      %v2124 = vpack.c.b16 %v2092, %v2092
      %v2125 = vpack.c.b16 %v2093, %v2093
      %v2126 = vpack.c.b16 %v2094, %v2094
      %v2127 = vpack.c.b16 %v2095, %v2095
      %v2128 = vpack.c.b16 %v2096, %v2096
      %v2129 = vpack.c.b16 %v2097, %v2097
      %v2130 = vpack.c.b16 %v2098, %v2098
      %v2131 = vpack.c.b16 %v2099, %v2099
      %v2132 = vpack.c.b16 %v2100, %v2100
      %vm2165 = vcmask 60416
      %2166 = vst.msk [vmem:[%s170] sm:$0xf] %vm2165, %v2101
      %2167 = vst.msk [vmem:[%s170 + $0x4] sm:$0xf] %vm2165, %v2102
      %2168 = vst.msk [vmem:[%s170 + $0x8] sm:$0xf] %vm2165, %v2103
      %2169 = vst.msk [vmem:[%s170 + $0xc] sm:$0xf] %vm2165, %v2104
      %2170 = vst.msk [vmem:[%s170 + $0x10] sm:$0xf] %vm2165, %v2105
      %2171 = vst.msk [vmem:[%s170 + $0x14] sm:$0xf] %vm2165, %v2106
      %2172 = vst.msk [vmem:[%s170 + $0x18] sm:$0xf] %vm2165, %v2107
      %2173 = vst.msk [vmem:[%s170 + $0x1c] sm:$0xf] %vm2165, %v2108
      %2174 = vst.msk [vmem:[%s170 + $0x20] sm:$0xf] %vm2165, %v2109
      %2175 = vst.msk [vmem:[%s170 + $0x24] sm:$0xf] %vm2165, %v2110
      %2176 = vst.msk [vmem:[%s170 + $0x28] sm:$0xf] %vm2165, %v2111
      %2177 = vst.msk [vmem:[%s170 + $0x2c] sm:$0xf] %vm2165, %v2112
      %2178 = vst.msk [vmem:[%s170 + $0x30] sm:$0xf] %vm2165, %v2113
      %2179 = vst.msk [vmem:[%s170 + $0x34] sm:$0xf] %vm2165, %v2114
      %2180 = vst.msk [vmem:[%s170 + $0x38] sm:$0xf] %vm2165, %v2115
      %2181 = vst.msk [vmem:[%s170 + $0x3c] sm:$0xf] %vm2165, %v2116
      %2182 = vst.msk [vmem:[%s170 + $0x40] sm:$0xf] %vm2165, %v2117
      %2183 = vst.msk [vmem:[%s170 + $0x44] sm:$0xf] %vm2165, %v2118
      %2184 = vst.msk [vmem:[%s170 + $0x48] sm:$0xf] %vm2165, %v2119
      %2185 = vst.msk [vmem:[%s170 + $0x4c] sm:$0xf] %vm2165, %v2120
      %2186 = vst.msk [vmem:[%s170 + $0x50] sm:$0xf] %vm2165, %v2121
      %2187 = vst.msk [vmem:[%s170 + $0x54] sm:$0xf] %vm2165, %v2122
      %2188 = vst.msk [vmem:[%s170 + $0x58] sm:$0xf] %vm2165, %v2123
      %2189 = vst.msk [vmem:[%s170 + $0x5c] sm:$0xf] %vm2165, %v2124
      %2190 = vst.msk [vmem:[%s170 + $0x60] sm:$0xf] %vm2165, %v2125
      %2191 = vst.msk [vmem:[%s170 + $0x64] sm:$0xf] %vm2165, %v2126
      %2192 = vst.msk [vmem:[%s170 + $0x68] sm:$0xf] %vm2165, %v2127
      %2193 = vst.msk [vmem:[%s170 + $0x6c] sm:$0xf] %vm2165, %v2128
      %2194 = vst.msk [vmem:[%s170 + $0x70] sm:$0xf] %vm2165, %v2129
      %2195 = vst.msk [vmem:[%s170 + $0x74] sm:$0xf] %vm2165, %v2130
      %2196 = vst.msk [vmem:[%s170 + $0x78] sm:$0xf] %vm2165, %v2131
      %2197 = vst.msk [vmem:[%s170 + $0x7c] sm:$0xf] %vm2165, %v2132
      %p2198 = scmp.lt.s32.totalorder %s14, 1
      %s2199 = scalar_select %p2198, %s14, 1
      %s2200 = smul.addr %s2199, 32
      %s2201 = smul.addr %s2200, 4
      %s2202 = scalar_lea.vmem %s3, %s2201
      // Predicated region
      $region33: #{image_captioning_forward.26} parent=31 // pred_check
        %p2203 = pneg %p100
      $region34: #{image_captioning_forward.26} parent=31 // pred_check_branch
        %2205 = sbr.rel (%p2203) target = $region36
      $region35: #{image_captioning_forward.26} parent=31 // pred_region
        _
      $region36: #{image_captioning_forward.26} parent=31 // pred_fallthru
        _
    $region32: #{image_captioning_forward.26} parent=5 // pred_fallthru
      _
    %p2206 = scmp.le.s32.totalorder 2, %s9
    // Predicated region
    $region37: #{image_captioning_forward.26} parent=5 // pred_check
      %p2207 = pneg %p2206
    $region38: #{image_captioning_forward.26} parent=5 // pred_check_branch
      %2209 = sbr.rel (%p2207) target = $region40
    $region39: #{image_captioning_forward.26} parent=5 // pred_region
      %s2210 = ssub.s32 %s9, 2
      // Predicated region
      $region41: #{image_captioning_forward.26} parent=39 // pred_check
        %p2211 = pneg %p106
      $region42: #{image_captioning_forward.26} parent=39 // pred_check_branch
        %2213 = sbr.rel (%p2211) target = $region44
      $region43: #{image_captioning_forward.26} parent=39 // pred_region
        %p2214 = scmp.lt.s32.totalorder %s15, 1
        %s2215 = scalar_select %p2214, %s15, 1
        %s2216 = smul.addr %s2215, 32
        %s2217 = smul.addr %s2216, 4
        %s2218 = scalar_lea.vmem %s3, %s2217
      $region44: #{image_captioning_forward.26} parent=39 // pred_fallthru
        _
    $region40: #{image_captioning_forward.26} parent=5 // pred_fallthru
      _
  $region6: #{image_captioning_forward.26} parent=0 // loop_footer
    %s13 = sadd.s32 1, %s9
  $region7: #{image_captioning_forward.26} parent=0 // loop_footer_branch
    %8 = sbr.rel target = $region3
  $region8: #{image_captioning_forward.26} parent=0 // loop_exit
    _

// kernel: image_captioning_forward.34
$region0: #{image_captioning_forward.34}
  #allocation0 [shape = 'u32[]', space=smem, size = 0x4, offset = 0x4, fixed_abs, tag = 'smem constant byte address 0x4 - core index']
  #allocation1 [shape = 'u32[144,128]{1,0:T(1,128)}', space=vmem, size = 0x12000, scoped, tag = 'internal scratch']
  %s0 = inlined_call_operand.vmem [shape: bf16[32,32], index: 0, kind: input, shape index: {}]
  %s1 = inlined_call_operand.vmem [shape: bf16[32,64], index: 1, kind: input, shape index: {}]
  %s2 = inlined_call_operand.vmem [shape: f32[1,64], index: 2, kind: input, shape index: {}]
  %s3 = inlined_call_operand.vmem [shape: bf16[32,64], index: 3, kind: output, shape index: {}]
  %s4 = sld [smem:[#allocation0]]
  $region22: #{image_captioning_forward.34} parent=0
    _
  %s6 = ssub.s32 1, %s4
  %s7 = scalar_select 0, %s6, %s4
  // Predicated region
  $region2: #{image_captioning_forward.34} parent=0 // pred_check
    _
  $region3: #{image_captioning_forward.34} parent=0 // pred_check_branch
    %9 = sbr.rel (0) target = $region5
  $region4: #{image_captioning_forward.34} parent=0 // pred_region
    _
  $region5: #{image_captioning_forward.34} parent=0 // pred_fallthru
    _
  // Predicated region
  $region6: #{image_captioning_forward.34} parent=0 // pred_check
    _
  $region7: #{image_captioning_forward.34} parent=0 // pred_check_branch
    %11 = sbr.rel (0) target = $region9
  $region8: #{image_captioning_forward.34} parent=0 // pred_region
    _
  $region9: #{image_captioning_forward.34} parent=0 // pred_fallthru
    _
  // Predicated region
  $region10: #{image_captioning_forward.34} parent=0 // pred_check
    _
  $region11: #{image_captioning_forward.34} parent=0 // pred_check_branch
    %13 = sbr.rel (0) target = $region13
  $region12: #{image_captioning_forward.34} parent=0 // pred_region
    _
  $region13: #{image_captioning_forward.34} parent=0 // pred_fallthru
    _
  %v15 = vld [vmem:[%s0] sm:$0xf]
  %v16 = vld [vmem:[%s0 + $0x4] sm:$0xf]
  %v17 = vld [vmem:[%s0 + $0x8] sm:$0xf]
  %v18 = vld [vmem:[%s0 + $0xc] sm:$0xf]
  %v19 = vld [vmem:[%s1] sm:$0xf]
  %v20 = vld [vmem:[%s1 + $0x4] sm:$0xf]
  %v21 = vld [vmem:[%s1 + $0x8] sm:$0xf]
  %v22 = vld [vmem:[%s1 + $0xc] sm:$0xf]
  %v23 = vld [vmem:[%s2] sm:$0x1]
  %v25 = vlaneseq
  %v26 = vshrl.u32 %v25, 7
  %v27 = vsub.s32 0, %v26
  %v28 = vrot.slane %v23, %v27
  %v34 = vunpack.c.l.b16 %v15
  %v35 = vunpack.c.l.b16 %v16
  %v36 = vunpack.c.l.b16 %v17
  %v37 = vunpack.c.l.b16 %v18
  %v38 = vpack.c.b16 %v35, %v34
  %v39 = vpack.c.b16 %v37, %v36
  %v44 = vunpack.c.l.b16 %v19
  %v45 = vunpack.c.l.b16 %v20
  %v46 = vunpack.c.l.b16 %v21
  %v47 = vunpack.c.l.b16 %v22
  %v48 = vpack.c.b16 %v45, %v44
  %v49 = vpack.c.b16 %v47, %v46
  %vm52 = vcmask 261120
  %v54 = vsel %vm52, %v38, 0
  %v57 = vsel %vm52, %v39, 0
  %59 = vmatprep.subr.bf16.mxu0 0
  %60 = vmatpush1.bf16.msra.mxu0 %v48
  %61 = vmatprep.subr.bf16.mxu0 0
  %62 = vmatpush1.bf16.msra.mxu0 %v49
  %63 = vmatprep.subr.bf16.mxu0 0
  %64 = vmatpush1.bf16.msra.mxu0 0
  %65 = vmatprep.subr.bf16.mxu0 0
  %66 = vmatpush1.bf16.msra.mxu0 0
  %67 = vmatprep.subr.bf16.mxu0 0
  %68 = vmatpush1.bf16.msra.mxu0 0
  %69 = vmatprep.subr.bf16.mxu0 0
  %70 = vmatpush1.bf16.msra.mxu0 0
  %71 = vmatprep.subr.bf16.mxu0 0
  %72 = vmatpush1.bf16.msra.mxu0 0
  %73 = vmatprep.subr.bf16.mxu0 0
  %74 = vmatpush1.bf16.msra.mxu0 0
  %75 = vmatprep.subr.bf16.mxu0 0
  %76 = vmatpush1.bf16.msra.mxu0 0
  %77 = vmatprep.subr.bf16.mxu0 0
  %78 = vmatpush1.bf16.msra.mxu0 0
  %79 = vmatprep.subr.bf16.mxu0 0
  %80 = vmatpush1.bf16.msra.mxu0 0
  %81 = vmatprep.subr.bf16.mxu0 0
  %82 = vmatpush1.bf16.msra.mxu0 0
  %83 = vmatprep.subr.bf16.mxu0 0
  %84 = vmatpush1.bf16.msra.mxu0 0
  %85 = vmatprep.subr.bf16.mxu0 0
  %86 = vmatpush1.bf16.msra.mxu0 0
  %87 = vmatprep.subr.bf16.mxu0 0
  %88 = vmatpush1.bf16.msra.mxu0 0
  %89 = vmatprep.subr.bf16.mxu0 0
  %90 = vmatpush1.bf16.msra.mxu0 0
  %91 = vmatprep.mubr.bf16.mxu0 0
  %92 = vmatmul.mubr.bf16.gmra.mrb[0].mxu0 %v54
  %v93 = vpop.f32.mrb[0].mxu0
  %v94 = vadd.f32 %v28, %v93
  %v95 = vpop.f32.mrb[0].mxu0
  %v96 = vpop.f32.mrb[0].mxu0
  %v97 = vadd.f32 %v28, %v96
  %v98 = vpop.f32.mrb[0].mxu0
  %99 = vmatprep.mubr.bf16.mxu0 0
  %100 = vmatmul.mubr.bf16.gmra.mrb[0].mxu0 %v57
  %v101 = vpop.f32.mrb[0].mxu0
  %v102 = vadd.f32 %v28, %v101
  %v103 = vpop.f32.mrb[0].mxu0
  %v104 = vpop.f32.mrb[0].mxu0
  %v105 = vadd.f32 %v28, %v104
  %v106 = vpop.f32.mrb[0].mxu0
  %107 = vdwg.mxu0
  %v108 = vpack.c.bf16 %v97, %v94
  %v109 = vpack.c.bf16 %v105, %v102
  %v112 = vunpack.c.l.b16 %v108
  %v113 = vunpack.c.h.b16 %v108
  %v114 = vunpack.c.l.b16 %v109
  %v115 = vunpack.c.h.b16 %v109
  %v116 = vpack.c.b16 %v112, %v112
  %v117 = vpack.c.b16 %v113, %v113
  %v118 = vpack.c.b16 %v114, %v114
  %v119 = vpack.c.b16 %v115, %v115
  %vm124 = vcmask 519168
  %125 = vst.msk [vmem:[%s3] sm:$0xf] %vm124, %v116
  %126 = vst.msk [vmem:[%s3 + $0x4] sm:$0xf] %vm124, %v117
  %127 = vst.msk [vmem:[%s3 + $0x8] sm:$0xf] %vm124, %v118
  %128 = vst.msk [vmem:[%s3 + $0xc] sm:$0xf] %vm124, %v119
  // Predicated region
  $region14: #{image_captioning_forward.34} parent=0 // pred_check
    _
  $region15: #{image_captioning_forward.34} parent=0 // pred_check_branch
    %130 = sbr.rel (0) target = $region17
  $region16: #{image_captioning_forward.34} parent=0 // pred_region
    _
  $region17: #{image_captioning_forward.34} parent=0 // pred_fallthru
    _
  // Predicated region
  $region18: #{image_captioning_forward.34} parent=0 // pred_check
    _
  $region19: #{image_captioning_forward.34} parent=0 // pred_check_branch
    %132 = sbr.rel (0) target = $region21
  $region20: #{image_captioning_forward.34} parent=0 // pred_region
    _
  $region21: #{image_captioning_forward.34} parent=0 // pred_fallthru
    _

// kernel: image_captioning_forward.27
$region0: #{image_captioning_forward.27}
  #allocation0 [shape = 'u32[]', space=smem, size = 0x4, offset = 0x4, fixed_abs, tag = 'smem constant byte address 0x4 - core index']
  #allocation1 [shape = 'u32[144,128]{1,0:T(1,128)}', space=vmem, size = 0x12000, scoped, tag = 'internal scratch']
  %s0 = inlined_call_operand.vmem [shape: bf16[2,10,10,8], index: 0, kind: input, shape index: {}]
  %s1 = inlined_call_operand.vmem [shape: bf16[72,16], index: 1, kind: input, shape index: {}]
  %s2 = inlined_call_operand.vmem [shape: f32[1,16], index: 2, kind: input, shape index: {}]
  %s3 = inlined_call_operand.vmem [shape: bf16[2,64,16], index: 3, kind: output, shape index: {}]
  %s4 = sld [smem:[#allocation0]]
  $region45: #{image_captioning_forward.27} parent=0
    _
  %s6 = ssub.s32 1, %s4
  %s7 = scalar_select 0, %s6, %s4
  loop: start=0, step=1, limit=4
  $region2: #{image_captioning_forward.27} parent=0 // loop_pre_header
    _
  $region3: #{image_captioning_forward.27} parent=0 // loop_header
    %s9 = sphi 0, %s13
    %p10 = scmp.ge.s32.totalorder %s9, 4
    %s19 = sphi 0, %s21
    %s22 = sphi 0, %s19
    %s23 = sphi 0, %s22
    %s39 = sphi 0, %s23
    %s43 = sphi 0, %s43
    %s45 = sphi 0, %s43
    %s46 = sphi 0, %s45
    %s60 = sphi 0, %s46
    %s64 = sphi 0, %s64
    %s66 = sphi 0, %s64
    %s67 = sphi 0, %s66
    %s81 = sphi 0, %s67
    %s87 = sphi 0, %s89
    %s90 = sphi 0, %s87
    %s91 = sphi 0, %s90
    %s107 = sphi 0, %s91
  $region4: #{image_captioning_forward.27} parent=0 // loop_header_branch
    %12 = sbr.rel (%p10) target = $region8
  $region5: #{image_captioning_forward.27} parent=0 // loop_body
    %s14 = ssub.s32 %s9, 1
    %s15 = ssub.s32 %s9, 2
    %s16 = sadd.s32 %s9, 1
    %s17 = ssub.s32 %s9, %s16
    %p18 = scmp.eq.s32.totalorder %s17, 0
    %s20 = sadd.s32 %s19, 1
    %s21 = scalar_select %p18, %s19, %s20
    %p24 = pneg %p18
    %p25 = scmp.eq.s32.totalorder %s9, 1
    %p26 = por %p24, %p25
    %p27 = scmp.ne.s32.totalorder %s19, %s22
    %p28 = scmp.eq.s32.totalorder %s9, 0
    %p29 = por %p27, %p28
    %p30 = scmp.ne.s32.totalorder %s19, %s22
    %p31 = scmp.eq.s32.totalorder %s14, 1
    %p32 = por %p30, %p31
    %p33 = scmp.ne.s32.totalorder %s22, %s23
    %p34 = scmp.eq.s32.totalorder %s14, 0
    %p35 = por %p33, %p34
    %p36 = scmp.ne.s32.totalorder %s22, %s23
    %p37 = scmp.eq.s32.totalorder %s15, 1
    %p38 = por %p36, %p37
    %p40 = scmp.ne.s32.totalorder %s23, %s39
    %p41 = scmp.eq.s32.totalorder %s15, 0
    %p42 = por %p40, %p41
    %s44 = sadd.s32 %s43, 1
    %p47 = scmp.eq.s32.totalorder %s9, 1
    %p48 = scmp.ne.s32.totalorder %s43, %s45
    %p49 = scmp.eq.s32.totalorder %s9, 0
    %p50 = por %p48, %p49
    %p51 = scmp.ne.s32.totalorder %s43, %s45
    %p52 = scmp.eq.s32.totalorder %s14, 1
    %p53 = por %p51, %p52
    %p54 = scmp.ne.s32.totalorder %s45, %s46
    %p55 = scmp.eq.s32.totalorder %s14, 0
    %p56 = por %p54, %p55
    %p57 = scmp.ne.s32.totalorder %s45, %s46
    %p58 = scmp.eq.s32.totalorder %s15, 1
    %p59 = por %p57, %p58
    %p61 = scmp.ne.s32.totalorder %s46, %s60
    %p62 = scmp.eq.s32.totalorder %s15, 0
    %p63 = por %p61, %p62
    %s65 = sadd.s32 %s64, 1
    %p68 = scmp.eq.s32.totalorder %s9, 1
    %p69 = scmp.ne.s32.totalorder %s64, %s66
    %p70 = scmp.eq.s32.totalorder %s9, 0
    %p71 = por %p69, %p70
    %p72 = scmp.ne.s32.totalorder %s64, %s66
    %p73 = scmp.eq.s32.totalorder %s14, 1
    %p74 = por %p72, %p73
    %p75 = scmp.ne.s32.totalorder %s66, %s67
    %p76 = scmp.eq.s32.totalorder %s14, 0
    %p77 = por %p75, %p76
    %p78 = scmp.ne.s32.totalorder %s66, %s67
    %p79 = scmp.eq.s32.totalorder %s15, 1
    %p80 = por %p78, %p79
    %p82 = scmp.ne.s32.totalorder %s67, %s81
    %p83 = scmp.eq.s32.totalorder %s15, 0
    %p84 = por %p82, %p83
    %s85 = ssub.s32 %s9, %s16
    %p86 = scmp.eq.s32.totalorder %s85, 0
    %s88 = sadd.s32 %s87, 1
    %s89 = scalar_select %p86, %s87, %s88
    %p92 = pneg %p86
    %p93 = scmp.eq.s32.totalorder %s9, 1
    %p94 = por %p92, %p93
    %p95 = scmp.ne.s32.totalorder %s87, %s90
    %p96 = scmp.eq.s32.totalorder %s9, 0
    %p97 = por %p95, %p96
    %p98 = scmp.ne.s32.totalorder %s87, %s90
    %p99 = scmp.eq.s32.totalorder %s14, 1
    %p100 = por %p98, %p99
    %p101 = scmp.ne.s32.totalorder %s90, %s91
    %p102 = scmp.eq.s32.totalorder %s14, 0
    %p103 = por %p101, %p102
    %p104 = scmp.ne.s32.totalorder %s90, %s91
    %p105 = scmp.eq.s32.totalorder %s15, 1
    %p106 = por %p104, %p105
    %p108 = scmp.ne.s32.totalorder %s91, %s107
    %p109 = scmp.eq.s32.totalorder %s15, 0
    %p110 = por %p108, %p109
    %p111 = scmp.le.s32.totalorder 1, %s9
    %p112 = scmp.lt.s32.totalorder %s9, 3
    %p113 = pnand %p111, %p112
    %p114 = pneg %p113
    // Predicated region
    $region9: #{image_captioning_forward.27} parent=5 // pred_check
      _
    $region10: #{image_captioning_forward.27} parent=5 // pred_check_branch
      %116 = sbr.rel (%p113) target = $region12
    $region11: #{image_captioning_forward.27} parent=5 // pred_region
      %s117 = ssub.s32 %s9, 1
      // Predicated region
      $region13: #{image_captioning_forward.27} parent=11 // pred_check
        %p118 = pneg %p56
      $region14: #{image_captioning_forward.27} parent=11 // pred_check_branch
        %120 = sbr.rel (%p118) target = $region16
      $region15: #{image_captioning_forward.27} parent=11 // pred_region
        _
      $region16: #{image_captioning_forward.27} parent=11 // pred_fallthru
        _
      // Predicated region
      $region17: #{image_captioning_forward.27} parent=11 // pred_check
        %p121 = pneg %p77
      $region18: #{image_captioning_forward.27} parent=11 // pred_check_branch
        %123 = sbr.rel (%p121) target = $region20
      $region19: #{image_captioning_forward.27} parent=11 // pred_region
        _
      $region20: #{image_captioning_forward.27} parent=11 // pred_fallthru
        _
    $region12: #{image_captioning_forward.27} parent=5 // pred_fallthru
      _
    %p124 = scmp.lt.s32.totalorder %s9, 2
    // Predicated region
    $region21: #{image_captioning_forward.27} parent=5 // pred_check
      %p125 = pneg %p124
    $region22: #{image_captioning_forward.27} parent=5 // pred_check_branch
      %127 = sbr.rel (%p125) target = $region24
    $region23: #{image_captioning_forward.27} parent=5 // pred_region
      // Predicated region
      $region25: #{image_captioning_forward.27} parent=23 // pred_check
        %p128 = pneg %p29
      $region26: #{image_captioning_forward.27} parent=23 // pred_check_branch
        %130 = sbr.rel (%p128) target = $region28
      $region27: #{image_captioning_forward.27} parent=23 // pred_region
        %p131 = scmp.lt.s32.totalorder %s9, 1
        %s132 = scalar_select %p131, %s9, 1
        %s133 = smul.addr %s132, 20
        %s134 = smul.addr %s133, 4
        %s135 = scalar_lea.vmem %s0, %s134
      $region28: #{image_captioning_forward.27} parent=23 // pred_fallthru
        _
    $region24: #{image_captioning_forward.27} parent=5 // pred_fallthru
      _
    %p136 = scmp.le.s32.totalorder 1, %s9
    %p137 = scmp.lt.s32.totalorder %s9, 3
    %p138 = pnand %p136, %p137
    %p139 = pneg %p138
    // Predicated region
    $region29: #{image_captioning_forward.27} parent=5 // pred_check
      _
    $region30: #{image_captioning_forward.27} parent=5 // pred_check_branch
      %141 = sbr.rel (%p138) target = $region32
    $region31: #{image_captioning_forward.27} parent=5 // pred_region
      %s142 = ssub.s32 %s9, 1
      %p143 = scmp.lt.s32.totalorder %s14, 1
      %s144 = scalar_select %p143, %s14, 1
      %s145 = smul.addr %s144, 20
      %s146 = smul.addr %s145, 4
      %s147 = scalar_lea.vmem %s0, %s146
      %p148 = pneg %p35
      %p149 = pneg %p32
      %p150 = pneg %p56
      %p151 = pneg %p53
      %p152 = pneg %p77
      %p153 = pneg %p74
      %p154 = pneg %p103
      %p155 = pneg %p100
      %p156 = scmp.lt.s32.totalorder %s14, 1
      %s157 = scalar_select %p156, %s14, 1
      %s158 = smul.addr %s157, 8
      %s159 = smul.addr %s158, 4
      %s160 = scalar_lea.vmem %s3, %s159
      %p161 = scmp.lt.s32.totalorder %s14, 1
      %s162 = scalar_select %p161, %s14, 1
      %s163 = smul.addr %s162, 20
      %s164 = smul.addr %s163, 4
      %s165 = scalar_lea.vmem %s0, %s164
      %p166 = scmp.lt.s32.totalorder %s14, 1
      %s167 = scalar_select %p166, %s14, 1
      %s168 = smul.addr %s167, 8
      %s169 = smul.addr %s168, 4
      %s170 = scalar_lea.vmem %s3, %s169
      %v172 = vld [vmem:[%s165] sm:$0xf]
      %v173 = vld [vmem:[%s165 + $0x8] sm:$0xf]
      %v174 = vld [vmem:[%s165 + $0x10] sm:$0xf]
      %v175 = vld [vmem:[%s165 + $0x18] sm:$0xf]
      %v176 = vld [vmem:[%s165 + $0x20] sm:$0xf]
      %v177 = vld [vmem:[%s165 + $0x28] sm:$0xf]
      %v178 = vld [vmem:[%s165 + $0x30] sm:$0xf]
      %v179 = vld [vmem:[%s165 + $0x38] sm:$0xf]
      %v180 = vld [vmem:[%s165 + $0x4] sm:$0x1]
      %v181 = vld [vmem:[%s165 + $0xc] sm:$0x1]
      %v182 = vld [vmem:[%s165 + $0x14] sm:$0x1]
      %v183 = vld [vmem:[%s165 + $0x1c] sm:$0x1]
      %v184 = vld [vmem:[%s165 + $0x24] sm:$0x1]
      %v185 = vld [vmem:[%s165 + $0x2c] sm:$0x1]
      %v186 = vld [vmem:[%s165 + $0x34] sm:$0x1]
      %v187 = vld [vmem:[%s165 + $0x3c] sm:$0x1]
      %v188 = vld [vmem:[%s165] sm:$0xe]
      %v189 = vld [vmem:[%s165 + $0x8] sm:$0xe]
      %v190 = vld [vmem:[%s165 + $0x10] sm:$0xe]
      %v191 = vld [vmem:[%s165 + $0x18] sm:$0xe]
      %v192 = vld [vmem:[%s165 + $0x20] sm:$0xe]
      %v193 = vld [vmem:[%s165 + $0x28] sm:$0xe]
      %v194 = vld [vmem:[%s165 + $0x30] sm:$0xe]
      %v195 = vld [vmem:[%s165 + $0x38] sm:$0xe]
      %s196 = scalar_lea.vmem %s165, 8
      %v197 = vld [vmem:[%s196] sm:$0xf]
      %v198 = vld [vmem:[%s196 + $0x8] sm:$0xf]
      %v199 = vld [vmem:[%s196 + $0x10] sm:$0xf]
      %v200 = vld [vmem:[%s196 + $0x18] sm:$0xf]
      %v201 = vld [vmem:[%s196 + $0x20] sm:$0xf]
      %v202 = vld [vmem:[%s196 + $0x28] sm:$0xf]
      %v203 = vld [vmem:[%s196 + $0x30] sm:$0xf]
      %v204 = vld [vmem:[%s196 + $0x38] sm:$0xf]
      %v205 = vld [vmem:[%s196 + $0x4] sm:$0x1]
      %v206 = vld [vmem:[%s196 + $0xc] sm:$0x1]
      %v207 = vld [vmem:[%s196 + $0x14] sm:$0x1]
      %v208 = vld [vmem:[%s196 + $0x1c] sm:$0x1]
      %v209 = vld [vmem:[%s196 + $0x24] sm:$0x1]
      %v210 = vld [vmem:[%s196 + $0x2c] sm:$0x1]
      %v211 = vld [vmem:[%s196 + $0x34] sm:$0x1]
      %v212 = vld [vmem:[%s196 + $0x3c] sm:$0x1]
      %v213 = vld [vmem:[%s196] sm:$0xe]
      %v214 = vld [vmem:[%s196 + $0x8] sm:$0xe]
      %v215 = vld [vmem:[%s196 + $0x10] sm:$0xe]
      %v216 = vld [vmem:[%s196 + $0x18] sm:$0xe]
      %v217 = vld [vmem:[%s196 + $0x20] sm:$0xe]
      %v218 = vld [vmem:[%s196 + $0x28] sm:$0xe]
      %v219 = vld [vmem:[%s196 + $0x30] sm:$0xe]
      %v220 = vld [vmem:[%s196 + $0x38] sm:$0xe]
      %s221 = scalar_lea.vmem %s165, 16
      %v222 = vld [vmem:[%s221] sm:$0xf]
      %v223 = vld [vmem:[%s221 + $0x8] sm:$0xf]
      %v224 = vld [vmem:[%s221 + $0x10] sm:$0xf]
      %v225 = vld [vmem:[%s221 + $0x18] sm:$0xf]
      %v226 = vld [vmem:[%s221 + $0x20] sm:$0xf]
      %v227 = vld [vmem:[%s221 + $0x28] sm:$0xf]
      %v228 = vld [vmem:[%s221 + $0x30] sm:$0xf]
      %v229 = vld [vmem:[%s221 + $0x38] sm:$0xf]
      %v230 = vld [vmem:[%s221 + $0x4] sm:$0x1]
      %v231 = vld [vmem:[%s221 + $0xc] sm:$0x1]
      %v232 = vld [vmem:[%s221 + $0x14] sm:$0x1]
      %v233 = vld [vmem:[%s221 + $0x1c] sm:$0x1]
      %v234 = vld [vmem:[%s221 + $0x24] sm:$0x1]
      %v235 = vld [vmem:[%s221 + $0x2c] sm:$0x1]
      %v236 = vld [vmem:[%s221 + $0x34] sm:$0x1]
      %v237 = vld [vmem:[%s221 + $0x3c] sm:$0x1]
      %v238 = vld [vmem:[%s221] sm:$0xe]
      %v239 = vld [vmem:[%s221 + $0x8] sm:$0xe]
      %v240 = vld [vmem:[%s221 + $0x10] sm:$0xe]
      %v241 = vld [vmem:[%s221 + $0x18] sm:$0xe]
      %v242 = vld [vmem:[%s221 + $0x20] sm:$0xe]
      %v243 = vld [vmem:[%s221 + $0x28] sm:$0xe]
      %v244 = vld [vmem:[%s221 + $0x30] sm:$0xe]
      %v245 = vld [vmem:[%s221 + $0x38] sm:$0xe]
      %v262 = vunpack.c.l.b16 %v172
      %v263 = vunpack.c.l.b16 %v180
      %v264 = vunpack.c.l.b16 %v173
      %v265 = vunpack.c.l.b16 %v181
      %v266 = vunpack.c.l.b16 %v174
      %v267 = vunpack.c.l.b16 %v182
      %v268 = vunpack.c.l.b16 %v175
      %v269 = vunpack.c.l.b16 %v183
      %v270 = vunpack.c.l.b16 %v176
      %v271 = vunpack.c.l.b16 %v184
      %v272 = vunpack.c.l.b16 %v177
      %v273 = vunpack.c.l.b16 %v185
      %v274 = vunpack.c.l.b16 %v178
      %v275 = vunpack.c.l.b16 %v186
      %v276 = vunpack.c.l.b16 %v179
      %v277 = vunpack.c.l.b16 %v187
      %v278 = vpack.c.b16 %v263, %v262
      %v279 = vpack.c.b16 %v265, %v264
      %v280 = vpack.c.b16 %v267, %v266
      %v281 = vpack.c.b16 %v269, %v268
      %v282 = vpack.c.b16 %v271, %v270
      %v283 = vpack.c.b16 %v273, %v272
      %v284 = vpack.c.b16 %v275, %v274
      %v285 = vpack.c.b16 %v277, %v276
      %v287 = vshrl.u32 %v278, 16
      %v289 = vshll.u32 %v278, 16
      %v291 = vrot.slane %v289, 1
      %v292 = vor.u32 %v287, %v291
      %v294 = vshrl.u32 %v279, 16
      %v296 = vshll.u32 %v279, 16
      %v298 = vrot.slane %v296, 1
      %v299 = vor.u32 %v294, %v298
      %v301 = vshrl.u32 %v280, 16
      %v303 = vshll.u32 %v280, 16
      %v305 = vrot.slane %v303, 1
      %v306 = vor.u32 %v301, %v305
      %v308 = vshrl.u32 %v281, 16
      %v310 = vshll.u32 %v281, 16
      %v312 = vrot.slane %v310, 1
      %v313 = vor.u32 %v308, %v312
      %v315 = vshrl.u32 %v282, 16
      %v317 = vshll.u32 %v282, 16
      %v319 = vrot.slane %v317, 1
      %v320 = vor.u32 %v315, %v319
      %v322 = vshrl.u32 %v283, 16
      %v324 = vshll.u32 %v283, 16
      %v326 = vrot.slane %v324, 1
      %v327 = vor.u32 %v322, %v326
      %v329 = vshrl.u32 %v284, 16
      %v331 = vshll.u32 %v284, 16
      %v333 = vrot.slane %v331, 1
      %v334 = vor.u32 %v329, %v333
      %v336 = vshrl.u32 %v285, 16
      %v338 = vshll.u32 %v285, 16
      %v340 = vrot.slane %v338, 1
      %v341 = vor.u32 %v336, %v340
      %342 = vrot.lane.b32.xlu0 %v292, 8
      %v343 = vpop.permute.xlu0 %342
      %344 = vrot.lane.b32.xlu0 %v299, 8
      %v345 = vpop.permute.xlu0 %344
      %346 = vrot.lane.b32.xlu0 %v306, 8
      %v347 = vpop.permute.xlu0 %346
      %348 = vrot.lane.b32.xlu0 %v313, 8
      %v349 = vpop.permute.xlu0 %348
      %350 = vrot.lane.b32.xlu0 %v320, 8
      %v351 = vpop.permute.xlu0 %350
      %352 = vrot.lane.b32.xlu0 %v327, 8
      %v353 = vpop.permute.xlu0 %352
      %354 = vrot.lane.b32.xlu0 %v334, 8
      %v355 = vpop.permute.xlu0 %354
      %356 = vrot.lane.b32.xlu0 %v341, 8
      %v357 = vpop.permute.xlu0 %356
      %v366 = vunpack.c.l.b16 %v188
      %v367 = vunpack.c.l.b16 %v189
      %v368 = vunpack.c.l.b16 %v190
      %v369 = vunpack.c.l.b16 %v191
      %v370 = vunpack.c.l.b16 %v192
      %v371 = vunpack.c.l.b16 %v193
      %v372 = vunpack.c.l.b16 %v194
      %v373 = vunpack.c.l.b16 %v195
      %v374 = vpack.c.b16 %v263, %v366
      %v375 = vpack.c.b16 %v265, %v367
      %v376 = vpack.c.b16 %v267, %v368
      %v377 = vpack.c.b16 %v269, %v369
      %v378 = vpack.c.b16 %v271, %v370
      %v379 = vpack.c.b16 %v273, %v371
      %v380 = vpack.c.b16 %v275, %v372
      %v381 = vpack.c.b16 %v277, %v373
      %v382 = vrot.slane %v374, 1
      %v383 = vrot.slane %v375, 1
      %v384 = vrot.slane %v376, 1
      %v385 = vrot.slane %v377, 1
      %v386 = vrot.slane %v378, 1
      %v387 = vrot.slane %v379, 1
      %v388 = vrot.slane %v380, 1
      %v389 = vrot.slane %v381, 1
      %390 = vrot.lane.b32.xlu0 %v382, 16
      %v391 = vpop.permute.xlu0 %390
      %392 = vrot.lane.b32.xlu0 %v383, 16
      %v393 = vpop.permute.xlu0 %392
      %394 = vrot.lane.b32.xlu0 %v384, 16
      %v395 = vpop.permute.xlu0 %394
      %396 = vrot.lane.b32.xlu0 %v385, 16
      %v397 = vpop.permute.xlu0 %396
      %398 = vrot.lane.b32.xlu0 %v386, 16
      %v399 = vpop.permute.xlu0 %398
      %400 = vrot.lane.b32.xlu0 %v387, 16
      %v401 = vpop.permute.xlu0 %400
      %402 = vrot.lane.b32.xlu0 %v388, 16
      %v403 = vpop.permute.xlu0 %402
      %404 = vrot.lane.b32.xlu0 %v389, 16
      %v405 = vpop.permute.xlu0 %404
      %v414 = vunpack.c.l.b16 %v197
      %v415 = vunpack.c.l.b16 %v198
      %v416 = vunpack.c.l.b16 %v199
      %v417 = vunpack.c.l.b16 %v200
      %v418 = vunpack.c.l.b16 %v201
      %v419 = vunpack.c.l.b16 %v202
      %v420 = vunpack.c.l.b16 %v203
      %v421 = vunpack.c.l.b16 %v204
      %v422 = vpack.c.b16 %v414, %v414
      %v423 = vpack.c.b16 %v415, %v415
      %v424 = vpack.c.b16 %v416, %v416
      %v425 = vpack.c.b16 %v417, %v417
      %v426 = vpack.c.b16 %v418, %v418
      %v427 = vpack.c.b16 %v419, %v419
      %v428 = vpack.c.b16 %v420, %v420
      %v429 = vpack.c.b16 %v421, %v421
      %430 = vrot.lane.b32.xlu0 %v422, 24
      %v431 = vpop.permute.xlu0 %430
      %432 = vrot.lane.b32.xlu0 %v423, 24
      %v433 = vpop.permute.xlu0 %432
      %434 = vrot.lane.b32.xlu0 %v424, 24
      %v435 = vpop.permute.xlu0 %434
      %436 = vrot.lane.b32.xlu0 %v425, 24
      %v437 = vpop.permute.xlu0 %436
      %438 = vrot.lane.b32.xlu0 %v426, 24
      %v439 = vpop.permute.xlu0 %438
      %440 = vrot.lane.b32.xlu0 %v427, 24
      %v441 = vpop.permute.xlu0 %440
      %442 = vrot.lane.b32.xlu0 %v428, 24
      %v443 = vpop.permute.xlu0 %442
      %444 = vrot.lane.b32.xlu0 %v429, 24
      %v445 = vpop.permute.xlu0 %444
      %v454 = vunpack.c.l.b16 %v205
      %v455 = vunpack.c.l.b16 %v206
      %v456 = vunpack.c.l.b16 %v207
      %v457 = vunpack.c.l.b16 %v208
      %v458 = vunpack.c.l.b16 %v209
      %v459 = vunpack.c.l.b16 %v210
      %v460 = vunpack.c.l.b16 %v211
      %v461 = vunpack.c.l.b16 %v212
      %v462 = vpack.c.b16 %v454, %v414
      %v463 = vpack.c.b16 %v455, %v415
      %v464 = vpack.c.b16 %v456, %v416
      %v465 = vpack.c.b16 %v457, %v417
      %v466 = vpack.c.b16 %v458, %v418
      %v467 = vpack.c.b16 %v459, %v419
      %v468 = vpack.c.b16 %v460, %v420
      %v469 = vpack.c.b16 %v461, %v421
      %v471 = vshrl.u32 %v462, 16
      %v473 = vshll.u32 %v462, 16
      %v475 = vrot.slane %v473, 1
      %v476 = vor.u32 %v471, %v475
      %v478 = vshrl.u32 %v463, 16
      %v480 = vshll.u32 %v463, 16
      %v482 = vrot.slane %v480, 1
      %v483 = vor.u32 %v478, %v482
      %v485 = vshrl.u32 %v464, 16
      %v487 = vshll.u32 %v464, 16
      %v489 = vrot.slane %v487, 1
      %v490 = vor.u32 %v485, %v489
      %v492 = vshrl.u32 %v465, 16
      %v494 = vshll.u32 %v465, 16
      %v496 = vrot.slane %v494, 1
      %v497 = vor.u32 %v492, %v496
      %v499 = vshrl.u32 %v466, 16
      %v501 = vshll.u32 %v466, 16
      %v503 = vrot.slane %v501, 1
      %v504 = vor.u32 %v499, %v503
      %v506 = vshrl.u32 %v467, 16
      %v508 = vshll.u32 %v467, 16
      %v510 = vrot.slane %v508, 1
      %v511 = vor.u32 %v506, %v510
      %v513 = vshrl.u32 %v468, 16
      %v515 = vshll.u32 %v468, 16
      %v517 = vrot.slane %v515, 1
      %v518 = vor.u32 %v513, %v517
      %v520 = vshrl.u32 %v469, 16
      %v522 = vshll.u32 %v469, 16
      %v524 = vrot.slane %v522, 1
      %v525 = vor.u32 %v520, %v524
      %526 = vrot.lane.b32.xlu0 %v476, 32
      %v527 = vpop.permute.xlu0 %526
      %528 = vrot.lane.b32.xlu0 %v483, 32
      %v529 = vpop.permute.xlu0 %528
      %530 = vrot.lane.b32.xlu0 %v490, 32
      %v531 = vpop.permute.xlu0 %530
      %532 = vrot.lane.b32.xlu0 %v497, 32
      %v533 = vpop.permute.xlu0 %532
      %534 = vrot.lane.b32.xlu0 %v504, 32
      %v535 = vpop.permute.xlu0 %534
      %536 = vrot.lane.b32.xlu0 %v511, 32
      %v537 = vpop.permute.xlu0 %536
      %538 = vrot.lane.b32.xlu0 %v518, 32
      %v539 = vpop.permute.xlu0 %538
      %540 = vrot.lane.b32.xlu0 %v525, 32
      %v541 = vpop.permute.xlu0 %540
      %v550 = vunpack.c.l.b16 %v213
      %v551 = vunpack.c.l.b16 %v214
      %v552 = vunpack.c.l.b16 %v215
      %v553 = vunpack.c.l.b16 %v216
      %v554 = vunpack.c.l.b16 %v217
      %v555 = vunpack.c.l.b16 %v218
      %v556 = vunpack.c.l.b16 %v219
      %v557 = vunpack.c.l.b16 %v220
      %v558 = vpack.c.b16 %v454, %v550
      %v559 = vpack.c.b16 %v455, %v551
      %v560 = vpack.c.b16 %v456, %v552
      %v561 = vpack.c.b16 %v457, %v553
      %v562 = vpack.c.b16 %v458, %v554
      %v563 = vpack.c.b16 %v459, %v555
      %v564 = vpack.c.b16 %v460, %v556
      %v565 = vpack.c.b16 %v461, %v557
      %v566 = vrot.slane %v558, 1
      %v567 = vrot.slane %v559, 1
      %v568 = vrot.slane %v560, 1
      %v569 = vrot.slane %v561, 1
      %v570 = vrot.slane %v562, 1
      %v571 = vrot.slane %v563, 1
      %v572 = vrot.slane %v564, 1
      %v573 = vrot.slane %v565, 1
      %574 = vrot.lane.b32.xlu0 %v566, 40
      %v575 = vpop.permute.xlu0 %574
      %576 = vrot.lane.b32.xlu0 %v567, 40
      %v577 = vpop.permute.xlu0 %576
      %578 = vrot.lane.b32.xlu0 %v568, 40
      %v579 = vpop.permute.xlu0 %578
      %580 = vrot.lane.b32.xlu0 %v569, 40
      %v581 = vpop.permute.xlu0 %580
      %582 = vrot.lane.b32.xlu0 %v570, 40
      %v583 = vpop.permute.xlu0 %582
      %584 = vrot.lane.b32.xlu0 %v571, 40
      %v585 = vpop.permute.xlu0 %584
      %586 = vrot.lane.b32.xlu0 %v572, 40
      %v587 = vpop.permute.xlu0 %586
      %588 = vrot.lane.b32.xlu0 %v573, 40
      %v589 = vpop.permute.xlu0 %588
      %v598 = vunpack.c.l.b16 %v222
      %v599 = vunpack.c.l.b16 %v223
      %v600 = vunpack.c.l.b16 %v224
      %v601 = vunpack.c.l.b16 %v225
      %v602 = vunpack.c.l.b16 %v226
      %v603 = vunpack.c.l.b16 %v227
      %v604 = vunpack.c.l.b16 %v228
      %v605 = vunpack.c.l.b16 %v229
      %v606 = vpack.c.b16 %v598, %v598
      %v607 = vpack.c.b16 %v599, %v599
      %v608 = vpack.c.b16 %v600, %v600
      %v609 = vpack.c.b16 %v601, %v601
      %v610 = vpack.c.b16 %v602, %v602
      %v611 = vpack.c.b16 %v603, %v603
      %v612 = vpack.c.b16 %v604, %v604
      %v613 = vpack.c.b16 %v605, %v605
      %614 = vrot.lane.b32.xlu0 %v606, 48
      %v615 = vpop.permute.xlu0 %614
      %616 = vrot.lane.b32.xlu0 %v607, 48
      %v617 = vpop.permute.xlu0 %616
      %618 = vrot.lane.b32.xlu0 %v608, 48
      %v619 = vpop.permute.xlu0 %618
      %620 = vrot.lane.b32.xlu0 %v609, 48
      %v621 = vpop.permute.xlu0 %620
      %622 = vrot.lane.b32.xlu0 %v610, 48
      %v623 = vpop.permute.xlu0 %622
      %624 = vrot.lane.b32.xlu0 %v611, 48
      %v625 = vpop.permute.xlu0 %624
      %626 = vrot.lane.b32.xlu0 %v612, 48
      %v627 = vpop.permute.xlu0 %626
      %628 = vrot.lane.b32.xlu0 %v613, 48
      %v629 = vpop.permute.xlu0 %628
      %v638 = vunpack.c.l.b16 %v230
      %v639 = vunpack.c.l.b16 %v231
      %v640 = vunpack.c.l.b16 %v232
      %v641 = vunpack.c.l.b16 %v233
      %v642 = vunpack.c.l.b16 %v234
      %v643 = vunpack.c.l.b16 %v235
      %v644 = vunpack.c.l.b16 %v236
      %v645 = vunpack.c.l.b16 %v237
      %v646 = vpack.c.b16 %v638, %v598
      %v647 = vpack.c.b16 %v639, %v599
      %v648 = vpack.c.b16 %v640, %v600
      %v649 = vpack.c.b16 %v641, %v601
      %v650 = vpack.c.b16 %v642, %v602
      %v651 = vpack.c.b16 %v643, %v603
      %v652 = vpack.c.b16 %v644, %v604
      %v653 = vpack.c.b16 %v645, %v605
      %v655 = vshrl.u32 %v646, 16
      %v657 = vshll.u32 %v646, 16
      %v659 = vrot.slane %v657, 1
      %v660 = vor.u32 %v655, %v659
      %v662 = vshrl.u32 %v647, 16
      %v664 = vshll.u32 %v647, 16
      %v666 = vrot.slane %v664, 1
      %v667 = vor.u32 %v662, %v666
      %v669 = vshrl.u32 %v648, 16
      %v671 = vshll.u32 %v648, 16
      %v673 = vrot.slane %v671, 1
      %v674 = vor.u32 %v669, %v673
      %v676 = vshrl.u32 %v649, 16
      %v678 = vshll.u32 %v649, 16
      %v680 = vrot.slane %v678, 1
      %v681 = vor.u32 %v676, %v680
      %v683 = vshrl.u32 %v650, 16
      %v685 = vshll.u32 %v650, 16
      %v687 = vrot.slane %v685, 1
      %v688 = vor.u32 %v683, %v687
      %v690 = vshrl.u32 %v651, 16
      %v692 = vshll.u32 %v651, 16
      %v694 = vrot.slane %v692, 1
      %v695 = vor.u32 %v690, %v694
      %v697 = vshrl.u32 %v652, 16
      %v699 = vshll.u32 %v652, 16
      %v701 = vrot.slane %v699, 1
      %v702 = vor.u32 %v697, %v701
      %v704 = vshrl.u32 %v653, 16
      %v706 = vshll.u32 %v653, 16
      %v708 = vrot.slane %v706, 1
      %v709 = vor.u32 %v704, %v708
      %710 = vrot.lane.b32.xlu0 %v660, 56
      %v711 = vpop.permute.xlu0 %710
      %712 = vrot.lane.b32.xlu0 %v667, 56
      %v713 = vpop.permute.xlu0 %712
      %714 = vrot.lane.b32.xlu0 %v674, 56
      %v715 = vpop.permute.xlu0 %714
      %716 = vrot.lane.b32.xlu0 %v681, 56
      %v717 = vpop.permute.xlu0 %716
      %718 = vrot.lane.b32.xlu0 %v688, 56
      %v719 = vpop.permute.xlu0 %718
      %720 = vrot.lane.b32.xlu0 %v695, 56
      %v721 = vpop.permute.xlu0 %720
      %722 = vrot.lane.b32.xlu0 %v702, 56
      %v723 = vpop.permute.xlu0 %722
      %724 = vrot.lane.b32.xlu0 %v709, 56
      %v725 = vpop.permute.xlu0 %724
      %v734 = vunpack.c.l.b16 %v238
      %v735 = vunpack.c.l.b16 %v239
      %v736 = vunpack.c.l.b16 %v240
      %v737 = vunpack.c.l.b16 %v241
      %v738 = vunpack.c.l.b16 %v242
      %v739 = vunpack.c.l.b16 %v243
      %v740 = vunpack.c.l.b16 %v244
      %v741 = vunpack.c.l.b16 %v245
      %v742 = vpack.c.b16 %v638, %v734
      %v743 = vpack.c.b16 %v639, %v735
      %v744 = vpack.c.b16 %v640, %v736
      %v745 = vpack.c.b16 %v641, %v737
      %v746 = vpack.c.b16 %v642, %v738
      %v747 = vpack.c.b16 %v643, %v739
      %v748 = vpack.c.b16 %v644, %v740
      %v749 = vpack.c.b16 %v645, %v741
      %v750 = vrot.slane %v742, 1
      %v751 = vrot.slane %v743, 1
      %v752 = vrot.slane %v744, 1
      %v753 = vrot.slane %v745, 1
      %v754 = vrot.slane %v746, 1
      %v755 = vrot.slane %v747, 1
      %v756 = vrot.slane %v748, 1
      %v757 = vrot.slane %v749, 1
      %758 = vrot.lane.b32.xlu0 %v750, 64
      %v759 = vpop.permute.xlu0 %758
      %760 = vrot.lane.b32.xlu0 %v751, 64
      %v761 = vpop.permute.xlu0 %760
      %762 = vrot.lane.b32.xlu0 %v752, 64
      %v763 = vpop.permute.xlu0 %762
      %764 = vrot.lane.b32.xlu0 %v753, 64
      %v765 = vpop.permute.xlu0 %764
      %766 = vrot.lane.b32.xlu0 %v754, 64
      %v767 = vpop.permute.xlu0 %766
      %768 = vrot.lane.b32.xlu0 %v755, 64
      %v769 = vpop.permute.xlu0 %768
      %770 = vrot.lane.b32.xlu0 %v756, 64
      %v771 = vpop.permute.xlu0 %770
      %772 = vrot.lane.b32.xlu0 %v757, 64
      %v773 = vpop.permute.xlu0 %772
      %vm774 = vcmask 64512
      %v777 = vsel %vm774, %v172, %v343
      %v780 = vsel %vm774, %v173, %v345
      %v783 = vsel %vm774, %v174, %v347
      %v786 = vsel %vm774, %v175, %v349
      %v789 = vsel %vm774, %v176, %v351
      %v792 = vsel %vm774, %v177, %v353
      %v795 = vsel %vm774, %v178, %v355
      %v798 = vsel %vm774, %v179, %v357
      %vm799 = vcmask 130048
      %v801 = vsel %vm799, %v777, %v391
      %v803 = vsel %vm799, %v780, %v393
      %v805 = vsel %vm799, %v783, %v395
      %v807 = vsel %vm799, %v786, %v397
      %v809 = vsel %vm799, %v789, %v399
      %v811 = vsel %vm799, %v792, %v401
      %v813 = vsel %vm799, %v795, %v403
      %v815 = vsel %vm799, %v798, %v405
      %vm816 = vcmask 195584
      %v818 = vsel %vm816, %v801, %v431
      %v820 = vsel %vm816, %v803, %v433
      %v822 = vsel %vm816, %v805, %v435
      %v824 = vsel %vm816, %v807, %v437
      %v826 = vsel %vm816, %v809, %v439
      %v828 = vsel %vm816, %v811, %v441
      %v830 = vsel %vm816, %v813, %v443
      %v832 = vsel %vm816, %v815, %v445
      %vm833 = vcmask 261120
      %v835 = vsel %vm833, %v818, %v527
      %v837 = vsel %vm833, %v820, %v529
      %v839 = vsel %vm833, %v822, %v531
      %v841 = vsel %vm833, %v824, %v533
      %v843 = vsel %vm833, %v826, %v535
      %v845 = vsel %vm833, %v828, %v537
      %v847 = vsel %vm833, %v830, %v539
      %v849 = vsel %vm833, %v832, %v541
      %vm850 = vcmask 326656
      %v852 = vsel %vm850, %v835, %v575
      %v854 = vsel %vm850, %v837, %v577
      %v856 = vsel %vm850, %v839, %v579
      %v858 = vsel %vm850, %v841, %v581
      %v860 = vsel %vm850, %v843, %v583
      %v862 = vsel %vm850, %v845, %v585
      %v864 = vsel %vm850, %v847, %v587
      %v866 = vsel %vm850, %v849, %v589
      %vm867 = vcmask 392192
      %v869 = vsel %vm867, %v852, %v615
      %v871 = vsel %vm867, %v854, %v617
      %v873 = vsel %vm867, %v856, %v619
      %v875 = vsel %vm867, %v858, %v621
      %v877 = vsel %vm867, %v860, %v623
      %v879 = vsel %vm867, %v862, %v625
      %v881 = vsel %vm867, %v864, %v627
      %v883 = vsel %vm867, %v866, %v629
      %vm884 = vcmask 457728
      %v886 = vsel %vm884, %v869, %v711
      %v888 = vsel %vm884, %v871, %v713
      %v890 = vsel %vm884, %v873, %v715
      %v892 = vsel %vm884, %v875, %v717
      %v894 = vsel %vm884, %v877, %v719
      %v896 = vsel %vm884, %v879, %v721
      %v898 = vsel %vm884, %v881, %v723
      %v900 = vsel %vm884, %v883, %v725
      %vm901 = vcmask 523264
      %v903 = vsel %vm901, %v886, %v759
      %v905 = vsel %vm901, %v888, %v761
      %v907 = vsel %vm901, %v890, %v763
      %v909 = vsel %vm901, %v892, %v765
      %v911 = vsel %vm901, %v894, %v767
      %v913 = vsel %vm901, %v896, %v769
      %v915 = vsel %vm901, %v898, %v771
      %v917 = vsel %vm901, %v900, %v773
      %v918 = vld [vmem:[%s1] sm:$0xf]
      %v919 = vld [vmem:[%s1 + $0x4] sm:$0xf]
      %v920 = vld [vmem:[%s1 + $0x8] sm:$0xf]
      %v921 = vld [vmem:[%s1 + $0xc] sm:$0xf]
      %v922 = vld [vmem:[%s1 + $0x10] sm:$0xf]
      %v923 = vld [vmem:[%s1 + $0x14] sm:$0xf]
      %v924 = vld [vmem:[%s1 + $0x18] sm:$0xf]
      %v925 = vld [vmem:[%s1 + $0x1c] sm:$0xf]
      %v926 = vld [vmem:[%s1 + $0x20] sm:$0xf]
      %v927 = vld [vmem:[%s2] sm:$0x1]
      %v929 = vlaneseq
      %v930 = vshrl.u32 %v929, 7
      %v931 = vsub.s32 0, %v930
      %v932 = vrot.slane %v927, %v931
      %v942 = vunpack.c.l.b16 %v903
      %v943 = vunpack.c.l.b16 %v905
      %v944 = vunpack.c.l.b16 %v907
      %v945 = vunpack.c.l.b16 %v909
      %v946 = vunpack.c.l.b16 %v911
      %v947 = vunpack.c.l.b16 %v913
      %v948 = vunpack.c.l.b16 %v915
      %v949 = vunpack.c.l.b16 %v917
      %v950 = vpack.c.b16 %v943, %v942
      %v951 = vpack.c.b16 %v945, %v944
      %v952 = vpack.c.b16 %v947, %v946
      %v953 = vpack.c.b16 %v949, %v948
      %v963 = vunpack.c.l.b16 %v918
      %v964 = vunpack.c.l.b16 %v919
      %v965 = vunpack.c.l.b16 %v920
      %v966 = vunpack.c.l.b16 %v921
      %v967 = vunpack.c.l.b16 %v922
      %v968 = vunpack.c.l.b16 %v923
      %v969 = vunpack.c.l.b16 %v924
      %v970 = vunpack.c.l.b16 %v925
      %v971 = vunpack.c.l.b16 %v926
      %v972 = vpack.c.b16 %v964, %v963
      %v973 = vpack.c.b16 %v966, %v965
      %v974 = vpack.c.b16 %v968, %v967
      %v975 = vpack.c.b16 %v970, %v969
      %v976 = vpack.c.b16 %v971, %v971
      %vm981 = vcmask 588800
      %v983 = vsel %vm981, %v950, 0
      %v986 = vsel %vm981, %v951, 0
      %v989 = vsel %vm981, %v952, 0
      %v992 = vsel %vm981, %v953, 0
      %vm994 = vcmask 1043456
      %v996 = vsel %vm994, %v976, 0
      %998 = vmatprep.subr.bf16.mxu0 0
      %999 = vmatpush1.bf16.msra.mxu0 %v972
      %1000 = vmatprep.subr.bf16.mxu0 0
      %1001 = vmatpush1.bf16.msra.mxu0 %v973
      %1002 = vmatprep.subr.bf16.mxu0 0
      %1003 = vmatpush1.bf16.msra.mxu0 %v974
      %1004 = vmatprep.subr.bf16.mxu0 0
      %1005 = vmatpush1.bf16.msra.mxu0 %v975
      %1006 = vmatprep.subr.bf16.mxu0 0
      %1007 = vmatpush1.bf16.msra.mxu0 %v996
      %1008 = vmatprep.subr.bf16.mxu0 0
      %1009 = vmatpush1.bf16.msra.mxu0 0
      %1010 = vmatprep.subr.bf16.mxu0 0
      %1011 = vmatpush1.bf16.msra.mxu0 0
      %1012 = vmatprep.subr.bf16.mxu0 0
      %1013 = vmatpush1.bf16.msra.mxu0 0
      %1014 = vmatprep.subr.bf16.mxu0 0
      %1015 = vmatpush1.bf16.msra.mxu0 0
      %1016 = vmatprep.subr.bf16.mxu0 0
      %1017 = vmatpush1.bf16.msra.mxu0 0
      %1018 = vmatprep.subr.bf16.mxu0 0
      %1019 = vmatpush1.bf16.msra.mxu0 0
      %1020 = vmatprep.subr.bf16.mxu0 0
      %1021 = vmatpush1.bf16.msra.mxu0 0
      %1022 = vmatprep.subr.bf16.mxu0 0
      %1023 = vmatpush1.bf16.msra.mxu0 0
      %1024 = vmatprep.subr.bf16.mxu0 0
      %1025 = vmatpush1.bf16.msra.mxu0 0
      %1026 = vmatprep.subr.bf16.mxu0 0
      %1027 = vmatpush1.bf16.msra.mxu0 0
      %1028 = vmatprep.subr.bf16.mxu0 0
      %1029 = vmatpush1.bf16.msra.mxu0 0
      %1030 = vmatprep.mubr.bf16.mxu0 0
      %1031 = vmatmul.mubr.bf16.gmra.mrb[0].mxu0 %v983
      %v1032 = vpop.f32.mrb[0].mxu0
      %v1033 = vadd.f32 %v932, %v1032
      %v1034 = vpop.f32.mrb[0].mxu0
      %v1035 = vpop.f32.mrb[0].mxu0
      %v1036 = vadd.f32 %v932, %v1035
      %v1037 = vpop.f32.mrb[0].mxu0
      %1038 = vmatprep.mubr.bf16.mxu0 0
      %1039 = vmatmul.mubr.bf16.gmra.mrb[0].mxu0 %v986
      %v1040 = vpop.f32.mrb[0].mxu0
      %v1041 = vadd.f32 %v932, %v1040
      %v1042 = vpop.f32.mrb[0].mxu0
      %v1043 = vpop.f32.mrb[0].mxu0
      %v1044 = vadd.f32 %v932, %v1043
      %v1045 = vpop.f32.mrb[0].mxu0
      %1046 = vmatprep.mubr.bf16.mxu0 0
      %1047 = vmatmul.mubr.bf16.gmra.mrb[0].mxu0 %v989
      %v1048 = vpop.f32.mrb[0].mxu0
      %v1049 = vadd.f32 %v932, %v1048
      %v1050 = vpop.f32.mrb[0].mxu0
      %v1051 = vpop.f32.mrb[0].mxu0
      %v1052 = vadd.f32 %v932, %v1051
      %v1053 = vpop.f32.mrb[0].mxu0
      %1054 = vmatprep.mubr.bf16.mxu0 0
      %1055 = vmatmul.mubr.bf16.gmra.mrb[0].mxu0 %v992
      %v1056 = vpop.f32.mrb[0].mxu0
      %v1057 = vadd.f32 %v932, %v1056
      %v1058 = vpop.f32.mrb[0].mxu0
      %v1059 = vpop.f32.mrb[0].mxu0
      %v1060 = vadd.f32 %v932, %v1059
      %v1061 = vpop.f32.mrb[0].mxu0
      %1062 = vdwg.mxu0
      %v1063 = vmax.f32 %v1033, 0.0
      %v1064 = vmax.f32 %v1036, 0.0
      %v1065 = vmax.f32 %v1041, 0.0
      %v1066 = vmax.f32 %v1044, 0.0
      %v1067 = vmax.f32 %v1049, 0.0
      %v1068 = vmax.f32 %v1052, 0.0
      %v1069 = vmax.f32 %v1057, 0.0
      %v1070 = vmax.f32 %v1060, 0.0
      %v1071 = vpack.c.bf16 %v1064, %v1063
      %v1072 = vpack.c.bf16 %v1066, %v1065
      %v1073 = vpack.c.bf16 %v1068, %v1067
      %v1074 = vpack.c.bf16 %v1070, %v1069
      %v1079 = vunpack.c.l.b16 %v1071
      %v1080 = vunpack.c.h.b16 %v1071
      %v1081 = vunpack.c.l.b16 %v1072
      %v1082 = vunpack.c.h.b16 %v1072
      %v1083 = vunpack.c.l.b16 %v1073
      %v1084 = vunpack.c.h.b16 %v1073
      %v1085 = vunpack.c.l.b16 %v1074
      %v1086 = vunpack.c.h.b16 %v1074
      %v1087 = vpack.c.b16 %v1079, %v1079
      %v1088 = vpack.c.b16 %v1080, %v1080
      %v1089 = vpack.c.b16 %v1081, %v1081
      %v1090 = vpack.c.b16 %v1082, %v1082
      %v1091 = vpack.c.b16 %v1083, %v1083
      %v1092 = vpack.c.b16 %v1084, %v1084
      %v1093 = vpack.c.b16 %v1085, %v1085
      %v1094 = vpack.c.b16 %v1086, %v1086
      %vm1103 = vcmask 125952
      %1104 = vst.msk [vmem:[%s170] sm:$0xf] %vm1103, %v1087
      %1105 = vst.msk [vmem:[%s170 + $0x4] sm:$0xf] %vm1103, %v1088
      %1106 = vst.msk [vmem:[%s170 + $0x8] sm:$0xf] %vm1103, %v1089
      %1107 = vst.msk [vmem:[%s170 + $0xc] sm:$0xf] %vm1103, %v1090
      %1108 = vst.msk [vmem:[%s170 + $0x10] sm:$0xf] %vm1103, %v1091
      %1109 = vst.msk [vmem:[%s170 + $0x14] sm:$0xf] %vm1103, %v1092
      %1110 = vst.msk [vmem:[%s170 + $0x18] sm:$0xf] %vm1103, %v1093
      %1111 = vst.msk [vmem:[%s170 + $0x1c] sm:$0xf] %vm1103, %v1094
      %p1112 = scmp.lt.s32.totalorder %s14, 1
      %s1113 = scalar_select %p1112, %s14, 1
      %s1114 = smul.addr %s1113, 8
      %s1115 = smul.addr %s1114, 4
      %s1116 = scalar_lea.vmem %s3, %s1115
      // Predicated region
      $region33: #{image_captioning_forward.27} parent=31 // pred_check
        %p1117 = pneg %p100
      $region34: #{image_captioning_forward.27} parent=31 // pred_check_branch
        %1119 = sbr.rel (%p1117) target = $region36
      $region35: #{image_captioning_forward.27} parent=31 // pred_region
        _
      $region36: #{image_captioning_forward.27} parent=31 // pred_fallthru
        _
    $region32: #{image_captioning_forward.27} parent=5 // pred_fallthru
      _
    %p1120 = scmp.le.s32.totalorder 2, %s9
    // Predicated region
    $region37: #{image_captioning_forward.27} parent=5 // pred_check
      %p1121 = pneg %p1120
    $region38: #{image_captioning_forward.27} parent=5 // pred_check_branch
      %1123 = sbr.rel (%p1121) target = $region40
    $region39: #{image_captioning_forward.27} parent=5 // pred_region
      %s1124 = ssub.s32 %s9, 2
      // Predicated region
      $region41: #{image_captioning_forward.27} parent=39 // pred_check
        %p1125 = pneg %p106
      $region42: #{image_captioning_forward.27} parent=39 // pred_check_branch
        %1127 = sbr.rel (%p1125) target = $region44
      $region43: #{image_captioning_forward.27} parent=39 // pred_region
        %p1128 = scmp.lt.s32.totalorder %s15, 1
        %s1129 = scalar_select %p1128, %s15, 1
        %s1130 = smul.addr %s1129, 8
        %s1131 = smul.addr %s1130, 4
        %s1132 = scalar_lea.vmem %s3, %s1131
      $region44: #{image_captioning_forward.27} parent=39 // pred_fallthru
        _
    $region40: #{image_captioning_forward.27} parent=5 // pred_fallthru
      _
  $region6: #{image_captioning_forward.27} parent=0 // loop_footer
    %s13 = sadd.s32 1, %s9
  $region7: #{image_captioning_forward.27} parent=0 // loop_footer_branch
    %8 = sbr.rel target = $region3
  $region8: #{image_captioning_forward.27} parent=0 // loop_exit
    _

// kernel: image_captioning_forward.51
$region0: #{image_captioning_forward.51}
  #allocation0 [shape = 'u32[]', space=smem, size = 0x4, offset = 0x4, fixed_abs, tag = 'smem constant byte address 0x4 - core index']
  #allocation1 [shape = 'u32[144,128]{1,0:T(1,128)}', space=vmem, size = 0x12000, scoped, tag = 'internal scratch']
  %s0 = inlined_call_operand.vmem [shape: bf16[16,32], index: 0, kind: input, shape index: {}]
  %s1 = inlined_call_operand.vmem [shape: bf16[32,30], index: 1, kind: input, shape index: {}]
  %s2 = inlined_call_operand.vmem [shape: f32[1,30], index: 2, kind: input, shape index: {}]
  %s3 = inlined_call_operand.hbm [shape: f32[16,30], index: 3, kind: output, shape index: {}]
  %s4 = sld [smem:[#allocation0]]
  $region22: #{image_captioning_forward.51} parent=0
    _
  %s6 = ssub.s32 1, %s4
  %s7 = scalar_select 0, %s6, %s4
  $region1: #{image_captioning_forward.51} parent=0
    #allocation2 [shape = 'u8[8192]{0}', space=vmem, size = 0x2000, scoped, tag = 'output window, operand 0, single buffered']
    #allocation3 [shape = 's32[1]{0}', space=sflag, size = 0x4, scoped, tag = 'scoped memory for image_captioning_forward.51']
    %8 = vsyncpa [#allocation3], 0
    // Predicated region
    $region2: #{image_captioning_forward.51} parent=1 // pred_check
      _
    $region3: #{image_captioning_forward.51} parent=1 // pred_check_branch
      %10 = sbr.rel (0) target = $region5
    $region4: #{image_captioning_forward.51} parent=1 // pred_region
      _
    $region5: #{image_captioning_forward.51} parent=1 // pred_fallthru
      _
    // Predicated region
    $region6: #{image_captioning_forward.51} parent=1 // pred_check
      _
    $region7: #{image_captioning_forward.51} parent=1 // pred_check_branch
      %12 = sbr.rel (0) target = $region9
    $region8: #{image_captioning_forward.51} parent=1 // pred_region
      _
    $region9: #{image_captioning_forward.51} parent=1 // pred_fallthru
      _
    // Predicated region
    $region10: #{image_captioning_forward.51} parent=1 // pred_check
      _
    $region11: #{image_captioning_forward.51} parent=1 // pred_check_branch
      %14 = sbr.rel (0) target = $region13
    $region12: #{image_captioning_forward.51} parent=1 // pred_region
      _
    $region13: #{image_captioning_forward.51} parent=1 // pred_fallthru
      _
    %v16 = vld [vmem:[%s0] sm:$0xf]
    %v17 = vld [vmem:[%s0 + $0x4] sm:$0xf]
    %v18 = vld [vmem:[%s1] sm:$0xf]
    %v19 = vld [vmem:[%s1 + $0x4] sm:$0xf]
    %v20 = vld [vmem:[%s1 + $0x8] sm:$0xf]
    %v21 = vld [vmem:[%s1 + $0xc] sm:$0xf]
    %v22 = vld [vmem:[%s2] sm:$0x1]
    %v24 = vlaneseq
    %v25 = vshrl.u32 %v24, 7
    %v26 = vsub.s32 0, %v25
    %v27 = vrot.slane %v22, %v26
    %v31 = vunpack.c.l.b16 %v16
    %v32 = vunpack.c.l.b16 %v17
    %v33 = vpack.c.b16 %v32, %v31
    %v38 = vunpack.c.l.b16 %v18
    %v39 = vunpack.c.l.b16 %v19
    %v40 = vunpack.c.l.b16 %v20
    %v41 = vunpack.c.l.b16 %v21
    %v42 = vpack.c.b16 %v39, %v38
    %v43 = vpack.c.b16 %v41, %v40
    %vm46 = vcmask 261120
    %v48 = vsel %vm46, %v33, 0
    %50 = vmatprep.subr.bf16.mxu0 0
    %51 = vmatpush1.bf16.msra.mxu0 %v42
    %52 = vmatprep.subr.bf16.mxu0 0
    %53 = vmatpush1.bf16.msra.mxu0 %v43
    %54 = vmatprep.subr.bf16.mxu0 0
    %55 = vmatpush1.bf16.msra.mxu0 0
    %56 = vmatprep.subr.bf16.mxu0 0
    %57 = vmatpush1.bf16.msra.mxu0 0
    %58 = vmatprep.subr.bf16.mxu0 0
    %59 = vmatpush1.bf16.msra.mxu0 0
    %60 = vmatprep.subr.bf16.mxu0 0
    %61 = vmatpush1.bf16.msra.mxu0 0
    %62 = vmatprep.subr.bf16.mxu0 0
    %63 = vmatpush1.bf16.msra.mxu0 0
    %64 = vmatprep.subr.bf16.mxu0 0
    %65 = vmatpush1.bf16.msra.mxu0 0
    %66 = vmatprep.subr.bf16.mxu0 0
    %67 = vmatpush1.bf16.msra.mxu0 0
    %68 = vmatprep.subr.bf16.mxu0 0
    %69 = vmatpush1.bf16.msra.mxu0 0
    %70 = vmatprep.subr.bf16.mxu0 0
    %71 = vmatpush1.bf16.msra.mxu0 0
    %72 = vmatprep.subr.bf16.mxu0 0
    %73 = vmatpush1.bf16.msra.mxu0 0
    %74 = vmatprep.subr.bf16.mxu0 0
    %75 = vmatpush1.bf16.msra.mxu0 0
    %76 = vmatprep.subr.bf16.mxu0 0
    %77 = vmatpush1.bf16.msra.mxu0 0
    %78 = vmatprep.subr.bf16.mxu0 0
    %79 = vmatpush1.bf16.msra.mxu0 0
    %80 = vmatprep.subr.bf16.mxu0 0
    %81 = vmatpush1.bf16.msra.mxu0 0
    %82 = vmatprep.mubr.bf16.mxu0 0
    %83 = vmatmul.mubr.bf16.gmra.mrb[0].mxu0 %v48
    %v84 = vpop.f32.mrb[0].mxu0
    %v85 = vadd.f32 %v27, %v84
    %v86 = vpop.f32.mrb[0].mxu0
    %v87 = vpop.f32.mrb[0].mxu0
    %v88 = vadd.f32 %v27, %v87
    %v89 = vpop.f32.mrb[0].mxu0
    %90 = vdwg.mxu0
    %vm91 = vcmask 244736
    %92 = vst.msk [vmem:[#allocation2] sm:$0xff] %vm91, %v85
    %93 = vst.msk [vmem:[#allocation2 + $0x8] sm:$0xff] %vm91, %v88
    // Predicated region
    $region14: #{image_captioning_forward.51} parent=1 // pred_check
      _
    $region15: #{image_captioning_forward.51} parent=1 // pred_check_branch
      %95 = sbr.rel (0) target = $region17
    $region16: #{image_captioning_forward.51} parent=1 // pred_region
      %s97 = ssub.s32 256, 256
      %98 = vsyncadd [#allocation3], %s97
      %s99 = sshll.u32 [#allocation2], 4
      %s100 = int_to_ptr.vmem [resolvable:$true] %s99
      %105 = dma.vmem_to_hbm [thread:$0]  %s100, 256, %s3, [#allocation3], 128, 128, 8
    $region17: #{image_captioning_forward.51} parent=1 // pred_fallthru
      _
    // Predicated region
    $region18: #{image_captioning_forward.51} parent=1 // pred_check
      _
    $region19: #{image_captioning_forward.51} parent=1 // pred_check_branch
      %107 = sbr.rel (0) target = $region21
    $region20: #{image_captioning_forward.51} parent=1 // pred_region
      %108 = dma.done [#allocation3], 256
    $region21: #{image_captioning_forward.51} parent=1 // pred_fallthru
      _
    %109 = vsyncpa [#allocation3], 1

// kernel: image_captioning_forward.35
$region0: #{image_captioning_forward.35}
  #allocation0 [shape = 'u32[]', space=smem, size = 0x4, offset = 0x4, fixed_abs, tag = 'smem constant byte address 0x4 - core index']
  #allocation1 [shape = 'u32[144,128]{1,0:T(1,128)}', space=vmem, size = 0x12000, scoped, tag = 'internal scratch']
  %s0 = inlined_call_operand.vmem [shape: bf16[2,8,32], index: 0, kind: input, shape index: {}]
  %s1 = inlined_call_operand.vmem [shape: bf16[2,16,64], index: 1, kind: input, shape index: {}]
  %s2 = inlined_call_operand.vmem [shape: bf16[2,8,32], index: 2, kind: output, shape index: {}]
  %s3 = sld [smem:[#allocation0]]
  $region41: #{image_captioning_forward.35} parent=0
    _
  %s5 = ssub.s32 1, %s3
  %s6 = scalar_select 0, %s5, %s3
  loop: start=0, step=1, limit=4
  $region2: #{image_captioning_forward.35} parent=0 // loop_pre_header
    _
  $region3: #{image_captioning_forward.35} parent=0 // loop_header
    %s8 = sphi 0, %s12
    %p9 = scmp.ge.s32.totalorder %s8, 4
    %s18 = sphi 0, %s20
    %s21 = sphi 0, %s18
    %s22 = sphi 0, %s21
    %s38 = sphi 0, %s22
    %s44 = sphi 0, %s46
    %s47 = sphi 0, %s44
    %s48 = sphi 0, %s47
    %s64 = sphi 0, %s48
    %s70 = sphi 0, %s72
    %s73 = sphi 0, %s70
    %s74 = sphi 0, %s73
    %s90 = sphi 0, %s74
  $region4: #{image_captioning_forward.35} parent=0 // loop_header_branch
    %11 = sbr.rel (%p9) target = $region8
  $region5: #{image_captioning_forward.35} parent=0 // loop_body
    %s13 = ssub.s32 %s8, 1
    %s14 = ssub.s32 %s8, 2
    %s15 = sadd.s32 %s8, 1
    %s16 = ssub.s32 %s8, %s15
    %p17 = scmp.eq.s32.totalorder %s16, 0
    %s19 = sadd.s32 %s18, 1
    %s20 = scalar_select %p17, %s18, %s19
    %p23 = pneg %p17
    %p24 = scmp.eq.s32.totalorder %s8, 1
    %p25 = por %p23, %p24
    %p26 = scmp.ne.s32.totalorder %s18, %s21
    %p27 = scmp.eq.s32.totalorder %s8, 0
    %p28 = por %p26, %p27
    %p29 = scmp.ne.s32.totalorder %s18, %s21
    %p30 = scmp.eq.s32.totalorder %s13, 1
    %p31 = por %p29, %p30
    %p32 = scmp.ne.s32.totalorder %s21, %s22
    %p33 = scmp.eq.s32.totalorder %s13, 0
    %p34 = por %p32, %p33
    %p35 = scmp.ne.s32.totalorder %s21, %s22
    %p36 = scmp.eq.s32.totalorder %s14, 1
    %p37 = por %p35, %p36
    %p39 = scmp.ne.s32.totalorder %s22, %s38
    %p40 = scmp.eq.s32.totalorder %s14, 0
    %p41 = por %p39, %p40
    %s42 = ssub.s32 %s8, %s15
    %p43 = scmp.eq.s32.totalorder %s42, 0
    %s45 = sadd.s32 %s44, 1
    %s46 = scalar_select %p43, %s44, %s45
    %p49 = pneg %p43
    %p50 = scmp.eq.s32.totalorder %s8, 1
    %p51 = por %p49, %p50
    %p52 = scmp.ne.s32.totalorder %s44, %s47
    %p53 = scmp.eq.s32.totalorder %s8, 0
    %p54 = por %p52, %p53
    %p55 = scmp.ne.s32.totalorder %s44, %s47
    %p56 = scmp.eq.s32.totalorder %s13, 1
    %p57 = por %p55, %p56
    %p58 = scmp.ne.s32.totalorder %s47, %s48
    %p59 = scmp.eq.s32.totalorder %s13, 0
    %p60 = por %p58, %p59
    %p61 = scmp.ne.s32.totalorder %s47, %s48
    %p62 = scmp.eq.s32.totalorder %s14, 1
    %p63 = por %p61, %p62
    %p65 = scmp.ne.s32.totalorder %s48, %s64
    %p66 = scmp.eq.s32.totalorder %s14, 0
    %p67 = por %p65, %p66
    %s68 = ssub.s32 %s8, %s15
    %p69 = scmp.eq.s32.totalorder %s68, 0
    %s71 = sadd.s32 %s70, 1
    %s72 = scalar_select %p69, %s70, %s71
    %p75 = pneg %p69
    %p76 = scmp.eq.s32.totalorder %s8, 1
    %p77 = por %p75, %p76
    %p78 = scmp.ne.s32.totalorder %s70, %s73
    %p79 = scmp.eq.s32.totalorder %s8, 0
    %p80 = por %p78, %p79
    %p81 = scmp.ne.s32.totalorder %s70, %s73
    %p82 = scmp.eq.s32.totalorder %s13, 1
    %p83 = por %p81, %p82
    %p84 = scmp.ne.s32.totalorder %s73, %s74
    %p85 = scmp.eq.s32.totalorder %s13, 0
    %p86 = por %p84, %p85
    %p87 = scmp.ne.s32.totalorder %s73, %s74
    %p88 = scmp.eq.s32.totalorder %s14, 1
    %p89 = por %p87, %p88
    %p91 = scmp.ne.s32.totalorder %s74, %s90
    %p92 = scmp.eq.s32.totalorder %s14, 0
    %p93 = por %p91, %p92
    %p94 = scmp.le.s32.totalorder 1, %s8
    %p95 = scmp.lt.s32.totalorder %s8, 3
    %p96 = pnand %p94, %p95
    %p97 = pneg %p96
    // Predicated region
    $region9: #{image_captioning_forward.35} parent=5 // pred_check
      _
    $region10: #{image_captioning_forward.35} parent=5 // pred_check_branch
      %99 = sbr.rel (%p96) target = $region12
    $region11: #{image_captioning_forward.35} parent=5 // pred_region
      %s100 = ssub.s32 %s8, 1
    $region12: #{image_captioning_forward.35} parent=5 // pred_fallthru
      _
    %p101 = scmp.lt.s32.totalorder %s8, 2
    // Predicated region
    $region13: #{image_captioning_forward.35} parent=5 // pred_check
      %p102 = pneg %p101
    $region14: #{image_captioning_forward.35} parent=5 // pred_check_branch
      %104 = sbr.rel (%p102) target = $region16
    $region15: #{image_captioning_forward.35} parent=5 // pred_region
      // Predicated region
      $region17: #{image_captioning_forward.35} parent=15 // pred_check
        %p105 = pneg %p28
      $region18: #{image_captioning_forward.35} parent=15 // pred_check_branch
        %107 = sbr.rel (%p105) target = $region20
      $region19: #{image_captioning_forward.35} parent=15 // pred_region
        %p108 = scmp.lt.s32.totalorder %s8, 1
        %s109 = scalar_select %p108, %s8, 1
        %s110 = smul.addr %s109, 4
        %s111 = scalar_lea.vmem %s0, %s110
      $region20: #{image_captioning_forward.35} parent=15 // pred_fallthru
        _
      // Predicated region
      $region21: #{image_captioning_forward.35} parent=15 // pred_check
        %p112 = pneg %p54
      $region22: #{image_captioning_forward.35} parent=15 // pred_check_branch
        %114 = sbr.rel (%p112) target = $region24
      $region23: #{image_captioning_forward.35} parent=15 // pred_region
        %p115 = scmp.lt.s32.totalorder %s8, 1
        %s116 = scalar_select %p115, %s8, 1
        %s117 = smul.addr %s116, 2
        %s118 = smul.addr %s117, 4
        %s119 = scalar_lea.vmem %s1, %s118
      $region24: #{image_captioning_forward.35} parent=15 // pred_fallthru
        _
    $region16: #{image_captioning_forward.35} parent=5 // pred_fallthru
      _
    %p120 = scmp.le.s32.totalorder 1, %s8
    %p121 = scmp.lt.s32.totalorder %s8, 3
    %p122 = pnand %p120, %p121
    %p123 = pneg %p122
    // Predicated region
    $region25: #{image_captioning_forward.35} parent=5 // pred_check
      _
    $region26: #{image_captioning_forward.35} parent=5 // pred_check_branch
      %125 = sbr.rel (%p122) target = $region28
    $region27: #{image_captioning_forward.35} parent=5 // pred_region
      %s126 = ssub.s32 %s8, 1
      %p127 = scmp.lt.s32.totalorder %s13, 1
      %s128 = scalar_select %p127, %s13, 1
      %s129 = smul.addr %s128, 4
      %s130 = scalar_lea.vmem %s0, %s129
      %p131 = pneg %p34
      %p132 = pneg %p31
      %p133 = scmp.lt.s32.totalorder %s13, 1
      %s134 = scalar_select %p133, %s13, 1
      %s135 = smul.addr %s134, 2
      %s136 = smul.addr %s135, 4
      %s137 = scalar_lea.vmem %s1, %s136
      %p138 = pneg %p60
      %p139 = pneg %p57
      %p140 = pneg %p86
      %p141 = pneg %p83
      %p142 = scmp.lt.s32.totalorder %s13, 1
      %s143 = scalar_select %p142, %s13, 1
      %s144 = smul.addr %s143, 4
      %s145 = scalar_lea.vmem %s2, %s144
      %p146 = scmp.lt.s32.totalorder %s13, 1
      %s147 = scalar_select %p146, %s13, 1
      %s148 = smul.addr %s147, 4
      %s149 = scalar_lea.vmem %s0, %s148
      %p150 = scmp.lt.s32.totalorder %s13, 1
      %s151 = scalar_select %p150, %s13, 1
      %s152 = smul.addr %s151, 2
      %s153 = smul.addr %s152, 4
      %s154 = scalar_lea.vmem %s1, %s153
      %p155 = scmp.lt.s32.totalorder %s13, 1
      %s156 = scalar_select %p155, %s13, 1
      %s157 = smul.addr %s156, 4
      %s158 = scalar_lea.vmem %s2, %s157
      %v160 = vld [vmem:[%s149] sm:$0xf]
      %v161 = vld [vmem:[%s154] sm:$0xf]
      %v162 = vld [vmem:[%s154 + $0x4] sm:$0xf]
      %v165 = vunpack.c.l.b16 %v161
      %v166 = vunpack.c.l.b16 %v162
      %v167 = vpack.c.b16 %v166, %v165
      %vm168 = vcmask 64512
      %v170 = vsel %vm168, %v160, 0
      %v173 = vsel %vm168, %v167, 0
      %175 = vmatprep.subr.bf16.mxu0 0
      %176 = vmatpush1.bf16.xpose.msra.mxu0 %v173
      %177 = vmatprep.subr.bf16.mxu0 0
      %178 = vmatpush1.bf16.xpose.msra.mxu0 0
      %179 = vmatprep.subr.bf16.mxu0 0
      %180 = vmatpush1.bf16.xpose.msra.mxu0 0
      %181 = vmatprep.subr.bf16.mxu0 0
      %182 = vmatpush1.bf16.xpose.msra.mxu0 0
      %183 = vmatprep.subr.bf16.mxu0 0
      %184 = vmatpush1.bf16.xpose.msra.mxu0 0
      %185 = vmatprep.subr.bf16.mxu0 0
      %186 = vmatpush1.bf16.xpose.msra.mxu0 0
      %187 = vmatprep.subr.bf16.mxu0 0
      %188 = vmatpush1.bf16.xpose.msra.mxu0 0
      %189 = vmatprep.subr.bf16.mxu0 0
      %190 = vmatpush1.bf16.xpose.msra.mxu0 0
      %191 = vmatprep.subr.bf16.mxu0 0
      %192 = vmatpush1.bf16.xpose.msra.mxu0 0
      %193 = vmatprep.subr.bf16.mxu0 0
      %194 = vmatpush1.bf16.xpose.msra.mxu0 0
      %195 = vmatprep.subr.bf16.mxu0 0
      %196 = vmatpush1.bf16.xpose.msra.mxu0 0
      %197 = vmatprep.subr.bf16.mxu0 0
      %198 = vmatpush1.bf16.xpose.msra.mxu0 0
      %199 = vmatprep.subr.bf16.mxu0 0
      %200 = vmatpush1.bf16.xpose.msra.mxu0 0
      %201 = vmatprep.subr.bf16.mxu0 0
      %202 = vmatpush1.bf16.xpose.msra.mxu0 0
      %203 = vmatprep.subr.bf16.mxu0 0
      %204 = vmatpush1.bf16.xpose.msra.mxu0 0
      %205 = vmatprep.subr.bf16.mxu0 0
      %206 = vmatpush1.bf16.xpose.msra.mxu0 0
      %207 = vmatprep.mubr.bf16.mxu0 0
      %208 = vmatmul.mubr.bf16.gmra.mrb[0].mxu0 %v170
      %v209 = vpop.f32.mrb[0].mxu0
      %v210 = vadd.f32 0.0, %v209
      %v211 = vpop.f32.mrb[0].mxu0
      %v212 = vpop.f32.mrb[0].mxu0
      %v213 = vpop.f32.mrb[0].mxu0
      %214 = vdwg.mxu0
      %v215 = vmul.f32 %v210, 0.35355338
      %vm216 = vcmask 130048
      %v217 = vsel %vm216, %v215, -inf
      %218 = vmax.xlane.f32.xlu0 %v217
      %v219 = vpop.xlane.xlu0 %218
      %v220 = vsub.f32 %v215, %v219
      %v221 = vmul.f32 %v220, 1.442695
      %v222 = vpow.pop %v221
      %v223 = vsel %vm216, %v222, 0.0
      %224 = vadd.xlane.f32.xlu0 %v223
      %v225 = vpop.xlane.xlu0 %224
      %v226 = vrcp.pop %v225
      %v227 = vmul.f32 %v222, %v226
      %v228 = vpack.c.bf16 %v227, %v227
      %229 = vrot.lane.b32.xlu0 %v167, 96
      %v230 = vpop.permute.xlu0 %229
      %v233 = vsel %vm216, %v228, 0
      %235 = vmatprep.subr.bf16.mxu0 0
      %236 = vmatpush1.bf16.msra.mxu0 %v230
      %237 = vmatprep.subr.bf16.mxu0 0
      %238 = vmatpush1.bf16.msra.mxu0 0
      %239 = vmatprep.subr.bf16.mxu0 0
      %240 = vmatpush1.bf16.msra.mxu0 0
      %241 = vmatprep.subr.bf16.mxu0 0
      %242 = vmatpush1.bf16.msra.mxu0 0
      %243 = vmatprep.subr.bf16.mxu0 0
      %244 = vmatpush1.bf16.msra.mxu0 0
      %245 = vmatprep.subr.bf16.mxu0 0
      %246 = vmatpush1.bf16.msra.mxu0 0
      %247 = vmatprep.subr.bf16.mxu0 0
      %248 = vmatpush1.bf16.msra.mxu0 0
      %249 = vmatprep.subr.bf16.mxu0 0
      %250 = vmatpush1.bf16.msra.mxu0 0
      %251 = vmatprep.subr.bf16.mxu0 0
      %252 = vmatpush1.bf16.msra.mxu0 0
      %253 = vmatprep.subr.bf16.mxu0 0
      %254 = vmatpush1.bf16.msra.mxu0 0
      %255 = vmatprep.subr.bf16.mxu0 0
      %256 = vmatpush1.bf16.msra.mxu0 0
      %257 = vmatprep.subr.bf16.mxu0 0
      %258 = vmatpush1.bf16.msra.mxu0 0
      %259 = vmatprep.subr.bf16.mxu0 0
      %260 = vmatpush1.bf16.msra.mxu0 0
      %261 = vmatprep.subr.bf16.mxu0 0
      %262 = vmatpush1.bf16.msra.mxu0 0
      %263 = vmatprep.subr.bf16.mxu0 0
      %264 = vmatpush1.bf16.msra.mxu0 0
      %265 = vmatprep.subr.bf16.mxu0 0
      %266 = vmatpush1.bf16.msra.mxu0 0
      %267 = vmatprep.mubr.bf16.mxu0 0
      %268 = vmatmul.mubr.bf16.gmra.mrb[0].mxu0 %v233
      %v269 = vpop.f32.mrb[0].mxu0
      %v270 = vadd.f32 0.0, %v269
      %v271 = vpop.f32.mrb[0].mxu0
      %v272 = vpop.f32.mrb[0].mxu0
      %v273 = vpop.f32.mrb[0].mxu0
      %274 = vdwg.mxu0
      %v275 = vpack.c.bf16 %v270, %v270
      %vm276 = vcmask 60416
      %277 = vst.msk [vmem:[%s158] sm:$0xf] %vm276, %v275
      %v278 = vld [vmem:[%s149] sm:$0xf]
      %v279 = vld [vmem:[%s154] sm:$0xf]
      %v280 = vld [vmem:[%s154 + $0x4] sm:$0xf]
      %v282 = vunpack.c.l.b16 %v278
      %v283 = vpack.c.b16 %v282, %v282
      %284 = vrot.lane.b32.xlu0 %v283, 120
      %v285 = vpop.permute.xlu0 %284
      %v288 = vunpack.c.l.b16 %v279
      %v289 = vunpack.c.l.b16 %v280
      %v290 = vpack.c.b16 %v289, %v288
      %291 = vrot.lane.b32.xlu0 %v290, 120
      %v292 = vpop.permute.xlu0 %291
      %v294 = vsel %vm168, %v285, 0
      %v297 = vsel %vm168, %v292, 0
      %299 = vmatprep.subr.bf16.mxu0 0
      %300 = vmatpush1.bf16.xpose.msra.mxu0 %v297
      %301 = vmatprep.subr.bf16.mxu0 0
      %302 = vmatpush1.bf16.xpose.msra.mxu0 0
      %303 = vmatprep.subr.bf16.mxu0 0
      %304 = vmatpush1.bf16.xpose.msra.mxu0 0
      %305 = vmatprep.subr.bf16.mxu0 0
      %306 = vmatpush1.bf16.xpose.msra.mxu0 0
      %307 = vmatprep.subr.bf16.mxu0 0
      %308 = vmatpush1.bf16.xpose.msra.mxu0 0
      %309 = vmatprep.subr.bf16.mxu0 0
      %310 = vmatpush1.bf16.xpose.msra.mxu0 0
      %311 = vmatprep.subr.bf16.mxu0 0
      %312 = vmatpush1.bf16.xpose.msra.mxu0 0
      %313 = vmatprep.subr.bf16.mxu0 0
      %314 = vmatpush1.bf16.xpose.msra.mxu0 0
      %315 = vmatprep.subr.bf16.mxu0 0
      %316 = vmatpush1.bf16.xpose.msra.mxu0 0
      %317 = vmatprep.subr.bf16.mxu0 0
      %318 = vmatpush1.bf16.xpose.msra.mxu0 0
      %319 = vmatprep.subr.bf16.mxu0 0
      %320 = vmatpush1.bf16.xpose.msra.mxu0 0
      %321 = vmatprep.subr.bf16.mxu0 0
      %322 = vmatpush1.bf16.xpose.msra.mxu0 0
      %323 = vmatprep.subr.bf16.mxu0 0
      %324 = vmatpush1.bf16.xpose.msra.mxu0 0
      %325 = vmatprep.subr.bf16.mxu0 0
      %326 = vmatpush1.bf16.xpose.msra.mxu0 0
      %327 = vmatprep.subr.bf16.mxu0 0
      %328 = vmatpush1.bf16.xpose.msra.mxu0 0
      %329 = vmatprep.subr.bf16.mxu0 0
      %330 = vmatpush1.bf16.xpose.msra.mxu0 0
      %331 = vmatprep.mubr.bf16.mxu0 0
      %332 = vmatmul.mubr.bf16.gmra.mrb[0].mxu0 %v294
      %v333 = vpop.f32.mrb[0].mxu0
      %v334 = vadd.f32 0.0, %v333
      %v335 = vpop.f32.mrb[0].mxu0
      %v336 = vpop.f32.mrb[0].mxu0
      %v337 = vpop.f32.mrb[0].mxu0
      %338 = vdwg.mxu0
      %v339 = vmul.f32 %v334, 0.35355338
      %v340 = vsel %vm216, %v339, -inf
      %341 = vmax.xlane.f32.xlu0 %v340
      %v342 = vpop.xlane.xlu0 %341
      %v343 = vsub.f32 %v339, %v342
      %v344 = vmul.f32 %v343, 1.442695
      %v345 = vpow.pop %v344
      %v346 = vsel %vm216, %v345, 0.0
      %347 = vadd.xlane.f32.xlu0 %v346
      %v348 = vpop.xlane.xlu0 %347
      %v349 = vrcp.pop %v348
      %v350 = vmul.f32 %v345, %v349
      %v351 = vpack.c.bf16 %v350, %v350
      %352 = vrot.lane.b32.xlu0 %v290, 88
      %v353 = vpop.permute.xlu0 %352
      %v356 = vsel %vm216, %v351, 0
      %358 = vmatprep.subr.bf16.mxu0 0
      %359 = vmatpush1.bf16.msra.mxu0 %v353
      %360 = vmatprep.subr.bf16.mxu0 0
      %361 = vmatpush1.bf16.msra.mxu0 0
      %362 = vmatprep.subr.bf16.mxu0 0
      %363 = vmatpush1.bf16.msra.mxu0 0
      %364 = vmatprep.subr.bf16.mxu0 0
      %365 = vmatpush1.bf16.msra.mxu0 0
      %366 = vmatprep.subr.bf16.mxu0 0
      %367 = vmatpush1.bf16.msra.mxu0 0
      %368 = vmatprep.subr.bf16.mxu0 0
      %369 = vmatpush1.bf16.msra.mxu0 0
      %370 = vmatprep.subr.bf16.mxu0 0
      %371 = vmatpush1.bf16.msra.mxu0 0
      %372 = vmatprep.subr.bf16.mxu0 0
      %373 = vmatpush1.bf16.msra.mxu0 0
      %374 = vmatprep.subr.bf16.mxu0 0
      %375 = vmatpush1.bf16.msra.mxu0 0
      %376 = vmatprep.subr.bf16.mxu0 0
      %377 = vmatpush1.bf16.msra.mxu0 0
      %378 = vmatprep.subr.bf16.mxu0 0
      %379 = vmatpush1.bf16.msra.mxu0 0
      %380 = vmatprep.subr.bf16.mxu0 0
      %381 = vmatpush1.bf16.msra.mxu0 0
      %382 = vmatprep.subr.bf16.mxu0 0
      %383 = vmatpush1.bf16.msra.mxu0 0
      %384 = vmatprep.subr.bf16.mxu0 0
      %385 = vmatpush1.bf16.msra.mxu0 0
      %386 = vmatprep.subr.bf16.mxu0 0
      %387 = vmatpush1.bf16.msra.mxu0 0
      %388 = vmatprep.subr.bf16.mxu0 0
      %389 = vmatpush1.bf16.msra.mxu0 0
      %390 = vmatprep.mubr.bf16.mxu0 0
      %391 = vmatmul.mubr.bf16.gmra.mrb[0].mxu0 %v356
      %v392 = vpop.f32.mrb[0].mxu0
      %v393 = vadd.f32 0.0, %v392
      %v394 = vpop.f32.mrb[0].mxu0
      %v395 = vpop.f32.mrb[0].mxu0
      %v396 = vpop.f32.mrb[0].mxu0
      %397 = vdwg.mxu0
      %v398 = vpack.c.bf16 %v393, %v393
      %v400 = vunpack.c.l.b16 %v398
      %v401 = vpack.c.b16 %v400, %v400
      %402 = vrot.lane.b32.xlu0 %v401, 8
      %v403 = vpop.permute.xlu0 %402
      %vm405 = vcmask 126016
      %406 = vst.msk [vmem:[%s158] sm:$0xf] %vm405, %v403
      %v407 = vld [vmem:[%s149] sm:$0xf]
      %v408 = vld [vmem:[%s154] sm:$0xf]
      %v409 = vld [vmem:[%s154 + $0x4] sm:$0xf]
      %v411 = vunpack.c.l.b16 %v407
      %v412 = vpack.c.b16 %v411, %v411
      %413 = vrot.lane.b32.xlu0 %v412, 112
      %v414 = vpop.permute.xlu0 %413
      %v417 = vunpack.c.l.b16 %v408
      %v418 = vunpack.c.l.b16 %v409
      %v419 = vpack.c.b16 %v418, %v417
      %420 = vrot.lane.b32.xlu0 %v419, 112
      %v421 = vpop.permute.xlu0 %420
      %v423 = vsel %vm168, %v414, 0
      %v426 = vsel %vm168, %v421, 0
      %428 = vmatprep.subr.bf16.mxu0 0
      %429 = vmatpush1.bf16.xpose.msra.mxu0 %v426
      %430 = vmatprep.subr.bf16.mxu0 0
      %431 = vmatpush1.bf16.xpose.msra.mxu0 0
      %432 = vmatprep.subr.bf16.mxu0 0
      %433 = vmatpush1.bf16.xpose.msra.mxu0 0
      %434 = vmatprep.subr.bf16.mxu0 0
      %435 = vmatpush1.bf16.xpose.msra.mxu0 0
      %436 = vmatprep.subr.bf16.mxu0 0
      %437 = vmatpush1.bf16.xpose.msra.mxu0 0
      %438 = vmatprep.subr.bf16.mxu0 0
      %439 = vmatpush1.bf16.xpose.msra.mxu0 0
      %440 = vmatprep.subr.bf16.mxu0 0
      %441 = vmatpush1.bf16.xpose.msra.mxu0 0
      %442 = vmatprep.subr.bf16.mxu0 0
      %443 = vmatpush1.bf16.xpose.msra.mxu0 0
      %444 = vmatprep.subr.bf16.mxu0 0
      %445 = vmatpush1.bf16.xpose.msra.mxu0 0
      %446 = vmatprep.subr.bf16.mxu0 0
      %447 = vmatpush1.bf16.xpose.msra.mxu0 0
      %448 = vmatprep.subr.bf16.mxu0 0
      %449 = vmatpush1.bf16.xpose.msra.mxu0 0
      %450 = vmatprep.subr.bf16.mxu0 0
      %451 = vmatpush1.bf16.xpose.msra.mxu0 0
      %452 = vmatprep.subr.bf16.mxu0 0
      %453 = vmatpush1.bf16.xpose.msra.mxu0 0
      %454 = vmatprep.subr.bf16.mxu0 0
      %455 = vmatpush1.bf16.xpose.msra.mxu0 0
      %456 = vmatprep.subr.bf16.mxu0 0
      %457 = vmatpush1.bf16.xpose.msra.mxu0 0
      %458 = vmatprep.subr.bf16.mxu0 0
      %459 = vmatpush1.bf16.xpose.msra.mxu0 0
      %460 = vmatprep.mubr.bf16.mxu0 0
      %461 = vmatmul.mubr.bf16.gmra.mrb[0].mxu0 %v423
      %v462 = vpop.f32.mrb[0].mxu0
      %v463 = vadd.f32 0.0, %v462
      %v464 = vpop.f32.mrb[0].mxu0
      %v465 = vpop.f32.mrb[0].mxu0
      %v466 = vpop.f32.mrb[0].mxu0
      %467 = vdwg.mxu0
      %v468 = vmul.f32 %v463, 0.35355338
      %v469 = vsel %vm216, %v468, -inf
      %470 = vmax.xlane.f32.xlu0 %v469
      %v471 = vpop.xlane.xlu0 %470
      %v472 = vsub.f32 %v468, %v471
      %v473 = vmul.f32 %v472, 1.442695
      %v474 = vpow.pop %v473
      %v475 = vsel %vm216, %v474, 0.0
      %476 = vadd.xlane.f32.xlu0 %v475
      %v477 = vpop.xlane.xlu0 %476
      %v478 = vrcp.pop %v477
      %v479 = vmul.f32 %v474, %v478
      %v480 = vpack.c.bf16 %v479, %v479
      %481 = vrot.lane.b32.xlu0 %v419, 80
      %v482 = vpop.permute.xlu0 %481
      %v485 = vsel %vm216, %v480, 0
      %487 = vmatprep.subr.bf16.mxu0 0
      %488 = vmatpush1.bf16.msra.mxu0 %v482
      %489 = vmatprep.subr.bf16.mxu0 0
      %490 = vmatpush1.bf16.msra.mxu0 0
      %491 = vmatprep.subr.bf16.mxu0 0
      %492 = vmatpush1.bf16.msra.mxu0 0
      %493 = vmatprep.subr.bf16.mxu0 0
      %494 = vmatpush1.bf16.msra.mxu0 0
      %495 = vmatprep.subr.bf16.mxu0 0
      %496 = vmatpush1.bf16.msra.mxu0 0
      %497 = vmatprep.subr.bf16.mxu0 0
      %498 = vmatpush1.bf16.msra.mxu0 0
      %499 = vmatprep.subr.bf16.mxu0 0
      %500 = vmatpush1.bf16.msra.mxu0 0
      %501 = vmatprep.subr.bf16.mxu0 0
      %502 = vmatpush1.bf16.msra.mxu0 0
      %503 = vmatprep.subr.bf16.mxu0 0
      %504 = vmatpush1.bf16.msra.mxu0 0
      %505 = vmatprep.subr.bf16.mxu0 0
      %506 = vmatpush1.bf16.msra.mxu0 0
      %507 = vmatprep.subr.bf16.mxu0 0
      %508 = vmatpush1.bf16.msra.mxu0 0
      %509 = vmatprep.subr.bf16.mxu0 0
      %510 = vmatpush1.bf16.msra.mxu0 0
      %511 = vmatprep.subr.bf16.mxu0 0
      %512 = vmatpush1.bf16.msra.mxu0 0
      %513 = vmatprep.subr.bf16.mxu0 0
      %514 = vmatpush1.bf16.msra.mxu0 0
      %515 = vmatprep.subr.bf16.mxu0 0
      %516 = vmatpush1.bf16.msra.mxu0 0
      %517 = vmatprep.subr.bf16.mxu0 0
      %518 = vmatpush1.bf16.msra.mxu0 0
      %519 = vmatprep.mubr.bf16.mxu0 0
      %520 = vmatmul.mubr.bf16.gmra.mrb[0].mxu0 %v485
      %v521 = vpop.f32.mrb[0].mxu0
      %v522 = vadd.f32 0.0, %v521
      %v523 = vpop.f32.mrb[0].mxu0
      %v524 = vpop.f32.mrb[0].mxu0
      %v525 = vpop.f32.mrb[0].mxu0
      %526 = vdwg.mxu0
      %v527 = vpack.c.bf16 %v522, %v522
      %v529 = vunpack.c.l.b16 %v527
      %v530 = vpack.c.b16 %v529, %v529
      %531 = vrot.lane.b32.xlu0 %v530, 16
      %v532 = vpop.permute.xlu0 %531
      %vm534 = vcmask 191616
      %535 = vst.msk [vmem:[%s158] sm:$0xf] %vm534, %v532
      %v536 = vld [vmem:[%s149] sm:$0xf]
      %v537 = vld [vmem:[%s154] sm:$0xf]
      %v538 = vld [vmem:[%s154 + $0x4] sm:$0xf]
      %v540 = vunpack.c.l.b16 %v536
      %v541 = vpack.c.b16 %v540, %v540
      %542 = vrot.lane.b32.xlu0 %v541, 104
      %v543 = vpop.permute.xlu0 %542
      %v546 = vunpack.c.l.b16 %v537
      %v547 = vunpack.c.l.b16 %v538
      %v548 = vpack.c.b16 %v547, %v546
      %549 = vrot.lane.b32.xlu0 %v548, 104
      %v550 = vpop.permute.xlu0 %549
      %v552 = vsel %vm168, %v543, 0
      %v555 = vsel %vm168, %v550, 0
      %557 = vmatprep.subr.bf16.mxu0 0
      %558 = vmatpush1.bf16.xpose.msra.mxu0 %v555
      %559 = vmatprep.subr.bf16.mxu0 0
      %560 = vmatpush1.bf16.xpose.msra.mxu0 0
      %561 = vmatprep.subr.bf16.mxu0 0
      %562 = vmatpush1.bf16.xpose.msra.mxu0 0
      %563 = vmatprep.subr.bf16.mxu0 0
      %564 = vmatpush1.bf16.xpose.msra.mxu0 0
      %565 = vmatprep.subr.bf16.mxu0 0
      %566 = vmatpush1.bf16.xpose.msra.mxu0 0
      %567 = vmatprep.subr.bf16.mxu0 0
      %568 = vmatpush1.bf16.xpose.msra.mxu0 0
      %569 = vmatprep.subr.bf16.mxu0 0
      %570 = vmatpush1.bf16.xpose.msra.mxu0 0
      %571 = vmatprep.subr.bf16.mxu0 0
      %572 = vmatpush1.bf16.xpose.msra.mxu0 0
      %573 = vmatprep.subr.bf16.mxu0 0
      %574 = vmatpush1.bf16.xpose.msra.mxu0 0
      %575 = vmatprep.subr.bf16.mxu0 0
      %576 = vmatpush1.bf16.xpose.msra.mxu0 0
      %577 = vmatprep.subr.bf16.mxu0 0
      %578 = vmatpush1.bf16.xpose.msra.mxu0 0
      %579 = vmatprep.subr.bf16.mxu0 0
      %580 = vmatpush1.bf16.xpose.msra.mxu0 0
      %581 = vmatprep.subr.bf16.mxu0 0
      %582 = vmatpush1.bf16.xpose.msra.mxu0 0
      %583 = vmatprep.subr.bf16.mxu0 0
      %584 = vmatpush1.bf16.xpose.msra.mxu0 0
      %585 = vmatprep.subr.bf16.mxu0 0
      %586 = vmatpush1.bf16.xpose.msra.mxu0 0
      %587 = vmatprep.subr.bf16.mxu0 0
      %588 = vmatpush1.bf16.xpose.msra.mxu0 0
      %589 = vmatprep.mubr.bf16.mxu0 0
      %590 = vmatmul.mubr.bf16.gmra.mrb[0].mxu0 %v552
      %v591 = vpop.f32.mrb[0].mxu0
      %v592 = vadd.f32 0.0, %v591
      %v593 = vpop.f32.mrb[0].mxu0
      %v594 = vpop.f32.mrb[0].mxu0
      %v595 = vpop.f32.mrb[0].mxu0
      %596 = vdwg.mxu0
      %v597 = vmul.f32 %v592, 0.35355338
      %v598 = vsel %vm216, %v597, -inf
      %599 = vmax.xlane.f32.xlu0 %v598
      %v600 = vpop.xlane.xlu0 %599
      %v601 = vsub.f32 %v597, %v600
      %v602 = vmul.f32 %v601, 1.442695
      %v603 = vpow.pop %v602
      %v604 = vsel %vm216, %v603, 0.0
      %605 = vadd.xlane.f32.xlu0 %v604
      %v606 = vpop.xlane.xlu0 %605
      %v607 = vrcp.pop %v606
      %v608 = vmul.f32 %v603, %v607
      %v609 = vpack.c.bf16 %v608, %v608
      %610 = vrot.lane.b32.xlu0 %v548, 72
      %v611 = vpop.permute.xlu0 %610
      %v614 = vsel %vm216, %v609, 0
      %616 = vmatprep.subr.bf16.mxu0 0
      %617 = vmatpush1.bf16.msra.mxu0 %v611
      %618 = vmatprep.subr.bf16.mxu0 0
      %619 = vmatpush1.bf16.msra.mxu0 0
      %620 = vmatprep.subr.bf16.mxu0 0
      %621 = vmatpush1.bf16.msra.mxu0 0
      %622 = vmatprep.subr.bf16.mxu0 0
      %623 = vmatpush1.bf16.msra.mxu0 0
      %624 = vmatprep.subr.bf16.mxu0 0
      %625 = vmatpush1.bf16.msra.mxu0 0
      %626 = vmatprep.subr.bf16.mxu0 0
      %627 = vmatpush1.bf16.msra.mxu0 0
      %628 = vmatprep.subr.bf16.mxu0 0
      %629 = vmatpush1.bf16.msra.mxu0 0
      %630 = vmatprep.subr.bf16.mxu0 0
      %631 = vmatpush1.bf16.msra.mxu0 0
      %632 = vmatprep.subr.bf16.mxu0 0
      %633 = vmatpush1.bf16.msra.mxu0 0
      %634 = vmatprep.subr.bf16.mxu0 0
      %635 = vmatpush1.bf16.msra.mxu0 0
      %636 = vmatprep.subr.bf16.mxu0 0
      %637 = vmatpush1.bf16.msra.mxu0 0
      %638 = vmatprep.subr.bf16.mxu0 0
      %639 = vmatpush1.bf16.msra.mxu0 0
      %640 = vmatprep.subr.bf16.mxu0 0
      %641 = vmatpush1.bf16.msra.mxu0 0
      %642 = vmatprep.subr.bf16.mxu0 0
      %643 = vmatpush1.bf16.msra.mxu0 0
      %644 = vmatprep.subr.bf16.mxu0 0
      %645 = vmatpush1.bf16.msra.mxu0 0
      %646 = vmatprep.subr.bf16.mxu0 0
      %647 = vmatpush1.bf16.msra.mxu0 0
      %648 = vmatprep.mubr.bf16.mxu0 0
      %649 = vmatmul.mubr.bf16.gmra.mrb[0].mxu0 %v614
      %v650 = vpop.f32.mrb[0].mxu0
      %v651 = vadd.f32 0.0, %v650
      %v652 = vpop.f32.mrb[0].mxu0
      %v653 = vpop.f32.mrb[0].mxu0
      %v654 = vpop.f32.mrb[0].mxu0
      %655 = vdwg.mxu0
      %v656 = vpack.c.bf16 %v651, %v651
      %v658 = vunpack.c.l.b16 %v656
      %v659 = vpack.c.b16 %v658, %v658
      %660 = vrot.lane.b32.xlu0 %v659, 24
      %v661 = vpop.permute.xlu0 %660
      %vm663 = vcmask 257216
      %664 = vst.msk [vmem:[%s158] sm:$0xf] %vm663, %v661
      %p665 = scmp.lt.s32.totalorder %s13, 1
      %s666 = scalar_select %p665, %s13, 1
      %s667 = smul.addr %s666, 4
      %s668 = scalar_lea.vmem %s2, %s667
      // Predicated region
      $region29: #{image_captioning_forward.35} parent=27 // pred_check
        %p669 = pneg %p83
      $region30: #{image_captioning_forward.35} parent=27 // pred_check_branch
        %671 = sbr.rel (%p669) target = $region32
      $region31: #{image_captioning_forward.35} parent=27 // pred_region
        _
      $region32: #{image_captioning_forward.35} parent=27 // pred_fallthru
        _
    $region28: #{image_captioning_forward.35} parent=5 // pred_fallthru
      _
    %p672 = scmp.le.s32.totalorder 2, %s8
    // Predicated region
    $region33: #{image_captioning_forward.35} parent=5 // pred_check
      %p673 = pneg %p672
    $region34: #{image_captioning_forward.35} parent=5 // pred_check_branch
      %675 = sbr.rel (%p673) target = $region36
    $region35: #{image_captioning_forward.35} parent=5 // pred_region
      %s676 = ssub.s32 %s8, 2
      // Predicated region
      $region37: #{image_captioning_forward.35} parent=35 // pred_check
        %p677 = pneg %p89
      $region38: #{image_captioning_forward.35} parent=35 // pred_check_branch
        %679 = sbr.rel (%p677) target = $region40
      $region39: #{image_captioning_forward.35} parent=35 // pred_region
        %p680 = scmp.lt.s32.totalorder %s14, 1
        %s681 = scalar_select %p680, %s14, 1
        %s682 = smul.addr %s681, 4
        %s683 = scalar_lea.vmem %s2, %s682
      $region40: #{image_captioning_forward.35} parent=35 // pred_fallthru
        _
    $region36: #{image_captioning_forward.35} parent=5 // pred_fallthru
      _
  $region6: #{image_captioning_forward.35} parent=0 // loop_footer
    %s12 = sadd.s32 1, %s8
  $region7: #{image_captioning_forward.35} parent=0 // loop_footer_branch
    %7 = sbr.rel target = $region3
  $region8: #{image_captioning_forward.35} parent=0 // loop_exit
    _

// kernel: image_captioning_forward.38
$region0: #{image_captioning_forward.38}
  #allocation0 [shape = 'u32[]', space=smem, size = 0x4, offset = 0x4, fixed_abs, tag = 'smem constant byte address 0x4 - core index']
  #allocation1 [shape = 'u32[144,128]{1,0:T(1,128)}', space=vmem, size = 0x12000, scoped, tag = 'internal scratch']
  %s0 = inlined_call_operand.vmem [shape: bf16[16,32], index: 0, kind: input, shape index: {}]
  %s1 = inlined_call_operand.vmem [shape: bf16[32,128], index: 1, kind: input, shape index: {}]
  %s2 = inlined_call_operand.vmem [shape: f32[1,128], index: 2, kind: input, shape index: {}]
  %s3 = inlined_call_operand.vmem [shape: bf16[128,32], index: 3, kind: input, shape index: {}]
  %s4 = inlined_call_operand.vmem [shape: f32[1,32], index: 4, kind: input, shape index: {}]
  %s5 = inlined_call_operand.vmem [shape: bf16[16,32], index: 5, kind: output, shape index: {}]
  %s6 = sld [smem:[#allocation0]]
  $region30: #{image_captioning_forward.38} parent=0
    _
  %s8 = ssub.s32 1, %s6
  %s9 = scalar_select 0, %s8, %s6
  // Predicated region
  $region2: #{image_captioning_forward.38} parent=0 // pred_check
    _
  $region3: #{image_captioning_forward.38} parent=0 // pred_check_branch
    %11 = sbr.rel (0) target = $region5
  $region4: #{image_captioning_forward.38} parent=0 // pred_region
    _
  $region5: #{image_captioning_forward.38} parent=0 // pred_fallthru
    _
  // Predicated region
  $region6: #{image_captioning_forward.38} parent=0 // pred_check
    _
  $region7: #{image_captioning_forward.38} parent=0 // pred_check_branch
    %13 = sbr.rel (0) target = $region9
  $region8: #{image_captioning_forward.38} parent=0 // pred_region
    _
  $region9: #{image_captioning_forward.38} parent=0 // pred_fallthru
    _
  // Predicated region
  $region10: #{image_captioning_forward.38} parent=0 // pred_check
    _
  $region11: #{image_captioning_forward.38} parent=0 // pred_check_branch
    %15 = sbr.rel (0) target = $region13
  $region12: #{image_captioning_forward.38} parent=0 // pred_region
    _
  $region13: #{image_captioning_forward.38} parent=0 // pred_fallthru
    _
  // Predicated region
  $region14: #{image_captioning_forward.38} parent=0 // pred_check
    _
  $region15: #{image_captioning_forward.38} parent=0 // pred_check_branch
    %17 = sbr.rel (0) target = $region17
  $region16: #{image_captioning_forward.38} parent=0 // pred_region
    _
  $region17: #{image_captioning_forward.38} parent=0 // pred_fallthru
    _
  // Predicated region
  $region18: #{image_captioning_forward.38} parent=0 // pred_check
    _
  $region19: #{image_captioning_forward.38} parent=0 // pred_check_branch
    %19 = sbr.rel (0) target = $region21
  $region20: #{image_captioning_forward.38} parent=0 // pred_region
    _
  $region21: #{image_captioning_forward.38} parent=0 // pred_fallthru
    _
  %v21 = vld [vmem:[%s0] sm:$0xf]
  %v22 = vld [vmem:[%s0 + $0x4] sm:$0xf]
  %v23 = vld [vmem:[%s1] sm:$0xf]
  %v24 = vld [vmem:[%s1 + $0x4] sm:$0xf]
  %v25 = vld [vmem:[%s1 + $0x8] sm:$0xf]
  %v26 = vld [vmem:[%s1 + $0xc] sm:$0xf]
  %v27 = vld [vmem:[%s2] sm:$0x1]
  %v29 = vlaneseq
  %v30 = vshrl.u32 %v29, 7
  %v31 = vsub.s32 0, %v30
  %v32 = vrot.slane %v27, %v31
  %v36 = vunpack.c.l.b16 %v21
  %v37 = vunpack.c.l.b16 %v22
  %v38 = vpack.c.b16 %v37, %v36
  %v43 = vunpack.c.l.b16 %v23
  %v44 = vunpack.c.l.b16 %v24
  %v45 = vunpack.c.l.b16 %v25
  %v46 = vunpack.c.l.b16 %v26
  %v47 = vpack.c.b16 %v44, %v43
  %v48 = vpack.c.b16 %v46, %v45
  %vm51 = vcmask 261120
  %v53 = vsel %vm51, %v38, 0
  %55 = vmatprep.subr.bf16.mxu0 0
  %56 = vmatpush1.bf16.msra.mxu0 %v47
  %57 = vmatprep.subr.bf16.mxu0 0
  %58 = vmatpush1.bf16.msra.mxu0 %v48
  %59 = vmatprep.subr.bf16.mxu0 0
  %60 = vmatpush1.bf16.msra.mxu0 0
  %61 = vmatprep.subr.bf16.mxu0 0
  %62 = vmatpush1.bf16.msra.mxu0 0
  %63 = vmatprep.subr.bf16.mxu0 0
  %64 = vmatpush1.bf16.msra.mxu0 0
  %65 = vmatprep.subr.bf16.mxu0 0
  %66 = vmatpush1.bf16.msra.mxu0 0
  %67 = vmatprep.subr.bf16.mxu0 0
  %68 = vmatpush1.bf16.msra.mxu0 0
  %69 = vmatprep.subr.bf16.mxu0 0
  %70 = vmatpush1.bf16.msra.mxu0 0
  %71 = vmatprep.subr.bf16.mxu0 0
  %72 = vmatpush1.bf16.msra.mxu0 0
  %73 = vmatprep.subr.bf16.mxu0 0
  %74 = vmatpush1.bf16.msra.mxu0 0
  %75 = vmatprep.subr.bf16.mxu0 0
  %76 = vmatpush1.bf16.msra.mxu0 0
  %77 = vmatprep.subr.bf16.mxu0 0
  %78 = vmatpush1.bf16.msra.mxu0 0
  %79 = vmatprep.subr.bf16.mxu0 0
  %80 = vmatpush1.bf16.msra.mxu0 0
  %81 = vmatprep.subr.bf16.mxu0 0
  %82 = vmatpush1.bf16.msra.mxu0 0
  %83 = vmatprep.subr.bf16.mxu0 0
  %84 = vmatpush1.bf16.msra.mxu0 0
  %85 = vmatprep.subr.bf16.mxu0 0
  %86 = vmatpush1.bf16.msra.mxu0 0
  %87 = vmatprep.mubr.bf16.mxu0 0
  %88 = vmatmul.mubr.bf16.gmra.mrb[0].mxu0 %v53
  %v89 = vpop.f32.mrb[0].mxu0
  %v90 = vadd.f32 %v32, %v89
  %v91 = vpop.f32.mrb[0].mxu0
  %v92 = vpop.f32.mrb[0].mxu0
  %v93 = vadd.f32 %v32, %v92
  %v94 = vpop.f32.mrb[0].mxu0
  %95 = vdwg.mxu0
  %v96 = vmax.f32 %v90, 0.0
  %v97 = vmax.f32 %v93, 0.0
  %v98 = vpack.c.bf16 %v97, %v96
  %v99 = vld [vmem:[%s3] sm:$0xf]
  %v100 = vld [vmem:[%s3 + $0x4] sm:$0xf]
  %v101 = vld [vmem:[%s3 + $0x8] sm:$0xf]
  %v102 = vld [vmem:[%s3 + $0xc] sm:$0xf]
  %v103 = vld [vmem:[%s3 + $0x10] sm:$0xf]
  %v104 = vld [vmem:[%s3 + $0x14] sm:$0xf]
  %v105 = vld [vmem:[%s3 + $0x18] sm:$0xf]
  %v106 = vld [vmem:[%s3 + $0x1c] sm:$0xf]
  %v107 = vld [vmem:[%s3 + $0x20] sm:$0xf]
  %v108 = vld [vmem:[%s3 + $0x24] sm:$0xf]
  %v109 = vld [vmem:[%s3 + $0x28] sm:$0xf]
  %v110 = vld [vmem:[%s3 + $0x2c] sm:$0xf]
  %v111 = vld [vmem:[%s3 + $0x30] sm:$0xf]
  %v112 = vld [vmem:[%s3 + $0x34] sm:$0xf]
  %v113 = vld [vmem:[%s3 + $0x38] sm:$0xf]
  %v114 = vld [vmem:[%s3 + $0x3c] sm:$0xf]
  %v115 = vld [vmem:[%s4] sm:$0x1]
  %v117 = vlaneseq
  %v118 = vshrl.u32 %v117, 7
  %v119 = vsub.s32 0, %v118
  %v120 = vrot.slane %v115, %v119
  %v138 = vunpack.c.l.b16 %v99
  %v139 = vunpack.c.l.b16 %v100
  %v140 = vunpack.c.l.b16 %v101
  %v141 = vunpack.c.l.b16 %v102
  %v142 = vunpack.c.l.b16 %v103
  %v143 = vunpack.c.l.b16 %v104
  %v144 = vunpack.c.l.b16 %v105
  %v145 = vunpack.c.l.b16 %v106
  %v146 = vunpack.c.l.b16 %v107
  %v147 = vunpack.c.l.b16 %v108
  %v148 = vunpack.c.l.b16 %v109
  %v149 = vunpack.c.l.b16 %v110
  %v150 = vunpack.c.l.b16 %v111
  %v151 = vunpack.c.l.b16 %v112
  %v152 = vunpack.c.l.b16 %v113
  %v153 = vunpack.c.l.b16 %v114
  %v154 = vpack.c.b16 %v139, %v138
  %v155 = vpack.c.b16 %v141, %v140
  %v156 = vpack.c.b16 %v143, %v142
  %v157 = vpack.c.b16 %v145, %v144
  %v158 = vpack.c.b16 %v147, %v146
  %v159 = vpack.c.b16 %v149, %v148
  %v160 = vpack.c.b16 %v151, %v150
  %v161 = vpack.c.b16 %v153, %v152
  %170 = vmatprep.subr.bf16.mxu0 0
  %171 = vmatpush1.bf16.msra.mxu0 %v154
  %172 = vmatprep.subr.bf16.mxu0 0
  %173 = vmatpush1.bf16.msra.mxu0 %v155
  %174 = vmatprep.subr.bf16.mxu0 0
  %175 = vmatpush1.bf16.msra.mxu0 %v156
  %176 = vmatprep.subr.bf16.mxu0 0
  %177 = vmatpush1.bf16.msra.mxu0 %v157
  %178 = vmatprep.subr.bf16.mxu0 0
  %179 = vmatpush1.bf16.msra.mxu0 %v158
  %180 = vmatprep.subr.bf16.mxu0 0
  %181 = vmatpush1.bf16.msra.mxu0 %v159
  %182 = vmatprep.subr.bf16.mxu0 0
  %183 = vmatpush1.bf16.msra.mxu0 %v160
  %184 = vmatprep.subr.bf16.mxu0 0
  %185 = vmatpush1.bf16.msra.mxu0 %v161
  %186 = vmatprep.subr.bf16.mxu0 0
  %187 = vmatpush1.bf16.msra.mxu0 0
  %188 = vmatprep.subr.bf16.mxu0 0
  %189 = vmatpush1.bf16.msra.mxu0 0
  %190 = vmatprep.subr.bf16.mxu0 0
  %191 = vmatpush1.bf16.msra.mxu0 0
  %192 = vmatprep.subr.bf16.mxu0 0
  %193 = vmatpush1.bf16.msra.mxu0 0
  %194 = vmatprep.subr.bf16.mxu0 0
  %195 = vmatpush1.bf16.msra.mxu0 0
  %196 = vmatprep.subr.bf16.mxu0 0
  %197 = vmatpush1.bf16.msra.mxu0 0
  %198 = vmatprep.subr.bf16.mxu0 0
  %199 = vmatpush1.bf16.msra.mxu0 0
  %200 = vmatprep.subr.bf16.mxu0 0
  %201 = vmatpush1.bf16.msra.mxu0 0
  %202 = vmatprep.mubr.bf16.mxu0 0
  %203 = vmatmul.mubr.bf16.gmra.mrb[0].mxu0 %v98
  %v204 = vpop.f32.mrb[0].mxu0
  %v205 = vadd.f32 %v120, %v204
  %v206 = vpop.f32.mrb[0].mxu0
  %v207 = vpop.f32.mrb[0].mxu0
  %v208 = vadd.f32 %v120, %v207
  %v209 = vpop.f32.mrb[0].mxu0
  %210 = vdwg.mxu0
  %v211 = vpack.c.bf16 %v208, %v205
  %v213 = vunpack.c.l.b16 %v211
  %v214 = vunpack.c.h.b16 %v211
  %v215 = vpack.c.b16 %v213, %v213
  %v216 = vpack.c.b16 %v214, %v214
  %vm219 = vcmask 257024
  %220 = vst.msk [vmem:[%s5] sm:$0xf] %vm219, %v215
  %221 = vst.msk [vmem:[%s5 + $0x4] sm:$0xf] %vm219, %v216
  // Predicated region
  $region22: #{image_captioning_forward.38} parent=0 // pred_check
    _
  $region23: #{image_captioning_forward.38} parent=0 // pred_check_branch
    %223 = sbr.rel (0) target = $region25
  $region24: #{image_captioning_forward.38} parent=0 // pred_region
    _
  $region25: #{image_captioning_forward.38} parent=0 // pred_fallthru
    _
  // Predicated region
  $region26: #{image_captioning_forward.38} parent=0 // pred_check
    _
  $region27: #{image_captioning_forward.38} parent=0 // pred_check_branch
    %225 = sbr.rel (0) target = $region29
  $region28: #{image_captioning_forward.38} parent=0 // pred_region
    _
  $region29: #{image_captioning_forward.38} parent=0 // pred_fallthru
    _

</llo_original>
